<compile_context>
chip_gen: v6e
topology: v6e:2x2x1
jax: 0.10.0
libtpu: 0.0.40
codegen_flags: <defaults>
</compile_context>

<pallas_src>
import jax
import jax.numpy as jnp
from jax.experimental import pallas as pl
from jax.experimental.pallas import tpu as pltpu

# ----------------------------- configuration --------------------------------
BATCH = 2
IN_CH = 3
IMG = 64
PATCH = 32
GRID_HW = IMG // PATCH            # 2
N_PATCH = GRID_HW * GRID_HW       # 4
TOKENS = N_PATCH + 1              # 5 (cls token)
T_PAD = 8                         # tokens padded to a sublane multiple
ROWS = BATCH * T_PAD              # 16
DIM = 128
HEADS = 4
HEAD_DIM = DIM // HEADS           # 32
DEPTH = 2
MLP_DIM = 4 * DIM                 # 512
VIT_CLASSES = 1000
FC1 = 100
FC2 = 1
LN_EPS = 1e-6
PATCH_FLAT = IN_CH * PATCH * PATCH
ATTN_SCALE = 1.0 / (HEAD_DIM ** 0.5)

# packed small-vector array layout: 3 global rows + 9 rows per layer
GLOBAL_ROWS = 3            # lnf_g, lnf_b, b_eff(padded)
LAYER_ROWS = 9             # ln1_g, ln1_b, bq, bk, bv, proj_b, ln2_g, ln2_b, fc2_b
VEC_ROWS = GLOBAL_ROWS + DEPTH * LAYER_ROWS

# order of weight arrays passed to the fused kernel (after `patches`)
PARAM_ORDER = (
    "pe_w", "emb_add", "qkv_w", "wproj",
    "fc1_w", "fc1_b", "fc2_w", "w_eff", "vecs",
)


# ----------------------------- fused Pallas kernel ---------------------------
def _vit_fused_kernel(
    patches_ref, pe_w_ref, emb_ref, qkv_w_ref, wproj_ref,
    fc1_w_ref, fc1_b_ref, fc2_w_ref, weff_ref, vecs_ref,
    o_ref,
):
    f32 = jnp.float32
    bf16 = jnp.bfloat16

    def vrow(i):                               # (1, 128) row of packed biases/scales
        return vecs_ref[i:i + 1, :]

    def layernorm(x, g, b):
        mu = jnp.mean(x, axis=-1, keepdims=True)
        var = jnp.mean(jnp.square(x - mu), axis=-1, keepdims=True)
        return (x - mu) * jax.lax.rsqrt(var + LN_EPS) * g + b

    # additive pad-key mask, built in-kernel (0 = real key, -1e9 = pad key)
    kidx = jax.lax.broadcasted_iota(jnp.int32, (1, 1, T_PAD), 2)
    kbias = jnp.where(kidx < TOKENS, 0.0, -1e9).astype(f32)

    # ---- patch embedding ----------------------------------------------------
    # (B*T_PAD, C*P*P) bf16 @ (C*P*P, D) bf16 -> f32; cls slot and pad rows are
    # zero in `patches`, the pre-folded additive term supplies their content.
    h = jnp.dot(patches_ref[...], pe_w_ref[...], preferred_element_type=f32)
    h = h + emb_ref[...]                                    # (ROWS, DIM) f32

    for d in range(DEPTH):
        base = GLOBAL_ROWS + d * LAYER_ROWS

        # ---- attention sub-block (pre-norm) ---------------------------------
        n1 = layernorm(h, vrow(base + 0), vrow(base + 1))
        qkv = jnp.dot(n1.astype(bf16), qkv_w_ref[d],
                      preferred_element_type=f32)           # (ROWS, 3*DIM)
        q_all = qkv[:, 0 * DIM:1 * DIM] + vrow(base + 2)
        k_all = qkv[:, 1 * DIM:2 * DIM] + vrow(base + 3)
        v_all = qkv[:, 2 * DIM:3 * DIM] + vrow(base + 4)

        head_outs = []
        for hd in range(HEADS):
            c0 = hd * HEAD_DIM
            q = q_all[:, c0:c0 + HEAD_DIM].reshape(BATCH, T_PAD, HEAD_DIM)
            k = k_all[:, c0:c0 + HEAD_DIM].reshape(BATCH, T_PAD, HEAD_DIM)
            v = v_all[:, c0:c0 + HEAD_DIM].reshape(BATCH, T_PAD, HEAD_DIM)
            s = jnp.einsum("bqd,bkd->bqk", q, k,
                           preferred_element_type=f32) * ATTN_SCALE + kbias
            s = s - jnp.max(s, axis=-1, keepdims=True)       # pad keys never win the max
            p = jnp.exp(s)
            p = p * pl.reciprocal(jnp.sum(p, axis=-1, keepdims=True), approx=True)
            o = jnp.einsum("bqk,bkd->bqd", p, v, preferred_element_type=f32)
            head_outs.append(o.reshape(ROWS, HEAD_DIM))

        attn = jnp.concatenate(head_outs, axis=-1)           # (ROWS, DIM)
        h = h + jnp.dot(attn.astype(bf16), wproj_ref[d],
                        preferred_element_type=f32) + vrow(base + 5)

        # ---- MLP sub-block (pre-norm) ----------------------------------------
        n2 = layernorm(h, vrow(base + 6), vrow(base + 7))
        m = jnp.dot(n2.astype(bf16), fc1_w_ref[d],
                    preferred_element_type=f32) + fc1_b_ref[d]
        # TODO(synk): timm ViT uses exact erf-GELU; tanh approximation kept for
        # Mosaic portability.
        m = jax.nn.gelu(m, approximate=True)
        h = h + jnp.dot(m.astype(bf16), fc2_w_ref[d],
                        preferred_element_type=f32) + vrow(base + 8)

    # ---- final norm + collapsed classifier tail (head @ lin1 @ lin2) --------
    hf = layernorm(h, vrow(0), vrow(1))
    y = jnp.dot(hf.astype(bf16), weff_ref[...], preferred_element_type=f32) + vrow(2)
    o_ref[...] = jax.nn.sigmoid(y).astype(o_ref.dtype)       # lane-dense (ROWS, 128)


# ----------------------------- parameter init --------------------------------
def init_params(key):
    def nrm(k, shape, scale=0.02):
        return scale * jax.random.normal(k, shape, dtype=jnp.float32)

    keys = iter(jax.random.split(key, 64))

    # ---- canonical (timm-layout) synthetic weights ---------------------------
    pe_w_conv = nrm(next(keys), (DIM, IN_CH, PATCH, PATCH))      # conv(D,C,P,P)
    pe_b = jnp.zeros((DIM,), jnp.float32)
    cls = nrm(next(keys), (1, 1, DIM))
    pos = nrm(next(keys), (1, TOKENS, DIM))

    blocks = []
    for _ in range(DEPTH):
        blocks.append(dict(
            ln1_g=jnp.ones((DIM,), jnp.float32), ln1_b=jnp.zeros((DIM,), jnp.float32),
            qkv_w=nrm(next(keys), (DIM, 3 * DIM)), qkv_b=jnp.zeros((3 * DIM,), jnp.float32),
            proj_w=nrm(next(keys), (DIM, DIM)), proj_b=jnp.zeros((DIM,), jnp.float32),
            ln2_g=jnp.ones((DIM,), jnp.float32), ln2_b=jnp.zeros((DIM,), jnp.float32),
            fc1_w=nrm(next(keys), (DIM, MLP_DIM)), fc1_b=jnp.zeros((MLP_DIM,), jnp.float32),
            fc2_w=nrm(next(keys), (MLP_DIM, DIM)), fc2_b=jnp.zeros((DIM,), jnp.float32),
        ))

    lnf_g = jnp.ones((DIM,), jnp.float32)
    lnf_b = jnp.zeros((DIM,), jnp.float32)
    head_w = nrm(next(keys), (DIM, VIT_CLASSES))
    head_b = jnp.zeros((VIT_CLASSES,), jnp.float32)
    lin1_w = nrm(next(keys), (VIT_CLASSES, FC1))
    lin1_b = jnp.zeros((FC1,), jnp.float32)
    lin2_w = nrm(next(keys), (FC1, FC2))
    lin2_b = jnp.zeros((FC2,), jnp.float32)

    # ---- kernel-friendly packing (one-time, outside the traced forward) -----
    p = {}
    # conv stride=P == patch-flatten + matmul, (c, ph, pw) flattening order
    p["pe_w"] = pe_w_conv.reshape(DIM, PATCH_FLAT).T.astype(jnp.bfloat16)

    # additive embedding term: cls+pos[0] | conv_bias+pos[1..4] | zeros (pad)
    emb_seq = jnp.concatenate([
        cls.reshape(1, DIM) + pos[0, 0:1],
        pe_b[None, :] + pos[0, 1:TOKENS],
        jnp.zeros((T_PAD - TOKENS, DIM), jnp.float32),
    ], axis=0)                                                        # (T_PAD, D)
    p["emb_add"] = jnp.tile(emb_seq, (BATCH, 1))                      # (B*T_PAD, D) f32

    def stack(name):
        return jnp.stack([blk[name] for blk in blocks])

    # full-width matmul weights, bf16 (native MXU input dtype on all gens)
    p["qkv_w"] = stack("qkv_w").astype(jnp.bfloat16)                  # (DEPTH, D, 3D)
    p["wproj"] = stack("proj_w").astype(jnp.bfloat16)                 # (DEPTH, D, D)
    p["fc1_w"] = stack("fc1_w").astype(jnp.bfloat16)                  # (DEPTH, D, MLP)
    p["fc2_w"] = stack("fc2_w").astype(jnp.bfloat16)                  # (DEPTH, MLP, D)
    p["fc1_b"] = stack("fc1_b").reshape(DEPTH, 1, MLP_DIM)            # f32

    # Collapse 128->1000->100->1 (no nonlinearity in between) into one matmul.
    # Mathematically exact; only accumulation order changes slightly.
    w_eff = head_w @ lin1_w @ lin2_w                                  # (D, 1)
    b_eff = (head_b @ lin1_w + lin1_b) @ lin2_w + lin2_b              # (1,)
    p["w_eff"] = jnp.pad(w_eff, ((0, 0), (0, DIM - FC2))).astype(jnp.bfloat16)

    # all remaining tiny vectors packed into ONE (VEC_ROWS, 128) f32 array
    rows = [lnf_g, lnf_b, jnp.pad(b_eff, (0, DIM - FC2))]
    for blk in blocks:
        qkv_b = blk["qkv_b"]
        rows += [
            blk["ln1_g"], blk["ln1_b"],
            qkv_b[0 * DIM:1 * DIM], qkv_b[1 * DIM:2 * DIM], qkv_b[2 * DIM:3 * DIM],
            blk["proj_b"], blk["ln2_g"], blk["ln2_b"], blk["fc2_b"],
        ]
    p["vecs"] = jnp.stack(rows).astype(jnp.float32)                   # (VEC_ROWS, 128)
    assert p["vecs"].shape == (VEC_ROWS, DIM)
    return p


# ----------------------------- forward pass -----------------------------------
@jax.jit
def vit_forward(params, x):
    B = x.shape[0]
    assert B == BATCH
    # NCHW -> (B, N_PATCH, C*P*P), flatten order (c, ph, pw) == Conv2d stride P
    patches = x.reshape(B, IN_CH, GRID_HW, PATCH, GRID_HW, PATCH)
    patches = patches.transpose(0, 2, 4, 1, 3, 5).reshape(B, N_PATCH, PATCH_FLAT)
    # zero row for the cls slot (front) + zero pad rows (back) -> (B*T_PAD, C*P*P)
    patches = jnp.pad(patches, ((0, 0), (1, T_PAD - 1 - N_PATCH), (0, 0)))
    patches = patches.reshape(B * T_PAD, PATCH_FLAT).astype(jnp.bfloat16)

    n_in = 1 + len(PARAM_ORDER)
    out = pl.pallas_call(
        _vit_fused_kernel,
        out_shape=jax.ShapeDtypeStruct((B * T_PAD, DIM), jnp.float32),
        in_specs=[pl.BlockSpec(memory_space=pltpu.MemorySpace.VMEM)] * n_in,
        out_specs=pl.BlockSpec(memory_space=pltpu.MemorySpace.VMEM),
    )(patches, *[params[k] for k in PARAM_ORDER])

    # cls-token row of each sequence, real column 0 of the lane-padded tail
    return out.reshape(B, T_PAD, DIM)[:, 0, 0:1]                      # (B, 1)


# ----------------------------- driver ------------------------------------------
if __name__ == "__main__":
    key = jax.random.PRNGKey(0)
    k_params, k_x = jax.random.split(key)
    params = init_params(k_params)
    x = jax.random.normal(k_x, (BATCH, IN_CH, IMG, IMG), dtype=jnp.float32)

    out = vit_forward(params, x)
    out = jax.block_until_ready(out)
    assert out.shape == (BATCH, 1)
    assert bool(jnp.all(jnp.isfinite(out)))
    assert bool(jnp.all((out >= 0.0) & (out <= 1.0)))
    print("KERNEL_OK")
</pallas_src>

<mosaic_0001>
module attributes {stable_mosaic.version = 11 : i64} {
  func.func @_vit_fused_kernel(%arg0: memref<16x3072xbf16, #tpu.memory_space<vmem>>, %arg1: memref<3072x128xbf16, #tpu.memory_space<vmem>>, %arg2: memref<16x128xf32, #tpu.memory_space<vmem>>, %arg3: memref<2x128x384xbf16, #tpu.memory_space<vmem>>, %arg4: memref<2x128x128xbf16, #tpu.memory_space<vmem>>, %arg5: memref<2x128x512xbf16, #tpu.memory_space<vmem>>, %arg6: memref<2x1x512xf32, #tpu.memory_space<vmem>>, %arg7: memref<2x512x128xbf16, #tpu.memory_space<vmem>>, %arg8: memref<128x128xbf16, #tpu.memory_space<vmem>>, %arg9: memref<21x128xf32, #tpu.memory_space<vmem>>, %arg10: memref<16x128xf32, #tpu.memory_space<vmem>>) attributes {dimension_semantics = [], scalar_prefetch = 0 : i64, scratch_operands = 0 : i64, tpu.core_type = #tpu.core_type<tc>} {
    %0 = tpu.iota {dimensions = array<i32: 2>} : vector<1x1x8xi32>
    %c5_i32 = arith.constant 5 : i32
    %1 = vector.broadcast %c5_i32 : i32 to vector<1x1x8xi32>
    %2 = arith.cmpi slt, %0, %1 : vector<1x1x8xi32>
    %cst = arith.constant 0.000000e+00 : f32
    %cst_0 = arith.constant -1.000000e+09 : f32
    %3 = vector.broadcast %cst : f32 to vector<1x1x8xf32>
    %4 = vector.broadcast %cst_0 : f32 to vector<1x1x8xf32>
    %5 = arith.select %2, %3, %4 : vector<1x1x8xi1>, vector<1x1x8xf32>
    %c0 = arith.constant 0 : index
    %c0_1 = arith.constant 0 : index
    %6 = vector.load %arg0[%c0, %c0_1] : memref<16x3072xbf16, #tpu.memory_space<vmem>>, vector<16x3072xbf16>
    %c0_2 = arith.constant 0 : index
    %c0_3 = arith.constant 0 : index
    %7 = vector.load %arg1[%c0_2, %c0_3] : memref<3072x128xbf16, #tpu.memory_space<vmem>>, vector<3072x128xbf16>
    %cst_4 = arith.constant dense<0.000000e+00> : vector<16x128xf32>
    %8 = tpu.matmul %6, %7, %cst_4 {dimension_numbers = #tpu.dot_dimension_numbers<[1], [0], [0], [1], [0, 0, 1, 1], [], []>} : vector<16x3072xbf16>, vector<3072x128xbf16>, vector<16x128xf32> -> vector<16x128xf32>
    %c0_5 = arith.constant 0 : index
    %c0_6 = arith.constant 0 : index
    %9 = vector.load %arg2[%c0_5, %c0_6] : memref<16x128xf32, #tpu.memory_space<vmem>>, vector<16x128xf32>
    %10 = arith.addf %8, %9 : vector<16x128xf32>
    %c3 = arith.constant 3 : index
    %c0_7 = arith.constant 0 : index
    %11 = vector.load %arg9[%c3, %c0_7] : memref<21x128xf32, #tpu.memory_space<vmem>>, vector<1x128xf32>
    %c4 = arith.constant 4 : index
    %c0_8 = arith.constant 0 : index
    %12 = vector.load %arg9[%c4, %c0_8] : memref<21x128xf32, #tpu.memory_space<vmem>>, vector<1x128xf32>
    %cst_9 = arith.constant dense<0.000000e+00> : vector<16xf32>
    %13 = vector.multi_reduction <add>, %10, %cst_9 [1] : vector<16x128xf32> to vector<16xf32>
    %14 = vector.shape_cast %13 : vector<16xf32> to vector<16x1xf32>
    %cst_10 = arith.constant 1.280000e+02 : f32
    %15 = vector.broadcast %cst_10 : f32 to vector<16x1xf32>
    %16 = arith.divf %14, %15 : vector<16x1xf32>
    %17 = vector.broadcast %16 : vector<16x1xf32> to vector<16x128xf32>
    %18 = arith.subf %10, %17 : vector<16x128xf32>
    %19 = arith.mulf %18, %18 : vector<16x128xf32>
    %cst_11 = arith.constant dense<0.000000e+00> : vector<16xf32>
    %20 = vector.multi_reduction <add>, %19, %cst_11 [1] : vector<16x128xf32> to vector<16xf32>
    %21 = vector.shape_cast %20 : vector<16xf32> to vector<16x1xf32>
    %cst_12 = arith.constant 1.280000e+02 : f32
    %22 = vector.broadcast %cst_12 : f32 to vector<16x1xf32>
    %23 = arith.divf %21, %22 : vector<16x1xf32>
    %24 = vector.broadcast %16 : vector<16x1xf32> to vector<16x128xf32>
    %25 = arith.subf %10, %24 : vector<16x128xf32>
    %cst_13 = arith.constant 9.99999997E-7 : f32
    %26 = vector.broadcast %cst_13 : f32 to vector<16x1xf32>
    %27 = arith.addf %23, %26 : vector<16x1xf32>
    %28 = math.rsqrt %27 : vector<16x1xf32>
    %29 = vector.broadcast %28 : vector<16x1xf32> to vector<16x128xf32>
    %30 = arith.mulf %25, %29 : vector<16x128xf32>
    %31 = vector.broadcast %11 : vector<1x128xf32> to vector<16x128xf32>
    %32 = arith.mulf %30, %31 : vector<16x128xf32>
    %33 = vector.broadcast %12 : vector<1x128xf32> to vector<16x128xf32>
    %34 = arith.addf %32, %33 : vector<16x128xf32>
    %35 = arith.truncf %34 : vector<16x128xf32> to vector<16x128xbf16>
    %c0_14 = arith.constant 0 : index
    %c0_15 = arith.constant 0 : index
    %c0_16 = arith.constant 0 : index
    %36 = vector.load %arg3[%c0_14, %c0_15, %c0_16] : memref<2x128x384xbf16, #tpu.memory_space<vmem>>, vector<1x128x384xbf16>
    %37 = vector.shape_cast %36 : vector<1x128x384xbf16> to vector<128x384xbf16>
    %cst_17 = arith.constant dense<0.000000e+00> : vector<16x384xf32>
    %38 = tpu.matmul %35, %37, %cst_17 {dimension_numbers = #tpu.dot_dimension_numbers<[1], [0], [0], [1], [0, 0, 1, 1], [], []>} : vector<16x128xbf16>, vector<128x384xbf16>, vector<16x384xf32> -> vector<16x384xf32>
    %39 = vector.extract_strided_slice %38 {offsets = [0, 0], sizes = [16, 128], strides = [1, 1]} : vector<16x384xf32> to vector<16x128xf32>
    %c5 = arith.constant 5 : index
    %c0_18 = arith.constant 0 : index
    %40 = vector.load %arg9[%c5, %c0_18] : memref<21x128xf32, #tpu.memory_space<vmem>>, vector<1x128xf32>
    %41 = vector.broadcast %40 : vector<1x128xf32> to vector<16x128xf32>
    %42 = arith.addf %39, %41 : vector<16x128xf32>
    %43 = vector.extract_strided_slice %38 {offsets = [0, 128], sizes = [16, 128], strides = [1, 1]} : vector<16x384xf32> to vector<16x128xf32>
    %c6 = arith.constant 6 : index
    %c0_19 = arith.constant 0 : index
    %44 = vector.load %arg9[%c6, %c0_19] : memref<21x128xf32, #tpu.memory_space<vmem>>, vector<1x128xf32>
    %45 = vector.broadcast %44 : vector<1x128xf32> to vector<16x128xf32>
    %46 = arith.addf %43, %45 : vector<16x128xf32>
    %47 = vector.extract_strided_slice %38 {offsets = [0, 256], sizes = [16, 128], strides = [1, 1]} : vector<16x384xf32> to vector<16x128xf32>
    %c7 = arith.constant 7 : index
    %c0_20 = arith.constant 0 : index
    %48 = vector.load %arg9[%c7, %c0_20] : memref<21x128xf32, #tpu.memory_space<vmem>>, vector<1x128xf32>
    %49 = vector.broadcast %48 : vector<1x128xf32> to vector<16x128xf32>
    %50 = arith.addf %47, %49 : vector<16x128xf32>
    %51 = vector.extract_strided_slice %42 {offsets = [0, 0], sizes = [16, 32], strides = [1, 1]} : vector<16x128xf32> to vector<16x32xf32>
    %52 = vector.shape_cast %51 : vector<16x32xf32> to vector<2x8x32xf32>
    %53 = vector.extract_strided_slice %46 {offsets = [0, 0], sizes = [16, 32], strides = [1, 1]} : vector<16x128xf32> to vector<16x32xf32>
    %54 = vector.shape_cast %53 : vector<16x32xf32> to vector<2x8x32xf32>
    %55 = vector.extract_strided_slice %50 {offsets = [0, 0], sizes = [16, 32], strides = [1, 1]} : vector<16x128xf32> to vector<16x32xf32>
    %56 = vector.shape_cast %55 : vector<16x32xf32> to vector<2x8x32xf32>
    "tpu.trace_start"() <{level = 10 : i32, message = "bqd,bkd->bqk"}> : () -> ()
    %cst_21 = arith.constant dense<0.000000e+00> : vector<2x8x8xf32>
    %57 = tpu.matmul %52, %54, %cst_21 {dimension_numbers = #tpu.dot_dimension_numbers<[2], [2], [1], [1], [0, 0, 0, 1, 1, 1], [0], [0]>} : vector<2x8x32xf32>, vector<2x8x32xf32>, vector<2x8x8xf32> -> vector<2x8x8xf32>
    "tpu.trace_stop"() : () -> ()
    %cst_22 = arith.constant 0.176776692 : f32
    %58 = vector.broadcast %cst_22 : f32 to vector<2x8x8xf32>
    %59 = arith.mulf %57, %58 : vector<2x8x8xf32>
    %60 = vector.broadcast %5 : vector<1x1x8xf32> to vector<2x8x8xf32>
    %61 = arith.addf %59, %60 : vector<2x8x8xf32>
    %cst_23 = arith.constant dense<0xFF800000> : vector<2x8xf32>
    %62 = vector.multi_reduction <maximumf>, %61, %cst_23 [2] : vector<2x8x8xf32> to vector<2x8xf32>
    %63 = vector.shape_cast %62 : vector<2x8xf32> to vector<2x8x1xf32>
    %64 = vector.broadcast %63 : vector<2x8x1xf32> to vector<2x8x8xf32>
    %65 = arith.subf %61, %64 : vector<2x8x8xf32>
    %66 = math.exp %65 : vector<2x8x8xf32>
    %cst_24 = arith.constant dense<0.000000e+00> : vector<2x8xf32>
    %67 = vector.multi_reduction <add>, %66, %cst_24 [2] : vector<2x8x8xf32> to vector<2x8xf32>
    %68 = vector.shape_cast %67 : vector<2x8xf32> to vector<2x8x1xf32>
    %69 = tpu.reciprocal %68 {approx = true} : vector<2x8x1xf32> -> vector<2x8x1xf32>
    %70 = vector.broadcast %69 : vector<2x8x1xf32> to vector<2x8x8xf32>
    %71 = arith.mulf %66, %70 : vector<2x8x8xf32>
    "tpu.trace_start"() <{level = 10 : i32, message = "bqk,bkd->bqd"}> : () -> ()
    %cst_25 = arith.constant dense<0.000000e+00> : vector<2x8x32xf32>
    %72 = tpu.matmul %71, %56, %cst_25 {dimension_numbers = #tpu.dot_dimension_numbers<[2], [1], [1], [2], [0, 0, 0, 1, 1, 2], [0], [0]>} : vector<2x8x8xf32>, vector<2x8x32xf32>, vector<2x8x32xf32> -> vector<2x8x32xf32>
    "tpu.trace_stop"() : () -> ()
    %73 = vector.shape_cast %72 : vector<2x8x32xf32> to vector<16x32xf32>
    %74 = vector.extract_strided_slice %42 {offsets = [0, 32], sizes = [16, 32], strides = [1, 1]} : vector<16x128xf32> to vector<16x32xf32>
    %75 = vector.shape_cast %74 : vector<16x32xf32> to vector<2x8x32xf32>
    %76 = vector.extract_strided_slice %46 {offsets = [0, 32], sizes = [16, 32], strides = [1, 1]} : vector<16x128xf32> to vector<16x32xf32>
    %77 = vector.shape_cast %76 : vector<16x32xf32> to vector<2x8x32xf32>
    %78 = vector.extract_strided_slice %50 {offsets = [0, 32], sizes = [16, 32], strides = [1, 1]} : vector<16x128xf32> to vector<16x32xf32>
    %79 = vector.shape_cast %78 : vector<16x32xf32> to vector<2x8x32xf32>
    "tpu.trace_start"() <{level = 10 : i32, message = "bqd,bkd->bqk"}> : () -> ()
    %cst_26 = arith.constant dense<0.000000e+00> : vector<2x8x8xf32>
    %80 = tpu.matmul %75, %77, %cst_26 {dimension_numbers = #tpu.dot_dimension_numbers<[2], [2], [1], [1], [0, 0, 0, 1, 1, 1], [0], [0]>} : vector<2x8x32xf32>, vector<2x8x32xf32>, vector<2x8x8xf32> -> vector<2x8x8xf32>
    "tpu.trace_stop"() : () -> ()
    %cst_27 = arith.constant 0.176776692 : f32
    %81 = vector.broadcast %cst_27 : f32 to vector<2x8x8xf32>
    %82 = arith.mulf %80, %81 : vector<2x8x8xf32>
    %83 = vector.broadcast %5 : vector<1x1x8xf32> to vector<2x8x8xf32>
    %84 = arith.addf %82, %83 : vector<2x8x8xf32>
    %cst_28 = arith.constant dense<0xFF800000> : vector<2x8xf32>
    %85 = vector.multi_reduction <maximumf>, %84, %cst_28 [2] : vector<2x8x8xf32> to vector<2x8xf32>
    %86 = vector.shape_cast %85 : vector<2x8xf32> to vector<2x8x1xf32>
    %87 = vector.broadcast %86 : vector<2x8x1xf32> to vector<2x8x8xf32>
    %88 = arith.subf %84, %87 : vector<2x8x8xf32>
    %89 = math.exp %88 : vector<2x8x8xf32>
    %cst_29 = arith.constant dense<0.000000e+00> : vector<2x8xf32>
    %90 = vector.multi_reduction <add>, %89, %cst_29 [2] : vector<2x8x8xf32> to vector<2x8xf32>
    %91 = vector.shape_cast %90 : vector<2x8xf32> to vector<2x8x1xf32>
    %92 = tpu.reciprocal %91 {approx = true} : vector<2x8x1xf32> -> vector<2x8x1xf32>
    %93 = vector.broadcast %92 : vector<2x8x1xf32> to vector<2x8x8xf32>
    %94 = arith.mulf %89, %93 : vector<2x8x8xf32>
    "tpu.trace_start"() <{level = 10 : i32, message = "bqk,bkd->bqd"}> : () -> ()
    %cst_30 = arith.constant dense<0.000000e+00> : vector<2x8x32xf32>
    %95 = tpu.matmul %94, %79, %cst_30 {dimension_numbers = #tpu.dot_dimension_numbers<[2], [1], [1], [2], [0, 0, 0, 1, 1, 2], [0], [0]>} : vector<2x8x8xf32>, vector<2x8x32xf32>, vector<2x8x32xf32> -> vector<2x8x32xf32>
    "tpu.trace_stop"() : () -> ()
    %96 = vector.shape_cast %95 : vector<2x8x32xf32> to vector<16x32xf32>
    %97 = vector.extract_strided_slice %42 {offsets = [0, 64], sizes = [16, 32], strides = [1, 1]} : vector<16x128xf32> to vector<16x32xf32>
    %98 = vector.shape_cast %97 : vector<16x32xf32> to vector<2x8x32xf32>
    %99 = vector.extract_strided_slice %46 {offsets = [0, 64], sizes = [16, 32], strides = [1, 1]} : vector<16x128xf32> to vector<16x32xf32>
    %100 = vector.shape_cast %99 : vector<16x32xf32> to vector<2x8x32xf32>
    %101 = vector.extract_strided_slice %50 {offsets = [0, 64], sizes = [16, 32], strides = [1, 1]} : vector<16x128xf32> to vector<16x32xf32>
    %102 = vector.shape_cast %101 : vector<16x32xf32> to vector<2x8x32xf32>
    "tpu.trace_start"() <{level = 10 : i32, message = "bqd,bkd->bqk"}> : () -> ()
    %cst_31 = arith.constant dense<0.000000e+00> : vector<2x8x8xf32>
    %103 = tpu.matmul %98, %100, %cst_31 {dimension_numbers = #tpu.dot_dimension_numbers<[2], [2], [1], [1], [0, 0, 0, 1, 1, 1], [0], [0]>} : vector<2x8x32xf32>, vector<2x8x32xf32>, vector<2x8x8xf32> -> vector<2x8x8xf32>
    "tpu.trace_stop"() : () -> ()
    %cst_32 = arith.constant 0.176776692 : f32
    %104 = vector.broadcast %cst_32 : f32 to vector<2x8x8xf32>
    %105 = arith.mulf %103, %104 : vector<2x8x8xf32>
    %106 = vector.broadcast %5 : vector<1x1x8xf32> to vector<2x8x8xf32>
    %107 = arith.addf %105, %106 : vector<2x8x8xf32>
    %cst_33 = arith.constant dense<0xFF800000> : vector<2x8xf32>
    %108 = vector.multi_reduction <maximumf>, %107, %cst_33 [2] : vector<2x8x8xf32> to vector<2x8xf32>
    %109 = vector.shape_cast %108 : vector<2x8xf32> to vector<2x8x1xf32>
    %110 = vector.broadcast %109 : vector<2x8x1xf32> to vector<2x8x8xf32>
    %111 = arith.subf %107, %110 : vector<2x8x8xf32>
    %112 = math.exp %111 : vector<2x8x8xf32>
    %cst_34 = arith.constant dense<0.000000e+00> : vector<2x8xf32>
    %113 = vector.multi_reduction <add>, %112, %cst_34 [2] : vector<2x8x8xf32> to vector<2x8xf32>
    %114 = vector.shape_cast %113 : vector<2x8xf32> to vector<2x8x1xf32>
    %115 = tpu.reciprocal %114 {approx = true} : vector<2x8x1xf32> -> vector<2x8x1xf32>
    %116 = vector.broadcast %115 : vector<2x8x1xf32> to vector<2x8x8xf32>
    %117 = arith.mulf %112, %116 : vector<2x8x8xf32>
    "tpu.trace_start"() <{level = 10 : i32, message = "bqk,bkd->bqd"}> : () -> ()
    %cst_35 = arith.constant dense<0.000000e+00> : vector<2x8x32xf32>
    %118 = tpu.matmul %117, %102, %cst_35 {dimension_numbers = #tpu.dot_dimension_numbers<[2], [1], [1], [2], [0, 0, 0, 1, 1, 2], [0], [0]>} : vector<2x8x8xf32>, vector<2x8x32xf32>, vector<2x8x32xf32> -> vector<2x8x32xf32>
    "tpu.trace_stop"() : () -> ()
    %119 = vector.shape_cast %118 : vector<2x8x32xf32> to vector<16x32xf32>
    %120 = vector.extract_strided_slice %42 {offsets = [0, 96], sizes = [16, 32], strides = [1, 1]} : vector<16x128xf32> to vector<16x32xf32>
    %121 = vector.shape_cast %120 : vector<16x32xf32> to vector<2x8x32xf32>
    %122 = vector.extract_strided_slice %46 {offsets = [0, 96], sizes = [16, 32], strides = [1, 1]} : vector<16x128xf32> to vector<16x32xf32>
    %123 = vector.shape_cast %122 : vector<16x32xf32> to vector<2x8x32xf32>
    %124 = vector.extract_strided_slice %50 {offsets = [0, 96], sizes = [16, 32], strides = [1, 1]} : vector<16x128xf32> to vector<16x32xf32>
    %125 = vector.shape_cast %124 : vector<16x32xf32> to vector<2x8x32xf32>
    "tpu.trace_start"() <{level = 10 : i32, message = "bqd,bkd->bqk"}> : () -> ()
    %cst_36 = arith.constant dense<0.000000e+00> : vector<2x8x8xf32>
    %126 = tpu.matmul %121, %123, %cst_36 {dimension_numbers = #tpu.dot_dimension_numbers<[2], [2], [1], [1], [0, 0, 0, 1, 1, 1], [0], [0]>} : vector<2x8x32xf32>, vector<2x8x32xf32>, vector<2x8x8xf32> -> vector<2x8x8xf32>
    "tpu.trace_stop"() : () -> ()
    %cst_37 = arith.constant 0.176776692 : f32
    %127 = vector.broadcast %cst_37 : f32 to vector<2x8x8xf32>
    %128 = arith.mulf %126, %127 : vector<2x8x8xf32>
    %129 = vector.broadcast %5 : vector<1x1x8xf32> to vector<2x8x8xf32>
    %130 = arith.addf %128, %129 : vector<2x8x8xf32>
    %cst_38 = arith.constant dense<0xFF800000> : vector<2x8xf32>
    %131 = vector.multi_reduction <maximumf>, %130, %cst_38 [2] : vector<2x8x8xf32> to vector<2x8xf32>
    %132 = vector.shape_cast %131 : vector<2x8xf32> to vector<2x8x1xf32>
    %133 = vector.broadcast %132 : vector<2x8x1xf32> to vector<2x8x8xf32>
    %134 = arith.subf %130, %133 : vector<2x8x8xf32>
    %135 = math.exp %134 : vector<2x8x8xf32>
    %cst_39 = arith.constant dense<0.000000e+00> : vector<2x8xf32>
    %136 = vector.multi_reduction <add>, %135, %cst_39 [2] : vector<2x8x8xf32> to vector<2x8xf32>
    %137 = vector.shape_cast %136 : vector<2x8xf32> to vector<2x8x1xf32>
    %138 = tpu.reciprocal %137 {approx = true} : vector<2x8x1xf32> -> vector<2x8x1xf32>
    %139 = vector.broadcast %138 : vector<2x8x1xf32> to vector<2x8x8xf32>
    %140 = arith.mulf %135, %139 : vector<2x8x8xf32>
    "tpu.trace_start"() <{level = 10 : i32, message = "bqk,bkd->bqd"}> : () -> ()
    %cst_40 = arith.constant dense<0.000000e+00> : vector<2x8x32xf32>
    %141 = tpu.matmul %140, %125, %cst_40 {dimension_numbers = #tpu.dot_dimension_numbers<[2], [1], [1], [2], [0, 0, 0, 1, 1, 2], [0], [0]>} : vector<2x8x8xf32>, vector<2x8x32xf32>, vector<2x8x32xf32> -> vector<2x8x32xf32>
    "tpu.trace_stop"() : () -> ()
    %142 = vector.shape_cast %141 : vector<2x8x32xf32> to vector<16x32xf32>
    %143 = tpu.concatenate %73, %96, %119, %142 in 1 : vector<16x32xf32>, vector<16x32xf32>, vector<16x32xf32>, vector<16x32xf32> -> vector<16x128xf32>
    %144 = arith.truncf %143 : vector<16x128xf32> to vector<16x128xbf16>
    %c0_41 = arith.constant 0 : index
    %c0_42 = arith.constant 0 : index
    %c0_43 = arith.constant 0 : index
    %145 = vector.load %arg4[%c0_41, %c0_42, %c0_43] : memref<2x128x128xbf16, #tpu.memory_space<vmem>>, vector<1x128x128xbf16>
    %146 = vector.shape_cast %145 : vector<1x128x128xbf16> to vector<128x128xbf16>
    %cst_44 = arith.constant dense<0.000000e+00> : vector<16x128xf32>
    %147 = tpu.matmul %144, %146, %cst_44 {dimension_numbers = #tpu.dot_dimension_numbers<[1], [0], [0], [1], [0, 0, 1, 1], [], []>} : vector<16x128xbf16>, vector<128x128xbf16>, vector<16x128xf32> -> vector<16x128xf32>
    %148 = arith.addf %10, %147 : vector<16x128xf32>
    %c8 = arith.constant 8 : index
    %c0_45 = arith.constant 0 : index
    %149 = vector.load %arg9[%c8, %c0_45] : memref<21x128xf32, #tpu.memory_space<vmem>>, vector<1x128xf32>
    %150 = vector.broadcast %149 : vector<1x128xf32> to vector<16x128xf32>
    %151 = arith.addf %148, %150 : vector<16x128xf32>
    %c9 = arith.constant 9 : index
    %c0_46 = arith.constant 0 : index
    %152 = vector.load %arg9[%c9, %c0_46] : memref<21x128xf32, #tpu.memory_space<vmem>>, vector<1x128xf32>
    %c10 = arith.constant 10 : index
    %c0_47 = arith.constant 0 : index
    %153 = vector.load %arg9[%c10, %c0_47] : memref<21x128xf32, #tpu.memory_space<vmem>>, vector<1x128xf32>
    %cst_48 = arith.constant dense<0.000000e+00> : vector<16xf32>
    %154 = vector.multi_reduction <add>, %151, %cst_48 [1] : vector<16x128xf32> to vector<16xf32>
    %155 = vector.shape_cast %154 : vector<16xf32> to vector<16x1xf32>
    %cst_49 = arith.constant 1.280000e+02 : f32
    %156 = vector.broadcast %cst_49 : f32 to vector<16x1xf32>
    %157 = arith.divf %155, %156 : vector<16x1xf32>
    %158 = vector.broadcast %157 : vector<16x1xf32> to vector<16x128xf32>
    %159 = arith.subf %151, %158 : vector<16x128xf32>
    %160 = arith.mulf %159, %159 : vector<16x128xf32>
    %cst_50 = arith.constant dense<0.000000e+00> : vector<16xf32>
    %161 = vector.multi_reduction <add>, %160, %cst_50 [1] : vector<16x128xf32> to vector<16xf32>
    %162 = vector.shape_cast %161 : vector<16xf32> to vector<16x1xf32>
    %cst_51 = arith.constant 1.280000e+02 : f32
    %163 = vector.broadcast %cst_51 : f32 to vector<16x1xf32>
    %164 = arith.divf %162, %163 : vector<16x1xf32>
    %165 = vector.broadcast %157 : vector<16x1xf32> to vector<16x128xf32>
    %166 = arith.subf %151, %165 : vector<16x128xf32>
    %cst_52 = arith.constant 9.99999997E-7 : f32
    %167 = vector.broadcast %cst_52 : f32 to vector<16x1xf32>
    %168 = arith.addf %164, %167 : vector<16x1xf32>
    %169 = math.rsqrt %168 : vector<16x1xf32>
    %170 = vector.broadcast %169 : vector<16x1xf32> to vector<16x128xf32>
    %171 = arith.mulf %166, %170 : vector<16x128xf32>
    %172 = vector.broadcast %152 : vector<1x128xf32> to vector<16x128xf32>
    %173 = arith.mulf %171, %172 : vector<16x128xf32>
    %174 = vector.broadcast %153 : vector<1x128xf32> to vector<16x128xf32>
    %175 = arith.addf %173, %174 : vector<16x128xf32>
    %176 = arith.truncf %175 : vector<16x128xf32> to vector<16x128xbf16>
    %c0_53 = arith.constant 0 : index
    %c0_54 = arith.constant 0 : index
    %c0_55 = arith.constant 0 : index
    %177 = vector.load %arg5[%c0_53, %c0_54, %c0_55] : memref<2x128x512xbf16, #tpu.memory_space<vmem>>, vector<1x128x512xbf16>
    %178 = vector.shape_cast %177 : vector<1x128x512xbf16> to vector<128x512xbf16>
    %cst_56 = arith.constant dense<0.000000e+00> : vector<16x512xf32>
    %179 = tpu.matmul %176, %178, %cst_56 {dimension_numbers = #tpu.dot_dimension_numbers<[1], [0], [0], [1], [0, 0, 1, 1], [], []>} : vector<16x128xbf16>, vector<128x512xbf16>, vector<16x512xf32> -> vector<16x512xf32>
    %c0_57 = arith.constant 0 : index
    %c0_58 = arith.constant 0 : index
    %c0_59 = arith.constant 0 : index
    %180 = vector.load %arg6[%c0_57, %c0_58, %c0_59] : memref<2x1x512xf32, #tpu.memory_space<vmem>>, vector<1x1x512xf32>
    %181 = vector.shape_cast %180 : vector<1x1x512xf32> to vector<1x512xf32>
    %182 = vector.broadcast %181 : vector<1x512xf32> to vector<16x512xf32>
    %183 = arith.addf %179, %182 : vector<16x512xf32>
    %184 = arith.mulf %183, %183 : vector<16x512xf32>
    %185 = arith.mulf %183, %184 : vector<16x512xf32>
    %cst_60 = arith.constant 4.471500e-02 : f32
    %186 = vector.broadcast %cst_60 : f32 to vector<16x512xf32>
    %187 = arith.mulf %186, %185 : vector<16x512xf32>
    %188 = arith.addf %183, %187 : vector<16x512xf32>
    %cst_61 = arith.constant 0.797884583 : f32
    %189 = vector.broadcast %cst_61 : f32 to vector<16x512xf32>
    %190 = arith.mulf %189, %188 : vector<16x512xf32>
    %191 = math.tanh %190 : vector<16x512xf32>
    %cst_62 = arith.constant 1.000000e+00 : f32
    %192 = vector.broadcast %cst_62 : f32 to vector<16x512xf32>
    %193 = arith.addf %192, %191 : vector<16x512xf32>
    %cst_63 = arith.constant 5.000000e-01 : f32
    %194 = vector.broadcast %cst_63 : f32 to vector<16x512xf32>
    %195 = arith.mulf %194, %193 : vector<16x512xf32>
    %196 = arith.mulf %183, %195 : vector<16x512xf32>
    %197 = arith.truncf %196 : vector<16x512xf32> to vector<16x512xbf16>
    %c0_64 = arith.constant 0 : index
    %c0_65 = arith.constant 0 : index
    %c0_66 = arith.constant 0 : index
    %198 = vector.load %arg7[%c0_64, %c0_65, %c0_66] : memref<2x512x128xbf16, #tpu.memory_space<vmem>>, vector<1x512x128xbf16>
    %199 = vector.shape_cast %198 : vector<1x512x128xbf16> to vector<512x128xbf16>
    %cst_67 = arith.constant dense<0.000000e+00> : vector<16x128xf32>
    %200 = tpu.matmul %197, %199, %cst_67 {dimension_numbers = #tpu.dot_dimension_numbers<[1], [0], [0], [1], [0, 0, 1, 1], [], []>} : vector<16x512xbf16>, vector<512x128xbf16>, vector<16x128xf32> -> vector<16x128xf32>
    %201 = arith.addf %151, %200 : vector<16x128xf32>
    %c11 = arith.constant 11 : index
    %c0_68 = arith.constant 0 : index
    %202 = vector.load %arg9[%c11, %c0_68] : memref<21x128xf32, #tpu.memory_space<vmem>>, vector<1x128xf32>
    %203 = vector.broadcast %202 : vector<1x128xf32> to vector<16x128xf32>
    %204 = arith.addf %201, %203 : vector<16x128xf32>
    %c12 = arith.constant 12 : index
    %c0_69 = arith.constant 0 : index
    %205 = vector.load %arg9[%c12, %c0_69] : memref<21x128xf32, #tpu.memory_space<vmem>>, vector<1x128xf32>
    %c13 = arith.constant 13 : index
    %c0_70 = arith.constant 0 : index
    %206 = vector.load %arg9[%c13, %c0_70] : memref<21x128xf32, #tpu.memory_space<vmem>>, vector<1x128xf32>
    %cst_71 = arith.constant dense<0.000000e+00> : vector<16xf32>
    %207 = vector.multi_reduction <add>, %204, %cst_71 [1] : vector<16x128xf32> to vector<16xf32>
    %208 = vector.shape_cast %207 : vector<16xf32> to vector<16x1xf32>
    %cst_72 = arith.constant 1.280000e+02 : f32
    %209 = vector.broadcast %cst_72 : f32 to vector<16x1xf32>
    %210 = arith.divf %208, %209 : vector<16x1xf32>
    %211 = vector.broadcast %210 : vector<16x1xf32> to vector<16x128xf32>
    %212 = arith.subf %204, %211 : vector<16x128xf32>
    %213 = arith.mulf %212, %212 : vector<16x128xf32>
    %cst_73 = arith.constant dense<0.000000e+00> : vector<16xf32>
    %214 = vector.multi_reduction <add>, %213, %cst_73 [1] : vector<16x128xf32> to vector<16xf32>
    %215 = vector.shape_cast %214 : vector<16xf32> to vector<16x1xf32>
    %cst_74 = arith.constant 1.280000e+02 : f32
    %216 = vector.broadcast %cst_74 : f32 to vector<16x1xf32>
    %217 = arith.divf %215, %216 : vector<16x1xf32>
    %218 = vector.broadcast %210 : vector<16x1xf32> to vector<16x128xf32>
    %219 = arith.subf %204, %218 : vector<16x128xf32>
    %cst_75 = arith.constant 9.99999997E-7 : f32
    %220 = vector.broadcast %cst_75 : f32 to vector<16x1xf32>
    %221 = arith.addf %217, %220 : vector<16x1xf32>
    %222 = math.rsqrt %221 : vector<16x1xf32>
    %223 = vector.broadcast %222 : vector<16x1xf32> to vector<16x128xf32>
    %224 = arith.mulf %219, %223 : vector<16x128xf32>
    %225 = vector.broadcast %205 : vector<1x128xf32> to vector<16x128xf32>
    %226 = arith.mulf %224, %225 : vector<16x128xf32>
    %227 = vector.broadcast %206 : vector<1x128xf32> to vector<16x128xf32>
    %228 = arith.addf %226, %227 : vector<16x128xf32>
    %229 = arith.truncf %228 : vector<16x128xf32> to vector<16x128xbf16>
    %c1 = arith.constant 1 : index
    %c0_76 = arith.constant 0 : index
    %c0_77 = arith.constant 0 : index
    %230 = vector.load %arg3[%c1, %c0_76, %c0_77] : memref<2x128x384xbf16, #tpu.memory_space<vmem>>, vector<1x128x384xbf16>
    %231 = vector.shape_cast %230 : vector<1x128x384xbf16> to vector<128x384xbf16>
    %cst_78 = arith.constant dense<0.000000e+00> : vector<16x384xf32>
    %232 = tpu.matmul %229, %231, %cst_78 {dimension_numbers = #tpu.dot_dimension_numbers<[1], [0], [0], [1], [0, 0, 1, 1], [], []>} : vector<16x128xbf16>, vector<128x384xbf16>, vector<16x384xf32> -> vector<16x384xf32>
    %233 = vector.extract_strided_slice %232 {offsets = [0, 0], sizes = [16, 128], strides = [1, 1]} : vector<16x384xf32> to vector<16x128xf32>
    %c14 = arith.constant 14 : index
    %c0_79 = arith.constant 0 : index
    %234 = vector.load %arg9[%c14, %c0_79] : memref<21x128xf32, #tpu.memory_space<vmem>>, vector<1x128xf32>
    %235 = vector.broadcast %234 : vector<1x128xf32> to vector<16x128xf32>
    %236 = arith.addf %233, %235 : vector<16x128xf32>
    %237 = vector.extract_strided_slice %232 {offsets = [0, 128], sizes = [16, 128], strides = [1, 1]} : vector<16x384xf32> to vector<16x128xf32>
    %c15 = arith.constant 15 : index
    %c0_80 = arith.constant 0 : index
    %238 = vector.load %arg9[%c15, %c0_80] : memref<21x128xf32, #tpu.memory_space<vmem>>, vector<1x128xf32>
    %239 = vector.broadcast %238 : vector<1x128xf32> to vector<16x128xf32>
    %240 = arith.addf %237, %239 : vector<16x128xf32>
    %241 = vector.extract_strided_slice %232 {offsets = [0, 256], sizes = [16, 128], strides = [1, 1]} : vector<16x384xf32> to vector<16x128xf32>
    %c16 = arith.constant 16 : index
    %c0_81 = arith.constant 0 : index
    %242 = vector.load %arg9[%c16, %c0_81] : memref<21x128xf32, #tpu.memory_space<vmem>>, vector<1x128xf32>
    %243 = vector.broadcast %242 : vector<1x128xf32> to vector<16x128xf32>
    %244 = arith.addf %241, %243 : vector<16x128xf32>
    %245 = vector.extract_strided_slice %236 {offsets = [0, 0], sizes = [16, 32], strides = [1, 1]} : vector<16x128xf32> to vector<16x32xf32>
    %246 = vector.shape_cast %245 : vector<16x32xf32> to vector<2x8x32xf32>
    %247 = vector.extract_strided_slice %240 {offsets = [0, 0], sizes = [16, 32], strides = [1, 1]} : vector<16x128xf32> to vector<16x32xf32>
    %248 = vector.shape_cast %247 : vector<16x32xf32> to vector<2x8x32xf32>
    %249 = vector.extract_strided_slice %244 {offsets = [0, 0], sizes = [16, 32], strides = [1, 1]} : vector<16x128xf32> to vector<16x32xf32>
    %250 = vector.shape_cast %249 : vector<16x32xf32> to vector<2x8x32xf32>
    "tpu.trace_start"() <{level = 10 : i32, message = "bqd,bkd->bqk"}> : () -> ()
    %cst_82 = arith.constant dense<0.000000e+00> : vector<2x8x8xf32>
    %251 = tpu.matmul %246, %248, %cst_82 {dimension_numbers = #tpu.dot_dimension_numbers<[2], [2], [1], [1], [0, 0, 0, 1, 1, 1], [0], [0]>} : vector<2x8x32xf32>, vector<2x8x32xf32>, vector<2x8x8xf32> -> vector<2x8x8xf32>
    "tpu.trace_stop"() : () -> ()
    %cst_83 = arith.constant 0.176776692 : f32
    %252 = vector.broadcast %cst_83 : f32 to vector<2x8x8xf32>
    %253 = arith.mulf %251, %252 : vector<2x8x8xf32>
    %254 = vector.broadcast %5 : vector<1x1x8xf32> to vector<2x8x8xf32>
    %255 = arith.addf %253, %254 : vector<2x8x8xf32>
    %cst_84 = arith.constant dense<0xFF800000> : vector<2x8xf32>
    %256 = vector.multi_reduction <maximumf>, %255, %cst_84 [2] : vector<2x8x8xf32> to vector<2x8xf32>
    %257 = vector.shape_cast %256 : vector<2x8xf32> to vector<2x8x1xf32>
    %258 = vector.broadcast %257 : vector<2x8x1xf32> to vector<2x8x8xf32>
    %259 = arith.subf %255, %258 : vector<2x8x8xf32>
    %260 = math.exp %259 : vector<2x8x8xf32>
    %cst_85 = arith.constant dense<0.000000e+00> : vector<2x8xf32>
    %261 = vector.multi_reduction <add>, %260, %cst_85 [2] : vector<2x8x8xf32> to vector<2x8xf32>
    %262 = vector.shape_cast %261 : vector<2x8xf32> to vector<2x8x1xf32>
    %263 = tpu.reciprocal %262 {approx = true} : vector<2x8x1xf32> -> vector<2x8x1xf32>
    %264 = vector.broadcast %263 : vector<2x8x1xf32> to vector<2x8x8xf32>
    %265 = arith.mulf %260, %264 : vector<2x8x8xf32>
    "tpu.trace_start"() <{level = 10 : i32, message = "bqk,bkd->bqd"}> : () -> ()
    %cst_86 = arith.constant dense<0.000000e+00> : vector<2x8x32xf32>
    %266 = tpu.matmul %265, %250, %cst_86 {dimension_numbers = #tpu.dot_dimension_numbers<[2], [1], [1], [2], [0, 0, 0, 1, 1, 2], [0], [0]>} : vector<2x8x8xf32>, vector<2x8x32xf32>, vector<2x8x32xf32> -> vector<2x8x32xf32>
    "tpu.trace_stop"() : () -> ()
    %267 = vector.shape_cast %266 : vector<2x8x32xf32> to vector<16x32xf32>
    %268 = vector.extract_strided_slice %236 {offsets = [0, 32], sizes = [16, 32], strides = [1, 1]} : vector<16x128xf32> to vector<16x32xf32>
    %269 = vector.shape_cast %268 : vector<16x32xf32> to vector<2x8x32xf32>
    %270 = vector.extract_strided_slice %240 {offsets = [0, 32], sizes = [16, 32], strides = [1, 1]} : vector<16x128xf32> to vector<16x32xf32>
    %271 = vector.shape_cast %270 : vector<16x32xf32> to vector<2x8x32xf32>
    %272 = vector.extract_strided_slice %244 {offsets = [0, 32], sizes = [16, 32], strides = [1, 1]} : vector<16x128xf32> to vector<16x32xf32>
    %273 = vector.shape_cast %272 : vector<16x32xf32> to vector<2x8x32xf32>
    "tpu.trace_start"() <{level = 10 : i32, message = "bqd,bkd->bqk"}> : () -> ()
    %cst_87 = arith.constant dense<0.000000e+00> : vector<2x8x8xf32>
    %274 = tpu.matmul %269, %271, %cst_87 {dimension_numbers = #tpu.dot_dimension_numbers<[2], [2], [1], [1], [0, 0, 0, 1, 1, 1], [0], [0]>} : vector<2x8x32xf32>, vector<2x8x32xf32>, vector<2x8x8xf32> -> vector<2x8x8xf32>
    "tpu.trace_stop"() : () -> ()
    %cst_88 = arith.constant 0.176776692 : f32
    %275 = vector.broadcast %cst_88 : f32 to vector<2x8x8xf32>
    %276 = arith.mulf %274, %275 : vector<2x8x8xf32>
    %277 = vector.broadcast %5 : vector<1x1x8xf32> to vector<2x8x8xf32>
    %278 = arith.addf %276, %277 : vector<2x8x8xf32>
    %cst_89 = arith.constant dense<0xFF800000> : vector<2x8xf32>
    %279 = vector.multi_reduction <maximumf>, %278, %cst_89 [2] : vector<2x8x8xf32> to vector<2x8xf32>
    %280 = vector.shape_cast %279 : vector<2x8xf32> to vector<2x8x1xf32>
    %281 = vector.broadcast %280 : vector<2x8x1xf32> to vector<2x8x8xf32>
    %282 = arith.subf %278, %281 : vector<2x8x8xf32>
    %283 = math.exp %282 : vector<2x8x8xf32>
    %cst_90 = arith.constant dense<0.000000e+00> : vector<2x8xf32>
    %284 = vector.multi_reduction <add>, %283, %cst_90 [2] : vector<2x8x8xf32> to vector<2x8xf32>
    %285 = vector.shape_cast %284 : vector<2x8xf32> to vector<2x8x1xf32>
    %286 = tpu.reciprocal %285 {approx = true} : vector<2x8x1xf32> -> vector<2x8x1xf32>
    %287 = vector.broadcast %286 : vector<2x8x1xf32> to vector<2x8x8xf32>
    %288 = arith.mulf %283, %287 : vector<2x8x8xf32>
    "tpu.trace_start"() <{level = 10 : i32, message = "bqk,bkd->bqd"}> : () -> ()
    %cst_91 = arith.constant dense<0.000000e+00> : vector<2x8x32xf32>
    %289 = tpu.matmul %288, %273, %cst_91 {dimension_numbers = #tpu.dot_dimension_numbers<[2], [1], [1], [2], [0, 0, 0, 1, 1, 2], [0], [0]>} : vector<2x8x8xf32>, vector<2x8x32xf32>, vector<2x8x32xf32> -> vector<2x8x32xf32>
    "tpu.trace_stop"() : () -> ()
    %290 = vector.shape_cast %289 : vector<2x8x32xf32> to vector<16x32xf32>
    %291 = vector.extract_strided_slice %236 {offsets = [0, 64], sizes = [16, 32], strides = [1, 1]} : vector<16x128xf32> to vector<16x32xf32>
    %292 = vector.shape_cast %291 : vector<16x32xf32> to vector<2x8x32xf32>
    %293 = vector.extract_strided_slice %240 {offsets = [0, 64], sizes = [16, 32], strides = [1, 1]} : vector<16x128xf32> to vector<16x32xf32>
    %294 = vector.shape_cast %293 : vector<16x32xf32> to vector<2x8x32xf32>
    %295 = vector.extract_strided_slice %244 {offsets = [0, 64], sizes = [16, 32], strides = [1, 1]} : vector<16x128xf32> to vector<16x32xf32>
    %296 = vector.shape_cast %295 : vector<16x32xf32> to vector<2x8x32xf32>
    "tpu.trace_start"() <{level = 10 : i32, message = "bqd,bkd->bqk"}> : () -> ()
    %cst_92 = arith.constant dense<0.000000e+00> : vector<2x8x8xf32>
    %297 = tpu.matmul %292, %294, %cst_92 {dimension_numbers = #tpu.dot_dimension_numbers<[2], [2], [1], [1], [0, 0, 0, 1, 1, 1], [0], [0]>} : vector<2x8x32xf32>, vector<2x8x32xf32>, vector<2x8x8xf32> -> vector<2x8x8xf32>
    "tpu.trace_stop"() : () -> ()
    %cst_93 = arith.constant 0.176776692 : f32
    %298 = vector.broadcast %cst_93 : f32 to vector<2x8x8xf32>
    %299 = arith.mulf %297, %298 : vector<2x8x8xf32>
    %300 = vector.broadcast %5 : vector<1x1x8xf32> to vector<2x8x8xf32>
    %301 = arith.addf %299, %300 : vector<2x8x8xf32>
    %cst_94 = arith.constant dense<0xFF800000> : vector<2x8xf32>
    %302 = vector.multi_reduction <maximumf>, %301, %cst_94 [2] : vector<2x8x8xf32> to vector<2x8xf32>
    %303 = vector.shape_cast %302 : vector<2x8xf32> to vector<2x8x1xf32>
    %304 = vector.broadcast %303 : vector<2x8x1xf32> to vector<2x8x8xf32>
    %305 = arith.subf %301, %304 : vector<2x8x8xf32>
    %306 = math.exp %305 : vector<2x8x8xf32>
    %cst_95 = arith.constant dense<0.000000e+00> : vector<2x8xf32>
    %307 = vector.multi_reduction <add>, %306, %cst_95 [2] : vector<2x8x8xf32> to vector<2x8xf32>
    %308 = vector.shape_cast %307 : vector<2x8xf32> to vector<2x8x1xf32>
    %309 = tpu.reciprocal %308 {approx = true} : vector<2x8x1xf32> -> vector<2x8x1xf32>
    %310 = vector.broadcast %309 : vector<2x8x1xf32> to vector<2x8x8xf32>
    %311 = arith.mulf %306, %310 : vector<2x8x8xf32>
    "tpu.trace_start"() <{level = 10 : i32, message = "bqk,bkd->bqd"}> : () -> ()
    %cst_96 = arith.constant dense<0.000000e+00> : vector<2x8x32xf32>
    %312 = tpu.matmul %311, %296, %cst_96 {dimension_numbers = #tpu.dot_dimension_numbers<[2], [1], [1], [2], [0, 0, 0, 1, 1, 2], [0], [0]>} : vector<2x8x8xf32>, vector<2x8x32xf32>, vector<2x8x32xf32> -> vector<2x8x32xf32>
    "tpu.trace_stop"() : () -> ()
    %313 = vector.shape_cast %312 : vector<2x8x32xf32> to vector<16x32xf32>
    %314 = vector.extract_strided_slice %236 {offsets = [0, 96], sizes = [16, 32], strides = [1, 1]} : vector<16x128xf32> to vector<16x32xf32>
    %315 = vector.shape_cast %314 : vector<16x32xf32> to vector<2x8x32xf32>
    %316 = vector.extract_strided_slice %240 {offsets = [0, 96], sizes = [16, 32], strides = [1, 1]} : vector<16x128xf32> to vector<16x32xf32>
    %317 = vector.shape_cast %316 : vector<16x32xf32> to vector<2x8x32xf32>
    %318 = vector.extract_strided_slice %244 {offsets = [0, 96], sizes = [16, 32], strides = [1, 1]} : vector<16x128xf32> to vector<16x32xf32>
    %319 = vector.shape_cast %318 : vector<16x32xf32> to vector<2x8x32xf32>
    "tpu.trace_start"() <{level = 10 : i32, message = "bqd,bkd->bqk"}> : () -> ()
    %cst_97 = arith.constant dense<0.000000e+00> : vector<2x8x8xf32>
    %320 = tpu.matmul %315, %317, %cst_97 {dimension_numbers = #tpu.dot_dimension_numbers<[2], [2], [1], [1], [0, 0, 0, 1, 1, 1], [0], [0]>} : vector<2x8x32xf32>, vector<2x8x32xf32>, vector<2x8x8xf32> -> vector<2x8x8xf32>
    "tpu.trace_stop"() : () -> ()
    %cst_98 = arith.constant 0.176776692 : f32
    %321 = vector.broadcast %cst_98 : f32 to vector<2x8x8xf32>
    %322 = arith.mulf %320, %321 : vector<2x8x8xf32>
    %323 = vector.broadcast %5 : vector<1x1x8xf32> to vector<2x8x8xf32>
    %324 = arith.addf %322, %323 : vector<2x8x8xf32>
    %cst_99 = arith.constant dense<0xFF800000> : vector<2x8xf32>
    %325 = vector.multi_reduction <maximumf>, %324, %cst_99 [2] : vector<2x8x8xf32> to vector<2x8xf32>
    %326 = vector.shape_cast %325 : vector<2x8xf32> to vector<2x8x1xf32>
    %327 = vector.broadcast %326 : vector<2x8x1xf32> to vector<2x8x8xf32>
    %328 = arith.subf %324, %327 : vector<2x8x8xf32>
    %329 = math.exp %328 : vector<2x8x8xf32>
    %cst_100 = arith.constant dense<0.000000e+00> : vector<2x8xf32>
    %330 = vector.multi_reduction <add>, %329, %cst_100 [2] : vector<2x8x8xf32> to vector<2x8xf32>
    %331 = vector.shape_cast %330 : vector<2x8xf32> to vector<2x8x1xf32>
    %332 = tpu.reciprocal %331 {approx = true} : vector<2x8x1xf32> -> vector<2x8x1xf32>
    %333 = vector.broadcast %332 : vector<2x8x1xf32> to vector<2x8x8xf32>
    %334 = arith.mulf %329, %333 : vector<2x8x8xf32>
    "tpu.trace_start"() <{level = 10 : i32, message = "bqk,bkd->bqd"}> : () -> ()
    %cst_101 = arith.constant dense<0.000000e+00> : vector<2x8x32xf32>
    %335 = tpu.matmul %334, %319, %cst_101 {dimension_numbers = #tpu.dot_dimension_numbers<[2], [1], [1], [2], [0, 0, 0, 1, 1, 2], [0], [0]>} : vector<2x8x8xf32>, vector<2x8x32xf32>, vector<2x8x32xf32> -> vector<2x8x32xf32>
    "tpu.trace_stop"() : () -> ()
    %336 = vector.shape_cast %335 : vector<2x8x32xf32> to vector<16x32xf32>
    %337 = tpu.concatenate %267, %290, %313, %336 in 1 : vector<16x32xf32>, vector<16x32xf32>, vector<16x32xf32>, vector<16x32xf32> -> vector<16x128xf32>
    %338 = arith.truncf %337 : vector<16x128xf32> to vector<16x128xbf16>
    %c1_102 = arith.constant 1 : index
    %c0_103 = arith.constant 0 : index
    %c0_104 = arith.constant 0 : index
    %339 = vector.load %arg4[%c1_102, %c0_103, %c0_104] : memref<2x128x128xbf16, #tpu.memory_space<vmem>>, vector<1x128x128xbf16>
    %340 = vector.shape_cast %339 : vector<1x128x128xbf16> to vector<128x128xbf16>
    %cst_105 = arith.constant dense<0.000000e+00> : vector<16x128xf32>
    %341 = tpu.matmul %338, %340, %cst_105 {dimension_numbers = #tpu.dot_dimension_numbers<[1], [0], [0], [1], [0, 0, 1, 1], [], []>} : vector<16x128xbf16>, vector<128x128xbf16>, vector<16x128xf32> -> vector<16x128xf32>
    %342 = arith.addf %204, %341 : vector<16x128xf32>
    %c17 = arith.constant 17 : index
    %c0_106 = arith.constant 0 : index
    %343 = vector.load %arg9[%c17, %c0_106] : memref<21x128xf32, #tpu.memory_space<vmem>>, vector<1x128xf32>
    %344 = vector.broadcast %343 : vector<1x128xf32> to vector<16x128xf32>
    %345 = arith.addf %342, %344 : vector<16x128xf32>
    %c18 = arith.constant 18 : index
    %c0_107 = arith.constant 0 : index
    %346 = vector.load %arg9[%c18, %c0_107] : memref<21x128xf32, #tpu.memory_space<vmem>>, vector<1x128xf32>
    %c19 = arith.constant 19 : index
    %c0_108 = arith.constant 0 : index
    %347 = vector.load %arg9[%c19, %c0_108] : memref<21x128xf32, #tpu.memory_space<vmem>>, vector<1x128xf32>
    %cst_109 = arith.constant dense<0.000000e+00> : vector<16xf32>
    %348 = vector.multi_reduction <add>, %345, %cst_109 [1] : vector<16x128xf32> to vector<16xf32>
    %349 = vector.shape_cast %348 : vector<16xf32> to vector<16x1xf32>
    %cst_110 = arith.constant 1.280000e+02 : f32
    %350 = vector.broadcast %cst_110 : f32 to vector<16x1xf32>
    %351 = arith.divf %349, %350 : vector<16x1xf32>
    %352 = vector.broadcast %351 : vector<16x1xf32> to vector<16x128xf32>
    %353 = arith.subf %345, %352 : vector<16x128xf32>
    %354 = arith.mulf %353, %353 : vector<16x128xf32>
    %cst_111 = arith.constant dense<0.000000e+00> : vector<16xf32>
    %355 = vector.multi_reduction <add>, %354, %cst_111 [1] : vector<16x128xf32> to vector<16xf32>
    %356 = vector.shape_cast %355 : vector<16xf32> to vector<16x1xf32>
    %cst_112 = arith.constant 1.280000e+02 : f32
    %357 = vector.broadcast %cst_112 : f32 to vector<16x1xf32>
    %358 = arith.divf %356, %357 : vector<16x1xf32>
    %359 = vector.broadcast %351 : vector<16x1xf32> to vector<16x128xf32>
    %360 = arith.subf %345, %359 : vector<16x128xf32>
    %cst_113 = arith.constant 9.99999997E-7 : f32
    %361 = vector.broadcast %cst_113 : f32 to vector<16x1xf32>
    %362 = arith.addf %358, %361 : vector<16x1xf32>
    %363 = math.rsqrt %362 : vector<16x1xf32>
    %364 = vector.broadcast %363 : vector<16x1xf32> to vector<16x128xf32>
    %365 = arith.mulf %360, %364 : vector<16x128xf32>
    %366 = vector.broadcast %346 : vector<1x128xf32> to vector<16x128xf32>
    %367 = arith.mulf %365, %366 : vector<16x128xf32>
    %368 = vector.broadcast %347 : vector<1x128xf32> to vector<16x128xf32>
    %369 = arith.addf %367, %368 : vector<16x128xf32>
    %370 = arith.truncf %369 : vector<16x128xf32> to vector<16x128xbf16>
    %c1_114 = arith.constant 1 : index
    %c0_115 = arith.constant 0 : index
    %c0_116 = arith.constant 0 : index
    %371 = vector.load %arg5[%c1_114, %c0_115, %c0_116] : memref<2x128x512xbf16, #tpu.memory_space<vmem>>, vector<1x128x512xbf16>
    %372 = vector.shape_cast %371 : vector<1x128x512xbf16> to vector<128x512xbf16>
    %cst_117 = arith.constant dense<0.000000e+00> : vector<16x512xf32>
    %373 = tpu.matmul %370, %372, %cst_117 {dimension_numbers = #tpu.dot_dimension_numbers<[1], [0], [0], [1], [0, 0, 1, 1], [], []>} : vector<16x128xbf16>, vector<128x512xbf16>, vector<16x512xf32> -> vector<16x512xf32>
    %c1_118 = arith.constant 1 : index
    %c0_119 = arith.constant 0 : index
    %c0_120 = arith.constant 0 : index
    %374 = vector.load %arg6[%c1_118, %c0_119, %c0_120] : memref<2x1x512xf32, #tpu.memory_space<vmem>>, vector<1x1x512xf32>
    %375 = vector.shape_cast %374 : vector<1x1x512xf32> to vector<1x512xf32>
    %376 = vector.broadcast %375 : vector<1x512xf32> to vector<16x512xf32>
    %377 = arith.addf %373, %376 : vector<16x512xf32>
    %378 = arith.mulf %377, %377 : vector<16x512xf32>
    %379 = arith.mulf %377, %378 : vector<16x512xf32>
    %cst_121 = arith.constant 4.471500e-02 : f32
    %380 = vector.broadcast %cst_121 : f32 to vector<16x512xf32>
    %381 = arith.mulf %380, %379 : vector<16x512xf32>
    %382 = arith.addf %377, %381 : vector<16x512xf32>
    %cst_122 = arith.constant 0.797884583 : f32
    %383 = vector.broadcast %cst_122 : f32 to vector<16x512xf32>
    %384 = arith.mulf %383, %382 : vector<16x512xf32>
    %385 = math.tanh %384 : vector<16x512xf32>
    %cst_123 = arith.constant 1.000000e+00 : f32
    %386 = vector.broadcast %cst_123 : f32 to vector<16x512xf32>
    %387 = arith.addf %386, %385 : vector<16x512xf32>
    %cst_124 = arith.constant 5.000000e-01 : f32
    %388 = vector.broadcast %cst_124 : f32 to vector<16x512xf32>
    %389 = arith.mulf %388, %387 : vector<16x512xf32>
    %390 = arith.mulf %377, %389 : vector<16x512xf32>
    %391 = arith.truncf %390 : vector<16x512xf32> to vector<16x512xbf16>
    %c1_125 = arith.constant 1 : index
    %c0_126 = arith.constant 0 : index
    %c0_127 = arith.constant 0 : index
    %392 = vector.load %arg7[%c1_125, %c0_126, %c0_127] : memref<2x512x128xbf16, #tpu.memory_space<vmem>>, vector<1x512x128xbf16>
    %393 = vector.shape_cast %392 : vector<1x512x128xbf16> to vector<512x128xbf16>
    %cst_128 = arith.constant dense<0.000000e+00> : vector<16x128xf32>
    %394 = tpu.matmul %391, %393, %cst_128 {dimension_numbers = #tpu.dot_dimension_numbers<[1], [0], [0], [1], [0, 0, 1, 1], [], []>} : vector<16x512xbf16>, vector<512x128xbf16>, vector<16x128xf32> -> vector<16x128xf32>
    %395 = arith.addf %345, %394 : vector<16x128xf32>
    %c20 = arith.constant 20 : index
    %c0_129 = arith.constant 0 : index
    %396 = vector.load %arg9[%c20, %c0_129] : memref<21x128xf32, #tpu.memory_space<vmem>>, vector<1x128xf32>
    %397 = vector.broadcast %396 : vector<1x128xf32> to vector<16x128xf32>
    %398 = arith.addf %395, %397 : vector<16x128xf32>
    %c0_130 = arith.constant 0 : index
    %c0_131 = arith.constant 0 : index
    %399 = vector.load %arg9[%c0_130, %c0_131] : memref<21x128xf32, #tpu.memory_space<vmem>>, vector<1x128xf32>
    %c1_132 = arith.constant 1 : index
    %c0_133 = arith.constant 0 : index
    %400 = vector.load %arg9[%c1_132, %c0_133] : memref<21x128xf32, #tpu.memory_space<vmem>>, vector<1x128xf32>
    %cst_134 = arith.constant dense<0.000000e+00> : vector<16xf32>
    %401 = vector.multi_reduction <add>, %398, %cst_134 [1] : vector<16x128xf32> to vector<16xf32>
    %402 = vector.shape_cast %401 : vector<16xf32> to vector<16x1xf32>
    %cst_135 = arith.constant 1.280000e+02 : f32
    %403 = vector.broadcast %cst_135 : f32 to vector<16x1xf32>
    %404 = arith.divf %402, %403 : vector<16x1xf32>
    %405 = vector.broadcast %404 : vector<16x1xf32> to vector<16x128xf32>
    %406 = arith.subf %398, %405 : vector<16x128xf32>
    %407 = arith.mulf %406, %406 : vector<16x128xf32>
    %cst_136 = arith.constant dense<0.000000e+00> : vector<16xf32>
    %408 = vector.multi_reduction <add>, %407, %cst_136 [1] : vector<16x128xf32> to vector<16xf32>
    %409 = vector.shape_cast %408 : vector<16xf32> to vector<16x1xf32>
    %cst_137 = arith.constant 1.280000e+02 : f32
    %410 = vector.broadcast %cst_137 : f32 to vector<16x1xf32>
    %411 = arith.divf %409, %410 : vector<16x1xf32>
    %412 = vector.broadcast %404 : vector<16x1xf32> to vector<16x128xf32>
    %413 = arith.subf %398, %412 : vector<16x128xf32>
    %cst_138 = arith.constant 9.99999997E-7 : f32
    %414 = vector.broadcast %cst_138 : f32 to vector<16x1xf32>
    %415 = arith.addf %411, %414 : vector<16x1xf32>
    %416 = math.rsqrt %415 : vector<16x1xf32>
    %417 = vector.broadcast %416 : vector<16x1xf32> to vector<16x128xf32>
    %418 = arith.mulf %413, %417 : vector<16x128xf32>
    %419 = vector.broadcast %399 : vector<1x128xf32> to vector<16x128xf32>
    %420 = arith.mulf %418, %419 : vector<16x128xf32>
    %421 = vector.broadcast %400 : vector<1x128xf32> to vector<16x128xf32>
    %422 = arith.addf %420, %421 : vector<16x128xf32>
    %423 = arith.truncf %422 : vector<16x128xf32> to vector<16x128xbf16>
    %c0_139 = arith.constant 0 : index
    %c0_140 = arith.constant 0 : index
    %424 = vector.load %arg8[%c0_139, %c0_140] : memref<128x128xbf16, #tpu.memory_space<vmem>>, vector<128x128xbf16>
    %cst_141 = arith.constant dense<0.000000e+00> : vector<16x128xf32>
    %425 = tpu.matmul %423, %424, %cst_141 {dimension_numbers = #tpu.dot_dimension_numbers<[1], [0], [0], [1], [0, 0, 1, 1], [], []>} : vector<16x128xbf16>, vector<128x128xbf16>, vector<16x128xf32> -> vector<16x128xf32>
    %c2 = arith.constant 2 : index
    %c0_142 = arith.constant 0 : index
    %426 = vector.load %arg9[%c2, %c0_142] : memref<21x128xf32, #tpu.memory_space<vmem>>, vector<1x128xf32>
    %427 = vector.broadcast %426 : vector<1x128xf32> to vector<16x128xf32>
    %428 = arith.addf %425, %427 : vector<16x128xf32>
    %429 = arith.negf %428 : vector<16x128xf32>
    %430 = math.exp %429 : vector<16x128xf32>
    %cst_143 = arith.constant 1.000000e+00 : f32
    %431 = vector.broadcast %cst_143 : f32 to vector<16x128xf32>
    %432 = arith.addf %431, %430 : vector<16x128xf32>
    %433 = arith.divf %431, %432 : vector<16x128xf32>
    %c0_144 = arith.constant 0 : index
    %c0_145 = arith.constant 0 : index
    %434 = vector.load %arg10[%c0_144, %c0_145] : memref<16x128xf32, #tpu.memory_space<vmem>>, vector<16x128xf32>
    tpu.vector_store %arg10[%c0_144, %c0_145], %433 {strides = array<i32>} : memref<16x128xf32, #tpu.memory_space<vmem>>, vector<16x128xf32>,
    return
  }
}

</mosaic_0001>

<llo_original>
// kernel: vit_forward.1
$region0: #{vit_forward.1}
  #allocation0 [shape = 'u32[]', space=smem, size = 0x4, offset = 0x4, fixed_abs, tag = 'smem constant byte address 0x4 - core index']
  #allocation1 [shape = 'u32[144,128]{1,0:T(1,128)}', space=vmem, size = 0x12000, scoped, tag = 'internal scratch']
  %s0 = inlined_call_operand.vmem [shape: bf16[16,3072], index: 0, kind: input, shape index: {}]
  %s1 = inlined_call_operand.vmem [shape: bf16[3072,128], index: 1, kind: input, shape index: {}]
  %s2 = inlined_call_operand.hbm [shape: f32[16,128], index: 2, kind: input, shape index: {}]
  %s3 = inlined_call_operand.hbm [shape: bf16[2,128,384], index: 3, kind: input, shape index: {}]
  %s4 = inlined_call_operand.vmem [shape: bf16[2,128,128], index: 4, kind: input, shape index: {}]
  %s5 = inlined_call_operand.vmem [shape: bf16[2,128,512], index: 5, kind: input, shape index: {}]
  %s6 = inlined_call_operand.vmem [shape: f32[2,1,512], index: 6, kind: input, shape index: {}]
  %s7 = inlined_call_operand.vmem [shape: bf16[2,512,128], index: 7, kind: input, shape index: {}]
  %s8 = inlined_call_operand.hbm [shape: bf16[128,128], index: 8, kind: input, shape index: {}]
  %s9 = inlined_call_operand.hbm [shape: f32[21,128], index: 9, kind: input, shape index: {}]
  %s10 = inlined_call_operand.vmem [shape: f32[16,128], index: 10, kind: output, shape index: {}]
  %s11 = sld [smem:[#allocation0]]
  $region66: #{vit_forward.1} parent=0
    _
  %s13 = ssub.s32 1, %s11
  %s14 = scalar_select 0, %s13, %s11
  $region1: #{vit_forward.1} parent=0
    #allocation2 [shape = 'u8[8192]{0}', space=vmem, size = 0x2000, scoped, tag = 'input window, operand 2, single buffered']
    #allocation3 [shape = 's32[1]{0}', space=sflag, size = 0x4, scoped, tag = 'scoped memory for vit_forward.1']
    #allocation4 [shape = 'u8[196608]{0}', space=vmem, size = 0x30000, scoped, tag = 'input window, operand 3, single buffered']
    #allocation5 [shape = 's32[1]{0}', space=sflag, size = 0x4, scoped, tag = 'scoped memory for vit_forward.1']
    #allocation6 [shape = 'u8[32768]{0}', space=vmem, size = 0x8000, scoped, tag = 'input window, operand 8, single buffered']
    #allocation7 [shape = 'u8[12288]{0}', space=vmem, size = 0x3000, scoped, tag = 'input window, operand 9, single buffered']
    #allocation8 [shape = 's32[1]{0}', space=sflag, size = 0x4, scoped, tag = 'scoped memory for vit_forward.1']
    %15 = vsyncpa [#allocation3], 0
    %16 = vsyncpa [#allocation5], 0
    %17 = vsyncpa [#allocation8], 0
    // Predicated region
    $region2: #{vit_forward.1} parent=1 // pred_check
      _
    $region3: #{vit_forward.1} parent=1 // pred_check_branch
      %19 = sbr.rel (0) target = $region5
    $region4: #{vit_forward.1} parent=1 // pred_region
      _
    $region5: #{vit_forward.1} parent=1 // pred_fallthru
      _
    // Predicated region
    $region6: #{vit_forward.1} parent=1 // pred_check
      _
    $region7: #{vit_forward.1} parent=1 // pred_check_branch
      %21 = sbr.rel (0) target = $region9
    $region8: #{vit_forward.1} parent=1 // pred_region
      _
    $region9: #{vit_forward.1} parent=1 // pred_fallthru
      _
    // Predicated region
    $region10: #{vit_forward.1} parent=1 // pred_check
      _
    $region11: #{vit_forward.1} parent=1 // pred_check_branch
      %23 = sbr.rel (0) target = $region13
    $region12: #{vit_forward.1} parent=1 // pred_region
      %s25 = ssub.s32 256, 256
      %26 = vsyncadd [#allocation3], %s25
      %s27 = sshll.u32 [#allocation2], 4
      %s28 = int_to_ptr.vmem [resolvable:$true] %s27
      %33 = dma.hbm_to_vmem [thread:$0]  %s2, 256, %s28, [#allocation3], 128, 128, 8
    $region13: #{vit_forward.1} parent=1 // pred_fallthru
      _
    // Predicated region
    $region14: #{vit_forward.1} parent=1 // pred_check
      _
    $region15: #{vit_forward.1} parent=1 // pred_check_branch
      %35 = sbr.rel (0) target = $region17
    $region16: #{vit_forward.1} parent=1 // pred_region
      %s37 = ssub.s32 6144, 6144
      %38 = vsyncadd [#allocation5], %s37
      %s39 = sshll.u32 [#allocation4], 4
      %s40 = int_to_ptr.vmem [resolvable:$true] %s39
      %45 = dma.hbm_to_vmem [thread:$0]  %s3, 6144, %s40, [#allocation5], 192, 192, 12
    $region17: #{vit_forward.1} parent=1 // pred_fallthru
      _
    // Predicated region
    $region18: #{vit_forward.1} parent=1 // pred_check
      _
    $region19: #{vit_forward.1} parent=1 // pred_check_branch
      %47 = sbr.rel (0) target = $region21
    $region20: #{vit_forward.1} parent=1 // pred_region
      _
    $region21: #{vit_forward.1} parent=1 // pred_fallthru
      _
    // Predicated region
    $region22: #{vit_forward.1} parent=1 // pred_check
      _
    $region23: #{vit_forward.1} parent=1 // pred_check_branch
      %49 = sbr.rel (0) target = $region25
    $region24: #{vit_forward.1} parent=1 // pred_region
      _
    $region25: #{vit_forward.1} parent=1 // pred_fallthru
      _
    // Predicated region
    $region26: #{vit_forward.1} parent=1 // pred_check
      _
    $region27: #{vit_forward.1} parent=1 // pred_check_branch
      %51 = sbr.rel (0) target = $region29
    $region28: #{vit_forward.1} parent=1 // pred_region
      _
    $region29: #{vit_forward.1} parent=1 // pred_fallthru
      _
    // Predicated region
    $region30: #{vit_forward.1} parent=1 // pred_check
      _
    $region31: #{vit_forward.1} parent=1 // pred_check_branch
      %53 = sbr.rel (0) target = $region33
    $region32: #{vit_forward.1} parent=1 // pred_region
      _
    $region33: #{vit_forward.1} parent=1 // pred_fallthru
      _
    // Predicated region
    $region34: #{vit_forward.1} parent=1 // pred_check
      _
    $region35: #{vit_forward.1} parent=1 // pred_check_branch
      %55 = sbr.rel (0) target = $region37
    $region36: #{vit_forward.1} parent=1 // pred_region
      %s57 = ssub.s32 1024, 1024
      %58 = vsyncadd [#allocation5], %s57
      %s59 = sshll.u32 [#allocation6], 4
      %s60 = int_to_ptr.vmem [resolvable:$true] %s59
      %65 = dma.hbm_to_vmem [thread:$0]  %s8, 1024, %s60, [#allocation5], 64, 64, 4
    $region37: #{vit_forward.1} parent=1 // pred_fallthru
      _
    // Predicated region
    $region38: #{vit_forward.1} parent=1 // pred_check
      _
    $region39: #{vit_forward.1} parent=1 // pred_check_branch
      %67 = sbr.rel (0) target = $region41
    $region40: #{vit_forward.1} parent=1 // pred_region
      %s69 = ssub.s32 384, 384
      %70 = vsyncadd [#allocation8], %s69
      %s71 = sshll.u32 [#allocation7], 4
      %s72 = int_to_ptr.vmem [resolvable:$true] %s71
      %77 = dma.hbm_to_vmem [thread:$0]  %s9, 384, %s72, [#allocation8], 128, 128, 8
    $region41: #{vit_forward.1} parent=1 // pred_fallthru
      _
    // Predicated region
    $region42: #{vit_forward.1} parent=1 // pred_check
      _
    $region43: #{vit_forward.1} parent=1 // pred_check_branch
      %79 = sbr.rel (0) target = $region45
    $region44: #{vit_forward.1} parent=1 // pred_region
      %80 = dma.done [#allocation3], 256
    $region45: #{vit_forward.1} parent=1 // pred_fallthru
      _
    // Predicated region
    $region46: #{vit_forward.1} parent=1 // pred_check
      _
    $region47: #{vit_forward.1} parent=1 // pred_check_branch
      %82 = sbr.rel (0) target = $region49
    $region48: #{vit_forward.1} parent=1 // pred_region
      %83 = dma.done [#allocation5], 6144
    $region49: #{vit_forward.1} parent=1 // pred_fallthru
      _
    // Predicated region
    $region50: #{vit_forward.1} parent=1 // pred_check
      _
    $region51: #{vit_forward.1} parent=1 // pred_check_branch
      %85 = sbr.rel (0) target = $region53
    $region52: #{vit_forward.1} parent=1 // pred_region
      %86 = dma.done [#allocation5], 1024
    $region53: #{vit_forward.1} parent=1 // pred_fallthru
      _
    // Predicated region
    $region54: #{vit_forward.1} parent=1 // pred_check
      _
    $region55: #{vit_forward.1} parent=1 // pred_check_branch
      %88 = sbr.rel (0) target = $region57
    $region56: #{vit_forward.1} parent=1 // pred_region
      %89 = dma.done [#allocation8], 384
    $region57: #{vit_forward.1} parent=1 // pred_fallthru
      _
    %v91 = vlaneseq
    %v92 = vand.u32 %v91, 127
    %vm93 = vcmp.lt.s32.totalorder %v92, 5
    %v94 = vsel %vm93, 0.0, -1e+09
    %v95 = vld [vmem:[%s0] sm:$0xff]
    %v96 = vld [vmem:[%s0 + $0x8] sm:$0xff]
    %v97 = vld [vmem:[%s0 + $0x10] sm:$0xff]
    %v98 = vld [vmem:[%s0 + $0x18] sm:$0xff]
    %v99 = vld [vmem:[%s0 + $0x20] sm:$0xff]
    %v100 = vld [vmem:[%s0 + $0x28] sm:$0xff]
    %v101 = vld [vmem:[%s0 + $0x30] sm:$0xff]
    %v102 = vld [vmem:[%s0 + $0x38] sm:$0xff]
    %v103 = vld [vmem:[%s0 + $0x40] sm:$0xff]
    %v104 = vld [vmem:[%s0 + $0x48] sm:$0xff]
    %v105 = vld [vmem:[%s0 + $0x50] sm:$0xff]
    %v106 = vld [vmem:[%s0 + $0x58] sm:$0xff]
    %v107 = vld [vmem:[%s0 + $0x60] sm:$0xff]
    %v108 = vld [vmem:[%s0 + $0x68] sm:$0xff]
    %v109 = vld [vmem:[%s0 + $0x70] sm:$0xff]
    %v110 = vld [vmem:[%s0 + $0x78] sm:$0xff]
    %v111 = vld [vmem:[%s0 + $0x80] sm:$0xff]
    %v112 = vld [vmem:[%s0 + $0x88] sm:$0xff]
    %v113 = vld [vmem:[%s0 + $0x90] sm:$0xff]
    %v114 = vld [vmem:[%s0 + $0x98] sm:$0xff]
    %v115 = vld [vmem:[%s0 + $0xa0] sm:$0xff]
    %v116 = vld [vmem:[%s0 + $0xa8] sm:$0xff]
    %v117 = vld [vmem:[%s0 + $0xb0] sm:$0xff]
    %v118 = vld [vmem:[%s0 + $0xb8] sm:$0xff]
    %v119 = vld [vmem:[%s1] sm:$0xf]
    %v120 = vld [vmem:[%s1 + $0x4] sm:$0xf]
    %v121 = vld [vmem:[%s1 + $0x8] sm:$0xf]
    %v122 = vld [vmem:[%s1 + $0xc] sm:$0xf]
    %v123 = vld [vmem:[%s1 + $0x10] sm:$0xf]
    %v124 = vld [vmem:[%s1 + $0x14] sm:$0xf]
    %v125 = vld [vmem:[%s1 + $0x18] sm:$0xf]
    %v126 = vld [vmem:[%s1 + $0x1c] sm:$0xf]
    %v127 = vld [vmem:[%s1 + $0x20] sm:$0xf]
    %v128 = vld [vmem:[%s1 + $0x24] sm:$0xf]
    %v129 = vld [vmem:[%s1 + $0x28] sm:$0xf]
    %v130 = vld [vmem:[%s1 + $0x2c] sm:$0xf]
    %v131 = vld [vmem:[%s1 + $0x30] sm:$0xf]
    %v132 = vld [vmem:[%s1 + $0x34] sm:$0xf]
    %v133 = vld [vmem:[%s1 + $0x38] sm:$0xf]
    %v134 = vld [vmem:[%s1 + $0x3c] sm:$0xf]
    %v135 = vld [vmem:[%s1 + $0x40] sm:$0xf]
    %v136 = vld [vmem:[%s1 + $0x44] sm:$0xf]
    %v137 = vld [vmem:[%s1 + $0x48] sm:$0xf]
    %v138 = vld [vmem:[%s1 + $0x4c] sm:$0xf]
    %v139 = vld [vmem:[%s1 + $0x50] sm:$0xf]
    %v140 = vld [vmem:[%s1 + $0x54] sm:$0xf]
    %v141 = vld [vmem:[%s1 + $0x58] sm:$0xf]
    %v142 = vld [vmem:[%s1 + $0x5c] sm:$0xf]
    %v143 = vld [vmem:[%s1 + $0x60] sm:$0xf]
    %v144 = vld [vmem:[%s1 + $0x64] sm:$0xf]
    %v145 = vld [vmem:[%s1 + $0x68] sm:$0xf]
    %v146 = vld [vmem:[%s1 + $0x6c] sm:$0xf]
    %v147 = vld [vmem:[%s1 + $0x70] sm:$0xf]
    %v148 = vld [vmem:[%s1 + $0x74] sm:$0xf]
    %v149 = vld [vmem:[%s1 + $0x78] sm:$0xf]
    %v150 = vld [vmem:[%s1 + $0x7c] sm:$0xf]
    %v151 = vld [vmem:[%s1 + $0x80] sm:$0xf]
    %v152 = vld [vmem:[%s1 + $0x84] sm:$0xf]
    %v153 = vld [vmem:[%s1 + $0x88] sm:$0xf]
    %v154 = vld [vmem:[%s1 + $0x8c] sm:$0xf]
    %v155 = vld [vmem:[%s1 + $0x90] sm:$0xf]
    %v156 = vld [vmem:[%s1 + $0x94] sm:$0xf]
    %v157 = vld [vmem:[%s1 + $0x98] sm:$0xf]
    %v158 = vld [vmem:[%s1 + $0x9c] sm:$0xf]
    %v159 = vld [vmem:[%s1 + $0xa0] sm:$0xf]
    %v160 = vld [vmem:[%s1 + $0xa4] sm:$0xf]
    %v161 = vld [vmem:[%s1 + $0xa8] sm:$0xf]
    %v162 = vld [vmem:[%s1 + $0xac] sm:$0xf]
    %v163 = vld [vmem:[%s1 + $0xb0] sm:$0xf]
    %v164 = vld [vmem:[%s1 + $0xb4] sm:$0xf]
    %v165 = vld [vmem:[%s1 + $0xb8] sm:$0xf]
    %v166 = vld [vmem:[%s1 + $0xbc] sm:$0xf]
    %v167 = vld [vmem:[%s1 + $0xc0] sm:$0xf]
    %v168 = vld [vmem:[%s1 + $0xc4] sm:$0xf]
    %v169 = vld [vmem:[%s1 + $0xc8] sm:$0xf]
    %v170 = vld [vmem:[%s1 + $0xcc] sm:$0xf]
    %v171 = vld [vmem:[%s1 + $0xd0] sm:$0xf]
    %v172 = vld [vmem:[%s1 + $0xd4] sm:$0xf]
    %v173 = vld [vmem:[%s1 + $0xd8] sm:$0xf]
    %v174 = vld [vmem:[%s1 + $0xdc] sm:$0xf]
    %v175 = vld [vmem:[%s1 + $0xe0] sm:$0xf]
    %v176 = vld [vmem:[%s1 + $0xe4] sm:$0xf]
    %v177 = vld [vmem:[%s1 + $0xe8] sm:$0xf]
    %v178 = vld [vmem:[%s1 + $0xec] sm:$0xf]
    %v179 = vld [vmem:[%s1 + $0xf0] sm:$0xf]
    %v180 = vld [vmem:[%s1 + $0xf4] sm:$0xf]
    %v181 = vld [vmem:[%s1 + $0xf8] sm:$0xf]
    %v182 = vld [vmem:[%s1 + $0xfc] sm:$0xf]
    %v183 = vld [vmem:[%s1 + $0x100] sm:$0xf]
    %v184 = vld [vmem:[%s1 + $0x104] sm:$0xf]
    %v185 = vld [vmem:[%s1 + $0x108] sm:$0xf]
    %v186 = vld [vmem:[%s1 + $0x10c] sm:$0xf]
    %v187 = vld [vmem:[%s1 + $0x110] sm:$0xf]
    %v188 = vld [vmem:[%s1 + $0x114] sm:$0xf]
    %v189 = vld [vmem:[%s1 + $0x118] sm:$0xf]
    %v190 = vld [vmem:[%s1 + $0x11c] sm:$0xf]
    %v191 = vld [vmem:[%s1 + $0x120] sm:$0xf]
    %v192 = vld [vmem:[%s1 + $0x124] sm:$0xf]
    %v193 = vld [vmem:[%s1 + $0x128] sm:$0xf]
    %v194 = vld [vmem:[%s1 + $0x12c] sm:$0xf]
    %v195 = vld [vmem:[%s1 + $0x130] sm:$0xf]
    %v196 = vld [vmem:[%s1 + $0x134] sm:$0xf]
    %v197 = vld [vmem:[%s1 + $0x138] sm:$0xf]
    %v198 = vld [vmem:[%s1 + $0x13c] sm:$0xf]
    %v199 = vld [vmem:[%s1 + $0x140] sm:$0xf]
    %v200 = vld [vmem:[%s1 + $0x144] sm:$0xf]
    %v201 = vld [vmem:[%s1 + $0x148] sm:$0xf]
    %v202 = vld [vmem:[%s1 + $0x14c] sm:$0xf]
    %v203 = vld [vmem:[%s1 + $0x150] sm:$0xf]
    %v204 = vld [vmem:[%s1 + $0x154] sm:$0xf]
    %v205 = vld [vmem:[%s1 + $0x158] sm:$0xf]
    %v206 = vld [vmem:[%s1 + $0x15c] sm:$0xf]
    %v207 = vld [vmem:[%s1 + $0x160] sm:$0xf]
    %v208 = vld [vmem:[%s1 + $0x164] sm:$0xf]
    %v209 = vld [vmem:[%s1 + $0x168] sm:$0xf]
    %v210 = vld [vmem:[%s1 + $0x16c] sm:$0xf]
    %v211 = vld [vmem:[%s1 + $0x170] sm:$0xf]
    %v212 = vld [vmem:[%s1 + $0x174] sm:$0xf]
    %v213 = vld [vmem:[%s1 + $0x178] sm:$0xf]
    %v214 = vld [vmem:[%s1 + $0x17c] sm:$0xf]
    %v215 = vld [vmem:[%s1 + $0x180] sm:$0xf]
    %v216 = vld [vmem:[%s1 + $0x184] sm:$0xf]
    %v217 = vld [vmem:[%s1 + $0x188] sm:$0xf]
    %v218 = vld [vmem:[%s1 + $0x18c] sm:$0xf]
    %v219 = vld [vmem:[%s1 + $0x190] sm:$0xf]
    %v220 = vld [vmem:[%s1 + $0x194] sm:$0xf]
    %v221 = vld [vmem:[%s1 + $0x198] sm:$0xf]
    %v222 = vld [vmem:[%s1 + $0x19c] sm:$0xf]
    %v223 = vld [vmem:[%s1 + $0x1a0] sm:$0xf]
    %v224 = vld [vmem:[%s1 + $0x1a4] sm:$0xf]
    %v225 = vld [vmem:[%s1 + $0x1a8] sm:$0xf]
    %v226 = vld [vmem:[%s1 + $0x1ac] sm:$0xf]
    %v227 = vld [vmem:[%s1 + $0x1b0] sm:$0xf]
    %v228 = vld [vmem:[%s1 + $0x1b4] sm:$0xf]
    %v229 = vld [vmem:[%s1 + $0x1b8] sm:$0xf]
    %v230 = vld [vmem:[%s1 + $0x1bc] sm:$0xf]
    %v231 = vld [vmem:[%s1 + $0x1c0] sm:$0xf]
    %v232 = vld [vmem:[%s1 + $0x1c4] sm:$0xf]
    %v233 = vld [vmem:[%s1 + $0x1c8] sm:$0xf]
    %v234 = vld [vmem:[%s1 + $0x1cc] sm:$0xf]
    %v235 = vld [vmem:[%s1 + $0x1d0] sm:$0xf]
    %v236 = vld [vmem:[%s1 + $0x1d4] sm:$0xf]
    %v237 = vld [vmem:[%s1 + $0x1d8] sm:$0xf]
    %v238 = vld [vmem:[%s1 + $0x1dc] sm:$0xf]
    %v239 = vld [vmem:[%s1 + $0x1e0] sm:$0xf]
    %v240 = vld [vmem:[%s1 + $0x1e4] sm:$0xf]
    %v241 = vld [vmem:[%s1 + $0x1e8] sm:$0xf]
    %v242 = vld [vmem:[%s1 + $0x1ec] sm:$0xf]
    %v243 = vld [vmem:[%s1 + $0x1f0] sm:$0xf]
    %v244 = vld [vmem:[%s1 + $0x1f4] sm:$0xf]
    %v245 = vld [vmem:[%s1 + $0x1f8] sm:$0xf]
    %v246 = vld [vmem:[%s1 + $0x1fc] sm:$0xf]
    %v247 = vld [vmem:[%s1 + $0x200] sm:$0xf]
    %v248 = vld [vmem:[%s1 + $0x204] sm:$0xf]
    %v249 = vld [vmem:[%s1 + $0x208] sm:$0xf]
    %v250 = vld [vmem:[%s1 + $0x20c] sm:$0xf]
    %v251 = vld [vmem:[%s1 + $0x210] sm:$0xf]
    %v252 = vld [vmem:[%s1 + $0x214] sm:$0xf]
    %v253 = vld [vmem:[%s1 + $0x218] sm:$0xf]
    %v254 = vld [vmem:[%s1 + $0x21c] sm:$0xf]
    %v255 = vld [vmem:[%s1 + $0x220] sm:$0xf]
    %v256 = vld [vmem:[%s1 + $0x224] sm:$0xf]
    %v257 = vld [vmem:[%s1 + $0x228] sm:$0xf]
    %v258 = vld [vmem:[%s1 + $0x22c] sm:$0xf]
    %v259 = vld [vmem:[%s1 + $0x230] sm:$0xf]
    %v260 = vld [vmem:[%s1 + $0x234] sm:$0xf]
    %v261 = vld [vmem:[%s1 + $0x238] sm:$0xf]
    %v262 = vld [vmem:[%s1 + $0x23c] sm:$0xf]
    %v263 = vld [vmem:[%s1 + $0x240] sm:$0xf]
    %v264 = vld [vmem:[%s1 + $0x244] sm:$0xf]
    %v265 = vld [vmem:[%s1 + $0x248] sm:$0xf]
    %v266 = vld [vmem:[%s1 + $0x24c] sm:$0xf]
    %v267 = vld [vmem:[%s1 + $0x250] sm:$0xf]
    %v268 = vld [vmem:[%s1 + $0x254] sm:$0xf]
    %v269 = vld [vmem:[%s1 + $0x258] sm:$0xf]
    %v270 = vld [vmem:[%s1 + $0x25c] sm:$0xf]
    %v271 = vld [vmem:[%s1 + $0x260] sm:$0xf]
    %v272 = vld [vmem:[%s1 + $0x264] sm:$0xf]
    %v273 = vld [vmem:[%s1 + $0x268] sm:$0xf]
    %v274 = vld [vmem:[%s1 + $0x26c] sm:$0xf]
    %v275 = vld [vmem:[%s1 + $0x270] sm:$0xf]
    %v276 = vld [vmem:[%s1 + $0x274] sm:$0xf]
    %v277 = vld [vmem:[%s1 + $0x278] sm:$0xf]
    %v278 = vld [vmem:[%s1 + $0x27c] sm:$0xf]
    %v279 = vld [vmem:[%s1 + $0x280] sm:$0xf]
    %v280 = vld [vmem:[%s1 + $0x284] sm:$0xf]
    %v281 = vld [vmem:[%s1 + $0x288] sm:$0xf]
    %v282 = vld [vmem:[%s1 + $0x28c] sm:$0xf]
    %v283 = vld [vmem:[%s1 + $0x290] sm:$0xf]
    %v284 = vld [vmem:[%s1 + $0x294] sm:$0xf]
    %v285 = vld [vmem:[%s1 + $0x298] sm:$0xf]
    %v286 = vld [vmem:[%s1 + $0x29c] sm:$0xf]
    %v287 = vld [vmem:[%s1 + $0x2a0] sm:$0xf]
    %v288 = vld [vmem:[%s1 + $0x2a4] sm:$0xf]
    %v289 = vld [vmem:[%s1 + $0x2a8] sm:$0xf]
    %v290 = vld [vmem:[%s1 + $0x2ac] sm:$0xf]
    %v291 = vld [vmem:[%s1 + $0x2b0] sm:$0xf]
    %v292 = vld [vmem:[%s1 + $0x2b4] sm:$0xf]
    %v293 = vld [vmem:[%s1 + $0x2b8] sm:$0xf]
    %v294 = vld [vmem:[%s1 + $0x2bc] sm:$0xf]
    %v295 = vld [vmem:[%s1 + $0x2c0] sm:$0xf]
    %v296 = vld [vmem:[%s1 + $0x2c4] sm:$0xf]
    %v297 = vld [vmem:[%s1 + $0x2c8] sm:$0xf]
    %v298 = vld [vmem:[%s1 + $0x2cc] sm:$0xf]
    %v299 = vld [vmem:[%s1 + $0x2d0] sm:$0xf]
    %v300 = vld [vmem:[%s1 + $0x2d4] sm:$0xf]
    %v301 = vld [vmem:[%s1 + $0x2d8] sm:$0xf]
    %v302 = vld [vmem:[%s1 + $0x2dc] sm:$0xf]
    %v303 = vld [vmem:[%s1 + $0x2e0] sm:$0xf]
    %v304 = vld [vmem:[%s1 + $0x2e4] sm:$0xf]
    %v305 = vld [vmem:[%s1 + $0x2e8] sm:$0xf]
    %v306 = vld [vmem:[%s1 + $0x2ec] sm:$0xf]
    %v307 = vld [vmem:[%s1 + $0x2f0] sm:$0xf]
    %v308 = vld [vmem:[%s1 + $0x2f4] sm:$0xf]
    %v309 = vld [vmem:[%s1 + $0x2f8] sm:$0xf]
    %v310 = vld [vmem:[%s1 + $0x2fc] sm:$0xf]
    %v311 = vld [vmem:[%s1 + $0x300] sm:$0xf]
    %v312 = vld [vmem:[%s1 + $0x304] sm:$0xf]
    %v313 = vld [vmem:[%s1 + $0x308] sm:$0xf]
    %v314 = vld [vmem:[%s1 + $0x30c] sm:$0xf]
    %v315 = vld [vmem:[%s1 + $0x310] sm:$0xf]
    %v316 = vld [vmem:[%s1 + $0x314] sm:$0xf]
    %v317 = vld [vmem:[%s1 + $0x318] sm:$0xf]
    %v318 = vld [vmem:[%s1 + $0x31c] sm:$0xf]
    %v319 = vld [vmem:[%s1 + $0x320] sm:$0xf]
    %v320 = vld [vmem:[%s1 + $0x324] sm:$0xf]
    %v321 = vld [vmem:[%s1 + $0x328] sm:$0xf]
    %v322 = vld [vmem:[%s1 + $0x32c] sm:$0xf]
    %v323 = vld [vmem:[%s1 + $0x330] sm:$0xf]
    %v324 = vld [vmem:[%s1 + $0x334] sm:$0xf]
    %v325 = vld [vmem:[%s1 + $0x338] sm:$0xf]
    %v326 = vld [vmem:[%s1 + $0x33c] sm:$0xf]
    %v327 = vld [vmem:[%s1 + $0x340] sm:$0xf]
    %v328 = vld [vmem:[%s1 + $0x344] sm:$0xf]
    %v329 = vld [vmem:[%s1 + $0x348] sm:$0xf]
    %v330 = vld [vmem:[%s1 + $0x34c] sm:$0xf]
    %v331 = vld [vmem:[%s1 + $0x350] sm:$0xf]
    %v332 = vld [vmem:[%s1 + $0x354] sm:$0xf]
    %v333 = vld [vmem:[%s1 + $0x358] sm:$0xf]
    %v334 = vld [vmem:[%s1 + $0x35c] sm:$0xf]
    %v335 = vld [vmem:[%s1 + $0x360] sm:$0xf]
    %v336 = vld [vmem:[%s1 + $0x364] sm:$0xf]
    %v337 = vld [vmem:[%s1 + $0x368] sm:$0xf]
    %v338 = vld [vmem:[%s1 + $0x36c] sm:$0xf]
    %v339 = vld [vmem:[%s1 + $0x370] sm:$0xf]
    %v340 = vld [vmem:[%s1 + $0x374] sm:$0xf]
    %v341 = vld [vmem:[%s1 + $0x378] sm:$0xf]
    %v342 = vld [vmem:[%s1 + $0x37c] sm:$0xf]
    %v343 = vld [vmem:[%s1 + $0x380] sm:$0xf]
    %v344 = vld [vmem:[%s1 + $0x384] sm:$0xf]
    %v345 = vld [vmem:[%s1 + $0x388] sm:$0xf]
    %v346 = vld [vmem:[%s1 + $0x38c] sm:$0xf]
    %v347 = vld [vmem:[%s1 + $0x390] sm:$0xf]
    %v348 = vld [vmem:[%s1 + $0x394] sm:$0xf]
    %v349 = vld [vmem:[%s1 + $0x398] sm:$0xf]
    %v350 = vld [vmem:[%s1 + $0x39c] sm:$0xf]
    %v351 = vld [vmem:[%s1 + $0x3a0] sm:$0xf]
    %v352 = vld [vmem:[%s1 + $0x3a4] sm:$0xf]
    %v353 = vld [vmem:[%s1 + $0x3a8] sm:$0xf]
    %v354 = vld [vmem:[%s1 + $0x3ac] sm:$0xf]
    %v355 = vld [vmem:[%s1 + $0x3b0] sm:$0xf]
    %v356 = vld [vmem:[%s1 + $0x3b4] sm:$0xf]
    %v357 = vld [vmem:[%s1 + $0x3b8] sm:$0xf]
    %v358 = vld [vmem:[%s1 + $0x3bc] sm:$0xf]
    %v359 = vld [vmem:[%s1 + $0x3c0] sm:$0xf]
    %v360 = vld [vmem:[%s1 + $0x3c4] sm:$0xf]
    %v361 = vld [vmem:[%s1 + $0x3c8] sm:$0xf]
    %v362 = vld [vmem:[%s1 + $0x3cc] sm:$0xf]
    %v363 = vld [vmem:[%s1 + $0x3d0] sm:$0xf]
    %v364 = vld [vmem:[%s1 + $0x3d4] sm:$0xf]
    %v365 = vld [vmem:[%s1 + $0x3d8] sm:$0xf]
    %v366 = vld [vmem:[%s1 + $0x3dc] sm:$0xf]
    %v367 = vld [vmem:[%s1 + $0x3e0] sm:$0xf]
    %v368 = vld [vmem:[%s1 + $0x3e4] sm:$0xf]
    %v369 = vld [vmem:[%s1 + $0x3e8] sm:$0xf]
    %v370 = vld [vmem:[%s1 + $0x3ec] sm:$0xf]
    %v371 = vld [vmem:[%s1 + $0x3f0] sm:$0xf]
    %v372 = vld [vmem:[%s1 + $0x3f4] sm:$0xf]
    %v373 = vld [vmem:[%s1 + $0x3f8] sm:$0xf]
    %v374 = vld [vmem:[%s1 + $0x3fc] sm:$0xf]
    %v375 = vld [vmem:[%s1 + $0x400] sm:$0xf]
    %v376 = vld [vmem:[%s1 + $0x404] sm:$0xf]
    %v377 = vld [vmem:[%s1 + $0x408] sm:$0xf]
    %v378 = vld [vmem:[%s1 + $0x40c] sm:$0xf]
    %v379 = vld [vmem:[%s1 + $0x410] sm:$0xf]
    %v380 = vld [vmem:[%s1 + $0x414] sm:$0xf]
    %v381 = vld [vmem:[%s1 + $0x418] sm:$0xf]
    %v382 = vld [vmem:[%s1 + $0x41c] sm:$0xf]
    %v383 = vld [vmem:[%s1 + $0x420] sm:$0xf]
    %v384 = vld [vmem:[%s1 + $0x424] sm:$0xf]
    %v385 = vld [vmem:[%s1 + $0x428] sm:$0xf]
    %v386 = vld [vmem:[%s1 + $0x42c] sm:$0xf]
    %v387 = vld [vmem:[%s1 + $0x430] sm:$0xf]
    %v388 = vld [vmem:[%s1 + $0x434] sm:$0xf]
    %v389 = vld [vmem:[%s1 + $0x438] sm:$0xf]
    %v390 = vld [vmem:[%s1 + $0x43c] sm:$0xf]
    %v391 = vld [vmem:[%s1 + $0x440] sm:$0xf]
    %v392 = vld [vmem:[%s1 + $0x444] sm:$0xf]
    %v393 = vld [vmem:[%s1 + $0x448] sm:$0xf]
    %v394 = vld [vmem:[%s1 + $0x44c] sm:$0xf]
    %v395 = vld [vmem:[%s1 + $0x450] sm:$0xf]
    %v396 = vld [vmem:[%s1 + $0x454] sm:$0xf]
    %v397 = vld [vmem:[%s1 + $0x458] sm:$0xf]
    %v398 = vld [vmem:[%s1 + $0x45c] sm:$0xf]
    %v399 = vld [vmem:[%s1 + $0x460] sm:$0xf]
    %v400 = vld [vmem:[%s1 + $0x464] sm:$0xf]
    %v401 = vld [vmem:[%s1 + $0x468] sm:$0xf]
    %v402 = vld [vmem:[%s1 + $0x46c] sm:$0xf]
    %v403 = vld [vmem:[%s1 + $0x470] sm:$0xf]
    %v404 = vld [vmem:[%s1 + $0x474] sm:$0xf]
    %v405 = vld [vmem:[%s1 + $0x478] sm:$0xf]
    %v406 = vld [vmem:[%s1 + $0x47c] sm:$0xf]
    %v407 = vld [vmem:[%s1 + $0x480] sm:$0xf]
    %v408 = vld [vmem:[%s1 + $0x484] sm:$0xf]
    %v409 = vld [vmem:[%s1 + $0x488] sm:$0xf]
    %v410 = vld [vmem:[%s1 + $0x48c] sm:$0xf]
    %v411 = vld [vmem:[%s1 + $0x490] sm:$0xf]
    %v412 = vld [vmem:[%s1 + $0x494] sm:$0xf]
    %v413 = vld [vmem:[%s1 + $0x498] sm:$0xf]
    %v414 = vld [vmem:[%s1 + $0x49c] sm:$0xf]
    %v415 = vld [vmem:[%s1 + $0x4a0] sm:$0xf]
    %v416 = vld [vmem:[%s1 + $0x4a4] sm:$0xf]
    %v417 = vld [vmem:[%s1 + $0x4a8] sm:$0xf]
    %v418 = vld [vmem:[%s1 + $0x4ac] sm:$0xf]
    %v419 = vld [vmem:[%s1 + $0x4b0] sm:$0xf]
    %v420 = vld [vmem:[%s1 + $0x4b4] sm:$0xf]
    %v421 = vld [vmem:[%s1 + $0x4b8] sm:$0xf]
    %v422 = vld [vmem:[%s1 + $0x4bc] sm:$0xf]
    %v423 = vld [vmem:[%s1 + $0x4c0] sm:$0xf]
    %v424 = vld [vmem:[%s1 + $0x4c4] sm:$0xf]
    %v425 = vld [vmem:[%s1 + $0x4c8] sm:$0xf]
    %v426 = vld [vmem:[%s1 + $0x4cc] sm:$0xf]
    %v427 = vld [vmem:[%s1 + $0x4d0] sm:$0xf]
    %v428 = vld [vmem:[%s1 + $0x4d4] sm:$0xf]
    %v429 = vld [vmem:[%s1 + $0x4d8] sm:$0xf]
    %v430 = vld [vmem:[%s1 + $0x4dc] sm:$0xf]
    %v431 = vld [vmem:[%s1 + $0x4e0] sm:$0xf]
    %v432 = vld [vmem:[%s1 + $0x4e4] sm:$0xf]
    %v433 = vld [vmem:[%s1 + $0x4e8] sm:$0xf]
    %v434 = vld [vmem:[%s1 + $0x4ec] sm:$0xf]
    %v435 = vld [vmem:[%s1 + $0x4f0] sm:$0xf]
    %v436 = vld [vmem:[%s1 + $0x4f4] sm:$0xf]
    %v437 = vld [vmem:[%s1 + $0x4f8] sm:$0xf]
    %v438 = vld [vmem:[%s1 + $0x4fc] sm:$0xf]
    %v439 = vld [vmem:[%s1 + $0x500] sm:$0xf]
    %v440 = vld [vmem:[%s1 + $0x504] sm:$0xf]
    %v441 = vld [vmem:[%s1 + $0x508] sm:$0xf]
    %v442 = vld [vmem:[%s1 + $0x50c] sm:$0xf]
    %v443 = vld [vmem:[%s1 + $0x510] sm:$0xf]
    %v444 = vld [vmem:[%s1 + $0x514] sm:$0xf]
    %v445 = vld [vmem:[%s1 + $0x518] sm:$0xf]
    %v446 = vld [vmem:[%s1 + $0x51c] sm:$0xf]
    %v447 = vld [vmem:[%s1 + $0x520] sm:$0xf]
    %v448 = vld [vmem:[%s1 + $0x524] sm:$0xf]
    %v449 = vld [vmem:[%s1 + $0x528] sm:$0xf]
    %v450 = vld [vmem:[%s1 + $0x52c] sm:$0xf]
    %v451 = vld [vmem:[%s1 + $0x530] sm:$0xf]
    %v452 = vld [vmem:[%s1 + $0x534] sm:$0xf]
    %v453 = vld [vmem:[%s1 + $0x538] sm:$0xf]
    %v454 = vld [vmem:[%s1 + $0x53c] sm:$0xf]
    %v455 = vld [vmem:[%s1 + $0x540] sm:$0xf]
    %v456 = vld [vmem:[%s1 + $0x544] sm:$0xf]
    %v457 = vld [vmem:[%s1 + $0x548] sm:$0xf]
    %v458 = vld [vmem:[%s1 + $0x54c] sm:$0xf]
    %v459 = vld [vmem:[%s1 + $0x550] sm:$0xf]
    %v460 = vld [vmem:[%s1 + $0x554] sm:$0xf]
    %v461 = vld [vmem:[%s1 + $0x558] sm:$0xf]
    %v462 = vld [vmem:[%s1 + $0x55c] sm:$0xf]
    %v463 = vld [vmem:[%s1 + $0x560] sm:$0xf]
    %v464 = vld [vmem:[%s1 + $0x564] sm:$0xf]
    %v465 = vld [vmem:[%s1 + $0x568] sm:$0xf]
    %v466 = vld [vmem:[%s1 + $0x56c] sm:$0xf]
    %v467 = vld [vmem:[%s1 + $0x570] sm:$0xf]
    %v468 = vld [vmem:[%s1 + $0x574] sm:$0xf]
    %v469 = vld [vmem:[%s1 + $0x578] sm:$0xf]
    %v470 = vld [vmem:[%s1 + $0x57c] sm:$0xf]
    %v471 = vld [vmem:[%s1 + $0x580] sm:$0xf]
    %v472 = vld [vmem:[%s1 + $0x584] sm:$0xf]
    %v473 = vld [vmem:[%s1 + $0x588] sm:$0xf]
    %v474 = vld [vmem:[%s1 + $0x58c] sm:$0xf]
    %v475 = vld [vmem:[%s1 + $0x590] sm:$0xf]
    %v476 = vld [vmem:[%s1 + $0x594] sm:$0xf]
    %v477 = vld [vmem:[%s1 + $0x598] sm:$0xf]
    %v478 = vld [vmem:[%s1 + $0x59c] sm:$0xf]
    %v479 = vld [vmem:[%s1 + $0x5a0] sm:$0xf]
    %v480 = vld [vmem:[%s1 + $0x5a4] sm:$0xf]
    %v481 = vld [vmem:[%s1 + $0x5a8] sm:$0xf]
    %v482 = vld [vmem:[%s1 + $0x5ac] sm:$0xf]
    %v483 = vld [vmem:[%s1 + $0x5b0] sm:$0xf]
    %v484 = vld [vmem:[%s1 + $0x5b4] sm:$0xf]
    %v485 = vld [vmem:[%s1 + $0x5b8] sm:$0xf]
    %v486 = vld [vmem:[%s1 + $0x5bc] sm:$0xf]
    %v487 = vld [vmem:[%s1 + $0x5c0] sm:$0xf]
    %v488 = vld [vmem:[%s1 + $0x5c4] sm:$0xf]
    %v489 = vld [vmem:[%s1 + $0x5c8] sm:$0xf]
    %v490 = vld [vmem:[%s1 + $0x5cc] sm:$0xf]
    %v491 = vld [vmem:[%s1 + $0x5d0] sm:$0xf]
    %v492 = vld [vmem:[%s1 + $0x5d4] sm:$0xf]
    %v493 = vld [vmem:[%s1 + $0x5d8] sm:$0xf]
    %v494 = vld [vmem:[%s1 + $0x5dc] sm:$0xf]
    %v495 = vld [vmem:[%s1 + $0x5e0] sm:$0xf]
    %v496 = vld [vmem:[%s1 + $0x5e4] sm:$0xf]
    %v497 = vld [vmem:[%s1 + $0x5e8] sm:$0xf]
    %v498 = vld [vmem:[%s1 + $0x5ec] sm:$0xf]
    %v499 = vld [vmem:[%s1 + $0x5f0] sm:$0xf]
    %v500 = vld [vmem:[%s1 + $0x5f4] sm:$0xf]
    %v501 = vld [vmem:[%s1 + $0x5f8] sm:$0xf]
    %v502 = vld [vmem:[%s1 + $0x5fc] sm:$0xf]
    %v503 = vld [vmem:[#allocation2] sm:$0xff]
    %v504 = vld [vmem:[#allocation2 + $0x8] sm:$0xff]
    %v529 = vunpack.c.l.b16 %v95
    %v530 = vunpack.c.h.b16 %v95
    %v531 = vunpack.c.l.b16 %v96
    %v532 = vunpack.c.h.b16 %v96
    %v533 = vunpack.c.l.b16 %v97
    %v534 = vunpack.c.h.b16 %v97
    %v535 = vunpack.c.l.b16 %v98
    %v536 = vunpack.c.h.b16 %v98
    %v537 = vunpack.c.l.b16 %v99
    %v538 = vunpack.c.h.b16 %v99
    %v539 = vunpack.c.l.b16 %v100
    %v540 = vunpack.c.h.b16 %v100
    %v541 = vunpack.c.l.b16 %v101
    %v542 = vunpack.c.h.b16 %v101
    %v543 = vunpack.c.l.b16 %v102
    %v544 = vunpack.c.h.b16 %v102
    %v545 = vunpack.c.l.b16 %v103
    %v546 = vunpack.c.h.b16 %v103
    %v547 = vunpack.c.l.b16 %v104
    %v548 = vunpack.c.h.b16 %v104
    %v549 = vunpack.c.l.b16 %v105
    %v550 = vunpack.c.h.b16 %v105
    %v551 = vunpack.c.l.b16 %v106
    %v552 = vunpack.c.h.b16 %v106
    %v553 = vunpack.c.l.b16 %v107
    %v554 = vunpack.c.h.b16 %v107
    %v555 = vunpack.c.l.b16 %v108
    %v556 = vunpack.c.h.b16 %v108
    %v557 = vunpack.c.l.b16 %v109
    %v558 = vunpack.c.h.b16 %v109
    %v559 = vunpack.c.l.b16 %v110
    %v560 = vunpack.c.h.b16 %v110
    %v561 = vunpack.c.l.b16 %v111
    %v562 = vunpack.c.h.b16 %v111
    %v563 = vunpack.c.l.b16 %v112
    %v564 = vunpack.c.h.b16 %v112
    %v565 = vunpack.c.l.b16 %v113
    %v566 = vunpack.c.h.b16 %v113
    %v567 = vunpack.c.l.b16 %v114
    %v568 = vunpack.c.h.b16 %v114
    %v569 = vunpack.c.l.b16 %v115
    %v570 = vunpack.c.h.b16 %v115
    %v571 = vunpack.c.l.b16 %v116
    %v572 = vunpack.c.h.b16 %v116
    %v573 = vunpack.c.l.b16 %v117
    %v574 = vunpack.c.h.b16 %v117
    %v575 = vunpack.c.l.b16 %v118
    %v576 = vunpack.c.h.b16 %v118
    %v577 = vpack.c.b16 %v553, %v529
    %v578 = vpack.c.b16 %v554, %v530
    %v579 = vpack.c.b16 %v555, %v531
    %v580 = vpack.c.b16 %v556, %v532
    %v581 = vpack.c.b16 %v557, %v533
    %v582 = vpack.c.b16 %v558, %v534
    %v583 = vpack.c.b16 %v559, %v535
    %v584 = vpack.c.b16 %v560, %v536
    %v585 = vpack.c.b16 %v561, %v537
    %v586 = vpack.c.b16 %v562, %v538
    %v587 = vpack.c.b16 %v563, %v539
    %v588 = vpack.c.b16 %v564, %v540
    %v589 = vpack.c.b16 %v565, %v541
    %v590 = vpack.c.b16 %v566, %v542
    %v591 = vpack.c.b16 %v567, %v543
    %v592 = vpack.c.b16 %v568, %v544
    %v593 = vpack.c.b16 %v569, %v545
    %v594 = vpack.c.b16 %v570, %v546
    %v595 = vpack.c.b16 %v571, %v547
    %v596 = vpack.c.b16 %v572, %v548
    %v597 = vpack.c.b16 %v573, %v549
    %v598 = vpack.c.b16 %v574, %v550
    %v599 = vpack.c.b16 %v575, %v551
    %v600 = vpack.c.b16 %v576, %v552
    %v1009 = vunpack.c.l.b16 %v119
    %v1010 = vunpack.c.l.b16 %v120
    %v1011 = vunpack.c.l.b16 %v121
    %v1012 = vunpack.c.l.b16 %v122
    %v1013 = vunpack.c.l.b16 %v123
    %v1014 = vunpack.c.l.b16 %v124
    %v1015 = vunpack.c.l.b16 %v125
    %v1016 = vunpack.c.l.b16 %v126
    %v1017 = vunpack.c.l.b16 %v127
    %v1018 = vunpack.c.l.b16 %v128
    %v1019 = vunpack.c.l.b16 %v129
    %v1020 = vunpack.c.l.b16 %v130
    %v1021 = vunpack.c.l.b16 %v131
    %v1022 = vunpack.c.l.b16 %v132
    %v1023 = vunpack.c.l.b16 %v133
    %v1024 = vunpack.c.l.b16 %v134
    %v1025 = vunpack.c.l.b16 %v135
    %v1026 = vunpack.c.l.b16 %v136
    %v1027 = vunpack.c.l.b16 %v137
    %v1028 = vunpack.c.l.b16 %v138
    %v1029 = vunpack.c.l.b16 %v139
    %v1030 = vunpack.c.l.b16 %v140
    %v1031 = vunpack.c.l.b16 %v141
    %v1032 = vunpack.c.l.b16 %v142
    %v1033 = vunpack.c.l.b16 %v143
    %v1034 = vunpack.c.l.b16 %v144
    %v1035 = vunpack.c.l.b16 %v145
    %v1036 = vunpack.c.l.b16 %v146
    %v1037 = vunpack.c.l.b16 %v147
    %v1038 = vunpack.c.l.b16 %v148
    %v1039 = vunpack.c.l.b16 %v149
    %v1040 = vunpack.c.l.b16 %v150
    %v1041 = vunpack.c.l.b16 %v151
    %v1042 = vunpack.c.l.b16 %v152
    %v1043 = vunpack.c.l.b16 %v153
    %v1044 = vunpack.c.l.b16 %v154
    %v1045 = vunpack.c.l.b16 %v155
    %v1046 = vunpack.c.l.b16 %v156
    %v1047 = vunpack.c.l.b16 %v157
    %v1048 = vunpack.c.l.b16 %v158
    %v1049 = vunpack.c.l.b16 %v159
    %v1050 = vunpack.c.l.b16 %v160
    %v1051 = vunpack.c.l.b16 %v161
    %v1052 = vunpack.c.l.b16 %v162
    %v1053 = vunpack.c.l.b16 %v163
    %v1054 = vunpack.c.l.b16 %v164
    %v1055 = vunpack.c.l.b16 %v165
    %v1056 = vunpack.c.l.b16 %v166
    %v1057 = vunpack.c.l.b16 %v167
    %v1058 = vunpack.c.l.b16 %v168
    %v1059 = vunpack.c.l.b16 %v169
    %v1060 = vunpack.c.l.b16 %v170
    %v1061 = vunpack.c.l.b16 %v171
    %v1062 = vunpack.c.l.b16 %v172
    %v1063 = vunpack.c.l.b16 %v173
    %v1064 = vunpack.c.l.b16 %v174
    %v1065 = vunpack.c.l.b16 %v175
    %v1066 = vunpack.c.l.b16 %v176
    %v1067 = vunpack.c.l.b16 %v177
    %v1068 = vunpack.c.l.b16 %v178
    %v1069 = vunpack.c.l.b16 %v179
    %v1070 = vunpack.c.l.b16 %v180
    %v1071 = vunpack.c.l.b16 %v181
    %v1072 = vunpack.c.l.b16 %v182
    %v1073 = vunpack.c.l.b16 %v183
    %v1074 = vunpack.c.l.b16 %v184
    %v1075 = vunpack.c.l.b16 %v185
    %v1076 = vunpack.c.l.b16 %v186
    %v1077 = vunpack.c.l.b16 %v187
    %v1078 = vunpack.c.l.b16 %v188
    %v1079 = vunpack.c.l.b16 %v189
    %v1080 = vunpack.c.l.b16 %v190
    %v1081 = vunpack.c.l.b16 %v191
    %v1082 = vunpack.c.l.b16 %v192
    %v1083 = vunpack.c.l.b16 %v193
    %v1084 = vunpack.c.l.b16 %v194
    %v1085 = vunpack.c.l.b16 %v195
    %v1086 = vunpack.c.l.b16 %v196
    %v1087 = vunpack.c.l.b16 %v197
    %v1088 = vunpack.c.l.b16 %v198
    %v1089 = vunpack.c.l.b16 %v199
    %v1090 = vunpack.c.l.b16 %v200
    %v1091 = vunpack.c.l.b16 %v201
    %v1092 = vunpack.c.l.b16 %v202
    %v1093 = vunpack.c.l.b16 %v203
    %v1094 = vunpack.c.l.b16 %v204
    %v1095 = vunpack.c.l.b16 %v205
    %v1096 = vunpack.c.l.b16 %v206
    %v1097 = vunpack.c.l.b16 %v207
    %v1098 = vunpack.c.l.b16 %v208
    %v1099 = vunpack.c.l.b16 %v209
    %v1100 = vunpack.c.l.b16 %v210
    %v1101 = vunpack.c.l.b16 %v211
    %v1102 = vunpack.c.l.b16 %v212
    %v1103 = vunpack.c.l.b16 %v213
    %v1104 = vunpack.c.l.b16 %v214
    %v1105 = vunpack.c.l.b16 %v215
    %v1106 = vunpack.c.l.b16 %v216
    %v1107 = vunpack.c.l.b16 %v217
    %v1108 = vunpack.c.l.b16 %v218
    %v1109 = vunpack.c.l.b16 %v219
    %v1110 = vunpack.c.l.b16 %v220
    %v1111 = vunpack.c.l.b16 %v221
    %v1112 = vunpack.c.l.b16 %v222
    %v1113 = vunpack.c.l.b16 %v223
    %v1114 = vunpack.c.l.b16 %v224
    %v1115 = vunpack.c.l.b16 %v225
    %v1116 = vunpack.c.l.b16 %v226
    %v1117 = vunpack.c.l.b16 %v227
    %v1118 = vunpack.c.l.b16 %v228
    %v1119 = vunpack.c.l.b16 %v229
    %v1120 = vunpack.c.l.b16 %v230
    %v1121 = vunpack.c.l.b16 %v231
    %v1122 = vunpack.c.l.b16 %v232
    %v1123 = vunpack.c.l.b16 %v233
    %v1124 = vunpack.c.l.b16 %v234
    %v1125 = vunpack.c.l.b16 %v235
    %v1126 = vunpack.c.l.b16 %v236
    %v1127 = vunpack.c.l.b16 %v237
    %v1128 = vunpack.c.l.b16 %v238
    %v1129 = vunpack.c.l.b16 %v239
    %v1130 = vunpack.c.l.b16 %v240
    %v1131 = vunpack.c.l.b16 %v241
    %v1132 = vunpack.c.l.b16 %v242
    %v1133 = vunpack.c.l.b16 %v243
    %v1134 = vunpack.c.l.b16 %v244
    %v1135 = vunpack.c.l.b16 %v245
    %v1136 = vunpack.c.l.b16 %v246
    %v1137 = vunpack.c.l.b16 %v247
    %v1138 = vunpack.c.l.b16 %v248
    %v1139 = vunpack.c.l.b16 %v249
    %v1140 = vunpack.c.l.b16 %v250
    %v1141 = vunpack.c.l.b16 %v251
    %v1142 = vunpack.c.l.b16 %v252
    %v1143 = vunpack.c.l.b16 %v253
    %v1144 = vunpack.c.l.b16 %v254
    %v1145 = vunpack.c.l.b16 %v255
    %v1146 = vunpack.c.l.b16 %v256
    %v1147 = vunpack.c.l.b16 %v257
    %v1148 = vunpack.c.l.b16 %v258
    %v1149 = vunpack.c.l.b16 %v259
    %v1150 = vunpack.c.l.b16 %v260
    %v1151 = vunpack.c.l.b16 %v261
    %v1152 = vunpack.c.l.b16 %v262
    %v1153 = vunpack.c.l.b16 %v263
    %v1154 = vunpack.c.l.b16 %v264
    %v1155 = vunpack.c.l.b16 %v265
    %v1156 = vunpack.c.l.b16 %v266
    %v1157 = vunpack.c.l.b16 %v267
    %v1158 = vunpack.c.l.b16 %v268
    %v1159 = vunpack.c.l.b16 %v269
    %v1160 = vunpack.c.l.b16 %v270
    %v1161 = vunpack.c.l.b16 %v271
    %v1162 = vunpack.c.l.b16 %v272
    %v1163 = vunpack.c.l.b16 %v273
    %v1164 = vunpack.c.l.b16 %v274
    %v1165 = vunpack.c.l.b16 %v275
    %v1166 = vunpack.c.l.b16 %v276
    %v1167 = vunpack.c.l.b16 %v277
    %v1168 = vunpack.c.l.b16 %v278
    %v1169 = vunpack.c.l.b16 %v279
    %v1170 = vunpack.c.l.b16 %v280
    %v1171 = vunpack.c.l.b16 %v281
    %v1172 = vunpack.c.l.b16 %v282
    %v1173 = vunpack.c.l.b16 %v283
    %v1174 = vunpack.c.l.b16 %v284
    %v1175 = vunpack.c.l.b16 %v285
    %v1176 = vunpack.c.l.b16 %v286
    %v1177 = vunpack.c.l.b16 %v287
    %v1178 = vunpack.c.l.b16 %v288
    %v1179 = vunpack.c.l.b16 %v289
    %v1180 = vunpack.c.l.b16 %v290
    %v1181 = vunpack.c.l.b16 %v291
    %v1182 = vunpack.c.l.b16 %v292
    %v1183 = vunpack.c.l.b16 %v293
    %v1184 = vunpack.c.l.b16 %v294
    %v1185 = vunpack.c.l.b16 %v295
    %v1186 = vunpack.c.l.b16 %v296
    %v1187 = vunpack.c.l.b16 %v297
    %v1188 = vunpack.c.l.b16 %v298
    %v1189 = vunpack.c.l.b16 %v299
    %v1190 = vunpack.c.l.b16 %v300
    %v1191 = vunpack.c.l.b16 %v301
    %v1192 = vunpack.c.l.b16 %v302
    %v1193 = vunpack.c.l.b16 %v303
    %v1194 = vunpack.c.l.b16 %v304
    %v1195 = vunpack.c.l.b16 %v305
    %v1196 = vunpack.c.l.b16 %v306
    %v1197 = vunpack.c.l.b16 %v307
    %v1198 = vunpack.c.l.b16 %v308
    %v1199 = vunpack.c.l.b16 %v309
    %v1200 = vunpack.c.l.b16 %v310
    %v1201 = vunpack.c.l.b16 %v311
    %v1202 = vunpack.c.l.b16 %v312
    %v1203 = vunpack.c.l.b16 %v313
    %v1204 = vunpack.c.l.b16 %v314
    %v1205 = vunpack.c.l.b16 %v315
    %v1206 = vunpack.c.l.b16 %v316
    %v1207 = vunpack.c.l.b16 %v317
    %v1208 = vunpack.c.l.b16 %v318
    %v1209 = vunpack.c.l.b16 %v319
    %v1210 = vunpack.c.l.b16 %v320
    %v1211 = vunpack.c.l.b16 %v321
    %v1212 = vunpack.c.l.b16 %v322
    %v1213 = vunpack.c.l.b16 %v323
    %v1214 = vunpack.c.l.b16 %v324
    %v1215 = vunpack.c.l.b16 %v325
    %v1216 = vunpack.c.l.b16 %v326
    %v1217 = vunpack.c.l.b16 %v327
    %v1218 = vunpack.c.l.b16 %v328
    %v1219 = vunpack.c.l.b16 %v329
    %v1220 = vunpack.c.l.b16 %v330
    %v1221 = vunpack.c.l.b16 %v331
    %v1222 = vunpack.c.l.b16 %v332
    %v1223 = vunpack.c.l.b16 %v333
    %v1224 = vunpack.c.l.b16 %v334
    %v1225 = vunpack.c.l.b16 %v335
    %v1226 = vunpack.c.l.b16 %v336
    %v1227 = vunpack.c.l.b16 %v337
    %v1228 = vunpack.c.l.b16 %v338
    %v1229 = vunpack.c.l.b16 %v339
    %v1230 = vunpack.c.l.b16 %v340
    %v1231 = vunpack.c.l.b16 %v341
    %v1232 = vunpack.c.l.b16 %v342
    %v1233 = vunpack.c.l.b16 %v343
    %v1234 = vunpack.c.l.b16 %v344
    %v1235 = vunpack.c.l.b16 %v345
    %v1236 = vunpack.c.l.b16 %v346
    %v1237 = vunpack.c.l.b16 %v347
    %v1238 = vunpack.c.l.b16 %v348
    %v1239 = vunpack.c.l.b16 %v349
    %v1240 = vunpack.c.l.b16 %v350
    %v1241 = vunpack.c.l.b16 %v351
    %v1242 = vunpack.c.l.b16 %v352
    %v1243 = vunpack.c.l.b16 %v353
    %v1244 = vunpack.c.l.b16 %v354
    %v1245 = vunpack.c.l.b16 %v355
    %v1246 = vunpack.c.l.b16 %v356
    %v1247 = vunpack.c.l.b16 %v357
    %v1248 = vunpack.c.l.b16 %v358
    %v1249 = vunpack.c.l.b16 %v359
    %v1250 = vunpack.c.l.b16 %v360
    %v1251 = vunpack.c.l.b16 %v361
    %v1252 = vunpack.c.l.b16 %v362
    %v1253 = vunpack.c.l.b16 %v363
    %v1254 = vunpack.c.l.b16 %v364
    %v1255 = vunpack.c.l.b16 %v365
    %v1256 = vunpack.c.l.b16 %v366
    %v1257 = vunpack.c.l.b16 %v367
    %v1258 = vunpack.c.l.b16 %v368
    %v1259 = vunpack.c.l.b16 %v369
    %v1260 = vunpack.c.l.b16 %v370
    %v1261 = vunpack.c.l.b16 %v371
    %v1262 = vunpack.c.l.b16 %v372
    %v1263 = vunpack.c.l.b16 %v373
    %v1264 = vunpack.c.l.b16 %v374
    %v1265 = vunpack.c.l.b16 %v375
    %v1266 = vunpack.c.l.b16 %v376
    %v1267 = vunpack.c.l.b16 %v377
    %v1268 = vunpack.c.l.b16 %v378
    %v1269 = vunpack.c.l.b16 %v379
    %v1270 = vunpack.c.l.b16 %v380
    %v1271 = vunpack.c.l.b16 %v381
    %v1272 = vunpack.c.l.b16 %v382
    %v1273 = vunpack.c.l.b16 %v383
    %v1274 = vunpack.c.l.b16 %v384
    %v1275 = vunpack.c.l.b16 %v385
    %v1276 = vunpack.c.l.b16 %v386
    %v1277 = vunpack.c.l.b16 %v387
    %v1278 = vunpack.c.l.b16 %v388
    %v1279 = vunpack.c.l.b16 %v389
    %v1280 = vunpack.c.l.b16 %v390
    %v1281 = vunpack.c.l.b16 %v391
    %v1282 = vunpack.c.l.b16 %v392
    %v1283 = vunpack.c.l.b16 %v393
    %v1284 = vunpack.c.l.b16 %v394
    %v1285 = vunpack.c.l.b16 %v395
    %v1286 = vunpack.c.l.b16 %v396
    %v1287 = vunpack.c.l.b16 %v397
    %v1288 = vunpack.c.l.b16 %v398
    %v1289 = vunpack.c.l.b16 %v399
    %v1290 = vunpack.c.l.b16 %v400
    %v1291 = vunpack.c.l.b16 %v401
    %v1292 = vunpack.c.l.b16 %v402
    %v1293 = vunpack.c.l.b16 %v403
    %v1294 = vunpack.c.l.b16 %v404
    %v1295 = vunpack.c.l.b16 %v405
    %v1296 = vunpack.c.l.b16 %v406
    %v1297 = vunpack.c.l.b16 %v407
    %v1298 = vunpack.c.l.b16 %v408
    %v1299 = vunpack.c.l.b16 %v409
    %v1300 = vunpack.c.l.b16 %v410
    %v1301 = vunpack.c.l.b16 %v411
    %v1302 = vunpack.c.l.b16 %v412
    %v1303 = vunpack.c.l.b16 %v413
    %v1304 = vunpack.c.l.b16 %v414
    %v1305 = vunpack.c.l.b16 %v415
    %v1306 = vunpack.c.l.b16 %v416
    %v1307 = vunpack.c.l.b16 %v417
    %v1308 = vunpack.c.l.b16 %v418
    %v1309 = vunpack.c.l.b16 %v419
    %v1310 = vunpack.c.l.b16 %v420
    %v1311 = vunpack.c.l.b16 %v421
    %v1312 = vunpack.c.l.b16 %v422
    %v1313 = vunpack.c.l.b16 %v423
    %v1314 = vunpack.c.l.b16 %v424
    %v1315 = vunpack.c.l.b16 %v425
    %v1316 = vunpack.c.l.b16 %v426
    %v1317 = vunpack.c.l.b16 %v427
    %v1318 = vunpack.c.l.b16 %v428
    %v1319 = vunpack.c.l.b16 %v429
    %v1320 = vunpack.c.l.b16 %v430
    %v1321 = vunpack.c.l.b16 %v431
    %v1322 = vunpack.c.l.b16 %v432
    %v1323 = vunpack.c.l.b16 %v433
    %v1324 = vunpack.c.l.b16 %v434
    %v1325 = vunpack.c.l.b16 %v435
    %v1326 = vunpack.c.l.b16 %v436
    %v1327 = vunpack.c.l.b16 %v437
    %v1328 = vunpack.c.l.b16 %v438
    %v1329 = vunpack.c.l.b16 %v439
    %v1330 = vunpack.c.l.b16 %v440
    %v1331 = vunpack.c.l.b16 %v441
    %v1332 = vunpack.c.l.b16 %v442
    %v1333 = vunpack.c.l.b16 %v443
    %v1334 = vunpack.c.l.b16 %v444
    %v1335 = vunpack.c.l.b16 %v445
    %v1336 = vunpack.c.l.b16 %v446
    %v1337 = vunpack.c.l.b16 %v447
    %v1338 = vunpack.c.l.b16 %v448
    %v1339 = vunpack.c.l.b16 %v449
    %v1340 = vunpack.c.l.b16 %v450
    %v1341 = vunpack.c.l.b16 %v451
    %v1342 = vunpack.c.l.b16 %v452
    %v1343 = vunpack.c.l.b16 %v453
    %v1344 = vunpack.c.l.b16 %v454
    %v1345 = vunpack.c.l.b16 %v455
    %v1346 = vunpack.c.l.b16 %v456
    %v1347 = vunpack.c.l.b16 %v457
    %v1348 = vunpack.c.l.b16 %v458
    %v1349 = vunpack.c.l.b16 %v459
    %v1350 = vunpack.c.l.b16 %v460
    %v1351 = vunpack.c.l.b16 %v461
    %v1352 = vunpack.c.l.b16 %v462
    %v1353 = vunpack.c.l.b16 %v463
    %v1354 = vunpack.c.l.b16 %v464
    %v1355 = vunpack.c.l.b16 %v465
    %v1356 = vunpack.c.l.b16 %v466
    %v1357 = vunpack.c.l.b16 %v467
    %v1358 = vunpack.c.l.b16 %v468
    %v1359 = vunpack.c.l.b16 %v469
    %v1360 = vunpack.c.l.b16 %v470
    %v1361 = vunpack.c.l.b16 %v471
    %v1362 = vunpack.c.l.b16 %v472
    %v1363 = vunpack.c.l.b16 %v473
    %v1364 = vunpack.c.l.b16 %v474
    %v1365 = vunpack.c.l.b16 %v475
    %v1366 = vunpack.c.l.b16 %v476
    %v1367 = vunpack.c.l.b16 %v477
    %v1368 = vunpack.c.l.b16 %v478
    %v1369 = vunpack.c.l.b16 %v479
    %v1370 = vunpack.c.l.b16 %v480
    %v1371 = vunpack.c.l.b16 %v481
    %v1372 = vunpack.c.l.b16 %v482
    %v1373 = vunpack.c.l.b16 %v483
    %v1374 = vunpack.c.l.b16 %v484
    %v1375 = vunpack.c.l.b16 %v485
    %v1376 = vunpack.c.l.b16 %v486
    %v1377 = vunpack.c.l.b16 %v487
    %v1378 = vunpack.c.l.b16 %v488
    %v1379 = vunpack.c.l.b16 %v489
    %v1380 = vunpack.c.l.b16 %v490
    %v1381 = vunpack.c.l.b16 %v491
    %v1382 = vunpack.c.l.b16 %v492
    %v1383 = vunpack.c.l.b16 %v493
    %v1384 = vunpack.c.l.b16 %v494
    %v1385 = vunpack.c.l.b16 %v495
    %v1386 = vunpack.c.l.b16 %v496
    %v1387 = vunpack.c.l.b16 %v497
    %v1388 = vunpack.c.l.b16 %v498
    %v1389 = vunpack.c.l.b16 %v499
    %v1390 = vunpack.c.l.b16 %v500
    %v1391 = vunpack.c.l.b16 %v501
    %v1392 = vunpack.c.l.b16 %v502
    %v1393 = vpack.c.b16 %v1010, %v1009
    %v1394 = vpack.c.b16 %v1012, %v1011
    %v1395 = vpack.c.b16 %v1014, %v1013
    %v1396 = vpack.c.b16 %v1016, %v1015
    %v1397 = vpack.c.b16 %v1018, %v1017
    %v1398 = vpack.c.b16 %v1020, %v1019
    %v1399 = vpack.c.b16 %v1022, %v1021
    %v1400 = vpack.c.b16 %v1024, %v1023
    %v1401 = vpack.c.b16 %v1026, %v1025
    %v1402 = vpack.c.b16 %v1028, %v1027
    %v1403 = vpack.c.b16 %v1030, %v1029
    %v1404 = vpack.c.b16 %v1032, %v1031
    %v1405 = vpack.c.b16 %v1034, %v1033
    %v1406 = vpack.c.b16 %v1036, %v1035
    %v1407 = vpack.c.b16 %v1038, %v1037
    %v1408 = vpack.c.b16 %v1040, %v1039
    %v1409 = vpack.c.b16 %v1042, %v1041
    %v1410 = vpack.c.b16 %v1044, %v1043
    %v1411 = vpack.c.b16 %v1046, %v1045
    %v1412 = vpack.c.b16 %v1048, %v1047
    %v1413 = vpack.c.b16 %v1050, %v1049
    %v1414 = vpack.c.b16 %v1052, %v1051
    %v1415 = vpack.c.b16 %v1054, %v1053
    %v1416 = vpack.c.b16 %v1056, %v1055
    %v1417 = vpack.c.b16 %v1058, %v1057
    %v1418 = vpack.c.b16 %v1060, %v1059
    %v1419 = vpack.c.b16 %v1062, %v1061
    %v1420 = vpack.c.b16 %v1064, %v1063
    %v1421 = vpack.c.b16 %v1066, %v1065
    %v1422 = vpack.c.b16 %v1068, %v1067
    %v1423 = vpack.c.b16 %v1070, %v1069
    %v1424 = vpack.c.b16 %v1072, %v1071
    %v1425 = vpack.c.b16 %v1074, %v1073
    %v1426 = vpack.c.b16 %v1076, %v1075
    %v1427 = vpack.c.b16 %v1078, %v1077
    %v1428 = vpack.c.b16 %v1080, %v1079
    %v1429 = vpack.c.b16 %v1082, %v1081
    %v1430 = vpack.c.b16 %v1084, %v1083
    %v1431 = vpack.c.b16 %v1086, %v1085
    %v1432 = vpack.c.b16 %v1088, %v1087
    %v1433 = vpack.c.b16 %v1090, %v1089
    %v1434 = vpack.c.b16 %v1092, %v1091
    %v1435 = vpack.c.b16 %v1094, %v1093
    %v1436 = vpack.c.b16 %v1096, %v1095
    %v1437 = vpack.c.b16 %v1098, %v1097
    %v1438 = vpack.c.b16 %v1100, %v1099
    %v1439 = vpack.c.b16 %v1102, %v1101
    %v1440 = vpack.c.b16 %v1104, %v1103
    %v1441 = vpack.c.b16 %v1106, %v1105
    %v1442 = vpack.c.b16 %v1108, %v1107
    %v1443 = vpack.c.b16 %v1110, %v1109
    %v1444 = vpack.c.b16 %v1112, %v1111
    %v1445 = vpack.c.b16 %v1114, %v1113
    %v1446 = vpack.c.b16 %v1116, %v1115
    %v1447 = vpack.c.b16 %v1118, %v1117
    %v1448 = vpack.c.b16 %v1120, %v1119
    %v1449 = vpack.c.b16 %v1122, %v1121
    %v1450 = vpack.c.b16 %v1124, %v1123
    %v1451 = vpack.c.b16 %v1126, %v1125
    %v1452 = vpack.c.b16 %v1128, %v1127
    %v1453 = vpack.c.b16 %v1130, %v1129
    %v1454 = vpack.c.b16 %v1132, %v1131
    %v1455 = vpack.c.b16 %v1134, %v1133
    %v1456 = vpack.c.b16 %v1136, %v1135
    %v1457 = vpack.c.b16 %v1138, %v1137
    %v1458 = vpack.c.b16 %v1140, %v1139
    %v1459 = vpack.c.b16 %v1142, %v1141
    %v1460 = vpack.c.b16 %v1144, %v1143
    %v1461 = vpack.c.b16 %v1146, %v1145
    %v1462 = vpack.c.b16 %v1148, %v1147
    %v1463 = vpack.c.b16 %v1150, %v1149
    %v1464 = vpack.c.b16 %v1152, %v1151
    %v1465 = vpack.c.b16 %v1154, %v1153
    %v1466 = vpack.c.b16 %v1156, %v1155
    %v1467 = vpack.c.b16 %v1158, %v1157
    %v1468 = vpack.c.b16 %v1160, %v1159
    %v1469 = vpack.c.b16 %v1162, %v1161
    %v1470 = vpack.c.b16 %v1164, %v1163
    %v1471 = vpack.c.b16 %v1166, %v1165
    %v1472 = vpack.c.b16 %v1168, %v1167
    %v1473 = vpack.c.b16 %v1170, %v1169
    %v1474 = vpack.c.b16 %v1172, %v1171
    %v1475 = vpack.c.b16 %v1174, %v1173
    %v1476 = vpack.c.b16 %v1176, %v1175
    %v1477 = vpack.c.b16 %v1178, %v1177
    %v1478 = vpack.c.b16 %v1180, %v1179
    %v1479 = vpack.c.b16 %v1182, %v1181
    %v1480 = vpack.c.b16 %v1184, %v1183
    %v1481 = vpack.c.b16 %v1186, %v1185
    %v1482 = vpack.c.b16 %v1188, %v1187
    %v1483 = vpack.c.b16 %v1190, %v1189
    %v1484 = vpack.c.b16 %v1192, %v1191
    %v1485 = vpack.c.b16 %v1194, %v1193
    %v1486 = vpack.c.b16 %v1196, %v1195
    %v1487 = vpack.c.b16 %v1198, %v1197
    %v1488 = vpack.c.b16 %v1200, %v1199
    %v1489 = vpack.c.b16 %v1202, %v1201
    %v1490 = vpack.c.b16 %v1204, %v1203
    %v1491 = vpack.c.b16 %v1206, %v1205
    %v1492 = vpack.c.b16 %v1208, %v1207
    %v1493 = vpack.c.b16 %v1210, %v1209
    %v1494 = vpack.c.b16 %v1212, %v1211
    %v1495 = vpack.c.b16 %v1214, %v1213
    %v1496 = vpack.c.b16 %v1216, %v1215
    %v1497 = vpack.c.b16 %v1218, %v1217
    %v1498 = vpack.c.b16 %v1220, %v1219
    %v1499 = vpack.c.b16 %v1222, %v1221
    %v1500 = vpack.c.b16 %v1224, %v1223
    %v1501 = vpack.c.b16 %v1226, %v1225
    %v1502 = vpack.c.b16 %v1228, %v1227
    %v1503 = vpack.c.b16 %v1230, %v1229
    %v1504 = vpack.c.b16 %v1232, %v1231
    %v1505 = vpack.c.b16 %v1234, %v1233
    %v1506 = vpack.c.b16 %v1236, %v1235
    %v1507 = vpack.c.b16 %v1238, %v1237
    %v1508 = vpack.c.b16 %v1240, %v1239
    %v1509 = vpack.c.b16 %v1242, %v1241
    %v1510 = vpack.c.b16 %v1244, %v1243
    %v1511 = vpack.c.b16 %v1246, %v1245
    %v1512 = vpack.c.b16 %v1248, %v1247
    %v1513 = vpack.c.b16 %v1250, %v1249
    %v1514 = vpack.c.b16 %v1252, %v1251
    %v1515 = vpack.c.b16 %v1254, %v1253
    %v1516 = vpack.c.b16 %v1256, %v1255
    %v1517 = vpack.c.b16 %v1258, %v1257
    %v1518 = vpack.c.b16 %v1260, %v1259
    %v1519 = vpack.c.b16 %v1262, %v1261
    %v1520 = vpack.c.b16 %v1264, %v1263
    %v1521 = vpack.c.b16 %v1266, %v1265
    %v1522 = vpack.c.b16 %v1268, %v1267
    %v1523 = vpack.c.b16 %v1270, %v1269
    %v1524 = vpack.c.b16 %v1272, %v1271
    %v1525 = vpack.c.b16 %v1274, %v1273
    %v1526 = vpack.c.b16 %v1276, %v1275
    %v1527 = vpack.c.b16 %v1278, %v1277
    %v1528 = vpack.c.b16 %v1280, %v1279
    %v1529 = vpack.c.b16 %v1282, %v1281
    %v1530 = vpack.c.b16 %v1284, %v1283
    %v1531 = vpack.c.b16 %v1286, %v1285
    %v1532 = vpack.c.b16 %v1288, %v1287
    %v1533 = vpack.c.b16 %v1290, %v1289
    %v1534 = vpack.c.b16 %v1292, %v1291
    %v1535 = vpack.c.b16 %v1294, %v1293
    %v1536 = vpack.c.b16 %v1296, %v1295
    %v1537 = vpack.c.b16 %v1298, %v1297
    %v1538 = vpack.c.b16 %v1300, %v1299
    %v1539 = vpack.c.b16 %v1302, %v1301
    %v1540 = vpack.c.b16 %v1304, %v1303
    %v1541 = vpack.c.b16 %v1306, %v1305
    %v1542 = vpack.c.b16 %v1308, %v1307
    %v1543 = vpack.c.b16 %v1310, %v1309
    %v1544 = vpack.c.b16 %v1312, %v1311
    %v1545 = vpack.c.b16 %v1314, %v1313
    %v1546 = vpack.c.b16 %v1316, %v1315
    %v1547 = vpack.c.b16 %v1318, %v1317
    %v1548 = vpack.c.b16 %v1320, %v1319
    %v1549 = vpack.c.b16 %v1322, %v1321
    %v1550 = vpack.c.b16 %v1324, %v1323
    %v1551 = vpack.c.b16 %v1326, %v1325
    %v1552 = vpack.c.b16 %v1328, %v1327
    %v1553 = vpack.c.b16 %v1330, %v1329
    %v1554 = vpack.c.b16 %v1332, %v1331
    %v1555 = vpack.c.b16 %v1334, %v1333
    %v1556 = vpack.c.b16 %v1336, %v1335
    %v1557 = vpack.c.b16 %v1338, %v1337
    %v1558 = vpack.c.b16 %v1340, %v1339
    %v1559 = vpack.c.b16 %v1342, %v1341
    %v1560 = vpack.c.b16 %v1344, %v1343
    %v1561 = vpack.c.b16 %v1346, %v1345
    %v1562 = vpack.c.b16 %v1348, %v1347
    %v1563 = vpack.c.b16 %v1350, %v1349
    %v1564 = vpack.c.b16 %v1352, %v1351
    %v1565 = vpack.c.b16 %v1354, %v1353
    %v1566 = vpack.c.b16 %v1356, %v1355
    %v1567 = vpack.c.b16 %v1358, %v1357
    %v1568 = vpack.c.b16 %v1360, %v1359
    %v1569 = vpack.c.b16 %v1362, %v1361
    %v1570 = vpack.c.b16 %v1364, %v1363
    %v1571 = vpack.c.b16 %v1366, %v1365
    %v1572 = vpack.c.b16 %v1368, %v1367
    %v1573 = vpack.c.b16 %v1370, %v1369
    %v1574 = vpack.c.b16 %v1372, %v1371
    %v1575 = vpack.c.b16 %v1374, %v1373
    %v1576 = vpack.c.b16 %v1376, %v1375
    %v1577 = vpack.c.b16 %v1378, %v1377
    %v1578 = vpack.c.b16 %v1380, %v1379
    %v1579 = vpack.c.b16 %v1382, %v1381
    %v1580 = vpack.c.b16 %v1384, %v1383
    %v1581 = vpack.c.b16 %v1386, %v1385
    %v1582 = vpack.c.b16 %v1388, %v1387
    %v1583 = vpack.c.b16 %v1390, %v1389
    %v1584 = vpack.c.b16 %v1392, %v1391
    %1777 = vmatprep.subr.bf16.mxu0 0
    %1778 = vmatpush1.bf16.msra.mxu0 %v1400
    %1779 = vmatprep.subr.bf16.mxu0 0
    %1780 = vmatpush1.bf16.msra.mxu0 %v1399
    %1781 = vmatprep.subr.bf16.mxu0 0
    %1782 = vmatpush1.bf16.msra.mxu0 %v1398
    %1783 = vmatprep.subr.bf16.mxu0 0
    %1784 = vmatpush1.bf16.msra.mxu0 %v1397
    %1785 = vmatprep.subr.bf16.mxu0 0
    %1786 = vmatpush1.bf16.msra.mxu0 %v1396
    %1787 = vmatprep.subr.bf16.mxu0 0
    %1788 = vmatpush1.bf16.msra.mxu0 %v1395
    %1789 = vmatprep.subr.bf16.mxu0 0
    %1790 = vmatpush1.bf16.msra.mxu0 %v1394
    %1791 = vmatprep.subr.bf16.mxu0 0
    %1792 = vmatpush1.bf16.msra.mxu0 %v1393
    %1793 = vmatprep.subr.bf16.mxu0 0
    %1794 = vmatpush2.bf16.msra.mxu0 %v1408
    %1795 = vmatprep.subr.bf16.mxu0 0
    %1796 = vmatpush2.bf16.msra.mxu0 %v1407
    %1797 = vmatprep.subr.bf16.mxu0 0
    %1798 = vmatpush2.bf16.msra.mxu0 %v1406
    %1799 = vmatprep.subr.bf16.mxu0 0
    %1800 = vmatpush2.bf16.msra.mxu0 %v1405
    %1801 = vmatprep.subr.bf16.mxu0 0
    %1802 = vmatpush2.bf16.msra.mxu0 %v1404
    %1803 = vmatprep.subr.bf16.mxu0 0
    %1804 = vmatpush2.bf16.msra.mxu0 %v1403
    %1805 = vmatprep.subr.bf16.mxu0 0
    %1806 = vmatpush2.bf16.msra.mxu0 %v1402
    %1807 = vmatprep.subr.bf16.mxu0 0
    %1808 = vmatpush2.bf16.msra.mxu0 %v1401
    %1809 = vmatprep.mubr.bf16.mxu0 %v578
    %1810 = vmatmul.mubr.bf16.gmra.mxu0 %v577
    %v1811 = vpop.f32.mrf.mxu0
    %v1812 = vadd.f32 %v503, %v1811
    %v1813 = vpop.f32.mrf.mxu0
    %v1814 = vpop.f32.mrf.mxu0
    %v1815 = vadd.f32 %v504, %v1814
    %v1816 = vpop.f32.mrf.mxu0
    %1817 = vdwg.mxu0
    %1818 = vmatprep.subr.bf16.mxu0 0
    %1819 = vmatpush1.bf16.msra.mxu0 %v1416
    %1820 = vmatprep.subr.bf16.mxu0 0
    %1821 = vmatpush1.bf16.msra.mxu0 %v1415
    %1822 = vmatprep.subr.bf16.mxu0 0
    %1823 = vmatpush1.bf16.msra.mxu0 %v1414
    %1824 = vmatprep.subr.bf16.mxu0 0
    %1825 = vmatpush1.bf16.msra.mxu0 %v1413
    %1826 = vmatprep.subr.bf16.mxu0 0
    %1827 = vmatpush1.bf16.msra.mxu0 %v1412
    %1828 = vmatprep.subr.bf16.mxu0 0
    %1829 = vmatpush1.bf16.msra.mxu0 %v1411
    %1830 = vmatprep.subr.bf16.mxu0 0
    %1831 = vmatpush1.bf16.msra.mxu0 %v1410
    %1832 = vmatprep.subr.bf16.mxu0 0
    %1833 = vmatpush1.bf16.msra.mxu0 %v1409
    %1834 = vmatprep.subr.bf16.mxu0 0
    %1835 = vmatpush2.bf16.msra.mxu0 %v1424
    %1836 = vmatprep.subr.bf16.mxu0 0
    %1837 = vmatpush2.bf16.msra.mxu0 %v1423
    %1838 = vmatprep.subr.bf16.mxu0 0
    %1839 = vmatpush2.bf16.msra.mxu0 %v1422
    %1840 = vmatprep.subr.bf16.mxu0 0
    %1841 = vmatpush2.bf16.msra.mxu0 %v1421
    %1842 = vmatprep.subr.bf16.mxu0 0
    %1843 = vmatpush2.bf16.msra.mxu0 %v1420
    %1844 = vmatprep.subr.bf16.mxu0 0
    %1845 = vmatpush2.bf16.msra.mxu0 %v1419
    %1846 = vmatprep.subr.bf16.mxu0 0
    %1847 = vmatpush2.bf16.msra.mxu0 %v1418
    %1848 = vmatprep.subr.bf16.mxu0 0
    %1849 = vmatpush2.bf16.msra.mxu0 %v1417
    %1850 = vmatprep.mubr.bf16.mxu0 %v580
    %1851 = vmatmul.mubr.bf16.gmra.mxu0 %v579
    %v1852 = vpop.f32.mrf.mxu0
    %v1853 = vadd.f32 %v1812, %v1852
    %v1854 = vpop.f32.mrf.mxu0
    %v1855 = vpop.f32.mrf.mxu0
    %v1856 = vadd.f32 %v1815, %v1855
    %v1857 = vpop.f32.mrf.mxu0
    %1858 = vdwg.mxu0
    %1859 = vmatprep.subr.bf16.mxu0 0
    %1860 = vmatpush1.bf16.msra.mxu0 %v1432
    %1861 = vmatprep.subr.bf16.mxu0 0
    %1862 = vmatpush1.bf16.msra.mxu0 %v1431
    %1863 = vmatprep.subr.bf16.mxu0 0
    %1864 = vmatpush1.bf16.msra.mxu0 %v1430
    %1865 = vmatprep.subr.bf16.mxu0 0
    %1866 = vmatpush1.bf16.msra.mxu0 %v1429
    %1867 = vmatprep.subr.bf16.mxu0 0
    %1868 = vmatpush1.bf16.msra.mxu0 %v1428
    %1869 = vmatprep.subr.bf16.mxu0 0
    %1870 = vmatpush1.bf16.msra.mxu0 %v1427
    %1871 = vmatprep.subr.bf16.mxu0 0
    %1872 = vmatpush1.bf16.msra.mxu0 %v1426
    %1873 = vmatprep.subr.bf16.mxu0 0
    %1874 = vmatpush1.bf16.msra.mxu0 %v1425
    %1875 = vmatprep.subr.bf16.mxu0 0
    %1876 = vmatpush2.bf16.msra.mxu0 %v1440
    %1877 = vmatprep.subr.bf16.mxu0 0
    %1878 = vmatpush2.bf16.msra.mxu0 %v1439
    %1879 = vmatprep.subr.bf16.mxu0 0
    %1880 = vmatpush2.bf16.msra.mxu0 %v1438
    %1881 = vmatprep.subr.bf16.mxu0 0
    %1882 = vmatpush2.bf16.msra.mxu0 %v1437
    %1883 = vmatprep.subr.bf16.mxu0 0
    %1884 = vmatpush2.bf16.msra.mxu0 %v1436
    %1885 = vmatprep.subr.bf16.mxu0 0
    %1886 = vmatpush2.bf16.msra.mxu0 %v1435
    %1887 = vmatprep.subr.bf16.mxu0 0
    %1888 = vmatpush2.bf16.msra.mxu0 %v1434
    %1889 = vmatprep.subr.bf16.mxu0 0
    %1890 = vmatpush2.bf16.msra.mxu0 %v1433
    %1891 = vmatprep.mubr.bf16.mxu0 %v582
    %1892 = vmatmul.mubr.bf16.gmra.mxu0 %v581
    %v1893 = vpop.f32.mrf.mxu0
    %v1894 = vadd.f32 %v1853, %v1893
    %v1895 = vpop.f32.mrf.mxu0
    %v1896 = vpop.f32.mrf.mxu0
    %v1897 = vadd.f32 %v1856, %v1896
    %v1898 = vpop.f32.mrf.mxu0
    %1899 = vdwg.mxu0
    %1900 = vmatprep.subr.bf16.mxu0 0
    %1901 = vmatpush1.bf16.msra.mxu0 %v1448
    %1902 = vmatprep.subr.bf16.mxu0 0
    %1903 = vmatpush1.bf16.msra.mxu0 %v1447
    %1904 = vmatprep.subr.bf16.mxu0 0
    %1905 = vmatpush1.bf16.msra.mxu0 %v1446
    %1906 = vmatprep.subr.bf16.mxu0 0
    %1907 = vmatpush1.bf16.msra.mxu0 %v1445
    %1908 = vmatprep.subr.bf16.mxu0 0
    %1909 = vmatpush1.bf16.msra.mxu0 %v1444
    %1910 = vmatprep.subr.bf16.mxu0 0
    %1911 = vmatpush1.bf16.msra.mxu0 %v1443
    %1912 = vmatprep.subr.bf16.mxu0 0
    %1913 = vmatpush1.bf16.msra.mxu0 %v1442
    %1914 = vmatprep.subr.bf16.mxu0 0
    %1915 = vmatpush1.bf16.msra.mxu0 %v1441
    %1916 = vmatprep.subr.bf16.mxu0 0
    %1917 = vmatpush2.bf16.msra.mxu0 %v1456
    %1918 = vmatprep.subr.bf16.mxu0 0
    %1919 = vmatpush2.bf16.msra.mxu0 %v1455
    %1920 = vmatprep.subr.bf16.mxu0 0
    %1921 = vmatpush2.bf16.msra.mxu0 %v1454
    %1922 = vmatprep.subr.bf16.mxu0 0
    %1923 = vmatpush2.bf16.msra.mxu0 %v1453
    %1924 = vmatprep.subr.bf16.mxu0 0
    %1925 = vmatpush2.bf16.msra.mxu0 %v1452
    %1926 = vmatprep.subr.bf16.mxu0 0
    %1927 = vmatpush2.bf16.msra.mxu0 %v1451
    %1928 = vmatprep.subr.bf16.mxu0 0
    %1929 = vmatpush2.bf16.msra.mxu0 %v1450
    %1930 = vmatprep.subr.bf16.mxu0 0
    %1931 = vmatpush2.bf16.msra.mxu0 %v1449
    %1932 = vmatprep.mubr.bf16.mxu0 %v584
    %1933 = vmatmul.mubr.bf16.gmra.mxu0 %v583
    %v1934 = vpop.f32.mrf.mxu0
    %v1935 = vadd.f32 %v1894, %v1934
    %v1936 = vpop.f32.mrf.mxu0
    %v1937 = vpop.f32.mrf.mxu0
    %v1938 = vadd.f32 %v1897, %v1937
    %v1939 = vpop.f32.mrf.mxu0
    %1940 = vdwg.mxu0
    %1941 = vmatprep.subr.bf16.mxu0 0
    %1942 = vmatpush1.bf16.msra.mxu0 %v1464
    %1943 = vmatprep.subr.bf16.mxu0 0
    %1944 = vmatpush1.bf16.msra.mxu0 %v1463
    %1945 = vmatprep.subr.bf16.mxu0 0
    %1946 = vmatpush1.bf16.msra.mxu0 %v1462
    %1947 = vmatprep.subr.bf16.mxu0 0
    %1948 = vmatpush1.bf16.msra.mxu0 %v1461
    %1949 = vmatprep.subr.bf16.mxu0 0
    %1950 = vmatpush1.bf16.msra.mxu0 %v1460
    %1951 = vmatprep.subr.bf16.mxu0 0
    %1952 = vmatpush1.bf16.msra.mxu0 %v1459
    %1953 = vmatprep.subr.bf16.mxu0 0
    %1954 = vmatpush1.bf16.msra.mxu0 %v1458
    %1955 = vmatprep.subr.bf16.mxu0 0
    %1956 = vmatpush1.bf16.msra.mxu0 %v1457
    %1957 = vmatprep.subr.bf16.mxu0 0
    %1958 = vmatpush2.bf16.msra.mxu0 %v1472
    %1959 = vmatprep.subr.bf16.mxu0 0
    %1960 = vmatpush2.bf16.msra.mxu0 %v1471
    %1961 = vmatprep.subr.bf16.mxu0 0
    %1962 = vmatpush2.bf16.msra.mxu0 %v1470
    %1963 = vmatprep.subr.bf16.mxu0 0
    %1964 = vmatpush2.bf16.msra.mxu0 %v1469
    %1965 = vmatprep.subr.bf16.mxu0 0
    %1966 = vmatpush2.bf16.msra.mxu0 %v1468
    %1967 = vmatprep.subr.bf16.mxu0 0
    %1968 = vmatpush2.bf16.msra.mxu0 %v1467
    %1969 = vmatprep.subr.bf16.mxu0 0
    %1970 = vmatpush2.bf16.msra.mxu0 %v1466
    %1971 = vmatprep.subr.bf16.mxu0 0
    %1972 = vmatpush2.bf16.msra.mxu0 %v1465
    %1973 = vmatprep.mubr.bf16.mxu0 %v586
    %1974 = vmatmul.mubr.bf16.gmra.mxu0 %v585
    %v1975 = vpop.f32.mrf.mxu0
    %v1976 = vadd.f32 %v1935, %v1975
    %v1977 = vpop.f32.mrf.mxu0
    %v1978 = vpop.f32.mrf.mxu0
    %v1979 = vadd.f32 %v1938, %v1978
    %v1980 = vpop.f32.mrf.mxu0
    %1981 = vdwg.mxu0
    %1982 = vmatprep.subr.bf16.mxu0 0
    %1983 = vmatpush1.bf16.msra.mxu0 %v1480
    %1984 = vmatprep.subr.bf16.mxu0 0
    %1985 = vmatpush1.bf16.msra.mxu0 %v1479
    %1986 = vmatprep.subr.bf16.mxu0 0
    %1987 = vmatpush1.bf16.msra.mxu0 %v1478
    %1988 = vmatprep.subr.bf16.mxu0 0
    %1989 = vmatpush1.bf16.msra.mxu0 %v1477
    %1990 = vmatprep.subr.bf16.mxu0 0
    %1991 = vmatpush1.bf16.msra.mxu0 %v1476
    %1992 = vmatprep.subr.bf16.mxu0 0
    %1993 = vmatpush1.bf16.msra.mxu0 %v1475
    %1994 = vmatprep.subr.bf16.mxu0 0
    %1995 = vmatpush1.bf16.msra.mxu0 %v1474
    %1996 = vmatprep.subr.bf16.mxu0 0
    %1997 = vmatpush1.bf16.msra.mxu0 %v1473
    %1998 = vmatprep.subr.bf16.mxu0 0
    %1999 = vmatpush2.bf16.msra.mxu0 %v1488
    %2000 = vmatprep.subr.bf16.mxu0 0
    %2001 = vmatpush2.bf16.msra.mxu0 %v1487
    %2002 = vmatprep.subr.bf16.mxu0 0
    %2003 = vmatpush2.bf16.msra.mxu0 %v1486
    %2004 = vmatprep.subr.bf16.mxu0 0
    %2005 = vmatpush2.bf16.msra.mxu0 %v1485
    %2006 = vmatprep.subr.bf16.mxu0 0
    %2007 = vmatpush2.bf16.msra.mxu0 %v1484
    %2008 = vmatprep.subr.bf16.mxu0 0
    %2009 = vmatpush2.bf16.msra.mxu0 %v1483
    %2010 = vmatprep.subr.bf16.mxu0 0
    %2011 = vmatpush2.bf16.msra.mxu0 %v1482
    %2012 = vmatprep.subr.bf16.mxu0 0
    %2013 = vmatpush2.bf16.msra.mxu0 %v1481
    %2014 = vmatprep.mubr.bf16.mxu0 %v588
    %2015 = vmatmul.mubr.bf16.gmra.mxu0 %v587
    %v2016 = vpop.f32.mrf.mxu0
    %v2017 = vadd.f32 %v1976, %v2016
    %v2018 = vpop.f32.mrf.mxu0
    %v2019 = vpop.f32.mrf.mxu0
    %v2020 = vadd.f32 %v1979, %v2019
    %v2021 = vpop.f32.mrf.mxu0
    %2022 = vdwg.mxu0
    %2023 = vmatprep.subr.bf16.mxu0 0
    %2024 = vmatpush1.bf16.msra.mxu0 %v1496
    %2025 = vmatprep.subr.bf16.mxu0 0
    %2026 = vmatpush1.bf16.msra.mxu0 %v1495
    %2027 = vmatprep.subr.bf16.mxu0 0
    %2028 = vmatpush1.bf16.msra.mxu0 %v1494
    %2029 = vmatprep.subr.bf16.mxu0 0
    %2030 = vmatpush1.bf16.msra.mxu0 %v1493
    %2031 = vmatprep.subr.bf16.mxu0 0
    %2032 = vmatpush1.bf16.msra.mxu0 %v1492
    %2033 = vmatprep.subr.bf16.mxu0 0
    %2034 = vmatpush1.bf16.msra.mxu0 %v1491
    %2035 = vmatprep.subr.bf16.mxu0 0
    %2036 = vmatpush1.bf16.msra.mxu0 %v1490
    %2037 = vmatprep.subr.bf16.mxu0 0
    %2038 = vmatpush1.bf16.msra.mxu0 %v1489
    %2039 = vmatprep.subr.bf16.mxu0 0
    %2040 = vmatpush2.bf16.msra.mxu0 %v1504
    %2041 = vmatprep.subr.bf16.mxu0 0
    %2042 = vmatpush2.bf16.msra.mxu0 %v1503
    %2043 = vmatprep.subr.bf16.mxu0 0
    %2044 = vmatpush2.bf16.msra.mxu0 %v1502
    %2045 = vmatprep.subr.bf16.mxu0 0
    %2046 = vmatpush2.bf16.msra.mxu0 %v1501
    %2047 = vmatprep.subr.bf16.mxu0 0
    %2048 = vmatpush2.bf16.msra.mxu0 %v1500
    %2049 = vmatprep.subr.bf16.mxu0 0
    %2050 = vmatpush2.bf16.msra.mxu0 %v1499
    %2051 = vmatprep.subr.bf16.mxu0 0
    %2052 = vmatpush2.bf16.msra.mxu0 %v1498
    %2053 = vmatprep.subr.bf16.mxu0 0
    %2054 = vmatpush2.bf16.msra.mxu0 %v1497
    %2055 = vmatprep.mubr.bf16.mxu0 %v590
    %2056 = vmatmul.mubr.bf16.gmra.mxu0 %v589
    %v2057 = vpop.f32.mrf.mxu0
    %v2058 = vadd.f32 %v2017, %v2057
    %v2059 = vpop.f32.mrf.mxu0
    %v2060 = vpop.f32.mrf.mxu0
    %v2061 = vadd.f32 %v2020, %v2060
    %v2062 = vpop.f32.mrf.mxu0
    %2063 = vdwg.mxu0
    %2064 = vmatprep.subr.bf16.mxu0 0
    %2065 = vmatpush1.bf16.msra.mxu0 %v1512
    %2066 = vmatprep.subr.bf16.mxu0 0
    %2067 = vmatpush1.bf16.msra.mxu0 %v1511
    %2068 = vmatprep.subr.bf16.mxu0 0
    %2069 = vmatpush1.bf16.msra.mxu0 %v1510
    %2070 = vmatprep.subr.bf16.mxu0 0
    %2071 = vmatpush1.bf16.msra.mxu0 %v1509
    %2072 = vmatprep.subr.bf16.mxu0 0
    %2073 = vmatpush1.bf16.msra.mxu0 %v1508
    %2074 = vmatprep.subr.bf16.mxu0 0
    %2075 = vmatpush1.bf16.msra.mxu0 %v1507
    %2076 = vmatprep.subr.bf16.mxu0 0
    %2077 = vmatpush1.bf16.msra.mxu0 %v1506
    %2078 = vmatprep.subr.bf16.mxu0 0
    %2079 = vmatpush1.bf16.msra.mxu0 %v1505
    %2080 = vmatprep.subr.bf16.mxu0 0
    %2081 = vmatpush2.bf16.msra.mxu0 %v1520
    %2082 = vmatprep.subr.bf16.mxu0 0
    %2083 = vmatpush2.bf16.msra.mxu0 %v1519
    %2084 = vmatprep.subr.bf16.mxu0 0
    %2085 = vmatpush2.bf16.msra.mxu0 %v1518
    %2086 = vmatprep.subr.bf16.mxu0 0
    %2087 = vmatpush2.bf16.msra.mxu0 %v1517
    %2088 = vmatprep.subr.bf16.mxu0 0
    %2089 = vmatpush2.bf16.msra.mxu0 %v1516
    %2090 = vmatprep.subr.bf16.mxu0 0
    %2091 = vmatpush2.bf16.msra.mxu0 %v1515
    %2092 = vmatprep.subr.bf16.mxu0 0
    %2093 = vmatpush2.bf16.msra.mxu0 %v1514
    %2094 = vmatprep.subr.bf16.mxu0 0
    %2095 = vmatpush2.bf16.msra.mxu0 %v1513
    %2096 = vmatprep.mubr.bf16.mxu0 %v592
    %2097 = vmatmul.mubr.bf16.gmra.mxu0 %v591
    %v2098 = vpop.f32.mrf.mxu0
    %v2099 = vadd.f32 %v2058, %v2098
    %v2100 = vpop.f32.mrf.mxu0
    %v2101 = vpop.f32.mrf.mxu0
    %v2102 = vadd.f32 %v2061, %v2101
    %v2103 = vpop.f32.mrf.mxu0
    %2104 = vdwg.mxu0
    %2105 = vmatprep.subr.bf16.mxu0 0
    %2106 = vmatpush1.bf16.msra.mxu0 %v1528
    %2107 = vmatprep.subr.bf16.mxu0 0
    %2108 = vmatpush1.bf16.msra.mxu0 %v1527
    %2109 = vmatprep.subr.bf16.mxu0 0
    %2110 = vmatpush1.bf16.msra.mxu0 %v1526
    %2111 = vmatprep.subr.bf16.mxu0 0
    %2112 = vmatpush1.bf16.msra.mxu0 %v1525
    %2113 = vmatprep.subr.bf16.mxu0 0
    %2114 = vmatpush1.bf16.msra.mxu0 %v1524
    %2115 = vmatprep.subr.bf16.mxu0 0
    %2116 = vmatpush1.bf16.msra.mxu0 %v1523
    %2117 = vmatprep.subr.bf16.mxu0 0
    %2118 = vmatpush1.bf16.msra.mxu0 %v1522
    %2119 = vmatprep.subr.bf16.mxu0 0
    %2120 = vmatpush1.bf16.msra.mxu0 %v1521
    %2121 = vmatprep.subr.bf16.mxu0 0
    %2122 = vmatpush2.bf16.msra.mxu0 %v1536
    %2123 = vmatprep.subr.bf16.mxu0 0
    %2124 = vmatpush2.bf16.msra.mxu0 %v1535
    %2125 = vmatprep.subr.bf16.mxu0 0
    %2126 = vmatpush2.bf16.msra.mxu0 %v1534
    %2127 = vmatprep.subr.bf16.mxu0 0
    %2128 = vmatpush2.bf16.msra.mxu0 %v1533
    %2129 = vmatprep.subr.bf16.mxu0 0
    %2130 = vmatpush2.bf16.msra.mxu0 %v1532
    %2131 = vmatprep.subr.bf16.mxu0 0
    %2132 = vmatpush2.bf16.msra.mxu0 %v1531
    %2133 = vmatprep.subr.bf16.mxu0 0
    %2134 = vmatpush2.bf16.msra.mxu0 %v1530
    %2135 = vmatprep.subr.bf16.mxu0 0
    %2136 = vmatpush2.bf16.msra.mxu0 %v1529
    %2137 = vmatprep.mubr.bf16.mxu0 %v594
    %2138 = vmatmul.mubr.bf16.gmra.mxu0 %v593
    %v2139 = vpop.f32.mrf.mxu0
    %v2140 = vadd.f32 %v2099, %v2139
    %v2141 = vpop.f32.mrf.mxu0
    %v2142 = vpop.f32.mrf.mxu0
    %v2143 = vadd.f32 %v2102, %v2142
    %v2144 = vpop.f32.mrf.mxu0
    %2145 = vdwg.mxu0
    %2146 = vmatprep.subr.bf16.mxu0 0
    %2147 = vmatpush1.bf16.msra.mxu0 %v1544
    %2148 = vmatprep.subr.bf16.mxu0 0
    %2149 = vmatpush1.bf16.msra.mxu0 %v1543
    %2150 = vmatprep.subr.bf16.mxu0 0
    %2151 = vmatpush1.bf16.msra.mxu0 %v1542
    %2152 = vmatprep.subr.bf16.mxu0 0
    %2153 = vmatpush1.bf16.msra.mxu0 %v1541
    %2154 = vmatprep.subr.bf16.mxu0 0
    %2155 = vmatpush1.bf16.msra.mxu0 %v1540
    %2156 = vmatprep.subr.bf16.mxu0 0
    %2157 = vmatpush1.bf16.msra.mxu0 %v1539
    %2158 = vmatprep.subr.bf16.mxu0 0
    %2159 = vmatpush1.bf16.msra.mxu0 %v1538
    %2160 = vmatprep.subr.bf16.mxu0 0
    %2161 = vmatpush1.bf16.msra.mxu0 %v1537
    %2162 = vmatprep.subr.bf16.mxu0 0
    %2163 = vmatpush2.bf16.msra.mxu0 %v1552
    %2164 = vmatprep.subr.bf16.mxu0 0
    %2165 = vmatpush2.bf16.msra.mxu0 %v1551
    %2166 = vmatprep.subr.bf16.mxu0 0
    %2167 = vmatpush2.bf16.msra.mxu0 %v1550
    %2168 = vmatprep.subr.bf16.mxu0 0
    %2169 = vmatpush2.bf16.msra.mxu0 %v1549
    %2170 = vmatprep.subr.bf16.mxu0 0
    %2171 = vmatpush2.bf16.msra.mxu0 %v1548
    %2172 = vmatprep.subr.bf16.mxu0 0
    %2173 = vmatpush2.bf16.msra.mxu0 %v1547
    %2174 = vmatprep.subr.bf16.mxu0 0
    %2175 = vmatpush2.bf16.msra.mxu0 %v1546
    %2176 = vmatprep.subr.bf16.mxu0 0
    %2177 = vmatpush2.bf16.msra.mxu0 %v1545
    %2178 = vmatprep.mubr.bf16.mxu0 %v596
    %2179 = vmatmul.mubr.bf16.gmra.mxu0 %v595
    %v2180 = vpop.f32.mrf.mxu0
    %v2181 = vadd.f32 %v2140, %v2180
    %v2182 = vpop.f32.mrf.mxu0
    %v2183 = vpop.f32.mrf.mxu0
    %v2184 = vadd.f32 %v2143, %v2183
    %v2185 = vpop.f32.mrf.mxu0
    %2186 = vdwg.mxu0
    %2187 = vmatprep.subr.bf16.mxu0 0
    %2188 = vmatpush1.bf16.msra.mxu0 %v1560
    %2189 = vmatprep.subr.bf16.mxu0 0
    %2190 = vmatpush1.bf16.msra.mxu0 %v1559
    %2191 = vmatprep.subr.bf16.mxu0 0
    %2192 = vmatpush1.bf16.msra.mxu0 %v1558
    %2193 = vmatprep.subr.bf16.mxu0 0
    %2194 = vmatpush1.bf16.msra.mxu0 %v1557
    %2195 = vmatprep.subr.bf16.mxu0 0
    %2196 = vmatpush1.bf16.msra.mxu0 %v1556
    %2197 = vmatprep.subr.bf16.mxu0 0
    %2198 = vmatpush1.bf16.msra.mxu0 %v1555
    %2199 = vmatprep.subr.bf16.mxu0 0
    %2200 = vmatpush1.bf16.msra.mxu0 %v1554
    %2201 = vmatprep.subr.bf16.mxu0 0
    %2202 = vmatpush1.bf16.msra.mxu0 %v1553
    %2203 = vmatprep.subr.bf16.mxu0 0
    %2204 = vmatpush2.bf16.msra.mxu0 %v1568
    %2205 = vmatprep.subr.bf16.mxu0 0
    %2206 = vmatpush2.bf16.msra.mxu0 %v1567
    %2207 = vmatprep.subr.bf16.mxu0 0
    %2208 = vmatpush2.bf16.msra.mxu0 %v1566
    %2209 = vmatprep.subr.bf16.mxu0 0
    %2210 = vmatpush2.bf16.msra.mxu0 %v1565
    %2211 = vmatprep.subr.bf16.mxu0 0
    %2212 = vmatpush2.bf16.msra.mxu0 %v1564
    %2213 = vmatprep.subr.bf16.mxu0 0
    %2214 = vmatpush2.bf16.msra.mxu0 %v1563
    %2215 = vmatprep.subr.bf16.mxu0 0
    %2216 = vmatpush2.bf16.msra.mxu0 %v1562
    %2217 = vmatprep.subr.bf16.mxu0 0
    %2218 = vmatpush2.bf16.msra.mxu0 %v1561
    %2219 = vmatprep.mubr.bf16.mxu0 %v598
    %2220 = vmatmul.mubr.bf16.gmra.mxu0 %v597
    %v2221 = vpop.f32.mrf.mxu0
    %v2222 = vadd.f32 %v2181, %v2221
    %v2223 = vpop.f32.mrf.mxu0
    %v2224 = vpop.f32.mrf.mxu0
    %v2225 = vadd.f32 %v2184, %v2224
    %v2226 = vpop.f32.mrf.mxu0
    %2227 = vdwg.mxu0
    %2228 = vmatprep.subr.bf16.mxu0 0
    %2229 = vmatpush1.bf16.msra.mxu0 %v1576
    %2230 = vmatprep.subr.bf16.mxu0 0
    %2231 = vmatpush1.bf16.msra.mxu0 %v1575
    %2232 = vmatprep.subr.bf16.mxu0 0
    %2233 = vmatpush1.bf16.msra.mxu0 %v1574
    %2234 = vmatprep.subr.bf16.mxu0 0
    %2235 = vmatpush1.bf16.msra.mxu0 %v1573
    %2236 = vmatprep.subr.bf16.mxu0 0
    %2237 = vmatpush1.bf16.msra.mxu0 %v1572
    %2238 = vmatprep.subr.bf16.mxu0 0
    %2239 = vmatpush1.bf16.msra.mxu0 %v1571
    %2240 = vmatprep.subr.bf16.mxu0 0
    %2241 = vmatpush1.bf16.msra.mxu0 %v1570
    %2242 = vmatprep.subr.bf16.mxu0 0
    %2243 = vmatpush1.bf16.msra.mxu0 %v1569
    %2244 = vmatprep.subr.bf16.mxu0 0
    %2245 = vmatpush2.bf16.msra.mxu0 %v1584
    %2246 = vmatprep.subr.bf16.mxu0 0
    %2247 = vmatpush2.bf16.msra.mxu0 %v1583
    %2248 = vmatprep.subr.bf16.mxu0 0
    %2249 = vmatpush2.bf16.msra.mxu0 %v1582
    %2250 = vmatprep.subr.bf16.mxu0 0
    %2251 = vmatpush2.bf16.msra.mxu0 %v1581
    %2252 = vmatprep.subr.bf16.mxu0 0
    %2253 = vmatpush2.bf16.msra.mxu0 %v1580
    %2254 = vmatprep.subr.bf16.mxu0 0
    %2255 = vmatpush2.bf16.msra.mxu0 %v1579
    %2256 = vmatprep.subr.bf16.mxu0 0
    %2257 = vmatpush2.bf16.msra.mxu0 %v1578
    %2258 = vmatprep.subr.bf16.mxu0 0
    %2259 = vmatpush2.bf16.msra.mxu0 %v1577
    %2260 = vmatprep.mubr.bf16.mxu0 %v600
    %2261 = vmatmul.mubr.bf16.gmra.mxu0 %v599
    %v2262 = vpop.f32.mrf.mxu0
    %v2263 = vadd.f32 %v2222, %v2262
    %v2264 = vpop.f32.mrf.mxu0
    %v2265 = vpop.f32.mrf.mxu0
    %v2266 = vadd.f32 %v2225, %v2265
    %v2267 = vpop.f32.mrf.mxu0
    %2268 = vdwg.mxu0
    %v2269 = vld [vmem:[#allocation7 + $0x3] sm:$0x1]
    %v2270 = vld [vmem:[#allocation7 + $0x4] sm:$0x1]
    %2271 = vadd.xlane.f32.xlu0 %v2263
    %v2272 = vpop.xlane.xlu0 %2271
    %2273 = vadd.xlane.f32.xlu0 %v2266
    %v2274 = vpop.xlane.xlu0 %2273
    %v2275 = vrcp.pop 128.0
    %v2276 = vmul.f32 %v2272, %v2275
    %v2277 = vmul.f32 %v2274, %v2275
    %v2278 = vsub.f32 %v2263, %v2276
    %v2279 = vsub.f32 %v2266, %v2277
    %v2280 = vmul.f32 %v2278, %v2278
    %v2281 = vmul.f32 %v2279, %v2279
    %2282 = vadd.xlane.f32.xlu0 %v2280
    %v2283 = vpop.xlane.xlu0 %2282
    %2284 = vadd.xlane.f32.xlu0 %v2281
    %v2285 = vpop.xlane.xlu0 %2284
    %v2286 = vmul.f32 %v2283, %v2275
    %v2287 = vmul.f32 %v2285, %v2275
    %v2288 = vadd.f32 %v2286, 1e-06
    %v2289 = vadd.f32 %v2287, 1e-06
    %v2290 = vrsqrt.pop %v2288
    %v2291 = vrsqrt.pop %v2289
    %v2292 = vmul.f32 %v2278, %v2290
    %v2293 = vmul.f32 %v2279, %v2291
    %v2294 = vlaneseq
    %v2295 = vshrl.u32 %v2294, 7
    %v2296 = vsub.s32 0, %v2295
    %v2297 = vrot.slane %v2269, %v2296
    %v2298 = vmul.f32 %v2292, %v2297
    %v2299 = vmul.f32 %v2293, %v2297
    %v2300 = vlaneseq
    %v2301 = vshrl.u32 %v2300, 7
    %v2302 = vsub.s32 0, %v2301
    %v2303 = vrot.slane %v2270, %v2302
    %v2304 = vadd.f32 %v2298, %v2303
    %v2305 = vadd.f32 %v2299, %v2303
    %v2306 = vpack.c.bf16 %v2305, %v2304
    %v2307 = vld [vmem:[#allocation4] sm:$0xff]
    %v2308 = vld [vmem:[#allocation4 + $0x8] sm:$0xf]
    %v2309 = vld [vmem:[#allocation4 + $0xc] sm:$0xff]
    %v2310 = vld [vmem:[#allocation4 + $0x14] sm:$0xf]
    %v2311 = vld [vmem:[#allocation4 + $0x18] sm:$0xff]
    %v2312 = vld [vmem:[#allocation4 + $0x20] sm:$0xf]
    %v2313 = vld [vmem:[#allocation4 + $0x24] sm:$0xff]
    %v2314 = vld [vmem:[#allocation4 + $0x2c] sm:$0xf]
    %v2315 = vld [vmem:[#allocation4 + $0x30] sm:$0xff]
    %v2316 = vld [vmem:[#allocation4 + $0x38] sm:$0xf]
    %v2317 = vld [vmem:[#allocation4 + $0x3c] sm:$0xff]
    %v2318 = vld [vmem:[#allocation4 + $0x44] sm:$0xf]
    %v2319 = vld [vmem:[#allocation4 + $0x48] sm:$0xff]
    %v2320 = vld [vmem:[#allocation4 + $0x50] sm:$0xf]
    %v2321 = vld [vmem:[#allocation4 + $0x54] sm:$0xff]
    %v2322 = vld [vmem:[#allocation4 + $0x5c] sm:$0xf]
    %v2323 = vld [vmem:[#allocation4 + $0x60] sm:$0xff]
    %v2324 = vld [vmem:[#allocation4 + $0x68] sm:$0xf]
    %v2325 = vld [vmem:[#allocation4 + $0x6c] sm:$0xff]
    %v2326 = vld [vmem:[#allocation4 + $0x74] sm:$0xf]
    %v2327 = vld [vmem:[#allocation4 + $0x78] sm:$0xff]
    %v2328 = vld [vmem:[#allocation4 + $0x80] sm:$0xf]
    %v2329 = vld [vmem:[#allocation4 + $0x84] sm:$0xff]
    %v2330 = vld [vmem:[#allocation4 + $0x8c] sm:$0xf]
    %v2331 = vld [vmem:[#allocation4 + $0x90] sm:$0xff]
    %v2332 = vld [vmem:[#allocation4 + $0x98] sm:$0xf]
    %v2333 = vld [vmem:[#allocation4 + $0x9c] sm:$0xff]
    %v2334 = vld [vmem:[#allocation4 + $0xa4] sm:$0xf]
    %v2335 = vld [vmem:[#allocation4 + $0xa8] sm:$0xff]
    %v2336 = vld [vmem:[#allocation4 + $0xb0] sm:$0xf]
    %v2337 = vld [vmem:[#allocation4 + $0xb4] sm:$0xff]
    %v2338 = vld [vmem:[#allocation4 + $0xbc] sm:$0xf]
    %v2371 = vunpack.c.l.b16 %v2307
    %v2372 = vunpack.c.h.b16 %v2307
    %v2373 = vunpack.c.l.b16 %v2308
    %v2374 = vunpack.c.l.b16 %v2309
    %v2375 = vunpack.c.h.b16 %v2309
    %v2376 = vunpack.c.l.b16 %v2310
    %v2377 = vunpack.c.l.b16 %v2311
    %v2378 = vunpack.c.h.b16 %v2311
    %v2379 = vunpack.c.l.b16 %v2312
    %v2380 = vunpack.c.l.b16 %v2313
    %v2381 = vunpack.c.h.b16 %v2313
    %v2382 = vunpack.c.l.b16 %v2314
    %v2383 = vunpack.c.l.b16 %v2315
    %v2384 = vunpack.c.h.b16 %v2315
    %v2385 = vunpack.c.l.b16 %v2316
    %v2386 = vunpack.c.l.b16 %v2317
    %v2387 = vunpack.c.h.b16 %v2317
    %v2388 = vunpack.c.l.b16 %v2318
    %v2389 = vunpack.c.l.b16 %v2319
    %v2390 = vunpack.c.h.b16 %v2319
    %v2391 = vunpack.c.l.b16 %v2320
    %v2392 = vunpack.c.l.b16 %v2321
    %v2393 = vunpack.c.h.b16 %v2321
    %v2394 = vunpack.c.l.b16 %v2322
    %v2395 = vunpack.c.l.b16 %v2323
    %v2396 = vunpack.c.h.b16 %v2323
    %v2397 = vunpack.c.l.b16 %v2324
    %v2398 = vunpack.c.l.b16 %v2325
    %v2399 = vunpack.c.h.b16 %v2325
    %v2400 = vunpack.c.l.b16 %v2326
    %v2401 = vunpack.c.l.b16 %v2327
    %v2402 = vunpack.c.h.b16 %v2327
    %v2403 = vunpack.c.l.b16 %v2328
    %v2404 = vunpack.c.l.b16 %v2329
    %v2405 = vunpack.c.h.b16 %v2329
    %v2406 = vunpack.c.l.b16 %v2330
    %v2407 = vunpack.c.l.b16 %v2331
    %v2408 = vunpack.c.h.b16 %v2331
    %v2409 = vunpack.c.l.b16 %v2332
    %v2410 = vunpack.c.l.b16 %v2333
    %v2411 = vunpack.c.h.b16 %v2333
    %v2412 = vunpack.c.l.b16 %v2334
    %v2413 = vunpack.c.l.b16 %v2335
    %v2414 = vunpack.c.h.b16 %v2335
    %v2415 = vunpack.c.l.b16 %v2336
    %v2416 = vunpack.c.l.b16 %v2337
    %v2417 = vunpack.c.h.b16 %v2337
    %v2418 = vunpack.c.l.b16 %v2338
    %v2419 = vpack.c.b16 %v2374, %v2371
    %v2420 = vpack.c.b16 %v2375, %v2372
    %v2421 = vpack.c.b16 %v2376, %v2373
    %v2422 = vpack.c.b16 %v2380, %v2377
    %v2423 = vpack.c.b16 %v2381, %v2378
    %v2424 = vpack.c.b16 %v2382, %v2379
    %v2425 = vpack.c.b16 %v2386, %v2383
    %v2426 = vpack.c.b16 %v2387, %v2384
    %v2427 = vpack.c.b16 %v2388, %v2385
    %v2428 = vpack.c.b16 %v2392, %v2389
    %v2429 = vpack.c.b16 %v2393, %v2390
    %v2430 = vpack.c.b16 %v2394, %v2391
    %v2431 = vpack.c.b16 %v2398, %v2395
    %v2432 = vpack.c.b16 %v2399, %v2396
    %v2433 = vpack.c.b16 %v2400, %v2397
    %v2434 = vpack.c.b16 %v2404, %v2401
    %v2435 = vpack.c.b16 %v2405, %v2402
    %v2436 = vpack.c.b16 %v2406, %v2403
    %v2437 = vpack.c.b16 %v2410, %v2407
    %v2438 = vpack.c.b16 %v2411, %v2408
    %v2439 = vpack.c.b16 %v2412, %v2409
    %v2440 = vpack.c.b16 %v2416, %v2413
    %v2441 = vpack.c.b16 %v2417, %v2414
    %v2442 = vpack.c.b16 %v2418, %v2415
    %2467 = vmatprep.subr.bf16.mxu0 %v2441
    %2468 = vmatpush1.bf16.msra.mxu0 %v2440
    %2469 = vmatprep.subr.bf16.mxu0 %v2438
    %2470 = vmatpush1.bf16.msra.mxu0 %v2437
    %2471 = vmatprep.subr.bf16.mxu0 %v2435
    %2472 = vmatpush1.bf16.msra.mxu0 %v2434
    %2473 = vmatprep.subr.bf16.mxu0 %v2432
    %2474 = vmatpush1.bf16.msra.mxu0 %v2431
    %2475 = vmatprep.subr.bf16.mxu0 %v2429
    %2476 = vmatpush1.bf16.msra.mxu0 %v2428
    %2477 = vmatprep.subr.bf16.mxu0 %v2426
    %2478 = vmatpush1.bf16.msra.mxu0 %v2425
    %2479 = vmatprep.subr.bf16.mxu0 %v2423
    %2480 = vmatpush1.bf16.msra.mxu0 %v2422
    %2481 = vmatprep.subr.bf16.mxu0 %v2420
    %2482 = vmatpush1.bf16.msra.mxu0 %v2419
    %2483 = vmatprep.subr.bf16.mxu0 0
    %2484 = vmatpush2.bf16.msra.mxu0 0
    %2485 = vmatprep.subr.bf16.mxu0 0
    %2486 = vmatpush2.bf16.msra.mxu0 0
    %2487 = vmatprep.subr.bf16.mxu0 0
    %2488 = vmatpush2.bf16.msra.mxu0 0
    %2489 = vmatprep.subr.bf16.mxu0 0
    %2490 = vmatpush2.bf16.msra.mxu0 0
    %2491 = vmatprep.subr.bf16.mxu0 0
    %2492 = vmatpush2.bf16.msra.mxu0 0
    %2493 = vmatprep.subr.bf16.mxu0 0
    %2494 = vmatpush2.bf16.msra.mxu0 0
    %2495 = vmatprep.subr.bf16.mxu0 0
    %2496 = vmatpush2.bf16.msra.mxu0 0
    %2497 = vmatprep.subr.bf16.mxu0 0
    %2498 = vmatpush2.bf16.msra.mxu0 0
    %2499 = vmatprep.mubr.bf16.mxu0 0
    %2500 = vmatmul.mubr.bf16.gmra.mxu0 %v2306
    %v2501 = vpop.f32.mrf.mxu0
    %v2502 = vadd.f32 0.0, %v2501
    %v2503 = vpop.f32.mrf.mxu0
    %v2504 = vadd.f32 0.0, %v2503
    %v2505 = vpop.f32.mrf.mxu0
    %v2506 = vadd.f32 0.0, %v2505
    %v2507 = vpop.f32.mrf.mxu0
    %v2508 = vadd.f32 0.0, %v2507
    %2509 = vdwg.mxu0
    %2510 = vmatprep.subr.bf16.mxu0 0
    %2511 = vmatpush1.bf16.msra.mxu0 %v2442
    %2512 = vmatprep.subr.bf16.mxu0 0
    %2513 = vmatpush1.bf16.msra.mxu0 %v2439
    %2514 = vmatprep.subr.bf16.mxu0 0
    %2515 = vmatpush1.bf16.msra.mxu0 %v2436
    %2516 = vmatprep.subr.bf16.mxu0 0
    %2517 = vmatpush1.bf16.msra.mxu0 %v2433
    %2518 = vmatprep.subr.bf16.mxu0 0
    %2519 = vmatpush1.bf16.msra.mxu0 %v2430
    %2520 = vmatprep.subr.bf16.mxu0 0
    %2521 = vmatpush1.bf16.msra.mxu0 %v2427
    %2522 = vmatprep.subr.bf16.mxu0 0
    %2523 = vmatpush1.bf16.msra.mxu0 %v2424
    %2524 = vmatprep.subr.bf16.mxu0 0
    %2525 = vmatpush1.bf16.msra.mxu0 %v2421
    %2526 = vmatprep.subr.bf16.mxu0 0
    %2527 = vmatpush2.bf16.msra.mxu0 0
    %2528 = vmatprep.subr.bf16.mxu0 0
    %2529 = vmatpush2.bf16.msra.mxu0 0
    %2530 = vmatprep.subr.bf16.mxu0 0
    %2531 = vmatpush2.bf16.msra.mxu0 0
    %2532 = vmatprep.subr.bf16.mxu0 0
    %2533 = vmatpush2.bf16.msra.mxu0 0
    %2534 = vmatprep.subr.bf16.mxu0 0
    %2535 = vmatpush2.bf16.msra.mxu0 0
    %2536 = vmatprep.subr.bf16.mxu0 0
    %2537 = vmatpush2.bf16.msra.mxu0 0
    %2538 = vmatprep.subr.bf16.mxu0 0
    %2539 = vmatpush2.bf16.msra.mxu0 0
    %2540 = vmatprep.subr.bf16.mxu0 0
    %2541 = vmatpush2.bf16.msra.mxu0 0
    %2542 = vmatprep.mubr.bf16.mxu0 0
    %2543 = vmatmul.mubr.bf16.gmra.mxu0 %v2306
    %v2544 = vpop.f32.mrf.mxu0
    %v2545 = vadd.f32 0.0, %v2544
    %v2546 = vpop.f32.mrf.mxu0
    %v2547 = vpop.f32.mrf.mxu0
    %v2548 = vadd.f32 0.0, %v2547
    %v2549 = vpop.f32.mrf.mxu0
    %2550 = vdwg.mxu0
    %v2551 = vld [vmem:[#allocation7 + $0x5] sm:$0x1]
    %v2552 = vlaneseq
    %v2553 = vshrl.u32 %v2552, 7
    %v2554 = vsub.s32 0, %v2553
    %v2555 = vrot.slane %v2551, %v2554
    %v2556 = vadd.f32 %v2502, %v2555
    %v2557 = vadd.f32 %v2506, %v2555
    %v2558 = vld [vmem:[#allocation7 + $0x6] sm:$0x1]
    %v2559 = vlaneseq
    %v2560 = vshrl.u32 %v2559, 7
    %v2561 = vsub.s32 0, %v2560
    %v2562 = vrot.slane %v2558, %v2561
    %v2563 = vadd.f32 %v2504, %v2562
    %v2564 = vadd.f32 %v2508, %v2562
    %v2565 = vld [vmem:[#allocation7 + $0x7] sm:$0x1]
    %v2566 = vlaneseq
    %v2567 = vshrl.u32 %v2566, 7
    %v2568 = vsub.s32 0, %v2567
    %v2569 = vrot.slane %v2565, %v2568
    %v2570 = vadd.f32 %v2545, %v2569
    %v2571 = vadd.f32 %v2548, %v2569
    %vm2572 = vcmask 261120
    %v2574 = vsel %vm2572, %v2556, 0
    %v2577 = vsel %vm2572, %v2563, 0
    %2579 = vmatprep.subr.mxu0 0.0
    %2580 = vmatpush1.xpose.msra.mxu0 0.0
    %2581 = vmatprep.subr.mxu0 0.0
    %2582 = vmatpush1.xpose.msra.mxu0 0.0
    %2583 = vmatprep.subr.mxu0 0.0
    %2584 = vmatpush1.xpose.msra.mxu0 0.0
    %2585 = vmatprep.subr.mxu0 0.0
    %2586 = vmatpush1.xpose.msra.mxu0 0.0
    %2587 = vmatprep.subr.mxu0 0.0
    %2588 = vmatpush1.xpose.msra.mxu0 0.0
    %2589 = vmatprep.subr.mxu0 0.0
    %2590 = vmatpush1.xpose.msra.mxu0 0.0
    %2591 = vmatprep.subr.mxu0 0.0
    %2592 = vmatpush1.xpose.msra.mxu0 0.0
    %2593 = vmatprep.subr.mxu0 0.0
    %2594 = vmatpush1.xpose.msra.mxu0 0.0
    %2595 = vmatprep.subr.mxu0 0.0
    %2596 = vmatpush1.xpose.msra.mxu0 0.0
    %2597 = vmatprep.subr.mxu0 0.0
    %2598 = vmatpush1.xpose.msra.mxu0 0.0
    %2599 = vmatprep.subr.mxu0 0.0
    %2600 = vmatpush1.xpose.msra.mxu0 0.0
    %2601 = vmatprep.subr.mxu0 0.0
    %2602 = vmatpush1.xpose.msra.mxu0 0.0
    %2603 = vmatprep.subr.mxu0 0.0
    %2604 = vmatpush1.xpose.msra.mxu0 0.0
    %2605 = vmatprep.subr.mxu0 0.0
    %2606 = vmatpush1.xpose.msra.mxu0 0.0
    %2607 = vmatprep.subr.mxu0 0.0
    %2608 = vmatpush1.xpose.msra.mxu0 0.0
    %2609 = vmatprep.subr.mxu0 0.0
    %2610 = vmatpush1.xpose.msra.mxu0 %v2577
    %2611 = vmatprep.subr.mxu0 0.0
    %2612 = vmatpush2.xpose.msra.mxu0 0.0
    %2613 = vmatprep.subr.mxu0 0.0
    %2614 = vmatpush2.xpose.msra.mxu0 0.0
    %2615 = vmatprep.subr.mxu0 0.0
    %2616 = vmatpush2.xpose.msra.mxu0 0.0
    %2617 = vmatprep.subr.mxu0 0.0
    %2618 = vmatpush2.xpose.msra.mxu0 0.0
    %2619 = vmatprep.subr.mxu0 0.0
    %2620 = vmatpush2.xpose.msra.mxu0 0.0
    %2621 = vmatprep.subr.mxu0 0.0
    %2622 = vmatpush2.xpose.msra.mxu0 0.0
    %2623 = vmatprep.subr.mxu0 0.0
    %2624 = vmatpush2.xpose.msra.mxu0 0.0
    %2625 = vmatprep.subr.mxu0 0.0
    %2626 = vmatpush2.xpose.msra.mxu0 0.0
    %2627 = vmatprep.subr.mxu0 0.0
    %2628 = vmatpush2.xpose.msra.mxu0 0.0
    %2629 = vmatprep.subr.mxu0 0.0
    %2630 = vmatpush2.xpose.msra.mxu0 0.0
    %2631 = vmatprep.subr.mxu0 0.0
    %2632 = vmatpush2.xpose.msra.mxu0 0.0
    %2633 = vmatprep.subr.mxu0 0.0
    %2634 = vmatpush2.xpose.msra.mxu0 0.0
    %2635 = vmatprep.subr.mxu0 0.0
    %2636 = vmatpush2.xpose.msra.mxu0 0.0
    %2637 = vmatprep.subr.mxu0 0.0
    %2638 = vmatpush2.xpose.msra.mxu0 0.0
    %2639 = vmatprep.subr.mxu0 0.0
    %2640 = vmatpush2.xpose.msra.mxu0 0.0
    %2641 = vmatprep.subr.mxu0 0.0
    %2642 = vmatpush2.xpose.msra.mxu0 0.0
    %2643 = vmatprep.mubr.f32.mxu0 0.0
    %2644 = vmatmul.mubr.f32.gmra.mxu0 %v2574
    %v2645 = vpop.f32.mrf.mxu0
    %v2646 = vadd.f32 0.0, %v2645
    %v2647 = vpop.f32.mrf.mxu0
    %2648 = vdwg.mxu0
    %v2650 = vsel %vm2572, %v2557, 0
    %v2653 = vsel %vm2572, %v2564, 0
    %2655 = vmatprep.subr.mxu0 0.0
    %2656 = vmatpush1.xpose.msra.mxu0 0.0
    %2657 = vmatprep.subr.mxu0 0.0
    %2658 = vmatpush1.xpose.msra.mxu0 0.0
    %2659 = vmatprep.subr.mxu0 0.0
    %2660 = vmatpush1.xpose.msra.mxu0 0.0
    %2661 = vmatprep.subr.mxu0 0.0
    %2662 = vmatpush1.xpose.msra.mxu0 0.0
    %2663 = vmatprep.subr.mxu0 0.0
    %2664 = vmatpush1.xpose.msra.mxu0 0.0
    %2665 = vmatprep.subr.mxu0 0.0
    %2666 = vmatpush1.xpose.msra.mxu0 0.0
    %2667 = vmatprep.subr.mxu0 0.0
    %2668 = vmatpush1.xpose.msra.mxu0 0.0
    %2669 = vmatprep.subr.mxu0 0.0
    %2670 = vmatpush1.xpose.msra.mxu0 0.0
    %2671 = vmatprep.subr.mxu0 0.0
    %2672 = vmatpush1.xpose.msra.mxu0 0.0
    %2673 = vmatprep.subr.mxu0 0.0
    %2674 = vmatpush1.xpose.msra.mxu0 0.0
    %2675 = vmatprep.subr.mxu0 0.0
    %2676 = vmatpush1.xpose.msra.mxu0 0.0
    %2677 = vmatprep.subr.mxu0 0.0
    %2678 = vmatpush1.xpose.msra.mxu0 0.0
    %2679 = vmatprep.subr.mxu0 0.0
    %2680 = vmatpush1.xpose.msra.mxu0 0.0
    %2681 = vmatprep.subr.mxu0 0.0
    %2682 = vmatpush1.xpose.msra.mxu0 0.0
    %2683 = vmatprep.subr.mxu0 0.0
    %2684 = vmatpush1.xpose.msra.mxu0 0.0
    %2685 = vmatprep.subr.mxu0 0.0
    %2686 = vmatpush1.xpose.msra.mxu0 %v2653
    %2687 = vmatprep.subr.mxu0 0.0
    %2688 = vmatpush2.xpose.msra.mxu0 0.0
    %2689 = vmatprep.subr.mxu0 0.0
    %2690 = vmatpush2.xpose.msra.mxu0 0.0
    %2691 = vmatprep.subr.mxu0 0.0
    %2692 = vmatpush2.xpose.msra.mxu0 0.0
    %2693 = vmatprep.subr.mxu0 0.0
    %2694 = vmatpush2.xpose.msra.mxu0 0.0
    %2695 = vmatprep.subr.mxu0 0.0
    %2696 = vmatpush2.xpose.msra.mxu0 0.0
    %2697 = vmatprep.subr.mxu0 0.0
    %2698 = vmatpush2.xpose.msra.mxu0 0.0
    %2699 = vmatprep.subr.mxu0 0.0
    %2700 = vmatpush2.xpose.msra.mxu0 0.0
    %2701 = vmatprep.subr.mxu0 0.0
    %2702 = vmatpush2.xpose.msra.mxu0 0.0
    %2703 = vmatprep.subr.mxu0 0.0
    %2704 = vmatpush2.xpose.msra.mxu0 0.0
    %2705 = vmatprep.subr.mxu0 0.0
    %2706 = vmatpush2.xpose.msra.mxu0 0.0
    %2707 = vmatprep.subr.mxu0 0.0
    %2708 = vmatpush2.xpose.msra.mxu0 0.0
    %2709 = vmatprep.subr.mxu0 0.0
    %2710 = vmatpush2.xpose.msra.mxu0 0.0
    %2711 = vmatprep.subr.mxu0 0.0
    %2712 = vmatpush2.xpose.msra.mxu0 0.0
    %2713 = vmatprep.subr.mxu0 0.0
    %2714 = vmatpush2.xpose.msra.mxu0 0.0
    %2715 = vmatprep.subr.mxu0 0.0
    %2716 = vmatpush2.xpose.msra.mxu0 0.0
    %2717 = vmatprep.subr.mxu0 0.0
    %2718 = vmatpush2.xpose.msra.mxu0 0.0
    %2719 = vmatprep.mubr.f32.mxu0 0.0
    %2720 = vmatmul.mubr.f32.gmra.mxu0 %v2650
    %v2721 = vpop.f32.mrf.mxu0
    %v2722 = vadd.f32 0.0, %v2721
    %v2723 = vpop.f32.mrf.mxu0
    %2724 = vdwg.mxu0
    %v2725 = vmul.f32 %v2646, 0.17677669
    %v2726 = vmul.f32 %v2722, 0.17677669
    %v2727 = vadd.f32 %v2725, %v94
    %v2728 = vadd.f32 %v2726, %v94
    %vm2729 = vcmask 64512
    %v2730 = vsel %vm2729, %v2727, -inf
    %2731 = vmax.xlane.f32.xlu0 %v2730
    %v2732 = vpop.xlane.xlu0 %2731
    %v2733 = vsel %vm2729, %v2728, -inf
    %2734 = vmax.xlane.f32.xlu0 %v2733
    %v2735 = vpop.xlane.xlu0 %2734
    %v2736 = vsub.f32 %v2727, %v2732
    %v2737 = vsub.f32 %v2728, %v2735
    %v2738 = vmul.f32 %v2736, 1.442695
    %v2739 = vpow.pop %v2738
    %v2740 = vmul.f32 %v2737, 1.442695
    %v2741 = vpow.pop %v2740
    %v2742 = vsel %vm2729, %v2739, 0.0
    %2743 = vadd.xlane.f32.xlu0 %v2742
    %v2744 = vpop.xlane.xlu0 %2743
    %v2745 = vsel %vm2729, %v2741, 0.0
    %2746 = vadd.xlane.f32.xlu0 %v2745
    %v2747 = vpop.xlane.xlu0 %2746
    %v2748 = vrcp.pop %v2744
    %v2749 = vrcp.pop %v2747
    %v2750 = vmul.f32 %v2739, %v2748
    %v2751 = vmul.f32 %v2741, %v2749
    %v2753 = vsel %vm2729, %v2750, 0
    %2755 = vmatprep.subr.mxu0 0.0
    %2756 = vmatpush1.msra.mxu0 0.0
    %2757 = vmatprep.subr.mxu0 0.0
    %2758 = vmatpush1.msra.mxu0 0.0
    %2759 = vmatprep.subr.mxu0 0.0
    %2760 = vmatpush1.msra.mxu0 0.0
    %2761 = vmatprep.subr.mxu0 0.0
    %2762 = vmatpush1.msra.mxu0 0.0
    %2763 = vmatprep.subr.mxu0 0.0
    %2764 = vmatpush1.msra.mxu0 0.0
    %2765 = vmatprep.subr.mxu0 0.0
    %2766 = vmatpush1.msra.mxu0 0.0
    %2767 = vmatprep.subr.mxu0 0.0
    %2768 = vmatpush1.msra.mxu0 0.0
    %2769 = vmatprep.subr.mxu0 0.0
    %2770 = vmatpush1.msra.mxu0 0.0
    %2771 = vmatprep.subr.mxu0 0.0
    %2772 = vmatpush1.msra.mxu0 0.0
    %2773 = vmatprep.subr.mxu0 0.0
    %2774 = vmatpush1.msra.mxu0 0.0
    %2775 = vmatprep.subr.mxu0 0.0
    %2776 = vmatpush1.msra.mxu0 0.0
    %2777 = vmatprep.subr.mxu0 0.0
    %2778 = vmatpush1.msra.mxu0 0.0
    %2779 = vmatprep.subr.mxu0 0.0
    %2780 = vmatpush1.msra.mxu0 0.0
    %2781 = vmatprep.subr.mxu0 0.0
    %2782 = vmatpush1.msra.mxu0 0.0
    %2783 = vmatprep.subr.mxu0 0.0
    %2784 = vmatpush1.msra.mxu0 0.0
    %2785 = vmatprep.subr.mxu0 0.0
    %2786 = vmatpush1.msra.mxu0 %v2570
    %2787 = vmatprep.subr.mxu0 0.0
    %2788 = vmatpush2.msra.mxu0 0.0
    %2789 = vmatprep.subr.mxu0 0.0
    %2790 = vmatpush2.msra.mxu0 0.0
    %2791 = vmatprep.subr.mxu0 0.0
    %2792 = vmatpush2.msra.mxu0 0.0
    %2793 = vmatprep.subr.mxu0 0.0
    %2794 = vmatpush2.msra.mxu0 0.0
    %2795 = vmatprep.subr.mxu0 0.0
    %2796 = vmatpush2.msra.mxu0 0.0
    %2797 = vmatprep.subr.mxu0 0.0
    %2798 = vmatpush2.msra.mxu0 0.0
    %2799 = vmatprep.subr.mxu0 0.0
    %2800 = vmatpush2.msra.mxu0 0.0
    %2801 = vmatprep.subr.mxu0 0.0
    %2802 = vmatpush2.msra.mxu0 0.0
    %2803 = vmatprep.subr.mxu0 0.0
    %2804 = vmatpush2.msra.mxu0 0.0
    %2805 = vmatprep.subr.mxu0 0.0
    %2806 = vmatpush2.msra.mxu0 0.0
    %2807 = vmatprep.subr.mxu0 0.0
    %2808 = vmatpush2.msra.mxu0 0.0
    %2809 = vmatprep.subr.mxu0 0.0
    %2810 = vmatpush2.msra.mxu0 0.0
    %2811 = vmatprep.subr.mxu0 0.0
    %2812 = vmatpush2.msra.mxu0 0.0
    %2813 = vmatprep.subr.mxu0 0.0
    %2814 = vmatpush2.msra.mxu0 0.0
    %2815 = vmatprep.subr.mxu0 0.0
    %2816 = vmatpush2.msra.mxu0 0.0
    %2817 = vmatprep.subr.mxu0 0.0
    %2818 = vmatpush2.msra.mxu0 0.0
    %2819 = vmatprep.mubr.f32.mxu0 0.0
    %2820 = vmatmul.mubr.f32.gmra.mxu0 %v2753
    %v2821 = vpop.f32.mrf.mxu0
    %v2822 = vadd.f32 0.0, %v2821
    %v2823 = vpop.f32.mrf.mxu0
    %2824 = vdwg.mxu0
    %v2826 = vsel %vm2729, %v2751, 0
    %2828 = vmatprep.subr.mxu0 0.0
    %2829 = vmatpush1.msra.mxu0 0.0
    %2830 = vmatprep.subr.mxu0 0.0
    %2831 = vmatpush1.msra.mxu0 0.0
    %2832 = vmatprep.subr.mxu0 0.0
    %2833 = vmatpush1.msra.mxu0 0.0
    %2834 = vmatprep.subr.mxu0 0.0
    %2835 = vmatpush1.msra.mxu0 0.0
    %2836 = vmatprep.subr.mxu0 0.0
    %2837 = vmatpush1.msra.mxu0 0.0
    %2838 = vmatprep.subr.mxu0 0.0
    %2839 = vmatpush1.msra.mxu0 0.0
    %2840 = vmatprep.subr.mxu0 0.0
    %2841 = vmatpush1.msra.mxu0 0.0
    %2842 = vmatprep.subr.mxu0 0.0
    %2843 = vmatpush1.msra.mxu0 0.0
    %2844 = vmatprep.subr.mxu0 0.0
    %2845 = vmatpush1.msra.mxu0 0.0
    %2846 = vmatprep.subr.mxu0 0.0
    %2847 = vmatpush1.msra.mxu0 0.0
    %2848 = vmatprep.subr.mxu0 0.0
    %2849 = vmatpush1.msra.mxu0 0.0
    %2850 = vmatprep.subr.mxu0 0.0
    %2851 = vmatpush1.msra.mxu0 0.0
    %2852 = vmatprep.subr.mxu0 0.0
    %2853 = vmatpush1.msra.mxu0 0.0
    %2854 = vmatprep.subr.mxu0 0.0
    %2855 = vmatpush1.msra.mxu0 0.0
    %2856 = vmatprep.subr.mxu0 0.0
    %2857 = vmatpush1.msra.mxu0 0.0
    %2858 = vmatprep.subr.mxu0 0.0
    %2859 = vmatpush1.msra.mxu0 %v2571
    %2860 = vmatprep.subr.mxu0 0.0
    %2861 = vmatpush2.msra.mxu0 0.0
    %2862 = vmatprep.subr.mxu0 0.0
    %2863 = vmatpush2.msra.mxu0 0.0
    %2864 = vmatprep.subr.mxu0 0.0
    %2865 = vmatpush2.msra.mxu0 0.0
    %2866 = vmatprep.subr.mxu0 0.0
    %2867 = vmatpush2.msra.mxu0 0.0
    %2868 = vmatprep.subr.mxu0 0.0
    %2869 = vmatpush2.msra.mxu0 0.0
    %2870 = vmatprep.subr.mxu0 0.0
    %2871 = vmatpush2.msra.mxu0 0.0
    %2872 = vmatprep.subr.mxu0 0.0
    %2873 = vmatpush2.msra.mxu0 0.0
    %2874 = vmatprep.subr.mxu0 0.0
    %2875 = vmatpush2.msra.mxu0 0.0
    %2876 = vmatprep.subr.mxu0 0.0
    %2877 = vmatpush2.msra.mxu0 0.0
    %2878 = vmatprep.subr.mxu0 0.0
    %2879 = vmatpush2.msra.mxu0 0.0
    %2880 = vmatprep.subr.mxu0 0.0
    %2881 = vmatpush2.msra.mxu0 0.0
    %2882 = vmatprep.subr.mxu0 0.0
    %2883 = vmatpush2.msra.mxu0 0.0
    %2884 = vmatprep.subr.mxu0 0.0
    %2885 = vmatpush2.msra.mxu0 0.0
    %2886 = vmatprep.subr.mxu0 0.0
    %2887 = vmatpush2.msra.mxu0 0.0
    %2888 = vmatprep.subr.mxu0 0.0
    %2889 = vmatpush2.msra.mxu0 0.0
    %2890 = vmatprep.subr.mxu0 0.0
    %2891 = vmatpush2.msra.mxu0 0.0
    %2892 = vmatprep.mubr.f32.mxu0 0.0
    %2893 = vmatmul.mubr.f32.gmra.mxu0 %v2826
    %v2894 = vpop.f32.mrf.mxu0
    %v2895 = vadd.f32 0.0, %v2894
    %v2896 = vpop.f32.mrf.mxu0
    %2897 = vdwg.mxu0
    %2898 = vrot.lane.b32.xlu0 %v2556, 96
    %v2899 = vpop.permute.xlu0 %2898
    %2900 = vrot.lane.b32.xlu0 %v2563, 96
    %v2901 = vpop.permute.xlu0 %2900
    %v2902 = vsel %vm2572, %v2899, 0
    %v2904 = vsel %vm2572, %v2901, 0
    %2906 = vmatprep.subr.mxu0 0.0
    %2907 = vmatpush1.xpose.msra.mxu0 0.0
    %2908 = vmatprep.subr.mxu0 0.0
    %2909 = vmatpush1.xpose.msra.mxu0 0.0
    %2910 = vmatprep.subr.mxu0 0.0
    %2911 = vmatpush1.xpose.msra.mxu0 0.0
    %2912 = vmatprep.subr.mxu0 0.0
    %2913 = vmatpush1.xpose.msra.mxu0 0.0
    %2914 = vmatprep.subr.mxu0 0.0
    %2915 = vmatpush1.xpose.msra.mxu0 0.0
    %2916 = vmatprep.subr.mxu0 0.0
    %2917 = vmatpush1.xpose.msra.mxu0 0.0
    %2918 = vmatprep.subr.mxu0 0.0
    %2919 = vmatpush1.xpose.msra.mxu0 0.0
    %2920 = vmatprep.subr.mxu0 0.0
    %2921 = vmatpush1.xpose.msra.mxu0 0.0
    %2922 = vmatprep.subr.mxu0 0.0
    %2923 = vmatpush1.xpose.msra.mxu0 0.0
    %2924 = vmatprep.subr.mxu0 0.0
    %2925 = vmatpush1.xpose.msra.mxu0 0.0
    %2926 = vmatprep.subr.mxu0 0.0
    %2927 = vmatpush1.xpose.msra.mxu0 0.0
    %2928 = vmatprep.subr.mxu0 0.0
    %2929 = vmatpush1.xpose.msra.mxu0 0.0
    %2930 = vmatprep.subr.mxu0 0.0
    %2931 = vmatpush1.xpose.msra.mxu0 0.0
    %2932 = vmatprep.subr.mxu0 0.0
    %2933 = vmatpush1.xpose.msra.mxu0 0.0
    %2934 = vmatprep.subr.mxu0 0.0
    %2935 = vmatpush1.xpose.msra.mxu0 0.0
    %2936 = vmatprep.subr.mxu0 0.0
    %2937 = vmatpush1.xpose.msra.mxu0 %v2904
    %2938 = vmatprep.subr.mxu0 0.0
    %2939 = vmatpush2.xpose.msra.mxu0 0.0
    %2940 = vmatprep.subr.mxu0 0.0
    %2941 = vmatpush2.xpose.msra.mxu0 0.0
    %2942 = vmatprep.subr.mxu0 0.0
    %2943 = vmatpush2.xpose.msra.mxu0 0.0
    %2944 = vmatprep.subr.mxu0 0.0
    %2945 = vmatpush2.xpose.msra.mxu0 0.0
    %2946 = vmatprep.subr.mxu0 0.0
    %2947 = vmatpush2.xpose.msra.mxu0 0.0
    %2948 = vmatprep.subr.mxu0 0.0
    %2949 = vmatpush2.xpose.msra.mxu0 0.0
    %2950 = vmatprep.subr.mxu0 0.0
    %2951 = vmatpush2.xpose.msra.mxu0 0.0
    %2952 = vmatprep.subr.mxu0 0.0
    %2953 = vmatpush2.xpose.msra.mxu0 0.0
    %2954 = vmatprep.subr.mxu0 0.0
    %2955 = vmatpush2.xpose.msra.mxu0 0.0
    %2956 = vmatprep.subr.mxu0 0.0
    %2957 = vmatpush2.xpose.msra.mxu0 0.0
    %2958 = vmatprep.subr.mxu0 0.0
    %2959 = vmatpush2.xpose.msra.mxu0 0.0
    %2960 = vmatprep.subr.mxu0 0.0
    %2961 = vmatpush2.xpose.msra.mxu0 0.0
    %2962 = vmatprep.subr.mxu0 0.0
    %2963 = vmatpush2.xpose.msra.mxu0 0.0
    %2964 = vmatprep.subr.mxu0 0.0
    %2965 = vmatpush2.xpose.msra.mxu0 0.0
    %2966 = vmatprep.subr.mxu0 0.0
    %2967 = vmatpush2.xpose.msra.mxu0 0.0
    %2968 = vmatprep.subr.mxu0 0.0
    %2969 = vmatpush2.xpose.msra.mxu0 0.0
    %2970 = vmatprep.mubr.f32.mxu0 0.0
    %2971 = vmatmul.mubr.f32.gmra.mxu0 %v2902
    %v2972 = vpop.f32.mrf.mxu0
    %v2973 = vadd.f32 0.0, %v2972
    %v2974 = vpop.f32.mrf.mxu0
    %2975 = vdwg.mxu0
    %2976 = vrot.lane.b32.xlu0 %v2557, 96
    %v2977 = vpop.permute.xlu0 %2976
    %2978 = vrot.lane.b32.xlu0 %v2564, 96
    %v2979 = vpop.permute.xlu0 %2978
    %v2980 = vsel %vm2572, %v2977, 0
    %v2982 = vsel %vm2572, %v2979, 0
    %2984 = vmatprep.subr.mxu0 0.0
    %2985 = vmatpush1.xpose.msra.mxu0 0.0
    %2986 = vmatprep.subr.mxu0 0.0
    %2987 = vmatpush1.xpose.msra.mxu0 0.0
    %2988 = vmatprep.subr.mxu0 0.0
    %2989 = vmatpush1.xpose.msra.mxu0 0.0
    %2990 = vmatprep.subr.mxu0 0.0
    %2991 = vmatpush1.xpose.msra.mxu0 0.0
    %2992 = vmatprep.subr.mxu0 0.0
    %2993 = vmatpush1.xpose.msra.mxu0 0.0
    %2994 = vmatprep.subr.mxu0 0.0
    %2995 = vmatpush1.xpose.msra.mxu0 0.0
    %2996 = vmatprep.subr.mxu0 0.0
    %2997 = vmatpush1.xpose.msra.mxu0 0.0
    %2998 = vmatprep.subr.mxu0 0.0
    %2999 = vmatpush1.xpose.msra.mxu0 0.0
    %3000 = vmatprep.subr.mxu0 0.0
    %3001 = vmatpush1.xpose.msra.mxu0 0.0
    %3002 = vmatprep.subr.mxu0 0.0
    %3003 = vmatpush1.xpose.msra.mxu0 0.0
    %3004 = vmatprep.subr.mxu0 0.0
    %3005 = vmatpush1.xpose.msra.mxu0 0.0
    %3006 = vmatprep.subr.mxu0 0.0
    %3007 = vmatpush1.xpose.msra.mxu0 0.0
    %3008 = vmatprep.subr.mxu0 0.0
    %3009 = vmatpush1.xpose.msra.mxu0 0.0
    %3010 = vmatprep.subr.mxu0 0.0
    %3011 = vmatpush1.xpose.msra.mxu0 0.0
    %3012 = vmatprep.subr.mxu0 0.0
    %3013 = vmatpush1.xpose.msra.mxu0 0.0
    %3014 = vmatprep.subr.mxu0 0.0
    %3015 = vmatpush1.xpose.msra.mxu0 %v2982
    %3016 = vmatprep.subr.mxu0 0.0
    %3017 = vmatpush2.xpose.msra.mxu0 0.0
    %3018 = vmatprep.subr.mxu0 0.0
    %3019 = vmatpush2.xpose.msra.mxu0 0.0
    %3020 = vmatprep.subr.mxu0 0.0
    %3021 = vmatpush2.xpose.msra.mxu0 0.0
    %3022 = vmatprep.subr.mxu0 0.0
    %3023 = vmatpush2.xpose.msra.mxu0 0.0
    %3024 = vmatprep.subr.mxu0 0.0
    %3025 = vmatpush2.xpose.msra.mxu0 0.0
    %3026 = vmatprep.subr.mxu0 0.0
    %3027 = vmatpush2.xpose.msra.mxu0 0.0
    %3028 = vmatprep.subr.mxu0 0.0
    %3029 = vmatpush2.xpose.msra.mxu0 0.0
    %3030 = vmatprep.subr.mxu0 0.0
    %3031 = vmatpush2.xpose.msra.mxu0 0.0
    %3032 = vmatprep.subr.mxu0 0.0
    %3033 = vmatpush2.xpose.msra.mxu0 0.0
    %3034 = vmatprep.subr.mxu0 0.0
    %3035 = vmatpush2.xpose.msra.mxu0 0.0
    %3036 = vmatprep.subr.mxu0 0.0
    %3037 = vmatpush2.xpose.msra.mxu0 0.0
    %3038 = vmatprep.subr.mxu0 0.0
    %3039 = vmatpush2.xpose.msra.mxu0 0.0
    %3040 = vmatprep.subr.mxu0 0.0
    %3041 = vmatpush2.xpose.msra.mxu0 0.0
    %3042 = vmatprep.subr.mxu0 0.0
    %3043 = vmatpush2.xpose.msra.mxu0 0.0
    %3044 = vmatprep.subr.mxu0 0.0
    %3045 = vmatpush2.xpose.msra.mxu0 0.0
    %3046 = vmatprep.subr.mxu0 0.0
    %3047 = vmatpush2.xpose.msra.mxu0 0.0
    %3048 = vmatprep.mubr.f32.mxu0 0.0
    %3049 = vmatmul.mubr.f32.gmra.mxu0 %v2980
    %v3050 = vpop.f32.mrf.mxu0
    %v3051 = vadd.f32 0.0, %v3050
    %v3052 = vpop.f32.mrf.mxu0
    %3053 = vdwg.mxu0
    %v3054 = vmul.f32 %v2973, 0.17677669
    %v3055 = vmul.f32 %v3051, 0.17677669
    %v3056 = vadd.f32 %v3054, %v94
    %v3057 = vadd.f32 %v3055, %v94
    %v3058 = vsel %vm2729, %v3056, -inf
    %3059 = vmax.xlane.f32.xlu0 %v3058
    %v3060 = vpop.xlane.xlu0 %3059
    %v3061 = vsel %vm2729, %v3057, -inf
    %3062 = vmax.xlane.f32.xlu0 %v3061
    %v3063 = vpop.xlane.xlu0 %3062
    %v3064 = vsub.f32 %v3056, %v3060
    %v3065 = vsub.f32 %v3057, %v3063
    %v3066 = vmul.f32 %v3064, 1.442695
    %v3067 = vpow.pop %v3066
    %v3068 = vmul.f32 %v3065, 1.442695
    %v3069 = vpow.pop %v3068
    %v3070 = vsel %vm2729, %v3067, 0.0
    %3071 = vadd.xlane.f32.xlu0 %v3070
    %v3072 = vpop.xlane.xlu0 %3071
    %v3073 = vsel %vm2729, %v3069, 0.0
    %3074 = vadd.xlane.f32.xlu0 %v3073
    %v3075 = vpop.xlane.xlu0 %3074
    %v3076 = vrcp.pop %v3072
    %v3077 = vrcp.pop %v3075
    %v3078 = vmul.f32 %v3067, %v3076
    %v3079 = vmul.f32 %v3069, %v3077
    %3081 = vrot.lane.b32.xlu0 %v2570, 96
    %v3082 = vpop.permute.xlu0 %3081
    %v3085 = vsel %vm2729, %v3078, 0
    %3087 = vmatprep.subr.mxu0 0.0
    %3088 = vmatpush1.msra.mxu0 0.0
    %3089 = vmatprep.subr.mxu0 0.0
    %3090 = vmatpush1.msra.mxu0 0.0
    %3091 = vmatprep.subr.mxu0 0.0
    %3092 = vmatpush1.msra.mxu0 0.0
    %3093 = vmatprep.subr.mxu0 0.0
    %3094 = vmatpush1.msra.mxu0 0.0
    %3095 = vmatprep.subr.mxu0 0.0
    %3096 = vmatpush1.msra.mxu0 0.0
    %3097 = vmatprep.subr.mxu0 0.0
    %3098 = vmatpush1.msra.mxu0 0.0
    %3099 = vmatprep.subr.mxu0 0.0
    %3100 = vmatpush1.msra.mxu0 0.0
    %3101 = vmatprep.subr.mxu0 0.0
    %3102 = vmatpush1.msra.mxu0 0.0
    %3103 = vmatprep.subr.mxu0 0.0
    %3104 = vmatpush1.msra.mxu0 0.0
    %3105 = vmatprep.subr.mxu0 0.0
    %3106 = vmatpush1.msra.mxu0 0.0
    %3107 = vmatprep.subr.mxu0 0.0
    %3108 = vmatpush1.msra.mxu0 0.0
    %3109 = vmatprep.subr.mxu0 0.0
    %3110 = vmatpush1.msra.mxu0 0.0
    %3111 = vmatprep.subr.mxu0 0.0
    %3112 = vmatpush1.msra.mxu0 0.0
    %3113 = vmatprep.subr.mxu0 0.0
    %3114 = vmatpush1.msra.mxu0 0.0
    %3115 = vmatprep.subr.mxu0 0.0
    %3116 = vmatpush1.msra.mxu0 0.0
    %3117 = vmatprep.subr.mxu0 0.0
    %3118 = vmatpush1.msra.mxu0 %v3082
    %3119 = vmatprep.subr.mxu0 0.0
    %3120 = vmatpush2.msra.mxu0 0.0
    %3121 = vmatprep.subr.mxu0 0.0
    %3122 = vmatpush2.msra.mxu0 0.0
    %3123 = vmatprep.subr.mxu0 0.0
    %3124 = vmatpush2.msra.mxu0 0.0
    %3125 = vmatprep.subr.mxu0 0.0
    %3126 = vmatpush2.msra.mxu0 0.0
    %3127 = vmatprep.subr.mxu0 0.0
    %3128 = vmatpush2.msra.mxu0 0.0
    %3129 = vmatprep.subr.mxu0 0.0
    %3130 = vmatpush2.msra.mxu0 0.0
    %3131 = vmatprep.subr.mxu0 0.0
    %3132 = vmatpush2.msra.mxu0 0.0
    %3133 = vmatprep.subr.mxu0 0.0
    %3134 = vmatpush2.msra.mxu0 0.0
    %3135 = vmatprep.subr.mxu0 0.0
    %3136 = vmatpush2.msra.mxu0 0.0
    %3137 = vmatprep.subr.mxu0 0.0
    %3138 = vmatpush2.msra.mxu0 0.0
    %3139 = vmatprep.subr.mxu0 0.0
    %3140 = vmatpush2.msra.mxu0 0.0
    %3141 = vmatprep.subr.mxu0 0.0
    %3142 = vmatpush2.msra.mxu0 0.0
    %3143 = vmatprep.subr.mxu0 0.0
    %3144 = vmatpush2.msra.mxu0 0.0
    %3145 = vmatprep.subr.mxu0 0.0
    %3146 = vmatpush2.msra.mxu0 0.0
    %3147 = vmatprep.subr.mxu0 0.0
    %3148 = vmatpush2.msra.mxu0 0.0
    %3149 = vmatprep.subr.mxu0 0.0
    %3150 = vmatpush2.msra.mxu0 0.0
    %3151 = vmatprep.mubr.f32.mxu0 0.0
    %3152 = vmatmul.mubr.f32.gmra.mxu0 %v3085
    %v3153 = vpop.f32.mrf.mxu0
    %v3154 = vadd.f32 0.0, %v3153
    %v3155 = vpop.f32.mrf.mxu0
    %3156 = vdwg.mxu0
    %3158 = vrot.lane.b32.xlu0 %v2571, 96
    %v3159 = vpop.permute.xlu0 %3158
    %v3162 = vsel %vm2729, %v3079, 0
    %3164 = vmatprep.subr.mxu0 0.0
    %3165 = vmatpush1.msra.mxu0 0.0
    %3166 = vmatprep.subr.mxu0 0.0
    %3167 = vmatpush1.msra.mxu0 0.0
    %3168 = vmatprep.subr.mxu0 0.0
    %3169 = vmatpush1.msra.mxu0 0.0
    %3170 = vmatprep.subr.mxu0 0.0
    %3171 = vmatpush1.msra.mxu0 0.0
    %3172 = vmatprep.subr.mxu0 0.0
    %3173 = vmatpush1.msra.mxu0 0.0
    %3174 = vmatprep.subr.mxu0 0.0
    %3175 = vmatpush1.msra.mxu0 0.0
    %3176 = vmatprep.subr.mxu0 0.0
    %3177 = vmatpush1.msra.mxu0 0.0
    %3178 = vmatprep.subr.mxu0 0.0
    %3179 = vmatpush1.msra.mxu0 0.0
    %3180 = vmatprep.subr.mxu0 0.0
    %3181 = vmatpush1.msra.mxu0 0.0
    %3182 = vmatprep.subr.mxu0 0.0
    %3183 = vmatpush1.msra.mxu0 0.0
    %3184 = vmatprep.subr.mxu0 0.0
    %3185 = vmatpush1.msra.mxu0 0.0
    %3186 = vmatprep.subr.mxu0 0.0
    %3187 = vmatpush1.msra.mxu0 0.0
    %3188 = vmatprep.subr.mxu0 0.0
    %3189 = vmatpush1.msra.mxu0 0.0
    %3190 = vmatprep.subr.mxu0 0.0
    %3191 = vmatpush1.msra.mxu0 0.0
    %3192 = vmatprep.subr.mxu0 0.0
    %3193 = vmatpush1.msra.mxu0 0.0
    %3194 = vmatprep.subr.mxu0 0.0
    %3195 = vmatpush1.msra.mxu0 %v3159
    %3196 = vmatprep.subr.mxu0 0.0
    %3197 = vmatpush2.msra.mxu0 0.0
    %3198 = vmatprep.subr.mxu0 0.0
    %3199 = vmatpush2.msra.mxu0 0.0
    %3200 = vmatprep.subr.mxu0 0.0
    %3201 = vmatpush2.msra.mxu0 0.0
    %3202 = vmatprep.subr.mxu0 0.0
    %3203 = vmatpush2.msra.mxu0 0.0
    %3204 = vmatprep.subr.mxu0 0.0
    %3205 = vmatpush2.msra.mxu0 0.0
    %3206 = vmatprep.subr.mxu0 0.0
    %3207 = vmatpush2.msra.mxu0 0.0
    %3208 = vmatprep.subr.mxu0 0.0
    %3209 = vmatpush2.msra.mxu0 0.0
    %3210 = vmatprep.subr.mxu0 0.0
    %3211 = vmatpush2.msra.mxu0 0.0
    %3212 = vmatprep.subr.mxu0 0.0
    %3213 = vmatpush2.msra.mxu0 0.0
    %3214 = vmatprep.subr.mxu0 0.0
    %3215 = vmatpush2.msra.mxu0 0.0
    %3216 = vmatprep.subr.mxu0 0.0
    %3217 = vmatpush2.msra.mxu0 0.0
    %3218 = vmatprep.subr.mxu0 0.0
    %3219 = vmatpush2.msra.mxu0 0.0
    %3220 = vmatprep.subr.mxu0 0.0
    %3221 = vmatpush2.msra.mxu0 0.0
    %3222 = vmatprep.subr.mxu0 0.0
    %3223 = vmatpush2.msra.mxu0 0.0
    %3224 = vmatprep.subr.mxu0 0.0
    %3225 = vmatpush2.msra.mxu0 0.0
    %3226 = vmatprep.subr.mxu0 0.0
    %3227 = vmatpush2.msra.mxu0 0.0
    %3228 = vmatprep.mubr.f32.mxu0 0.0
    %3229 = vmatmul.mubr.f32.gmra.mxu0 %v3162
    %v3230 = vpop.f32.mrf.mxu0
    %v3231 = vadd.f32 0.0, %v3230
    %v3232 = vpop.f32.mrf.mxu0
    %3233 = vdwg.mxu0
    %3234 = vrot.lane.b32.xlu0 %v2556, 64
    %v3235 = vpop.permute.xlu0 %3234
    %3236 = vrot.lane.b32.xlu0 %v2563, 64
    %v3237 = vpop.permute.xlu0 %3236
    %v3238 = vsel %vm2572, %v3235, 0
    %v3240 = vsel %vm2572, %v3237, 0
    %3242 = vmatprep.subr.mxu0 0.0
    %3243 = vmatpush1.xpose.msra.mxu0 0.0
    %3244 = vmatprep.subr.mxu0 0.0
    %3245 = vmatpush1.xpose.msra.mxu0 0.0
    %3246 = vmatprep.subr.mxu0 0.0
    %3247 = vmatpush1.xpose.msra.mxu0 0.0
    %3248 = vmatprep.subr.mxu0 0.0
    %3249 = vmatpush1.xpose.msra.mxu0 0.0
    %3250 = vmatprep.subr.mxu0 0.0
    %3251 = vmatpush1.xpose.msra.mxu0 0.0
    %3252 = vmatprep.subr.mxu0 0.0
    %3253 = vmatpush1.xpose.msra.mxu0 0.0
    %3254 = vmatprep.subr.mxu0 0.0
    %3255 = vmatpush1.xpose.msra.mxu0 0.0
    %3256 = vmatprep.subr.mxu0 0.0
    %3257 = vmatpush1.xpose.msra.mxu0 0.0
    %3258 = vmatprep.subr.mxu0 0.0
    %3259 = vmatpush1.xpose.msra.mxu0 0.0
    %3260 = vmatprep.subr.mxu0 0.0
    %3261 = vmatpush1.xpose.msra.mxu0 0.0
    %3262 = vmatprep.subr.mxu0 0.0
    %3263 = vmatpush1.xpose.msra.mxu0 0.0
    %3264 = vmatprep.subr.mxu0 0.0
    %3265 = vmatpush1.xpose.msra.mxu0 0.0
    %3266 = vmatprep.subr.mxu0 0.0
    %3267 = vmatpush1.xpose.msra.mxu0 0.0
    %3268 = vmatprep.subr.mxu0 0.0
    %3269 = vmatpush1.xpose.msra.mxu0 0.0
    %3270 = vmatprep.subr.mxu0 0.0
    %3271 = vmatpush1.xpose.msra.mxu0 0.0
    %3272 = vmatprep.subr.mxu0 0.0
    %3273 = vmatpush1.xpose.msra.mxu0 %v3240
    %3274 = vmatprep.subr.mxu0 0.0
    %3275 = vmatpush2.xpose.msra.mxu0 0.0
    %3276 = vmatprep.subr.mxu0 0.0
    %3277 = vmatpush2.xpose.msra.mxu0 0.0
    %3278 = vmatprep.subr.mxu0 0.0
    %3279 = vmatpush2.xpose.msra.mxu0 0.0
    %3280 = vmatprep.subr.mxu0 0.0
    %3281 = vmatpush2.xpose.msra.mxu0 0.0
    %3282 = vmatprep.subr.mxu0 0.0
    %3283 = vmatpush2.xpose.msra.mxu0 0.0
    %3284 = vmatprep.subr.mxu0 0.0
    %3285 = vmatpush2.xpose.msra.mxu0 0.0
    %3286 = vmatprep.subr.mxu0 0.0
    %3287 = vmatpush2.xpose.msra.mxu0 0.0
    %3288 = vmatprep.subr.mxu0 0.0
    %3289 = vmatpush2.xpose.msra.mxu0 0.0
    %3290 = vmatprep.subr.mxu0 0.0
    %3291 = vmatpush2.xpose.msra.mxu0 0.0
    %3292 = vmatprep.subr.mxu0 0.0
    %3293 = vmatpush2.xpose.msra.mxu0 0.0
    %3294 = vmatprep.subr.mxu0 0.0
    %3295 = vmatpush2.xpose.msra.mxu0 0.0
    %3296 = vmatprep.subr.mxu0 0.0
    %3297 = vmatpush2.xpose.msra.mxu0 0.0
    %3298 = vmatprep.subr.mxu0 0.0
    %3299 = vmatpush2.xpose.msra.mxu0 0.0
    %3300 = vmatprep.subr.mxu0 0.0
    %3301 = vmatpush2.xpose.msra.mxu0 0.0
    %3302 = vmatprep.subr.mxu0 0.0
    %3303 = vmatpush2.xpose.msra.mxu0 0.0
    %3304 = vmatprep.subr.mxu0 0.0
    %3305 = vmatpush2.xpose.msra.mxu0 0.0
    %3306 = vmatprep.mubr.f32.mxu0 0.0
    %3307 = vmatmul.mubr.f32.gmra.mxu0 %v3238
    %v3308 = vpop.f32.mrf.mxu0
    %v3309 = vadd.f32 0.0, %v3308
    %v3310 = vpop.f32.mrf.mxu0
    %3311 = vdwg.mxu0
    %3312 = vrot.lane.b32.xlu0 %v2557, 64
    %v3313 = vpop.permute.xlu0 %3312
    %3314 = vrot.lane.b32.xlu0 %v2564, 64
    %v3315 = vpop.permute.xlu0 %3314
    %v3316 = vsel %vm2572, %v3313, 0
    %v3318 = vsel %vm2572, %v3315, 0
    %3320 = vmatprep.subr.mxu0 0.0
    %3321 = vmatpush1.xpose.msra.mxu0 0.0
    %3322 = vmatprep.subr.mxu0 0.0
    %3323 = vmatpush1.xpose.msra.mxu0 0.0
    %3324 = vmatprep.subr.mxu0 0.0
    %3325 = vmatpush1.xpose.msra.mxu0 0.0
    %3326 = vmatprep.subr.mxu0 0.0
    %3327 = vmatpush1.xpose.msra.mxu0 0.0
    %3328 = vmatprep.subr.mxu0 0.0
    %3329 = vmatpush1.xpose.msra.mxu0 0.0
    %3330 = vmatprep.subr.mxu0 0.0
    %3331 = vmatpush1.xpose.msra.mxu0 0.0
    %3332 = vmatprep.subr.mxu0 0.0
    %3333 = vmatpush1.xpose.msra.mxu0 0.0
    %3334 = vmatprep.subr.mxu0 0.0
    %3335 = vmatpush1.xpose.msra.mxu0 0.0
    %3336 = vmatprep.subr.mxu0 0.0
    %3337 = vmatpush1.xpose.msra.mxu0 0.0
    %3338 = vmatprep.subr.mxu0 0.0
    %3339 = vmatpush1.xpose.msra.mxu0 0.0
    %3340 = vmatprep.subr.mxu0 0.0
    %3341 = vmatpush1.xpose.msra.mxu0 0.0
    %3342 = vmatprep.subr.mxu0 0.0
    %3343 = vmatpush1.xpose.msra.mxu0 0.0
    %3344 = vmatprep.subr.mxu0 0.0
    %3345 = vmatpush1.xpose.msra.mxu0 0.0
    %3346 = vmatprep.subr.mxu0 0.0
    %3347 = vmatpush1.xpose.msra.mxu0 0.0
    %3348 = vmatprep.subr.mxu0 0.0
    %3349 = vmatpush1.xpose.msra.mxu0 0.0
    %3350 = vmatprep.subr.mxu0 0.0
    %3351 = vmatpush1.xpose.msra.mxu0 %v3318
    %3352 = vmatprep.subr.mxu0 0.0
    %3353 = vmatpush2.xpose.msra.mxu0 0.0
    %3354 = vmatprep.subr.mxu0 0.0
    %3355 = vmatpush2.xpose.msra.mxu0 0.0
    %3356 = vmatprep.subr.mxu0 0.0
    %3357 = vmatpush2.xpose.msra.mxu0 0.0
    %3358 = vmatprep.subr.mxu0 0.0
    %3359 = vmatpush2.xpose.msra.mxu0 0.0
    %3360 = vmatprep.subr.mxu0 0.0
    %3361 = vmatpush2.xpose.msra.mxu0 0.0
    %3362 = vmatprep.subr.mxu0 0.0
    %3363 = vmatpush2.xpose.msra.mxu0 0.0
    %3364 = vmatprep.subr.mxu0 0.0
    %3365 = vmatpush2.xpose.msra.mxu0 0.0
    %3366 = vmatprep.subr.mxu0 0.0
    %3367 = vmatpush2.xpose.msra.mxu0 0.0
    %3368 = vmatprep.subr.mxu0 0.0
    %3369 = vmatpush2.xpose.msra.mxu0 0.0
    %3370 = vmatprep.subr.mxu0 0.0
    %3371 = vmatpush2.xpose.msra.mxu0 0.0
    %3372 = vmatprep.subr.mxu0 0.0
    %3373 = vmatpush2.xpose.msra.mxu0 0.0
    %3374 = vmatprep.subr.mxu0 0.0
    %3375 = vmatpush2.xpose.msra.mxu0 0.0
    %3376 = vmatprep.subr.mxu0 0.0
    %3377 = vmatpush2.xpose.msra.mxu0 0.0
    %3378 = vmatprep.subr.mxu0 0.0
    %3379 = vmatpush2.xpose.msra.mxu0 0.0
    %3380 = vmatprep.subr.mxu0 0.0
    %3381 = vmatpush2.xpose.msra.mxu0 0.0
    %3382 = vmatprep.subr.mxu0 0.0
    %3383 = vmatpush2.xpose.msra.mxu0 0.0
    %3384 = vmatprep.mubr.f32.mxu0 0.0
    %3385 = vmatmul.mubr.f32.gmra.mxu0 %v3316
    %v3386 = vpop.f32.mrf.mxu0
    %v3387 = vadd.f32 0.0, %v3386
    %v3388 = vpop.f32.mrf.mxu0
    %3389 = vdwg.mxu0
    %v3390 = vmul.f32 %v3309, 0.17677669
    %v3391 = vmul.f32 %v3387, 0.17677669
    %v3392 = vadd.f32 %v3390, %v94
    %v3393 = vadd.f32 %v3391, %v94
    %v3394 = vsel %vm2729, %v3392, -inf
    %3395 = vmax.xlane.f32.xlu0 %v3394
    %v3396 = vpop.xlane.xlu0 %3395
    %v3397 = vsel %vm2729, %v3393, -inf
    %3398 = vmax.xlane.f32.xlu0 %v3397
    %v3399 = vpop.xlane.xlu0 %3398
    %v3400 = vsub.f32 %v3392, %v3396
    %v3401 = vsub.f32 %v3393, %v3399
    %v3402 = vmul.f32 %v3400, 1.442695
    %v3403 = vpow.pop %v3402
    %v3404 = vmul.f32 %v3401, 1.442695
    %v3405 = vpow.pop %v3404
    %v3406 = vsel %vm2729, %v3403, 0.0
    %3407 = vadd.xlane.f32.xlu0 %v3406
    %v3408 = vpop.xlane.xlu0 %3407
    %v3409 = vsel %vm2729, %v3405, 0.0
    %3410 = vadd.xlane.f32.xlu0 %v3409
    %v3411 = vpop.xlane.xlu0 %3410
    %v3412 = vrcp.pop %v3408
    %v3413 = vrcp.pop %v3411
    %v3414 = vmul.f32 %v3403, %v3412
    %v3415 = vmul.f32 %v3405, %v3413
    %3416 = vrot.lane.b32.xlu0 %v2570, 64
    %v3417 = vpop.permute.xlu0 %3416
    %v3420 = vsel %vm2729, %v3414, 0
    %3422 = vmatprep.subr.mxu0 0.0
    %3423 = vmatpush1.msra.mxu0 0.0
    %3424 = vmatprep.subr.mxu0 0.0
    %3425 = vmatpush1.msra.mxu0 0.0
    %3426 = vmatprep.subr.mxu0 0.0
    %3427 = vmatpush1.msra.mxu0 0.0
    %3428 = vmatprep.subr.mxu0 0.0
    %3429 = vmatpush1.msra.mxu0 0.0
    %3430 = vmatprep.subr.mxu0 0.0
    %3431 = vmatpush1.msra.mxu0 0.0
    %3432 = vmatprep.subr.mxu0 0.0
    %3433 = vmatpush1.msra.mxu0 0.0
    %3434 = vmatprep.subr.mxu0 0.0
    %3435 = vmatpush1.msra.mxu0 0.0
    %3436 = vmatprep.subr.mxu0 0.0
    %3437 = vmatpush1.msra.mxu0 0.0
    %3438 = vmatprep.subr.mxu0 0.0
    %3439 = vmatpush1.msra.mxu0 0.0
    %3440 = vmatprep.subr.mxu0 0.0
    %3441 = vmatpush1.msra.mxu0 0.0
    %3442 = vmatprep.subr.mxu0 0.0
    %3443 = vmatpush1.msra.mxu0 0.0
    %3444 = vmatprep.subr.mxu0 0.0
    %3445 = vmatpush1.msra.mxu0 0.0
    %3446 = vmatprep.subr.mxu0 0.0
    %3447 = vmatpush1.msra.mxu0 0.0
    %3448 = vmatprep.subr.mxu0 0.0
    %3449 = vmatpush1.msra.mxu0 0.0
    %3450 = vmatprep.subr.mxu0 0.0
    %3451 = vmatpush1.msra.mxu0 0.0
    %3452 = vmatprep.subr.mxu0 0.0
    %3453 = vmatpush1.msra.mxu0 %v3417
    %3454 = vmatprep.subr.mxu0 0.0
    %3455 = vmatpush2.msra.mxu0 0.0
    %3456 = vmatprep.subr.mxu0 0.0
    %3457 = vmatpush2.msra.mxu0 0.0
    %3458 = vmatprep.subr.mxu0 0.0
    %3459 = vmatpush2.msra.mxu0 0.0
    %3460 = vmatprep.subr.mxu0 0.0
    %3461 = vmatpush2.msra.mxu0 0.0
    %3462 = vmatprep.subr.mxu0 0.0
    %3463 = vmatpush2.msra.mxu0 0.0
    %3464 = vmatprep.subr.mxu0 0.0
    %3465 = vmatpush2.msra.mxu0 0.0
    %3466 = vmatprep.subr.mxu0 0.0
    %3467 = vmatpush2.msra.mxu0 0.0
    %3468 = vmatprep.subr.mxu0 0.0
    %3469 = vmatpush2.msra.mxu0 0.0
    %3470 = vmatprep.subr.mxu0 0.0
    %3471 = vmatpush2.msra.mxu0 0.0
    %3472 = vmatprep.subr.mxu0 0.0
    %3473 = vmatpush2.msra.mxu0 0.0
    %3474 = vmatprep.subr.mxu0 0.0
    %3475 = vmatpush2.msra.mxu0 0.0
    %3476 = vmatprep.subr.mxu0 0.0
    %3477 = vmatpush2.msra.mxu0 0.0
    %3478 = vmatprep.subr.mxu0 0.0
    %3479 = vmatpush2.msra.mxu0 0.0
    %3480 = vmatprep.subr.mxu0 0.0
    %3481 = vmatpush2.msra.mxu0 0.0
    %3482 = vmatprep.subr.mxu0 0.0
    %3483 = vmatpush2.msra.mxu0 0.0
    %3484 = vmatprep.subr.mxu0 0.0
    %3485 = vmatpush2.msra.mxu0 0.0
    %3486 = vmatprep.mubr.f32.mxu0 0.0
    %3487 = vmatmul.mubr.f32.gmra.mxu0 %v3420
    %v3488 = vpop.f32.mrf.mxu0
    %v3489 = vadd.f32 0.0, %v3488
    %v3490 = vpop.f32.mrf.mxu0
    %3491 = vdwg.mxu0
    %3492 = vrot.lane.b32.xlu0 %v2571, 64
    %v3493 = vpop.permute.xlu0 %3492
    %v3496 = vsel %vm2729, %v3415, 0
    %3498 = vmatprep.subr.mxu0 0.0
    %3499 = vmatpush1.msra.mxu0 0.0
    %3500 = vmatprep.subr.mxu0 0.0
    %3501 = vmatpush1.msra.mxu0 0.0
    %3502 = vmatprep.subr.mxu0 0.0
    %3503 = vmatpush1.msra.mxu0 0.0
    %3504 = vmatprep.subr.mxu0 0.0
    %3505 = vmatpush1.msra.mxu0 0.0
    %3506 = vmatprep.subr.mxu0 0.0
    %3507 = vmatpush1.msra.mxu0 0.0
    %3508 = vmatprep.subr.mxu0 0.0
    %3509 = vmatpush1.msra.mxu0 0.0
    %3510 = vmatprep.subr.mxu0 0.0
    %3511 = vmatpush1.msra.mxu0 0.0
    %3512 = vmatprep.subr.mxu0 0.0
    %3513 = vmatpush1.msra.mxu0 0.0
    %3514 = vmatprep.subr.mxu0 0.0
    %3515 = vmatpush1.msra.mxu0 0.0
    %3516 = vmatprep.subr.mxu0 0.0
    %3517 = vmatpush1.msra.mxu0 0.0
    %3518 = vmatprep.subr.mxu0 0.0
    %3519 = vmatpush1.msra.mxu0 0.0
    %3520 = vmatprep.subr.mxu0 0.0
    %3521 = vmatpush1.msra.mxu0 0.0
    %3522 = vmatprep.subr.mxu0 0.0
    %3523 = vmatpush1.msra.mxu0 0.0
    %3524 = vmatprep.subr.mxu0 0.0
    %3525 = vmatpush1.msra.mxu0 0.0
    %3526 = vmatprep.subr.mxu0 0.0
    %3527 = vmatpush1.msra.mxu0 0.0
    %3528 = vmatprep.subr.mxu0 0.0
    %3529 = vmatpush1.msra.mxu0 %v3493
    %3530 = vmatprep.subr.mxu0 0.0
    %3531 = vmatpush2.msra.mxu0 0.0
    %3532 = vmatprep.subr.mxu0 0.0
    %3533 = vmatpush2.msra.mxu0 0.0
    %3534 = vmatprep.subr.mxu0 0.0
    %3535 = vmatpush2.msra.mxu0 0.0
    %3536 = vmatprep.subr.mxu0 0.0
    %3537 = vmatpush2.msra.mxu0 0.0
    %3538 = vmatprep.subr.mxu0 0.0
    %3539 = vmatpush2.msra.mxu0 0.0
    %3540 = vmatprep.subr.mxu0 0.0
    %3541 = vmatpush2.msra.mxu0 0.0
    %3542 = vmatprep.subr.mxu0 0.0
    %3543 = vmatpush2.msra.mxu0 0.0
    %3544 = vmatprep.subr.mxu0 0.0
    %3545 = vmatpush2.msra.mxu0 0.0
    %3546 = vmatprep.subr.mxu0 0.0
    %3547 = vmatpush2.msra.mxu0 0.0
    %3548 = vmatprep.subr.mxu0 0.0
    %3549 = vmatpush2.msra.mxu0 0.0
    %3550 = vmatprep.subr.mxu0 0.0
    %3551 = vmatpush2.msra.mxu0 0.0
    %3552 = vmatprep.subr.mxu0 0.0
    %3553 = vmatpush2.msra.mxu0 0.0
    %3554 = vmatprep.subr.mxu0 0.0
    %3555 = vmatpush2.msra.mxu0 0.0
    %3556 = vmatprep.subr.mxu0 0.0
    %3557 = vmatpush2.msra.mxu0 0.0
    %3558 = vmatprep.subr.mxu0 0.0
    %3559 = vmatpush2.msra.mxu0 0.0
    %3560 = vmatprep.subr.mxu0 0.0
    %3561 = vmatpush2.msra.mxu0 0.0
    %3562 = vmatprep.mubr.f32.mxu0 0.0
    %3563 = vmatmul.mubr.f32.gmra.mxu0 %v3496
    %v3564 = vpop.f32.mrf.mxu0
    %v3565 = vadd.f32 0.0, %v3564
    %v3566 = vpop.f32.mrf.mxu0
    %3567 = vdwg.mxu0
    %3568 = vrot.lane.b32.xlu0 %v2556, 32
    %v3569 = vpop.permute.xlu0 %3568
    %3570 = vrot.lane.b32.xlu0 %v2563, 32
    %v3571 = vpop.permute.xlu0 %3570
    %v3572 = vsel %vm2572, %v3569, 0
    %v3574 = vsel %vm2572, %v3571, 0
    %3576 = vmatprep.subr.mxu0 0.0
    %3577 = vmatpush1.xpose.msra.mxu0 0.0
    %3578 = vmatprep.subr.mxu0 0.0
    %3579 = vmatpush1.xpose.msra.mxu0 0.0
    %3580 = vmatprep.subr.mxu0 0.0
    %3581 = vmatpush1.xpose.msra.mxu0 0.0
    %3582 = vmatprep.subr.mxu0 0.0
    %3583 = vmatpush1.xpose.msra.mxu0 0.0
    %3584 = vmatprep.subr.mxu0 0.0
    %3585 = vmatpush1.xpose.msra.mxu0 0.0
    %3586 = vmatprep.subr.mxu0 0.0
    %3587 = vmatpush1.xpose.msra.mxu0 0.0
    %3588 = vmatprep.subr.mxu0 0.0
    %3589 = vmatpush1.xpose.msra.mxu0 0.0
    %3590 = vmatprep.subr.mxu0 0.0
    %3591 = vmatpush1.xpose.msra.mxu0 0.0
    %3592 = vmatprep.subr.mxu0 0.0
    %3593 = vmatpush1.xpose.msra.mxu0 0.0
    %3594 = vmatprep.subr.mxu0 0.0
    %3595 = vmatpush1.xpose.msra.mxu0 0.0
    %3596 = vmatprep.subr.mxu0 0.0
    %3597 = vmatpush1.xpose.msra.mxu0 0.0
    %3598 = vmatprep.subr.mxu0 0.0
    %3599 = vmatpush1.xpose.msra.mxu0 0.0
    %3600 = vmatprep.subr.mxu0 0.0
    %3601 = vmatpush1.xpose.msra.mxu0 0.0
    %3602 = vmatprep.subr.mxu0 0.0
    %3603 = vmatpush1.xpose.msra.mxu0 0.0
    %3604 = vmatprep.subr.mxu0 0.0
    %3605 = vmatpush1.xpose.msra.mxu0 0.0
    %3606 = vmatprep.subr.mxu0 0.0
    %3607 = vmatpush1.xpose.msra.mxu0 %v3574
    %3608 = vmatprep.subr.mxu0 0.0
    %3609 = vmatpush2.xpose.msra.mxu0 0.0
    %3610 = vmatprep.subr.mxu0 0.0
    %3611 = vmatpush2.xpose.msra.mxu0 0.0
    %3612 = vmatprep.subr.mxu0 0.0
    %3613 = vmatpush2.xpose.msra.mxu0 0.0
    %3614 = vmatprep.subr.mxu0 0.0
    %3615 = vmatpush2.xpose.msra.mxu0 0.0
    %3616 = vmatprep.subr.mxu0 0.0
    %3617 = vmatpush2.xpose.msra.mxu0 0.0
    %3618 = vmatprep.subr.mxu0 0.0
    %3619 = vmatpush2.xpose.msra.mxu0 0.0
    %3620 = vmatprep.subr.mxu0 0.0
    %3621 = vmatpush2.xpose.msra.mxu0 0.0
    %3622 = vmatprep.subr.mxu0 0.0
    %3623 = vmatpush2.xpose.msra.mxu0 0.0
    %3624 = vmatprep.subr.mxu0 0.0
    %3625 = vmatpush2.xpose.msra.mxu0 0.0
    %3626 = vmatprep.subr.mxu0 0.0
    %3627 = vmatpush2.xpose.msra.mxu0 0.0
    %3628 = vmatprep.subr.mxu0 0.0
    %3629 = vmatpush2.xpose.msra.mxu0 0.0
    %3630 = vmatprep.subr.mxu0 0.0
    %3631 = vmatpush2.xpose.msra.mxu0 0.0
    %3632 = vmatprep.subr.mxu0 0.0
    %3633 = vmatpush2.xpose.msra.mxu0 0.0
    %3634 = vmatprep.subr.mxu0 0.0
    %3635 = vmatpush2.xpose.msra.mxu0 0.0
    %3636 = vmatprep.subr.mxu0 0.0
    %3637 = vmatpush2.xpose.msra.mxu0 0.0
    %3638 = vmatprep.subr.mxu0 0.0
    %3639 = vmatpush2.xpose.msra.mxu0 0.0
    %3640 = vmatprep.mubr.f32.mxu0 0.0
    %3641 = vmatmul.mubr.f32.gmra.mxu0 %v3572
    %v3642 = vpop.f32.mrf.mxu0
    %v3643 = vadd.f32 0.0, %v3642
    %v3644 = vpop.f32.mrf.mxu0
    %3645 = vdwg.mxu0
    %3646 = vrot.lane.b32.xlu0 %v2557, 32
    %v3647 = vpop.permute.xlu0 %3646
    %3648 = vrot.lane.b32.xlu0 %v2564, 32
    %v3649 = vpop.permute.xlu0 %3648
    %v3650 = vsel %vm2572, %v3647, 0
    %v3652 = vsel %vm2572, %v3649, 0
    %3654 = vmatprep.subr.mxu0 0.0
    %3655 = vmatpush1.xpose.msra.mxu0 0.0
    %3656 = vmatprep.subr.mxu0 0.0
    %3657 = vmatpush1.xpose.msra.mxu0 0.0
    %3658 = vmatprep.subr.mxu0 0.0
    %3659 = vmatpush1.xpose.msra.mxu0 0.0
    %3660 = vmatprep.subr.mxu0 0.0
    %3661 = vmatpush1.xpose.msra.mxu0 0.0
    %3662 = vmatprep.subr.mxu0 0.0
    %3663 = vmatpush1.xpose.msra.mxu0 0.0
    %3664 = vmatprep.subr.mxu0 0.0
    %3665 = vmatpush1.xpose.msra.mxu0 0.0
    %3666 = vmatprep.subr.mxu0 0.0
    %3667 = vmatpush1.xpose.msra.mxu0 0.0
    %3668 = vmatprep.subr.mxu0 0.0
    %3669 = vmatpush1.xpose.msra.mxu0 0.0
    %3670 = vmatprep.subr.mxu0 0.0
    %3671 = vmatpush1.xpose.msra.mxu0 0.0
    %3672 = vmatprep.subr.mxu0 0.0
    %3673 = vmatpush1.xpose.msra.mxu0 0.0
    %3674 = vmatprep.subr.mxu0 0.0
    %3675 = vmatpush1.xpose.msra.mxu0 0.0
    %3676 = vmatprep.subr.mxu0 0.0
    %3677 = vmatpush1.xpose.msra.mxu0 0.0
    %3678 = vmatprep.subr.mxu0 0.0
    %3679 = vmatpush1.xpose.msra.mxu0 0.0
    %3680 = vmatprep.subr.mxu0 0.0
    %3681 = vmatpush1.xpose.msra.mxu0 0.0
    %3682 = vmatprep.subr.mxu0 0.0
    %3683 = vmatpush1.xpose.msra.mxu0 0.0
    %3684 = vmatprep.subr.mxu0 0.0
    %3685 = vmatpush1.xpose.msra.mxu0 %v3652
    %3686 = vmatprep.subr.mxu0 0.0
    %3687 = vmatpush2.xpose.msra.mxu0 0.0
    %3688 = vmatprep.subr.mxu0 0.0
    %3689 = vmatpush2.xpose.msra.mxu0 0.0
    %3690 = vmatprep.subr.mxu0 0.0
    %3691 = vmatpush2.xpose.msra.mxu0 0.0
    %3692 = vmatprep.subr.mxu0 0.0
    %3693 = vmatpush2.xpose.msra.mxu0 0.0
    %3694 = vmatprep.subr.mxu0 0.0
    %3695 = vmatpush2.xpose.msra.mxu0 0.0
    %3696 = vmatprep.subr.mxu0 0.0
    %3697 = vmatpush2.xpose.msra.mxu0 0.0
    %3698 = vmatprep.subr.mxu0 0.0
    %3699 = vmatpush2.xpose.msra.mxu0 0.0
    %3700 = vmatprep.subr.mxu0 0.0
    %3701 = vmatpush2.xpose.msra.mxu0 0.0
    %3702 = vmatprep.subr.mxu0 0.0
    %3703 = vmatpush2.xpose.msra.mxu0 0.0
    %3704 = vmatprep.subr.mxu0 0.0
    %3705 = vmatpush2.xpose.msra.mxu0 0.0
    %3706 = vmatprep.subr.mxu0 0.0
    %3707 = vmatpush2.xpose.msra.mxu0 0.0
    %3708 = vmatprep.subr.mxu0 0.0
    %3709 = vmatpush2.xpose.msra.mxu0 0.0
    %3710 = vmatprep.subr.mxu0 0.0
    %3711 = vmatpush2.xpose.msra.mxu0 0.0
    %3712 = vmatprep.subr.mxu0 0.0
    %3713 = vmatpush2.xpose.msra.mxu0 0.0
    %3714 = vmatprep.subr.mxu0 0.0
    %3715 = vmatpush2.xpose.msra.mxu0 0.0
    %3716 = vmatprep.subr.mxu0 0.0
    %3717 = vmatpush2.xpose.msra.mxu0 0.0
    %3718 = vmatprep.mubr.f32.mxu0 0.0
    %3719 = vmatmul.mubr.f32.gmra.mxu0 %v3650
    %v3720 = vpop.f32.mrf.mxu0
    %v3721 = vadd.f32 0.0, %v3720
    %v3722 = vpop.f32.mrf.mxu0
    %3723 = vdwg.mxu0
    %v3724 = vmul.f32 %v3643, 0.17677669
    %v3725 = vmul.f32 %v3721, 0.17677669
    %v3726 = vadd.f32 %v3724, %v94
    %v3727 = vadd.f32 %v3725, %v94
    %v3728 = vsel %vm2729, %v3726, -inf
    %3729 = vmax.xlane.f32.xlu0 %v3728
    %v3730 = vpop.xlane.xlu0 %3729
    %v3731 = vsel %vm2729, %v3727, -inf
    %3732 = vmax.xlane.f32.xlu0 %v3731
    %v3733 = vpop.xlane.xlu0 %3732
    %v3734 = vsub.f32 %v3726, %v3730
    %v3735 = vsub.f32 %v3727, %v3733
    %v3736 = vmul.f32 %v3734, 1.442695
    %v3737 = vpow.pop %v3736
    %v3738 = vmul.f32 %v3735, 1.442695
    %v3739 = vpow.pop %v3738
    %v3740 = vsel %vm2729, %v3737, 0.0
    %3741 = vadd.xlane.f32.xlu0 %v3740
    %v3742 = vpop.xlane.xlu0 %3741
    %v3743 = vsel %vm2729, %v3739, 0.0
    %3744 = vadd.xlane.f32.xlu0 %v3743
    %v3745 = vpop.xlane.xlu0 %3744
    %v3746 = vrcp.pop %v3742
    %v3747 = vrcp.pop %v3745
    %v3748 = vmul.f32 %v3737, %v3746
    %v3749 = vmul.f32 %v3739, %v3747
    %3750 = vrot.lane.b32.xlu0 %v2570, 32
    %v3751 = vpop.permute.xlu0 %3750
    %v3754 = vsel %vm2729, %v3748, 0
    %3756 = vmatprep.subr.mxu0 0.0
    %3757 = vmatpush1.msra.mxu0 0.0
    %3758 = vmatprep.subr.mxu0 0.0
    %3759 = vmatpush1.msra.mxu0 0.0
    %3760 = vmatprep.subr.mxu0 0.0
    %3761 = vmatpush1.msra.mxu0 0.0
    %3762 = vmatprep.subr.mxu0 0.0
    %3763 = vmatpush1.msra.mxu0 0.0
    %3764 = vmatprep.subr.mxu0 0.0
    %3765 = vmatpush1.msra.mxu0 0.0
    %3766 = vmatprep.subr.mxu0 0.0
    %3767 = vmatpush1.msra.mxu0 0.0
    %3768 = vmatprep.subr.mxu0 0.0
    %3769 = vmatpush1.msra.mxu0 0.0
    %3770 = vmatprep.subr.mxu0 0.0
    %3771 = vmatpush1.msra.mxu0 0.0
    %3772 = vmatprep.subr.mxu0 0.0
    %3773 = vmatpush1.msra.mxu0 0.0
    %3774 = vmatprep.subr.mxu0 0.0
    %3775 = vmatpush1.msra.mxu0 0.0
    %3776 = vmatprep.subr.mxu0 0.0
    %3777 = vmatpush1.msra.mxu0 0.0
    %3778 = vmatprep.subr.mxu0 0.0
    %3779 = vmatpush1.msra.mxu0 0.0
    %3780 = vmatprep.subr.mxu0 0.0
    %3781 = vmatpush1.msra.mxu0 0.0
    %3782 = vmatprep.subr.mxu0 0.0
    %3783 = vmatpush1.msra.mxu0 0.0
    %3784 = vmatprep.subr.mxu0 0.0
    %3785 = vmatpush1.msra.mxu0 0.0
    %3786 = vmatprep.subr.mxu0 0.0
    %3787 = vmatpush1.msra.mxu0 %v3751
    %3788 = vmatprep.subr.mxu0 0.0
    %3789 = vmatpush2.msra.mxu0 0.0
    %3790 = vmatprep.subr.mxu0 0.0
    %3791 = vmatpush2.msra.mxu0 0.0
    %3792 = vmatprep.subr.mxu0 0.0
    %3793 = vmatpush2.msra.mxu0 0.0
    %3794 = vmatprep.subr.mxu0 0.0
    %3795 = vmatpush2.msra.mxu0 0.0
    %3796 = vmatprep.subr.mxu0 0.0
    %3797 = vmatpush2.msra.mxu0 0.0
    %3798 = vmatprep.subr.mxu0 0.0
    %3799 = vmatpush2.msra.mxu0 0.0
    %3800 = vmatprep.subr.mxu0 0.0
    %3801 = vmatpush2.msra.mxu0 0.0
    %3802 = vmatprep.subr.mxu0 0.0
    %3803 = vmatpush2.msra.mxu0 0.0
    %3804 = vmatprep.subr.mxu0 0.0
    %3805 = vmatpush2.msra.mxu0 0.0
    %3806 = vmatprep.subr.mxu0 0.0
    %3807 = vmatpush2.msra.mxu0 0.0
    %3808 = vmatprep.subr.mxu0 0.0
    %3809 = vmatpush2.msra.mxu0 0.0
    %3810 = vmatprep.subr.mxu0 0.0
    %3811 = vmatpush2.msra.mxu0 0.0
    %3812 = vmatprep.subr.mxu0 0.0
    %3813 = vmatpush2.msra.mxu0 0.0
    %3814 = vmatprep.subr.mxu0 0.0
    %3815 = vmatpush2.msra.mxu0 0.0
    %3816 = vmatprep.subr.mxu0 0.0
    %3817 = vmatpush2.msra.mxu0 0.0
    %3818 = vmatprep.subr.mxu0 0.0
    %3819 = vmatpush2.msra.mxu0 0.0
    %3820 = vmatprep.mubr.f32.mxu0 0.0
    %3821 = vmatmul.mubr.f32.gmra.mxu0 %v3754
    %v3822 = vpop.f32.mrf.mxu0
    %v3823 = vadd.f32 0.0, %v3822
    %v3824 = vpop.f32.mrf.mxu0
    %3825 = vdwg.mxu0
    %3826 = vrot.lane.b32.xlu0 %v2571, 32
    %v3827 = vpop.permute.xlu0 %3826
    %v3830 = vsel %vm2729, %v3749, 0
    %3832 = vmatprep.subr.mxu0 0.0
    %3833 = vmatpush1.msra.mxu0 0.0
    %3834 = vmatprep.subr.mxu0 0.0
    %3835 = vmatpush1.msra.mxu0 0.0
    %3836 = vmatprep.subr.mxu0 0.0
    %3837 = vmatpush1.msra.mxu0 0.0
    %3838 = vmatprep.subr.mxu0 0.0
    %3839 = vmatpush1.msra.mxu0 0.0
    %3840 = vmatprep.subr.mxu0 0.0
    %3841 = vmatpush1.msra.mxu0 0.0
    %3842 = vmatprep.subr.mxu0 0.0
    %3843 = vmatpush1.msra.mxu0 0.0
    %3844 = vmatprep.subr.mxu0 0.0
    %3845 = vmatpush1.msra.mxu0 0.0
    %3846 = vmatprep.subr.mxu0 0.0
    %3847 = vmatpush1.msra.mxu0 0.0
    %3848 = vmatprep.subr.mxu0 0.0
    %3849 = vmatpush1.msra.mxu0 0.0
    %3850 = vmatprep.subr.mxu0 0.0
    %3851 = vmatpush1.msra.mxu0 0.0
    %3852 = vmatprep.subr.mxu0 0.0
    %3853 = vmatpush1.msra.mxu0 0.0
    %3854 = vmatprep.subr.mxu0 0.0
    %3855 = vmatpush1.msra.mxu0 0.0
    %3856 = vmatprep.subr.mxu0 0.0
    %3857 = vmatpush1.msra.mxu0 0.0
    %3858 = vmatprep.subr.mxu0 0.0
    %3859 = vmatpush1.msra.mxu0 0.0
    %3860 = vmatprep.subr.mxu0 0.0
    %3861 = vmatpush1.msra.mxu0 0.0
    %3862 = vmatprep.subr.mxu0 0.0
    %3863 = vmatpush1.msra.mxu0 %v3827
    %3864 = vmatprep.subr.mxu0 0.0
    %3865 = vmatpush2.msra.mxu0 0.0
    %3866 = vmatprep.subr.mxu0 0.0
    %3867 = vmatpush2.msra.mxu0 0.0
    %3868 = vmatprep.subr.mxu0 0.0
    %3869 = vmatpush2.msra.mxu0 0.0
    %3870 = vmatprep.subr.mxu0 0.0
    %3871 = vmatpush2.msra.mxu0 0.0
    %3872 = vmatprep.subr.mxu0 0.0
    %3873 = vmatpush2.msra.mxu0 0.0
    %3874 = vmatprep.subr.mxu0 0.0
    %3875 = vmatpush2.msra.mxu0 0.0
    %3876 = vmatprep.subr.mxu0 0.0
    %3877 = vmatpush2.msra.mxu0 0.0
    %3878 = vmatprep.subr.mxu0 0.0
    %3879 = vmatpush2.msra.mxu0 0.0
    %3880 = vmatprep.subr.mxu0 0.0
    %3881 = vmatpush2.msra.mxu0 0.0
    %3882 = vmatprep.subr.mxu0 0.0
    %3883 = vmatpush2.msra.mxu0 0.0
    %3884 = vmatprep.subr.mxu0 0.0
    %3885 = vmatpush2.msra.mxu0 0.0
    %3886 = vmatprep.subr.mxu0 0.0
    %3887 = vmatpush2.msra.mxu0 0.0
    %3888 = vmatprep.subr.mxu0 0.0
    %3889 = vmatpush2.msra.mxu0 0.0
    %3890 = vmatprep.subr.mxu0 0.0
    %3891 = vmatpush2.msra.mxu0 0.0
    %3892 = vmatprep.subr.mxu0 0.0
    %3893 = vmatpush2.msra.mxu0 0.0
    %3894 = vmatprep.subr.mxu0 0.0
    %3895 = vmatpush2.msra.mxu0 0.0
    %3896 = vmatprep.mubr.f32.mxu0 0.0
    %3897 = vmatmul.mubr.f32.gmra.mxu0 %v3830
    %v3898 = vpop.f32.mrf.mxu0
    %v3899 = vadd.f32 0.0, %v3898
    %v3900 = vpop.f32.mrf.mxu0
    %3901 = vdwg.mxu0
    %3904 = vrot.lane.b32.xlu0 %v3154, 32
    %v3905 = vpop.permute.xlu0 %3904
    %3906 = vrot.lane.b32.xlu0 %v3231, 32
    %v3907 = vpop.permute.xlu0 %3906
    %3912 = vrot.lane.b32.xlu0 %v3489, 64
    %v3913 = vpop.permute.xlu0 %3912
    %3914 = vrot.lane.b32.xlu0 %v3565, 64
    %v3915 = vpop.permute.xlu0 %3914
    %3920 = vrot.lane.b32.xlu0 %v3823, 96
    %v3921 = vpop.permute.xlu0 %3920
    %3922 = vrot.lane.b32.xlu0 %v3899, 96
    %v3923 = vpop.permute.xlu0 %3922
    %v3926 = vsel %vm2572, %v2822, %v3905
    %v3927 = vsel %vm2572, %v2895, %v3907
    %vm3928 = vcmask 523264
    %v3929 = vsel %vm3928, %v3926, %v3913
    %v3930 = vsel %vm3928, %v3927, %v3915
    %vm3931 = vcmask 785408
    %v3932 = vsel %vm3931, %v3929, %v3921
    %v3933 = vsel %vm3931, %v3930, %v3923
    %v3934 = vpack.c.bf16 %v3933, %v3932
    %v3935 = vld [vmem:[%s4] sm:$0xf]
    %v3936 = vld [vmem:[%s4 + $0x4] sm:$0xf]
    %v3937 = vld [vmem:[%s4 + $0x8] sm:$0xf]
    %v3938 = vld [vmem:[%s4 + $0xc] sm:$0xf]
    %v3939 = vld [vmem:[%s4 + $0x10] sm:$0xf]
    %v3940 = vld [vmem:[%s4 + $0x14] sm:$0xf]
    %v3941 = vld [vmem:[%s4 + $0x18] sm:$0xf]
    %v3942 = vld [vmem:[%s4 + $0x1c] sm:$0xf]
    %v3943 = vld [vmem:[%s4 + $0x20] sm:$0xf]
    %v3944 = vld [vmem:[%s4 + $0x24] sm:$0xf]
    %v3945 = vld [vmem:[%s4 + $0x28] sm:$0xf]
    %v3946 = vld [vmem:[%s4 + $0x2c] sm:$0xf]
    %v3947 = vld [vmem:[%s4 + $0x30] sm:$0xf]
    %v3948 = vld [vmem:[%s4 + $0x34] sm:$0xf]
    %v3949 = vld [vmem:[%s4 + $0x38] sm:$0xf]
    %v3950 = vld [vmem:[%s4 + $0x3c] sm:$0xf]
    %v3967 = vunpack.c.l.b16 %v3935
    %v3968 = vunpack.c.l.b16 %v3936
    %v3969 = vunpack.c.l.b16 %v3937
    %v3970 = vunpack.c.l.b16 %v3938
    %v3971 = vunpack.c.l.b16 %v3939
    %v3972 = vunpack.c.l.b16 %v3940
    %v3973 = vunpack.c.l.b16 %v3941
    %v3974 = vunpack.c.l.b16 %v3942
    %v3975 = vunpack.c.l.b16 %v3943
    %v3976 = vunpack.c.l.b16 %v3944
    %v3977 = vunpack.c.l.b16 %v3945
    %v3978 = vunpack.c.l.b16 %v3946
    %v3979 = vunpack.c.l.b16 %v3947
    %v3980 = vunpack.c.l.b16 %v3948
    %v3981 = vunpack.c.l.b16 %v3949
    %v3982 = vunpack.c.l.b16 %v3950
    %v3983 = vpack.c.b16 %v3968, %v3967
    %v3984 = vpack.c.b16 %v3970, %v3969
    %v3985 = vpack.c.b16 %v3972, %v3971
    %v3986 = vpack.c.b16 %v3974, %v3973
    %v3987 = vpack.c.b16 %v3976, %v3975
    %v3988 = vpack.c.b16 %v3978, %v3977
    %v3989 = vpack.c.b16 %v3980, %v3979
    %v3990 = vpack.c.b16 %v3982, %v3981
    %3999 = vmatprep.subr.bf16.mxu0 0
    %4000 = vmatpush1.bf16.msra.mxu0 %v3990
    %4001 = vmatprep.subr.bf16.mxu0 0
    %4002 = vmatpush1.bf16.msra.mxu0 %v3989
    %4003 = vmatprep.subr.bf16.mxu0 0
    %4004 = vmatpush1.bf16.msra.mxu0 %v3988
    %4005 = vmatprep.subr.bf16.mxu0 0
    %4006 = vmatpush1.bf16.msra.mxu0 %v3987
    %4007 = vmatprep.subr.bf16.mxu0 0
    %4008 = vmatpush1.bf16.msra.mxu0 %v3986
    %4009 = vmatprep.subr.bf16.mxu0 0
    %4010 = vmatpush1.bf16.msra.mxu0 %v3985
    %4011 = vmatprep.subr.bf16.mxu0 0
    %4012 = vmatpush1.bf16.msra.mxu0 %v3984
    %4013 = vmatprep.subr.bf16.mxu0 0
    %4014 = vmatpush1.bf16.msra.mxu0 %v3983
    %4015 = vmatprep.subr.bf16.mxu0 0
    %4016 = vmatpush2.bf16.msra.mxu0 0
    %4017 = vmatprep.subr.bf16.mxu0 0
    %4018 = vmatpush2.bf16.msra.mxu0 0
    %4019 = vmatprep.subr.bf16.mxu0 0
    %4020 = vmatpush2.bf16.msra.mxu0 0
    %4021 = vmatprep.subr.bf16.mxu0 0
    %4022 = vmatpush2.bf16.msra.mxu0 0
    %4023 = vmatprep.subr.bf16.mxu0 0
    %4024 = vmatpush2.bf16.msra.mxu0 0
    %4025 = vmatprep.subr.bf16.mxu0 0
    %4026 = vmatpush2.bf16.msra.mxu0 0
    %4027 = vmatprep.subr.bf16.mxu0 0
    %4028 = vmatpush2.bf16.msra.mxu0 0
    %4029 = vmatprep.subr.bf16.mxu0 0
    %4030 = vmatpush2.bf16.msra.mxu0 0
    %4031 = vmatprep.mubr.bf16.mxu0 0
    %4032 = vmatmul.mubr.bf16.gmra.mxu0 %v3934
    %v4033 = vpop.f32.mrf.mxu0
    %v4034 = vadd.f32 0.0, %v4033
    %v4035 = vpop.f32.mrf.mxu0
    %v4036 = vpop.f32.mrf.mxu0
    %v4037 = vadd.f32 0.0, %v4036
    %v4038 = vpop.f32.mrf.mxu0
    %4039 = vdwg.mxu0
    %v4040 = vadd.f32 %v2263, %v4034
    %v4041 = vadd.f32 %v2266, %v4037
    %v4042 = vld [vmem:[#allocation7 + $0x8] sm:$0x1]
    %v4043 = vlaneseq
    %v4044 = vshrl.u32 %v4043, 7
    %v4045 = vsub.s32 0, %v4044
    %v4046 = vrot.slane %v4042, %v4045
    %v4047 = vadd.f32 %v4040, %v4046
    %v4048 = vadd.f32 %v4041, %v4046
    %v4049 = vld [vmem:[#allocation7 + $0x9] sm:$0x1]
    %v4050 = vld [vmem:[#allocation7 + $0xa] sm:$0x1]
    %4051 = vadd.xlane.f32.xlu0 %v4047
    %v4052 = vpop.xlane.xlu0 %4051
    %4053 = vadd.xlane.f32.xlu0 %v4048
    %v4054 = vpop.xlane.xlu0 %4053
    %v4055 = vmul.f32 %v4052, %v2275
    %v4056 = vmul.f32 %v4054, %v2275
    %v4057 = vsub.f32 %v4047, %v4055
    %v4058 = vsub.f32 %v4048, %v4056
    %v4059 = vmul.f32 %v4057, %v4057
    %v4060 = vmul.f32 %v4058, %v4058
    %4061 = vadd.xlane.f32.xlu0 %v4059
    %v4062 = vpop.xlane.xlu0 %4061
    %4063 = vadd.xlane.f32.xlu0 %v4060
    %v4064 = vpop.xlane.xlu0 %4063
    %v4065 = vmul.f32 %v4062, %v2275
    %v4066 = vmul.f32 %v4064, %v2275
    %v4067 = vadd.f32 %v4065, 1e-06
    %v4068 = vadd.f32 %v4066, 1e-06
    %v4069 = vrsqrt.pop %v4067
    %v4070 = vrsqrt.pop %v4068
    %v4071 = vmul.f32 %v4057, %v4069
    %v4072 = vmul.f32 %v4058, %v4070
    %v4073 = vlaneseq
    %v4074 = vshrl.u32 %v4073, 7
    %v4075 = vsub.s32 0, %v4074
    %v4076 = vrot.slane %v4049, %v4075
    %v4077 = vmul.f32 %v4071, %v4076
    %v4078 = vmul.f32 %v4072, %v4076
    %v4079 = vlaneseq
    %v4080 = vshrl.u32 %v4079, 7
    %v4081 = vsub.s32 0, %v4080
    %v4082 = vrot.slane %v4050, %v4081
    %v4083 = vadd.f32 %v4077, %v4082
    %v4084 = vadd.f32 %v4078, %v4082
    %v4085 = vpack.c.bf16 %v4084, %v4083
    %v4086 = vld [vmem:[%s5] sm:$0xff]
    %v4087 = vld [vmem:[%s5 + $0x8] sm:$0xff]
    %v4088 = vld [vmem:[%s5 + $0x10] sm:$0xff]
    %v4089 = vld [vmem:[%s5 + $0x18] sm:$0xff]
    %v4090 = vld [vmem:[%s5 + $0x20] sm:$0xff]
    %v4091 = vld [vmem:[%s5 + $0x28] sm:$0xff]
    %v4092 = vld [vmem:[%s5 + $0x30] sm:$0xff]
    %v4093 = vld [vmem:[%s5 + $0x38] sm:$0xff]
    %v4094 = vld [vmem:[%s5 + $0x40] sm:$0xff]
    %v4095 = vld [vmem:[%s5 + $0x48] sm:$0xff]
    %v4096 = vld [vmem:[%s5 + $0x50] sm:$0xff]
    %v4097 = vld [vmem:[%s5 + $0x58] sm:$0xff]
    %v4098 = vld [vmem:[%s5 + $0x60] sm:$0xff]
    %v4099 = vld [vmem:[%s5 + $0x68] sm:$0xff]
    %v4100 = vld [vmem:[%s5 + $0x70] sm:$0xff]
    %v4101 = vld [vmem:[%s5 + $0x78] sm:$0xff]
    %v4102 = vld [vmem:[%s5 + $0x80] sm:$0xff]
    %v4103 = vld [vmem:[%s5 + $0x88] sm:$0xff]
    %v4104 = vld [vmem:[%s5 + $0x90] sm:$0xff]
    %v4105 = vld [vmem:[%s5 + $0x98] sm:$0xff]
    %v4106 = vld [vmem:[%s5 + $0xa0] sm:$0xff]
    %v4107 = vld [vmem:[%s5 + $0xa8] sm:$0xff]
    %v4108 = vld [vmem:[%s5 + $0xb0] sm:$0xff]
    %v4109 = vld [vmem:[%s5 + $0xb8] sm:$0xff]
    %v4110 = vld [vmem:[%s5 + $0xc0] sm:$0xff]
    %v4111 = vld [vmem:[%s5 + $0xc8] sm:$0xff]
    %v4112 = vld [vmem:[%s5 + $0xd0] sm:$0xff]
    %v4113 = vld [vmem:[%s5 + $0xd8] sm:$0xff]
    %v4114 = vld [vmem:[%s5 + $0xe0] sm:$0xff]
    %v4115 = vld [vmem:[%s5 + $0xe8] sm:$0xff]
    %v4116 = vld [vmem:[%s5 + $0xf0] sm:$0xff]
    %v4117 = vld [vmem:[%s5 + $0xf8] sm:$0xff]
    %v4118 = vld [vmem:[%s6] sm:$0xf]
    %v4120 = vlaneseq
    %v4121 = vshrl.u32 %v4120, 7
    %v4122 = vsub.s32 0, %v4121
    %v4123 = vrot.slane %v4118, %v4122
    %v4124 = vlaneseq
    %v4125 = vshrl.u32 %v4124, 7
    %v4126 = vsub.s32 1, %v4125
    %v4127 = vrot.slane %v4118, %v4126
    %v4128 = vlaneseq
    %v4129 = vshrl.u32 %v4128, 7
    %v4130 = vsub.s32 2, %v4129
    %v4131 = vrot.slane %v4118, %v4130
    %v4132 = vlaneseq
    %v4133 = vshrl.u32 %v4132, 7
    %v4134 = vsub.s32 3, %v4133
    %v4135 = vrot.slane %v4118, %v4134
    %v4172 = vunpack.c.l.b16 %v4086
    %v4173 = vunpack.c.h.b16 %v4086
    %v4174 = vunpack.c.l.b16 %v4087
    %v4175 = vunpack.c.h.b16 %v4087
    %v4176 = vunpack.c.l.b16 %v4088
    %v4177 = vunpack.c.h.b16 %v4088
    %v4178 = vunpack.c.l.b16 %v4089
    %v4179 = vunpack.c.h.b16 %v4089
    %v4180 = vunpack.c.l.b16 %v4090
    %v4181 = vunpack.c.h.b16 %v4090
    %v4182 = vunpack.c.l.b16 %v4091
    %v4183 = vunpack.c.h.b16 %v4091
    %v4184 = vunpack.c.l.b16 %v4092
    %v4185 = vunpack.c.h.b16 %v4092
    %v4186 = vunpack.c.l.b16 %v4093
    %v4187 = vunpack.c.h.b16 %v4093
    %v4188 = vunpack.c.l.b16 %v4094
    %v4189 = vunpack.c.h.b16 %v4094
    %v4190 = vunpack.c.l.b16 %v4095
    %v4191 = vunpack.c.h.b16 %v4095
    %v4192 = vunpack.c.l.b16 %v4096
    %v4193 = vunpack.c.h.b16 %v4096
    %v4194 = vunpack.c.l.b16 %v4097
    %v4195 = vunpack.c.h.b16 %v4097
    %v4196 = vunpack.c.l.b16 %v4098
    %v4197 = vunpack.c.h.b16 %v4098
    %v4198 = vunpack.c.l.b16 %v4099
    %v4199 = vunpack.c.h.b16 %v4099
    %v4200 = vunpack.c.l.b16 %v4100
    %v4201 = vunpack.c.h.b16 %v4100
    %v4202 = vunpack.c.l.b16 %v4101
    %v4203 = vunpack.c.h.b16 %v4101
    %v4204 = vunpack.c.l.b16 %v4102
    %v4205 = vunpack.c.h.b16 %v4102
    %v4206 = vunpack.c.l.b16 %v4103
    %v4207 = vunpack.c.h.b16 %v4103
    %v4208 = vunpack.c.l.b16 %v4104
    %v4209 = vunpack.c.h.b16 %v4104
    %v4210 = vunpack.c.l.b16 %v4105
    %v4211 = vunpack.c.h.b16 %v4105
    %v4212 = vunpack.c.l.b16 %v4106
    %v4213 = vunpack.c.h.b16 %v4106
    %v4214 = vunpack.c.l.b16 %v4107
    %v4215 = vunpack.c.h.b16 %v4107
    %v4216 = vunpack.c.l.b16 %v4108
    %v4217 = vunpack.c.h.b16 %v4108
    %v4218 = vunpack.c.l.b16 %v4109
    %v4219 = vunpack.c.h.b16 %v4109
    %v4220 = vunpack.c.l.b16 %v4110
    %v4221 = vunpack.c.h.b16 %v4110
    %v4222 = vunpack.c.l.b16 %v4111
    %v4223 = vunpack.c.h.b16 %v4111
    %v4224 = vunpack.c.l.b16 %v4112
    %v4225 = vunpack.c.h.b16 %v4112
    %v4226 = vunpack.c.l.b16 %v4113
    %v4227 = vunpack.c.h.b16 %v4113
    %v4228 = vunpack.c.l.b16 %v4114
    %v4229 = vunpack.c.h.b16 %v4114
    %v4230 = vunpack.c.l.b16 %v4115
    %v4231 = vunpack.c.h.b16 %v4115
    %v4232 = vunpack.c.l.b16 %v4116
    %v4233 = vunpack.c.h.b16 %v4116
    %v4234 = vunpack.c.l.b16 %v4117
    %v4235 = vunpack.c.h.b16 %v4117
    %v4236 = vpack.c.b16 %v4176, %v4172
    %v4237 = vpack.c.b16 %v4177, %v4173
    %v4238 = vpack.c.b16 %v4178, %v4174
    %v4239 = vpack.c.b16 %v4179, %v4175
    %v4240 = vpack.c.b16 %v4184, %v4180
    %v4241 = vpack.c.b16 %v4185, %v4181
    %v4242 = vpack.c.b16 %v4186, %v4182
    %v4243 = vpack.c.b16 %v4187, %v4183
    %v4244 = vpack.c.b16 %v4192, %v4188
    %v4245 = vpack.c.b16 %v4193, %v4189
    %v4246 = vpack.c.b16 %v4194, %v4190
    %v4247 = vpack.c.b16 %v4195, %v4191
    %v4248 = vpack.c.b16 %v4200, %v4196
    %v4249 = vpack.c.b16 %v4201, %v4197
    %v4250 = vpack.c.b16 %v4202, %v4198
    %v4251 = vpack.c.b16 %v4203, %v4199
    %v4252 = vpack.c.b16 %v4208, %v4204
    %v4253 = vpack.c.b16 %v4209, %v4205
    %v4254 = vpack.c.b16 %v4210, %v4206
    %v4255 = vpack.c.b16 %v4211, %v4207
    %v4256 = vpack.c.b16 %v4216, %v4212
    %v4257 = vpack.c.b16 %v4217, %v4213
    %v4258 = vpack.c.b16 %v4218, %v4214
    %v4259 = vpack.c.b16 %v4219, %v4215
    %v4260 = vpack.c.b16 %v4224, %v4220
    %v4261 = vpack.c.b16 %v4225, %v4221
    %v4262 = vpack.c.b16 %v4226, %v4222
    %v4263 = vpack.c.b16 %v4227, %v4223
    %v4264 = vpack.c.b16 %v4232, %v4228
    %v4265 = vpack.c.b16 %v4233, %v4229
    %v4266 = vpack.c.b16 %v4234, %v4230
    %v4267 = vpack.c.b16 %v4235, %v4231
    %4300 = vmatprep.subr.bf16.mxu0 %v4265
    %4301 = vmatpush1.bf16.msra.mxu0 %v4264
    %4302 = vmatprep.subr.bf16.mxu0 %v4261
    %4303 = vmatpush1.bf16.msra.mxu0 %v4260
    %4304 = vmatprep.subr.bf16.mxu0 %v4257
    %4305 = vmatpush1.bf16.msra.mxu0 %v4256
    %4306 = vmatprep.subr.bf16.mxu0 %v4253
    %4307 = vmatpush1.bf16.msra.mxu0 %v4252
    %4308 = vmatprep.subr.bf16.mxu0 %v4249
    %4309 = vmatpush1.bf16.msra.mxu0 %v4248
    %4310 = vmatprep.subr.bf16.mxu0 %v4245
    %4311 = vmatpush1.bf16.msra.mxu0 %v4244
    %4312 = vmatprep.subr.bf16.mxu0 %v4241
    %4313 = vmatpush1.bf16.msra.mxu0 %v4240
    %4314 = vmatprep.subr.bf16.mxu0 %v4237
    %4315 = vmatpush1.bf16.msra.mxu0 %v4236
    %4316 = vmatprep.subr.bf16.mxu0 0
    %4317 = vmatpush2.bf16.msra.mxu0 0
    %4318 = vmatprep.subr.bf16.mxu0 0
    %4319 = vmatpush2.bf16.msra.mxu0 0
    %4320 = vmatprep.subr.bf16.mxu0 0
    %4321 = vmatpush2.bf16.msra.mxu0 0
    %4322 = vmatprep.subr.bf16.mxu0 0
    %4323 = vmatpush2.bf16.msra.mxu0 0
    %4324 = vmatprep.subr.bf16.mxu0 0
    %4325 = vmatpush2.bf16.msra.mxu0 0
    %4326 = vmatprep.subr.bf16.mxu0 0
    %4327 = vmatpush2.bf16.msra.mxu0 0
    %4328 = vmatprep.subr.bf16.mxu0 0
    %4329 = vmatpush2.bf16.msra.mxu0 0
    %4330 = vmatprep.subr.bf16.mxu0 0
    %4331 = vmatpush2.bf16.msra.mxu0 0
    %4332 = vmatprep.mubr.bf16.mxu0 0
    %4333 = vmatmul.mubr.bf16.gmra.mxu0 %v4085
    %v4334 = vpop.f32.mrf.mxu0
    %v4335 = vadd.f32 %v4123, %v4334
    %v4336 = vpop.f32.mrf.mxu0
    %v4337 = vadd.f32 %v4127, %v4336
    %v4338 = vpop.f32.mrf.mxu0
    %v4339 = vadd.f32 %v4123, %v4338
    %v4340 = vpop.f32.mrf.mxu0
    %v4341 = vadd.f32 %v4127, %v4340
    %4342 = vdwg.mxu0
    %4343 = vmatprep.subr.bf16.mxu0 %v4267
    %4344 = vmatpush1.bf16.msra.mxu0 %v4266
    %4345 = vmatprep.subr.bf16.mxu0 %v4263
    %4346 = vmatpush1.bf16.msra.mxu0 %v4262
    %4347 = vmatprep.subr.bf16.mxu0 %v4259
    %4348 = vmatpush1.bf16.msra.mxu0 %v4258
    %4349 = vmatprep.subr.bf16.mxu0 %v4255
    %4350 = vmatpush1.bf16.msra.mxu0 %v4254
    %4351 = vmatprep.subr.bf16.mxu0 %v4251
    %4352 = vmatpush1.bf16.msra.mxu0 %v4250
    %4353 = vmatprep.subr.bf16.mxu0 %v4247
    %4354 = vmatpush1.bf16.msra.mxu0 %v4246
    %4355 = vmatprep.subr.bf16.mxu0 %v4243
    %4356 = vmatpush1.bf16.msra.mxu0 %v4242
    %4357 = vmatprep.subr.bf16.mxu0 %v4239
    %4358 = vmatpush1.bf16.msra.mxu0 %v4238
    %4359 = vmatprep.subr.bf16.mxu0 0
    %4360 = vmatpush2.bf16.msra.mxu0 0
    %4361 = vmatprep.subr.bf16.mxu0 0
    %4362 = vmatpush2.bf16.msra.mxu0 0
    %4363 = vmatprep.subr.bf16.mxu0 0
    %4364 = vmatpush2.bf16.msra.mxu0 0
    %4365 = vmatprep.subr.bf16.mxu0 0
    %4366 = vmatpush2.bf16.msra.mxu0 0
    %4367 = vmatprep.subr.bf16.mxu0 0
    %4368 = vmatpush2.bf16.msra.mxu0 0
    %4369 = vmatprep.subr.bf16.mxu0 0
    %4370 = vmatpush2.bf16.msra.mxu0 0
    %4371 = vmatprep.subr.bf16.mxu0 0
    %4372 = vmatpush2.bf16.msra.mxu0 0
    %4373 = vmatprep.subr.bf16.mxu0 0
    %4374 = vmatpush2.bf16.msra.mxu0 0
    %4375 = vmatprep.mubr.bf16.mxu0 0
    %4376 = vmatmul.mubr.bf16.gmra.mxu0 %v4085
    %v4377 = vpop.f32.mrf.mxu0
    %v4378 = vadd.f32 %v4131, %v4377
    %v4379 = vpop.f32.mrf.mxu0
    %v4380 = vadd.f32 %v4135, %v4379
    %v4381 = vpop.f32.mrf.mxu0
    %v4382 = vadd.f32 %v4131, %v4381
    %v4383 = vpop.f32.mrf.mxu0
    %v4384 = vadd.f32 %v4135, %v4383
    %4385 = vdwg.mxu0
    %v4386 = vmul.f32 %v4335, %v4335
    %v4387 = vmul.f32 %v4337, %v4337
    %v4388 = vmul.f32 %v4378, %v4378
    %v4389 = vmul.f32 %v4380, %v4380
    %v4390 = vmul.f32 %v4339, %v4339
    %v4391 = vmul.f32 %v4341, %v4341
    %v4392 = vmul.f32 %v4382, %v4382
    %v4393 = vmul.f32 %v4384, %v4384
    %v4394 = vmul.f32 %v4335, %v4386
    %v4395 = vmul.f32 %v4337, %v4387
    %v4396 = vmul.f32 %v4378, %v4388
    %v4397 = vmul.f32 %v4380, %v4389
    %v4398 = vmul.f32 %v4339, %v4390
    %v4399 = vmul.f32 %v4341, %v4391
    %v4400 = vmul.f32 %v4382, %v4392
    %v4401 = vmul.f32 %v4384, %v4393
    %v4402 = vmul.f32 %v4394, 0.044715
    %v4403 = vmul.f32 %v4395, 0.044715
    %v4404 = vmul.f32 %v4396, 0.044715
    %v4405 = vmul.f32 %v4397, 0.044715
    %v4406 = vmul.f32 %v4398, 0.044715
    %v4407 = vmul.f32 %v4399, 0.044715
    %v4408 = vmul.f32 %v4400, 0.044715
    %v4409 = vmul.f32 %v4401, 0.044715
    %v4410 = vadd.f32 %v4335, %v4402
    %v4411 = vadd.f32 %v4337, %v4403
    %v4412 = vadd.f32 %v4378, %v4404
    %v4413 = vadd.f32 %v4380, %v4405
    %v4414 = vadd.f32 %v4339, %v4406
    %v4415 = vadd.f32 %v4341, %v4407
    %v4416 = vadd.f32 %v4382, %v4408
    %v4417 = vadd.f32 %v4384, %v4409
    %v4418 = vmul.f32 %v4410, 0.7978846
    %v4419 = vmul.f32 %v4411, 0.7978846
    %v4420 = vmul.f32 %v4412, 0.7978846
    %v4421 = vmul.f32 %v4413, 0.7978846
    %v4422 = vmul.f32 %v4414, 0.7978846
    %v4423 = vmul.f32 %v4415, 0.7978846
    %v4424 = vmul.f32 %v4416, 0.7978846
    %v4425 = vmul.f32 %v4417, 0.7978846
    %v4426 = vtanh.pop %v4418
    %v4427 = vtanh.pop %v4419
    %v4428 = vtanh.pop %v4420
    %v4429 = vtanh.pop %v4421
    %v4430 = vtanh.pop %v4422
    %v4431 = vtanh.pop %v4423
    %v4432 = vtanh.pop %v4424
    %v4433 = vtanh.pop %v4425
    %v4434 = vadd.f32 %v4426, 1.0
    %v4435 = vadd.f32 %v4427, 1.0
    %v4436 = vadd.f32 %v4428, 1.0
    %v4437 = vadd.f32 %v4429, 1.0
    %v4438 = vadd.f32 %v4430, 1.0
    %v4439 = vadd.f32 %v4431, 1.0
    %v4440 = vadd.f32 %v4432, 1.0
    %v4441 = vadd.f32 %v4433, 1.0
    %v4442 = vmul.f32 %v4434, 0.5
    %v4443 = vmul.f32 %v4435, 0.5
    %v4444 = vmul.f32 %v4436, 0.5
    %v4445 = vmul.f32 %v4437, 0.5
    %v4446 = vmul.f32 %v4438, 0.5
    %v4447 = vmul.f32 %v4439, 0.5
    %v4448 = vmul.f32 %v4440, 0.5
    %v4449 = vmul.f32 %v4441, 0.5
    %v4450 = vmul.f32 %v4335, %v4442
    %v4451 = vmul.f32 %v4337, %v4443
    %v4452 = vmul.f32 %v4378, %v4444
    %v4453 = vmul.f32 %v4380, %v4445
    %v4454 = vmul.f32 %v4339, %v4446
    %v4455 = vmul.f32 %v4341, %v4447
    %v4456 = vmul.f32 %v4382, %v4448
    %v4457 = vmul.f32 %v4384, %v4449
    %v4458 = vpack.c.bf16 %v4454, %v4450
    %v4459 = vpack.c.bf16 %v4455, %v4451
    %v4460 = vpack.c.bf16 %v4456, %v4452
    %v4461 = vpack.c.bf16 %v4457, %v4453
    %v4462 = vld [vmem:[%s7] sm:$0xf]
    %v4463 = vld [vmem:[%s7 + $0x4] sm:$0xf]
    %v4464 = vld [vmem:[%s7 + $0x8] sm:$0xf]
    %v4465 = vld [vmem:[%s7 + $0xc] sm:$0xf]
    %v4466 = vld [vmem:[%s7 + $0x10] sm:$0xf]
    %v4467 = vld [vmem:[%s7 + $0x14] sm:$0xf]
    %v4468 = vld [vmem:[%s7 + $0x18] sm:$0xf]
    %v4469 = vld [vmem:[%s7 + $0x1c] sm:$0xf]
    %v4470 = vld [vmem:[%s7 + $0x20] sm:$0xf]
    %v4471 = vld [vmem:[%s7 + $0x24] sm:$0xf]
    %v4472 = vld [vmem:[%s7 + $0x28] sm:$0xf]
    %v4473 = vld [vmem:[%s7 + $0x2c] sm:$0xf]
    %v4474 = vld [vmem:[%s7 + $0x30] sm:$0xf]
    %v4475 = vld [vmem:[%s7 + $0x34] sm:$0xf]
    %v4476 = vld [vmem:[%s7 + $0x38] sm:$0xf]
    %v4477 = vld [vmem:[%s7 + $0x3c] sm:$0xf]
    %v4478 = vld [vmem:[%s7 + $0x40] sm:$0xf]
    %v4479 = vld [vmem:[%s7 + $0x44] sm:$0xf]
    %v4480 = vld [vmem:[%s7 + $0x48] sm:$0xf]
    %v4481 = vld [vmem:[%s7 + $0x4c] sm:$0xf]
    %v4482 = vld [vmem:[%s7 + $0x50] sm:$0xf]
    %v4483 = vld [vmem:[%s7 + $0x54] sm:$0xf]
    %v4484 = vld [vmem:[%s7 + $0x58] sm:$0xf]
    %v4485 = vld [vmem:[%s7 + $0x5c] sm:$0xf]
    %v4486 = vld [vmem:[%s7 + $0x60] sm:$0xf]
    %v4487 = vld [vmem:[%s7 + $0x64] sm:$0xf]
    %v4488 = vld [vmem:[%s7 + $0x68] sm:$0xf]
    %v4489 = vld [vmem:[%s7 + $0x6c] sm:$0xf]
    %v4490 = vld [vmem:[%s7 + $0x70] sm:$0xf]
    %v4491 = vld [vmem:[%s7 + $0x74] sm:$0xf]
    %v4492 = vld [vmem:[%s7 + $0x78] sm:$0xf]
    %v4493 = vld [vmem:[%s7 + $0x7c] sm:$0xf]
    %v4494 = vld [vmem:[%s7 + $0x80] sm:$0xf]
    %v4495 = vld [vmem:[%s7 + $0x84] sm:$0xf]
    %v4496 = vld [vmem:[%s7 + $0x88] sm:$0xf]
    %v4497 = vld [vmem:[%s7 + $0x8c] sm:$0xf]
    %v4498 = vld [vmem:[%s7 + $0x90] sm:$0xf]
    %v4499 = vld [vmem:[%s7 + $0x94] sm:$0xf]
    %v4500 = vld [vmem:[%s7 + $0x98] sm:$0xf]
    %v4501 = vld [vmem:[%s7 + $0x9c] sm:$0xf]
    %v4502 = vld [vmem:[%s7 + $0xa0] sm:$0xf]
    %v4503 = vld [vmem:[%s7 + $0xa4] sm:$0xf]
    %v4504 = vld [vmem:[%s7 + $0xa8] sm:$0xf]
    %v4505 = vld [vmem:[%s7 + $0xac] sm:$0xf]
    %v4506 = vld [vmem:[%s7 + $0xb0] sm:$0xf]
    %v4507 = vld [vmem:[%s7 + $0xb4] sm:$0xf]
    %v4508 = vld [vmem:[%s7 + $0xb8] sm:$0xf]
    %v4509 = vld [vmem:[%s7 + $0xbc] sm:$0xf]
    %v4510 = vld [vmem:[%s7 + $0xc0] sm:$0xf]
    %v4511 = vld [vmem:[%s7 + $0xc4] sm:$0xf]
    %v4512 = vld [vmem:[%s7 + $0xc8] sm:$0xf]
    %v4513 = vld [vmem:[%s7 + $0xcc] sm:$0xf]
    %v4514 = vld [vmem:[%s7 + $0xd0] sm:$0xf]
    %v4515 = vld [vmem:[%s7 + $0xd4] sm:$0xf]
    %v4516 = vld [vmem:[%s7 + $0xd8] sm:$0xf]
    %v4517 = vld [vmem:[%s7 + $0xdc] sm:$0xf]
    %v4518 = vld [vmem:[%s7 + $0xe0] sm:$0xf]
    %v4519 = vld [vmem:[%s7 + $0xe4] sm:$0xf]
    %v4520 = vld [vmem:[%s7 + $0xe8] sm:$0xf]
    %v4521 = vld [vmem:[%s7 + $0xec] sm:$0xf]
    %v4522 = vld [vmem:[%s7 + $0xf0] sm:$0xf]
    %v4523 = vld [vmem:[%s7 + $0xf4] sm:$0xf]
    %v4524 = vld [vmem:[%s7 + $0xf8] sm:$0xf]
    %v4525 = vld [vmem:[%s7 + $0xfc] sm:$0xf]
    %v4590 = vunpack.c.l.b16 %v4462
    %v4591 = vunpack.c.l.b16 %v4463
    %v4592 = vunpack.c.l.b16 %v4464
    %v4593 = vunpack.c.l.b16 %v4465
    %v4594 = vunpack.c.l.b16 %v4466
    %v4595 = vunpack.c.l.b16 %v4467
    %v4596 = vunpack.c.l.b16 %v4468
    %v4597 = vunpack.c.l.b16 %v4469
    %v4598 = vunpack.c.l.b16 %v4470
    %v4599 = vunpack.c.l.b16 %v4471
    %v4600 = vunpack.c.l.b16 %v4472
    %v4601 = vunpack.c.l.b16 %v4473
    %v4602 = vunpack.c.l.b16 %v4474
    %v4603 = vunpack.c.l.b16 %v4475
    %v4604 = vunpack.c.l.b16 %v4476
    %v4605 = vunpack.c.l.b16 %v4477
    %v4606 = vunpack.c.l.b16 %v4478
    %v4607 = vunpack.c.l.b16 %v4479
    %v4608 = vunpack.c.l.b16 %v4480
    %v4609 = vunpack.c.l.b16 %v4481
    %v4610 = vunpack.c.l.b16 %v4482
    %v4611 = vunpack.c.l.b16 %v4483
    %v4612 = vunpack.c.l.b16 %v4484
    %v4613 = vunpack.c.l.b16 %v4485
    %v4614 = vunpack.c.l.b16 %v4486
    %v4615 = vunpack.c.l.b16 %v4487
    %v4616 = vunpack.c.l.b16 %v4488
    %v4617 = vunpack.c.l.b16 %v4489
    %v4618 = vunpack.c.l.b16 %v4490
    %v4619 = vunpack.c.l.b16 %v4491
    %v4620 = vunpack.c.l.b16 %v4492
    %v4621 = vunpack.c.l.b16 %v4493
    %v4622 = vunpack.c.l.b16 %v4494
    %v4623 = vunpack.c.l.b16 %v4495
    %v4624 = vunpack.c.l.b16 %v4496
    %v4625 = vunpack.c.l.b16 %v4497
    %v4626 = vunpack.c.l.b16 %v4498
    %v4627 = vunpack.c.l.b16 %v4499
    %v4628 = vunpack.c.l.b16 %v4500
    %v4629 = vunpack.c.l.b16 %v4501
    %v4630 = vunpack.c.l.b16 %v4502
    %v4631 = vunpack.c.l.b16 %v4503
    %v4632 = vunpack.c.l.b16 %v4504
    %v4633 = vunpack.c.l.b16 %v4505
    %v4634 = vunpack.c.l.b16 %v4506
    %v4635 = vunpack.c.l.b16 %v4507
    %v4636 = vunpack.c.l.b16 %v4508
    %v4637 = vunpack.c.l.b16 %v4509
    %v4638 = vunpack.c.l.b16 %v4510
    %v4639 = vunpack.c.l.b16 %v4511
    %v4640 = vunpack.c.l.b16 %v4512
    %v4641 = vunpack.c.l.b16 %v4513
    %v4642 = vunpack.c.l.b16 %v4514
    %v4643 = vunpack.c.l.b16 %v4515
    %v4644 = vunpack.c.l.b16 %v4516
    %v4645 = vunpack.c.l.b16 %v4517
    %v4646 = vunpack.c.l.b16 %v4518
    %v4647 = vunpack.c.l.b16 %v4519
    %v4648 = vunpack.c.l.b16 %v4520
    %v4649 = vunpack.c.l.b16 %v4521
    %v4650 = vunpack.c.l.b16 %v4522
    %v4651 = vunpack.c.l.b16 %v4523
    %v4652 = vunpack.c.l.b16 %v4524
    %v4653 = vunpack.c.l.b16 %v4525
    %v4654 = vpack.c.b16 %v4591, %v4590
    %v4655 = vpack.c.b16 %v4593, %v4592
    %v4656 = vpack.c.b16 %v4595, %v4594
    %v4657 = vpack.c.b16 %v4597, %v4596
    %v4658 = vpack.c.b16 %v4599, %v4598
    %v4659 = vpack.c.b16 %v4601, %v4600
    %v4660 = vpack.c.b16 %v4603, %v4602
    %v4661 = vpack.c.b16 %v4605, %v4604
    %v4662 = vpack.c.b16 %v4607, %v4606
    %v4663 = vpack.c.b16 %v4609, %v4608
    %v4664 = vpack.c.b16 %v4611, %v4610
    %v4665 = vpack.c.b16 %v4613, %v4612
    %v4666 = vpack.c.b16 %v4615, %v4614
    %v4667 = vpack.c.b16 %v4617, %v4616
    %v4668 = vpack.c.b16 %v4619, %v4618
    %v4669 = vpack.c.b16 %v4621, %v4620
    %v4670 = vpack.c.b16 %v4623, %v4622
    %v4671 = vpack.c.b16 %v4625, %v4624
    %v4672 = vpack.c.b16 %v4627, %v4626
    %v4673 = vpack.c.b16 %v4629, %v4628
    %v4674 = vpack.c.b16 %v4631, %v4630
    %v4675 = vpack.c.b16 %v4633, %v4632
    %v4676 = vpack.c.b16 %v4635, %v4634
    %v4677 = vpack.c.b16 %v4637, %v4636
    %v4678 = vpack.c.b16 %v4639, %v4638
    %v4679 = vpack.c.b16 %v4641, %v4640
    %v4680 = vpack.c.b16 %v4643, %v4642
    %v4681 = vpack.c.b16 %v4645, %v4644
    %v4682 = vpack.c.b16 %v4647, %v4646
    %v4683 = vpack.c.b16 %v4649, %v4648
    %v4684 = vpack.c.b16 %v4651, %v4650
    %v4685 = vpack.c.b16 %v4653, %v4652
    %4718 = vmatprep.subr.bf16.mxu0 0
    %4719 = vmatpush1.bf16.msra.mxu0 %v4661
    %4720 = vmatprep.subr.bf16.mxu0 0
    %4721 = vmatpush1.bf16.msra.mxu0 %v4660
    %4722 = vmatprep.subr.bf16.mxu0 0
    %4723 = vmatpush1.bf16.msra.mxu0 %v4659
    %4724 = vmatprep.subr.bf16.mxu0 0
    %4725 = vmatpush1.bf16.msra.mxu0 %v4658
    %4726 = vmatprep.subr.bf16.mxu0 0
    %4727 = vmatpush1.bf16.msra.mxu0 %v4657
    %4728 = vmatprep.subr.bf16.mxu0 0
    %4729 = vmatpush1.bf16.msra.mxu0 %v4656
    %4730 = vmatprep.subr.bf16.mxu0 0
    %4731 = vmatpush1.bf16.msra.mxu0 %v4655
    %4732 = vmatprep.subr.bf16.mxu0 0
    %4733 = vmatpush1.bf16.msra.mxu0 %v4654
    %4734 = vmatprep.subr.bf16.mxu0 0
    %4735 = vmatpush2.bf16.msra.mxu0 %v4669
    %4736 = vmatprep.subr.bf16.mxu0 0
    %4737 = vmatpush2.bf16.msra.mxu0 %v4668
    %4738 = vmatprep.subr.bf16.mxu0 0
    %4739 = vmatpush2.bf16.msra.mxu0 %v4667
    %4740 = vmatprep.subr.bf16.mxu0 0
    %4741 = vmatpush2.bf16.msra.mxu0 %v4666
    %4742 = vmatprep.subr.bf16.mxu0 0
    %4743 = vmatpush2.bf16.msra.mxu0 %v4665
    %4744 = vmatprep.subr.bf16.mxu0 0
    %4745 = vmatpush2.bf16.msra.mxu0 %v4664
    %4746 = vmatprep.subr.bf16.mxu0 0
    %4747 = vmatpush2.bf16.msra.mxu0 %v4663
    %4748 = vmatprep.subr.bf16.mxu0 0
    %4749 = vmatpush2.bf16.msra.mxu0 %v4662
    %4750 = vmatprep.mubr.bf16.mxu0 %v4459
    %4751 = vmatmul.mubr.bf16.gmra.mxu0 %v4458
    %v4752 = vpop.f32.mrf.mxu0
    %v4753 = vadd.f32 0.0, %v4752
    %v4754 = vpop.f32.mrf.mxu0
    %v4755 = vpop.f32.mrf.mxu0
    %v4756 = vadd.f32 0.0, %v4755
    %v4757 = vpop.f32.mrf.mxu0
    %4758 = vdwg.mxu0
    %4759 = vmatprep.subr.bf16.mxu0 0
    %4760 = vmatpush1.bf16.msra.mxu0 %v4677
    %4761 = vmatprep.subr.bf16.mxu0 0
    %4762 = vmatpush1.bf16.msra.mxu0 %v4676
    %4763 = vmatprep.subr.bf16.mxu0 0
    %4764 = vmatpush1.bf16.msra.mxu0 %v4675
    %4765 = vmatprep.subr.bf16.mxu0 0
    %4766 = vmatpush1.bf16.msra.mxu0 %v4674
    %4767 = vmatprep.subr.bf16.mxu0 0
    %4768 = vmatpush1.bf16.msra.mxu0 %v4673
    %4769 = vmatprep.subr.bf16.mxu0 0
    %4770 = vmatpush1.bf16.msra.mxu0 %v4672
    %4771 = vmatprep.subr.bf16.mxu0 0
    %4772 = vmatpush1.bf16.msra.mxu0 %v4671
    %4773 = vmatprep.subr.bf16.mxu0 0
    %4774 = vmatpush1.bf16.msra.mxu0 %v4670
    %4775 = vmatprep.subr.bf16.mxu0 0
    %4776 = vmatpush2.bf16.msra.mxu0 %v4685
    %4777 = vmatprep.subr.bf16.mxu0 0
    %4778 = vmatpush2.bf16.msra.mxu0 %v4684
    %4779 = vmatprep.subr.bf16.mxu0 0
    %4780 = vmatpush2.bf16.msra.mxu0 %v4683
    %4781 = vmatprep.subr.bf16.mxu0 0
    %4782 = vmatpush2.bf16.msra.mxu0 %v4682
    %4783 = vmatprep.subr.bf16.mxu0 0
    %4784 = vmatpush2.bf16.msra.mxu0 %v4681
    %4785 = vmatprep.subr.bf16.mxu0 0
    %4786 = vmatpush2.bf16.msra.mxu0 %v4680
    %4787 = vmatprep.subr.bf16.mxu0 0
    %4788 = vmatpush2.bf16.msra.mxu0 %v4679
    %4789 = vmatprep.subr.bf16.mxu0 0
    %4790 = vmatpush2.bf16.msra.mxu0 %v4678
    %4791 = vmatprep.mubr.bf16.mxu0 %v4461
    %4792 = vmatmul.mubr.bf16.gmra.mxu0 %v4460
    %v4793 = vpop.f32.mrf.mxu0
    %v4794 = vadd.f32 %v4753, %v4793
    %v4795 = vpop.f32.mrf.mxu0
    %v4796 = vpop.f32.mrf.mxu0
    %v4797 = vadd.f32 %v4756, %v4796
    %v4798 = vpop.f32.mrf.mxu0
    %4799 = vdwg.mxu0
    %v4800 = vadd.f32 %v4047, %v4794
    %v4801 = vadd.f32 %v4048, %v4797
    %v4802 = vld [vmem:[#allocation7 + $0xb] sm:$0x1]
    %v4803 = vlaneseq
    %v4804 = vshrl.u32 %v4803, 7
    %v4805 = vsub.s32 0, %v4804
    %v4806 = vrot.slane %v4802, %v4805
    %v4807 = vadd.f32 %v4800, %v4806
    %v4808 = vadd.f32 %v4801, %v4806
    %v4809 = vld [vmem:[#allocation7 + $0xc] sm:$0x1]
    %v4810 = vld [vmem:[#allocation7 + $0xd] sm:$0x1]
    %4811 = vadd.xlane.f32.xlu0 %v4807
    %v4812 = vpop.xlane.xlu0 %4811
    %4813 = vadd.xlane.f32.xlu0 %v4808
    %v4814 = vpop.xlane.xlu0 %4813
    %v4815 = vmul.f32 %v4812, %v2275
    %v4816 = vmul.f32 %v4814, %v2275
    %v4817 = vsub.f32 %v4807, %v4815
    %v4818 = vsub.f32 %v4808, %v4816
    %v4819 = vmul.f32 %v4817, %v4817
    %v4820 = vmul.f32 %v4818, %v4818
    %4821 = vadd.xlane.f32.xlu0 %v4819
    %v4822 = vpop.xlane.xlu0 %4821
    %4823 = vadd.xlane.f32.xlu0 %v4820
    %v4824 = vpop.xlane.xlu0 %4823
    %v4825 = vmul.f32 %v4822, %v2275
    %v4826 = vmul.f32 %v4824, %v2275
    %v4827 = vadd.f32 %v4825, 1e-06
    %v4828 = vadd.f32 %v4826, 1e-06
    %v4829 = vrsqrt.pop %v4827
    %v4830 = vrsqrt.pop %v4828
    %v4831 = vmul.f32 %v4817, %v4829
    %v4832 = vmul.f32 %v4818, %v4830
    %v4833 = vlaneseq
    %v4834 = vshrl.u32 %v4833, 7
    %v4835 = vsub.s32 0, %v4834
    %v4836 = vrot.slane %v4809, %v4835
    %v4837 = vmul.f32 %v4831, %v4836
    %v4838 = vmul.f32 %v4832, %v4836
    %v4839 = vlaneseq
    %v4840 = vshrl.u32 %v4839, 7
    %v4841 = vsub.s32 0, %v4840
    %v4842 = vrot.slane %v4810, %v4841
    %v4843 = vadd.f32 %v4837, %v4842
    %v4844 = vadd.f32 %v4838, %v4842
    %v4845 = vpack.c.bf16 %v4844, %v4843
    %s4846 = scalar_lea.vmem [#allocation4], 192
    %v4847 = vld [vmem:[%s4846] sm:$0xff]
    %v4848 = vld [vmem:[%s4846 + $0x8] sm:$0xf]
    %v4849 = vld [vmem:[%s4846 + $0xc] sm:$0xff]
    %v4850 = vld [vmem:[%s4846 + $0x14] sm:$0xf]
    %v4851 = vld [vmem:[%s4846 + $0x18] sm:$0xff]
    %v4852 = vld [vmem:[%s4846 + $0x20] sm:$0xf]
    %v4853 = vld [vmem:[%s4846 + $0x24] sm:$0xff]
    %v4854 = vld [vmem:[%s4846 + $0x2c] sm:$0xf]
    %v4855 = vld [vmem:[%s4846 + $0x30] sm:$0xff]
    %v4856 = vld [vmem:[%s4846 + $0x38] sm:$0xf]
    %v4857 = vld [vmem:[%s4846 + $0x3c] sm:$0xff]
    %v4858 = vld [vmem:[%s4846 + $0x44] sm:$0xf]
    %v4859 = vld [vmem:[%s4846 + $0x48] sm:$0xff]
    %v4860 = vld [vmem:[%s4846 + $0x50] sm:$0xf]
    %v4861 = vld [vmem:[%s4846 + $0x54] sm:$0xff]
    %v4862 = vld [vmem:[%s4846 + $0x5c] sm:$0xf]
    %v4863 = vld [vmem:[%s4846 + $0x60] sm:$0xff]
    %v4864 = vld [vmem:[%s4846 + $0x68] sm:$0xf]
    %v4865 = vld [vmem:[%s4846 + $0x6c] sm:$0xff]
    %v4866 = vld [vmem:[%s4846 + $0x74] sm:$0xf]
    %v4867 = vld [vmem:[%s4846 + $0x78] sm:$0xff]
    %v4868 = vld [vmem:[%s4846 + $0x80] sm:$0xf]
    %v4869 = vld [vmem:[%s4846 + $0x84] sm:$0xff]
    %v4870 = vld [vmem:[%s4846 + $0x8c] sm:$0xf]
    %v4871 = vld [vmem:[%s4846 + $0x90] sm:$0xff]
    %v4872 = vld [vmem:[%s4846 + $0x98] sm:$0xf]
    %v4873 = vld [vmem:[%s4846 + $0x9c] sm:$0xff]
    %v4874 = vld [vmem:[%s4846 + $0xa4] sm:$0xf]
    %v4875 = vld [vmem:[%s4846 + $0xa8] sm:$0xff]
    %v4876 = vld [vmem:[%s4846 + $0xb0] sm:$0xf]
    %v4877 = vld [vmem:[%s4846 + $0xb4] sm:$0xff]
    %v4878 = vld [vmem:[%s4846 + $0xbc] sm:$0xf]
    %v4911 = vunpack.c.l.b16 %v4847
    %v4912 = vunpack.c.h.b16 %v4847
    %v4913 = vunpack.c.l.b16 %v4848
    %v4914 = vunpack.c.l.b16 %v4849
    %v4915 = vunpack.c.h.b16 %v4849
    %v4916 = vunpack.c.l.b16 %v4850
    %v4917 = vunpack.c.l.b16 %v4851
    %v4918 = vunpack.c.h.b16 %v4851
    %v4919 = vunpack.c.l.b16 %v4852
    %v4920 = vunpack.c.l.b16 %v4853
    %v4921 = vunpack.c.h.b16 %v4853
    %v4922 = vunpack.c.l.b16 %v4854
    %v4923 = vunpack.c.l.b16 %v4855
    %v4924 = vunpack.c.h.b16 %v4855
    %v4925 = vunpack.c.l.b16 %v4856
    %v4926 = vunpack.c.l.b16 %v4857
    %v4927 = vunpack.c.h.b16 %v4857
    %v4928 = vunpack.c.l.b16 %v4858
    %v4929 = vunpack.c.l.b16 %v4859
    %v4930 = vunpack.c.h.b16 %v4859
    %v4931 = vunpack.c.l.b16 %v4860
    %v4932 = vunpack.c.l.b16 %v4861
    %v4933 = vunpack.c.h.b16 %v4861
    %v4934 = vunpack.c.l.b16 %v4862
    %v4935 = vunpack.c.l.b16 %v4863
    %v4936 = vunpack.c.h.b16 %v4863
    %v4937 = vunpack.c.l.b16 %v4864
    %v4938 = vunpack.c.l.b16 %v4865
    %v4939 = vunpack.c.h.b16 %v4865
    %v4940 = vunpack.c.l.b16 %v4866
    %v4941 = vunpack.c.l.b16 %v4867
    %v4942 = vunpack.c.h.b16 %v4867
    %v4943 = vunpack.c.l.b16 %v4868
    %v4944 = vunpack.c.l.b16 %v4869
    %v4945 = vunpack.c.h.b16 %v4869
    %v4946 = vunpack.c.l.b16 %v4870
    %v4947 = vunpack.c.l.b16 %v4871
    %v4948 = vunpack.c.h.b16 %v4871
    %v4949 = vunpack.c.l.b16 %v4872
    %v4950 = vunpack.c.l.b16 %v4873
    %v4951 = vunpack.c.h.b16 %v4873
    %v4952 = vunpack.c.l.b16 %v4874
    %v4953 = vunpack.c.l.b16 %v4875
    %v4954 = vunpack.c.h.b16 %v4875
    %v4955 = vunpack.c.l.b16 %v4876
    %v4956 = vunpack.c.l.b16 %v4877
    %v4957 = vunpack.c.h.b16 %v4877
    %v4958 = vunpack.c.l.b16 %v4878
    %v4959 = vpack.c.b16 %v4914, %v4911
    %v4960 = vpack.c.b16 %v4915, %v4912
    %v4961 = vpack.c.b16 %v4916, %v4913
    %v4962 = vpack.c.b16 %v4920, %v4917
    %v4963 = vpack.c.b16 %v4921, %v4918
    %v4964 = vpack.c.b16 %v4922, %v4919
    %v4965 = vpack.c.b16 %v4926, %v4923
    %v4966 = vpack.c.b16 %v4927, %v4924
    %v4967 = vpack.c.b16 %v4928, %v4925
    %v4968 = vpack.c.b16 %v4932, %v4929
    %v4969 = vpack.c.b16 %v4933, %v4930
    %v4970 = vpack.c.b16 %v4934, %v4931
    %v4971 = vpack.c.b16 %v4938, %v4935
    %v4972 = vpack.c.b16 %v4939, %v4936
    %v4973 = vpack.c.b16 %v4940, %v4937
    %v4974 = vpack.c.b16 %v4944, %v4941
    %v4975 = vpack.c.b16 %v4945, %v4942
    %v4976 = vpack.c.b16 %v4946, %v4943
    %v4977 = vpack.c.b16 %v4950, %v4947
    %v4978 = vpack.c.b16 %v4951, %v4948
    %v4979 = vpack.c.b16 %v4952, %v4949
    %v4980 = vpack.c.b16 %v4956, %v4953
    %v4981 = vpack.c.b16 %v4957, %v4954
    %v4982 = vpack.c.b16 %v4958, %v4955
    %5007 = vmatprep.subr.bf16.mxu0 %v4981
    %5008 = vmatpush1.bf16.msra.mxu0 %v4980
    %5009 = vmatprep.subr.bf16.mxu0 %v4978
    %5010 = vmatpush1.bf16.msra.mxu0 %v4977
    %5011 = vmatprep.subr.bf16.mxu0 %v4975
    %5012 = vmatpush1.bf16.msra.mxu0 %v4974
    %5013 = vmatprep.subr.bf16.mxu0 %v4972
    %5014 = vmatpush1.bf16.msra.mxu0 %v4971
    %5015 = vmatprep.subr.bf16.mxu0 %v4969
    %5016 = vmatpush1.bf16.msra.mxu0 %v4968
    %5017 = vmatprep.subr.bf16.mxu0 %v4966
    %5018 = vmatpush1.bf16.msra.mxu0 %v4965
    %5019 = vmatprep.subr.bf16.mxu0 %v4963
    %5020 = vmatpush1.bf16.msra.mxu0 %v4962
    %5021 = vmatprep.subr.bf16.mxu0 %v4960
    %5022 = vmatpush1.bf16.msra.mxu0 %v4959
    %5023 = vmatprep.subr.bf16.mxu0 0
    %5024 = vmatpush2.bf16.msra.mxu0 0
    %5025 = vmatprep.subr.bf16.mxu0 0
    %5026 = vmatpush2.bf16.msra.mxu0 0
    %5027 = vmatprep.subr.bf16.mxu0 0
    %5028 = vmatpush2.bf16.msra.mxu0 0
    %5029 = vmatprep.subr.bf16.mxu0 0
    %5030 = vmatpush2.bf16.msra.mxu0 0
    %5031 = vmatprep.subr.bf16.mxu0 0
    %5032 = vmatpush2.bf16.msra.mxu0 0
    %5033 = vmatprep.subr.bf16.mxu0 0
    %5034 = vmatpush2.bf16.msra.mxu0 0
    %5035 = vmatprep.subr.bf16.mxu0 0
    %5036 = vmatpush2.bf16.msra.mxu0 0
    %5037 = vmatprep.subr.bf16.mxu0 0
    %5038 = vmatpush2.bf16.msra.mxu0 0
    %5039 = vmatprep.mubr.bf16.mxu0 0
    %5040 = vmatmul.mubr.bf16.gmra.mxu0 %v4845
    %v5041 = vpop.f32.mrf.mxu0
    %v5042 = vadd.f32 0.0, %v5041
    %v5043 = vpop.f32.mrf.mxu0
    %v5044 = vadd.f32 0.0, %v5043
    %v5045 = vpop.f32.mrf.mxu0
    %v5046 = vadd.f32 0.0, %v5045
    %v5047 = vpop.f32.mrf.mxu0
    %v5048 = vadd.f32 0.0, %v5047
    %5049 = vdwg.mxu0
    %5050 = vmatprep.subr.bf16.mxu0 0
    %5051 = vmatpush1.bf16.msra.mxu0 %v4982
    %5052 = vmatprep.subr.bf16.mxu0 0
    %5053 = vmatpush1.bf16.msra.mxu0 %v4979
    %5054 = vmatprep.subr.bf16.mxu0 0
    %5055 = vmatpush1.bf16.msra.mxu0 %v4976
    %5056 = vmatprep.subr.bf16.mxu0 0
    %5057 = vmatpush1.bf16.msra.mxu0 %v4973
    %5058 = vmatprep.subr.bf16.mxu0 0
    %5059 = vmatpush1.bf16.msra.mxu0 %v4970
    %5060 = vmatprep.subr.bf16.mxu0 0
    %5061 = vmatpush1.bf16.msra.mxu0 %v4967
    %5062 = vmatprep.subr.bf16.mxu0 0
    %5063 = vmatpush1.bf16.msra.mxu0 %v4964
    %5064 = vmatprep.subr.bf16.mxu0 0
    %5065 = vmatpush1.bf16.msra.mxu0 %v4961
    %5066 = vmatprep.subr.bf16.mxu0 0
    %5067 = vmatpush2.bf16.msra.mxu0 0
    %5068 = vmatprep.subr.bf16.mxu0 0
    %5069 = vmatpush2.bf16.msra.mxu0 0
    %5070 = vmatprep.subr.bf16.mxu0 0
    %5071 = vmatpush2.bf16.msra.mxu0 0
    %5072 = vmatprep.subr.bf16.mxu0 0
    %5073 = vmatpush2.bf16.msra.mxu0 0
    %5074 = vmatprep.subr.bf16.mxu0 0
    %5075 = vmatpush2.bf16.msra.mxu0 0
    %5076 = vmatprep.subr.bf16.mxu0 0
    %5077 = vmatpush2.bf16.msra.mxu0 0
    %5078 = vmatprep.subr.bf16.mxu0 0
    %5079 = vmatpush2.bf16.msra.mxu0 0
    %5080 = vmatprep.subr.bf16.mxu0 0
    %5081 = vmatpush2.bf16.msra.mxu0 0
    %5082 = vmatprep.mubr.bf16.mxu0 0
    %5083 = vmatmul.mubr.bf16.gmra.mxu0 %v4845
    %v5084 = vpop.f32.mrf.mxu0
    %v5085 = vadd.f32 0.0, %v5084
    %v5086 = vpop.f32.mrf.mxu0
    %v5087 = vpop.f32.mrf.mxu0
    %v5088 = vadd.f32 0.0, %v5087
    %v5089 = vpop.f32.mrf.mxu0
    %5090 = vdwg.mxu0
    %v5091 = vld [vmem:[#allocation7 + $0xe] sm:$0x1]
    %v5092 = vlaneseq
    %v5093 = vshrl.u32 %v5092, 7
    %v5094 = vsub.s32 0, %v5093
    %v5095 = vrot.slane %v5091, %v5094
    %v5096 = vadd.f32 %v5042, %v5095
    %v5097 = vadd.f32 %v5046, %v5095
    %v5098 = vld [vmem:[#allocation7 + $0xf] sm:$0x1]
    %v5099 = vlaneseq
    %v5100 = vshrl.u32 %v5099, 7
    %v5101 = vsub.s32 0, %v5100
    %v5102 = vrot.slane %v5098, %v5101
    %v5103 = vadd.f32 %v5044, %v5102
    %v5104 = vadd.f32 %v5048, %v5102
    %v5105 = vld [vmem:[#allocation7 + $0x10] sm:$0x1]
    %v5106 = vlaneseq
    %v5107 = vshrl.u32 %v5106, 7
    %v5108 = vsub.s32 0, %v5107
    %v5109 = vrot.slane %v5105, %v5108
    %v5110 = vadd.f32 %v5085, %v5109
    %v5111 = vadd.f32 %v5088, %v5109
    %v5113 = vsel %vm2572, %v5096, 0
    %v5116 = vsel %vm2572, %v5103, 0
    %5118 = vmatprep.subr.mxu0 0.0
    %5119 = vmatpush1.xpose.msra.mxu0 0.0
    %5120 = vmatprep.subr.mxu0 0.0
    %5121 = vmatpush1.xpose.msra.mxu0 0.0
    %5122 = vmatprep.subr.mxu0 0.0
    %5123 = vmatpush1.xpose.msra.mxu0 0.0
    %5124 = vmatprep.subr.mxu0 0.0
    %5125 = vmatpush1.xpose.msra.mxu0 0.0
    %5126 = vmatprep.subr.mxu0 0.0
    %5127 = vmatpush1.xpose.msra.mxu0 0.0
    %5128 = vmatprep.subr.mxu0 0.0
    %5129 = vmatpush1.xpose.msra.mxu0 0.0
    %5130 = vmatprep.subr.mxu0 0.0
    %5131 = vmatpush1.xpose.msra.mxu0 0.0
    %5132 = vmatprep.subr.mxu0 0.0
    %5133 = vmatpush1.xpose.msra.mxu0 0.0
    %5134 = vmatprep.subr.mxu0 0.0
    %5135 = vmatpush1.xpose.msra.mxu0 0.0
    %5136 = vmatprep.subr.mxu0 0.0
    %5137 = vmatpush1.xpose.msra.mxu0 0.0
    %5138 = vmatprep.subr.mxu0 0.0
    %5139 = vmatpush1.xpose.msra.mxu0 0.0
    %5140 = vmatprep.subr.mxu0 0.0
    %5141 = vmatpush1.xpose.msra.mxu0 0.0
    %5142 = vmatprep.subr.mxu0 0.0
    %5143 = vmatpush1.xpose.msra.mxu0 0.0
    %5144 = vmatprep.subr.mxu0 0.0
    %5145 = vmatpush1.xpose.msra.mxu0 0.0
    %5146 = vmatprep.subr.mxu0 0.0
    %5147 = vmatpush1.xpose.msra.mxu0 0.0
    %5148 = vmatprep.subr.mxu0 0.0
    %5149 = vmatpush1.xpose.msra.mxu0 %v5116
    %5150 = vmatprep.subr.mxu0 0.0
    %5151 = vmatpush2.xpose.msra.mxu0 0.0
    %5152 = vmatprep.subr.mxu0 0.0
    %5153 = vmatpush2.xpose.msra.mxu0 0.0
    %5154 = vmatprep.subr.mxu0 0.0
    %5155 = vmatpush2.xpose.msra.mxu0 0.0
    %5156 = vmatprep.subr.mxu0 0.0
    %5157 = vmatpush2.xpose.msra.mxu0 0.0
    %5158 = vmatprep.subr.mxu0 0.0
    %5159 = vmatpush2.xpose.msra.mxu0 0.0
    %5160 = vmatprep.subr.mxu0 0.0
    %5161 = vmatpush2.xpose.msra.mxu0 0.0
    %5162 = vmatprep.subr.mxu0 0.0
    %5163 = vmatpush2.xpose.msra.mxu0 0.0
    %5164 = vmatprep.subr.mxu0 0.0
    %5165 = vmatpush2.xpose.msra.mxu0 0.0
    %5166 = vmatprep.subr.mxu0 0.0
    %5167 = vmatpush2.xpose.msra.mxu0 0.0
    %5168 = vmatprep.subr.mxu0 0.0
    %5169 = vmatpush2.xpose.msra.mxu0 0.0
    %5170 = vmatprep.subr.mxu0 0.0
    %5171 = vmatpush2.xpose.msra.mxu0 0.0
    %5172 = vmatprep.subr.mxu0 0.0
    %5173 = vmatpush2.xpose.msra.mxu0 0.0
    %5174 = vmatprep.subr.mxu0 0.0
    %5175 = vmatpush2.xpose.msra.mxu0 0.0
    %5176 = vmatprep.subr.mxu0 0.0
    %5177 = vmatpush2.xpose.msra.mxu0 0.0
    %5178 = vmatprep.subr.mxu0 0.0
    %5179 = vmatpush2.xpose.msra.mxu0 0.0
    %5180 = vmatprep.subr.mxu0 0.0
    %5181 = vmatpush2.xpose.msra.mxu0 0.0
    %5182 = vmatprep.mubr.f32.mxu0 0.0
    %5183 = vmatmul.mubr.f32.gmra.mxu0 %v5113
    %v5184 = vpop.f32.mrf.mxu0
    %v5185 = vadd.f32 0.0, %v5184
    %v5186 = vpop.f32.mrf.mxu0
    %5187 = vdwg.mxu0
    %v5189 = vsel %vm2572, %v5097, 0
    %v5192 = vsel %vm2572, %v5104, 0
    %5194 = vmatprep.subr.mxu0 0.0
    %5195 = vmatpush1.xpose.msra.mxu0 0.0
    %5196 = vmatprep.subr.mxu0 0.0
    %5197 = vmatpush1.xpose.msra.mxu0 0.0
    %5198 = vmatprep.subr.mxu0 0.0
    %5199 = vmatpush1.xpose.msra.mxu0 0.0
    %5200 = vmatprep.subr.mxu0 0.0
    %5201 = vmatpush1.xpose.msra.mxu0 0.0
    %5202 = vmatprep.subr.mxu0 0.0
    %5203 = vmatpush1.xpose.msra.mxu0 0.0
    %5204 = vmatprep.subr.mxu0 0.0
    %5205 = vmatpush1.xpose.msra.mxu0 0.0
    %5206 = vmatprep.subr.mxu0 0.0
    %5207 = vmatpush1.xpose.msra.mxu0 0.0
    %5208 = vmatprep.subr.mxu0 0.0
    %5209 = vmatpush1.xpose.msra.mxu0 0.0
    %5210 = vmatprep.subr.mxu0 0.0
    %5211 = vmatpush1.xpose.msra.mxu0 0.0
    %5212 = vmatprep.subr.mxu0 0.0
    %5213 = vmatpush1.xpose.msra.mxu0 0.0
    %5214 = vmatprep.subr.mxu0 0.0
    %5215 = vmatpush1.xpose.msra.mxu0 0.0
    %5216 = vmatprep.subr.mxu0 0.0
    %5217 = vmatpush1.xpose.msra.mxu0 0.0
    %5218 = vmatprep.subr.mxu0 0.0
    %5219 = vmatpush1.xpose.msra.mxu0 0.0
    %5220 = vmatprep.subr.mxu0 0.0
    %5221 = vmatpush1.xpose.msra.mxu0 0.0
    %5222 = vmatprep.subr.mxu0 0.0
    %5223 = vmatpush1.xpose.msra.mxu0 0.0
    %5224 = vmatprep.subr.mxu0 0.0
    %5225 = vmatpush1.xpose.msra.mxu0 %v5192
    %5226 = vmatprep.subr.mxu0 0.0
    %5227 = vmatpush2.xpose.msra.mxu0 0.0
    %5228 = vmatprep.subr.mxu0 0.0
    %5229 = vmatpush2.xpose.msra.mxu0 0.0
    %5230 = vmatprep.subr.mxu0 0.0
    %5231 = vmatpush2.xpose.msra.mxu0 0.0
    %5232 = vmatprep.subr.mxu0 0.0
    %5233 = vmatpush2.xpose.msra.mxu0 0.0
    %5234 = vmatprep.subr.mxu0 0.0
    %5235 = vmatpush2.xpose.msra.mxu0 0.0
    %5236 = vmatprep.subr.mxu0 0.0
    %5237 = vmatpush2.xpose.msra.mxu0 0.0
    %5238 = vmatprep.subr.mxu0 0.0
    %5239 = vmatpush2.xpose.msra.mxu0 0.0
    %5240 = vmatprep.subr.mxu0 0.0
    %5241 = vmatpush2.xpose.msra.mxu0 0.0
    %5242 = vmatprep.subr.mxu0 0.0
    %5243 = vmatpush2.xpose.msra.mxu0 0.0
    %5244 = vmatprep.subr.mxu0 0.0
    %5245 = vmatpush2.xpose.msra.mxu0 0.0
    %5246 = vmatprep.subr.mxu0 0.0
    %5247 = vmatpush2.xpose.msra.mxu0 0.0
    %5248 = vmatprep.subr.mxu0 0.0
    %5249 = vmatpush2.xpose.msra.mxu0 0.0
    %5250 = vmatprep.subr.mxu0 0.0
    %5251 = vmatpush2.xpose.msra.mxu0 0.0
    %5252 = vmatprep.subr.mxu0 0.0
    %5253 = vmatpush2.xpose.msra.mxu0 0.0
    %5254 = vmatprep.subr.mxu0 0.0
    %5255 = vmatpush2.xpose.msra.mxu0 0.0
    %5256 = vmatprep.subr.mxu0 0.0
    %5257 = vmatpush2.xpose.msra.mxu0 0.0
    %5258 = vmatprep.mubr.f32.mxu0 0.0
    %5259 = vmatmul.mubr.f32.gmra.mxu0 %v5189
    %v5260 = vpop.f32.mrf.mxu0
    %v5261 = vadd.f32 0.0, %v5260
    %v5262 = vpop.f32.mrf.mxu0
    %5263 = vdwg.mxu0
    %v5264 = vmul.f32 %v5185, 0.17677669
    %v5265 = vmul.f32 %v5261, 0.17677669
    %v5266 = vadd.f32 %v5264, %v94
    %v5267 = vadd.f32 %v5265, %v94
    %v5268 = vsel %vm2729, %v5266, -inf
    %5269 = vmax.xlane.f32.xlu0 %v5268
    %v5270 = vpop.xlane.xlu0 %5269
    %v5271 = vsel %vm2729, %v5267, -inf
    %5272 = vmax.xlane.f32.xlu0 %v5271
    %v5273 = vpop.xlane.xlu0 %5272
    %v5274 = vsub.f32 %v5266, %v5270
    %v5275 = vsub.f32 %v5267, %v5273
    %v5276 = vmul.f32 %v5274, 1.442695
    %v5277 = vpow.pop %v5276
    %v5278 = vmul.f32 %v5275, 1.442695
    %v5279 = vpow.pop %v5278
    %v5280 = vsel %vm2729, %v5277, 0.0
    %5281 = vadd.xlane.f32.xlu0 %v5280
    %v5282 = vpop.xlane.xlu0 %5281
    %v5283 = vsel %vm2729, %v5279, 0.0
    %5284 = vadd.xlane.f32.xlu0 %v5283
    %v5285 = vpop.xlane.xlu0 %5284
    %v5286 = vrcp.pop %v5282
    %v5287 = vrcp.pop %v5285
    %v5288 = vmul.f32 %v5277, %v5286
    %v5289 = vmul.f32 %v5279, %v5287
    %v5291 = vsel %vm2729, %v5288, 0
    %5293 = vmatprep.subr.mxu0 0.0
    %5294 = vmatpush1.msra.mxu0 0.0
    %5295 = vmatprep.subr.mxu0 0.0
    %5296 = vmatpush1.msra.mxu0 0.0
    %5297 = vmatprep.subr.mxu0 0.0
    %5298 = vmatpush1.msra.mxu0 0.0
    %5299 = vmatprep.subr.mxu0 0.0
    %5300 = vmatpush1.msra.mxu0 0.0
    %5301 = vmatprep.subr.mxu0 0.0
    %5302 = vmatpush1.msra.mxu0 0.0
    %5303 = vmatprep.subr.mxu0 0.0
    %5304 = vmatpush1.msra.mxu0 0.0
    %5305 = vmatprep.subr.mxu0 0.0
    %5306 = vmatpush1.msra.mxu0 0.0
    %5307 = vmatprep.subr.mxu0 0.0
    %5308 = vmatpush1.msra.mxu0 0.0
    %5309 = vmatprep.subr.mxu0 0.0
    %5310 = vmatpush1.msra.mxu0 0.0
    %5311 = vmatprep.subr.mxu0 0.0
    %5312 = vmatpush1.msra.mxu0 0.0
    %5313 = vmatprep.subr.mxu0 0.0
    %5314 = vmatpush1.msra.mxu0 0.0
    %5315 = vmatprep.subr.mxu0 0.0
    %5316 = vmatpush1.msra.mxu0 0.0
    %5317 = vmatprep.subr.mxu0 0.0
    %5318 = vmatpush1.msra.mxu0 0.0
    %5319 = vmatprep.subr.mxu0 0.0
    %5320 = vmatpush1.msra.mxu0 0.0
    %5321 = vmatprep.subr.mxu0 0.0
    %5322 = vmatpush1.msra.mxu0 0.0
    %5323 = vmatprep.subr.mxu0 0.0
    %5324 = vmatpush1.msra.mxu0 %v5110
    %5325 = vmatprep.subr.mxu0 0.0
    %5326 = vmatpush2.msra.mxu0 0.0
    %5327 = vmatprep.subr.mxu0 0.0
    %5328 = vmatpush2.msra.mxu0 0.0
    %5329 = vmatprep.subr.mxu0 0.0
    %5330 = vmatpush2.msra.mxu0 0.0
    %5331 = vmatprep.subr.mxu0 0.0
    %5332 = vmatpush2.msra.mxu0 0.0
    %5333 = vmatprep.subr.mxu0 0.0
    %5334 = vmatpush2.msra.mxu0 0.0
    %5335 = vmatprep.subr.mxu0 0.0
    %5336 = vmatpush2.msra.mxu0 0.0
    %5337 = vmatprep.subr.mxu0 0.0
    %5338 = vmatpush2.msra.mxu0 0.0
    %5339 = vmatprep.subr.mxu0 0.0
    %5340 = vmatpush2.msra.mxu0 0.0
    %5341 = vmatprep.subr.mxu0 0.0
    %5342 = vmatpush2.msra.mxu0 0.0
    %5343 = vmatprep.subr.mxu0 0.0
    %5344 = vmatpush2.msra.mxu0 0.0
    %5345 = vmatprep.subr.mxu0 0.0
    %5346 = vmatpush2.msra.mxu0 0.0
    %5347 = vmatprep.subr.mxu0 0.0
    %5348 = vmatpush2.msra.mxu0 0.0
    %5349 = vmatprep.subr.mxu0 0.0
    %5350 = vmatpush2.msra.mxu0 0.0
    %5351 = vmatprep.subr.mxu0 0.0
    %5352 = vmatpush2.msra.mxu0 0.0
    %5353 = vmatprep.subr.mxu0 0.0
    %5354 = vmatpush2.msra.mxu0 0.0
    %5355 = vmatprep.subr.mxu0 0.0
    %5356 = vmatpush2.msra.mxu0 0.0
    %5357 = vmatprep.mubr.f32.mxu0 0.0
    %5358 = vmatmul.mubr.f32.gmra.mxu0 %v5291
    %v5359 = vpop.f32.mrf.mxu0
    %v5360 = vadd.f32 0.0, %v5359
    %v5361 = vpop.f32.mrf.mxu0
    %5362 = vdwg.mxu0
    %v5364 = vsel %vm2729, %v5289, 0
    %5366 = vmatprep.subr.mxu0 0.0
    %5367 = vmatpush1.msra.mxu0 0.0
    %5368 = vmatprep.subr.mxu0 0.0
    %5369 = vmatpush1.msra.mxu0 0.0
    %5370 = vmatprep.subr.mxu0 0.0
    %5371 = vmatpush1.msra.mxu0 0.0
    %5372 = vmatprep.subr.mxu0 0.0
    %5373 = vmatpush1.msra.mxu0 0.0
    %5374 = vmatprep.subr.mxu0 0.0
    %5375 = vmatpush1.msra.mxu0 0.0
    %5376 = vmatprep.subr.mxu0 0.0
    %5377 = vmatpush1.msra.mxu0 0.0
    %5378 = vmatprep.subr.mxu0 0.0
    %5379 = vmatpush1.msra.mxu0 0.0
    %5380 = vmatprep.subr.mxu0 0.0
    %5381 = vmatpush1.msra.mxu0 0.0
    %5382 = vmatprep.subr.mxu0 0.0
    %5383 = vmatpush1.msra.mxu0 0.0
    %5384 = vmatprep.subr.mxu0 0.0
    %5385 = vmatpush1.msra.mxu0 0.0
    %5386 = vmatprep.subr.mxu0 0.0
    %5387 = vmatpush1.msra.mxu0 0.0
    %5388 = vmatprep.subr.mxu0 0.0
    %5389 = vmatpush1.msra.mxu0 0.0
    %5390 = vmatprep.subr.mxu0 0.0
    %5391 = vmatpush1.msra.mxu0 0.0
    %5392 = vmatprep.subr.mxu0 0.0
    %5393 = vmatpush1.msra.mxu0 0.0
    %5394 = vmatprep.subr.mxu0 0.0
    %5395 = vmatpush1.msra.mxu0 0.0
    %5396 = vmatprep.subr.mxu0 0.0
    %5397 = vmatpush1.msra.mxu0 %v5111
    %5398 = vmatprep.subr.mxu0 0.0
    %5399 = vmatpush2.msra.mxu0 0.0
    %5400 = vmatprep.subr.mxu0 0.0
    %5401 = vmatpush2.msra.mxu0 0.0
    %5402 = vmatprep.subr.mxu0 0.0
    %5403 = vmatpush2.msra.mxu0 0.0
    %5404 = vmatprep.subr.mxu0 0.0
    %5405 = vmatpush2.msra.mxu0 0.0
    %5406 = vmatprep.subr.mxu0 0.0
    %5407 = vmatpush2.msra.mxu0 0.0
    %5408 = vmatprep.subr.mxu0 0.0
    %5409 = vmatpush2.msra.mxu0 0.0
    %5410 = vmatprep.subr.mxu0 0.0
    %5411 = vmatpush2.msra.mxu0 0.0
    %5412 = vmatprep.subr.mxu0 0.0
    %5413 = vmatpush2.msra.mxu0 0.0
    %5414 = vmatprep.subr.mxu0 0.0
    %5415 = vmatpush2.msra.mxu0 0.0
    %5416 = vmatprep.subr.mxu0 0.0
    %5417 = vmatpush2.msra.mxu0 0.0
    %5418 = vmatprep.subr.mxu0 0.0
    %5419 = vmatpush2.msra.mxu0 0.0
    %5420 = vmatprep.subr.mxu0 0.0
    %5421 = vmatpush2.msra.mxu0 0.0
    %5422 = vmatprep.subr.mxu0 0.0
    %5423 = vmatpush2.msra.mxu0 0.0
    %5424 = vmatprep.subr.mxu0 0.0
    %5425 = vmatpush2.msra.mxu0 0.0
    %5426 = vmatprep.subr.mxu0 0.0
    %5427 = vmatpush2.msra.mxu0 0.0
    %5428 = vmatprep.subr.mxu0 0.0
    %5429 = vmatpush2.msra.mxu0 0.0
    %5430 = vmatprep.mubr.f32.mxu0 0.0
    %5431 = vmatmul.mubr.f32.gmra.mxu0 %v5364
    %v5432 = vpop.f32.mrf.mxu0
    %v5433 = vadd.f32 0.0, %v5432
    %v5434 = vpop.f32.mrf.mxu0
    %5435 = vdwg.mxu0
    %5436 = vrot.lane.b32.xlu0 %v5096, 96
    %v5437 = vpop.permute.xlu0 %5436
    %5438 = vrot.lane.b32.xlu0 %v5103, 96
    %v5439 = vpop.permute.xlu0 %5438
    %v5440 = vsel %vm2572, %v5437, 0
    %v5442 = vsel %vm2572, %v5439, 0
    %5444 = vmatprep.subr.mxu0 0.0
    %5445 = vmatpush1.xpose.msra.mxu0 0.0
    %5446 = vmatprep.subr.mxu0 0.0
    %5447 = vmatpush1.xpose.msra.mxu0 0.0
    %5448 = vmatprep.subr.mxu0 0.0
    %5449 = vmatpush1.xpose.msra.mxu0 0.0
    %5450 = vmatprep.subr.mxu0 0.0
    %5451 = vmatpush1.xpose.msra.mxu0 0.0
    %5452 = vmatprep.subr.mxu0 0.0
    %5453 = vmatpush1.xpose.msra.mxu0 0.0
    %5454 = vmatprep.subr.mxu0 0.0
    %5455 = vmatpush1.xpose.msra.mxu0 0.0
    %5456 = vmatprep.subr.mxu0 0.0
    %5457 = vmatpush1.xpose.msra.mxu0 0.0
    %5458 = vmatprep.subr.mxu0 0.0
    %5459 = vmatpush1.xpose.msra.mxu0 0.0
    %5460 = vmatprep.subr.mxu0 0.0
    %5461 = vmatpush1.xpose.msra.mxu0 0.0
    %5462 = vmatprep.subr.mxu0 0.0
    %5463 = vmatpush1.xpose.msra.mxu0 0.0
    %5464 = vmatprep.subr.mxu0 0.0
    %5465 = vmatpush1.xpose.msra.mxu0 0.0
    %5466 = vmatprep.subr.mxu0 0.0
    %5467 = vmatpush1.xpose.msra.mxu0 0.0
    %5468 = vmatprep.subr.mxu0 0.0
    %5469 = vmatpush1.xpose.msra.mxu0 0.0
    %5470 = vmatprep.subr.mxu0 0.0
    %5471 = vmatpush1.xpose.msra.mxu0 0.0
    %5472 = vmatprep.subr.mxu0 0.0
    %5473 = vmatpush1.xpose.msra.mxu0 0.0
    %5474 = vmatprep.subr.mxu0 0.0
    %5475 = vmatpush1.xpose.msra.mxu0 %v5442
    %5476 = vmatprep.subr.mxu0 0.0
    %5477 = vmatpush2.xpose.msra.mxu0 0.0
    %5478 = vmatprep.subr.mxu0 0.0
    %5479 = vmatpush2.xpose.msra.mxu0 0.0
    %5480 = vmatprep.subr.mxu0 0.0
    %5481 = vmatpush2.xpose.msra.mxu0 0.0
    %5482 = vmatprep.subr.mxu0 0.0
    %5483 = vmatpush2.xpose.msra.mxu0 0.0
    %5484 = vmatprep.subr.mxu0 0.0
    %5485 = vmatpush2.xpose.msra.mxu0 0.0
    %5486 = vmatprep.subr.mxu0 0.0
    %5487 = vmatpush2.xpose.msra.mxu0 0.0
    %5488 = vmatprep.subr.mxu0 0.0
    %5489 = vmatpush2.xpose.msra.mxu0 0.0
    %5490 = vmatprep.subr.mxu0 0.0
    %5491 = vmatpush2.xpose.msra.mxu0 0.0
    %5492 = vmatprep.subr.mxu0 0.0
    %5493 = vmatpush2.xpose.msra.mxu0 0.0
    %5494 = vmatprep.subr.mxu0 0.0
    %5495 = vmatpush2.xpose.msra.mxu0 0.0
    %5496 = vmatprep.subr.mxu0 0.0
    %5497 = vmatpush2.xpose.msra.mxu0 0.0
    %5498 = vmatprep.subr.mxu0 0.0
    %5499 = vmatpush2.xpose.msra.mxu0 0.0
    %5500 = vmatprep.subr.mxu0 0.0
    %5501 = vmatpush2.xpose.msra.mxu0 0.0
    %5502 = vmatprep.subr.mxu0 0.0
    %5503 = vmatpush2.xpose.msra.mxu0 0.0
    %5504 = vmatprep.subr.mxu0 0.0
    %5505 = vmatpush2.xpose.msra.mxu0 0.0
    %5506 = vmatprep.subr.mxu0 0.0
    %5507 = vmatpush2.xpose.msra.mxu0 0.0
    %5508 = vmatprep.mubr.f32.mxu0 0.0
    %5509 = vmatmul.mubr.f32.gmra.mxu0 %v5440
    %v5510 = vpop.f32.mrf.mxu0
    %v5511 = vadd.f32 0.0, %v5510
    %v5512 = vpop.f32.mrf.mxu0
    %5513 = vdwg.mxu0
    %5514 = vrot.lane.b32.xlu0 %v5097, 96
    %v5515 = vpop.permute.xlu0 %5514
    %5516 = vrot.lane.b32.xlu0 %v5104, 96
    %v5517 = vpop.permute.xlu0 %5516
    %v5518 = vsel %vm2572, %v5515, 0
    %v5520 = vsel %vm2572, %v5517, 0
    %5522 = vmatprep.subr.mxu0 0.0
    %5523 = vmatpush1.xpose.msra.mxu0 0.0
    %5524 = vmatprep.subr.mxu0 0.0
    %5525 = vmatpush1.xpose.msra.mxu0 0.0
    %5526 = vmatprep.subr.mxu0 0.0
    %5527 = vmatpush1.xpose.msra.mxu0 0.0
    %5528 = vmatprep.subr.mxu0 0.0
    %5529 = vmatpush1.xpose.msra.mxu0 0.0
    %5530 = vmatprep.subr.mxu0 0.0
    %5531 = vmatpush1.xpose.msra.mxu0 0.0
    %5532 = vmatprep.subr.mxu0 0.0
    %5533 = vmatpush1.xpose.msra.mxu0 0.0
    %5534 = vmatprep.subr.mxu0 0.0
    %5535 = vmatpush1.xpose.msra.mxu0 0.0
    %5536 = vmatprep.subr.mxu0 0.0
    %5537 = vmatpush1.xpose.msra.mxu0 0.0
    %5538 = vmatprep.subr.mxu0 0.0
    %5539 = vmatpush1.xpose.msra.mxu0 0.0
    %5540 = vmatprep.subr.mxu0 0.0
    %5541 = vmatpush1.xpose.msra.mxu0 0.0
    %5542 = vmatprep.subr.mxu0 0.0
    %5543 = vmatpush1.xpose.msra.mxu0 0.0
    %5544 = vmatprep.subr.mxu0 0.0
    %5545 = vmatpush1.xpose.msra.mxu0 0.0
    %5546 = vmatprep.subr.mxu0 0.0
    %5547 = vmatpush1.xpose.msra.mxu0 0.0
    %5548 = vmatprep.subr.mxu0 0.0
    %5549 = vmatpush1.xpose.msra.mxu0 0.0
    %5550 = vmatprep.subr.mxu0 0.0
    %5551 = vmatpush1.xpose.msra.mxu0 0.0
    %5552 = vmatprep.subr.mxu0 0.0
    %5553 = vmatpush1.xpose.msra.mxu0 %v5520
    %5554 = vmatprep.subr.mxu0 0.0
    %5555 = vmatpush2.xpose.msra.mxu0 0.0
    %5556 = vmatprep.subr.mxu0 0.0
    %5557 = vmatpush2.xpose.msra.mxu0 0.0
    %5558 = vmatprep.subr.mxu0 0.0
    %5559 = vmatpush2.xpose.msra.mxu0 0.0
    %5560 = vmatprep.subr.mxu0 0.0
    %5561 = vmatpush2.xpose.msra.mxu0 0.0
    %5562 = vmatprep.subr.mxu0 0.0
    %5563 = vmatpush2.xpose.msra.mxu0 0.0
    %5564 = vmatprep.subr.mxu0 0.0
    %5565 = vmatpush2.xpose.msra.mxu0 0.0
    %5566 = vmatprep.subr.mxu0 0.0
    %5567 = vmatpush2.xpose.msra.mxu0 0.0
    %5568 = vmatprep.subr.mxu0 0.0
    %5569 = vmatpush2.xpose.msra.mxu0 0.0
    %5570 = vmatprep.subr.mxu0 0.0
    %5571 = vmatpush2.xpose.msra.mxu0 0.0
    %5572 = vmatprep.subr.mxu0 0.0
    %5573 = vmatpush2.xpose.msra.mxu0 0.0
    %5574 = vmatprep.subr.mxu0 0.0
    %5575 = vmatpush2.xpose.msra.mxu0 0.0
    %5576 = vmatprep.subr.mxu0 0.0
    %5577 = vmatpush2.xpose.msra.mxu0 0.0
    %5578 = vmatprep.subr.mxu0 0.0
    %5579 = vmatpush2.xpose.msra.mxu0 0.0
    %5580 = vmatprep.subr.mxu0 0.0
    %5581 = vmatpush2.xpose.msra.mxu0 0.0
    %5582 = vmatprep.subr.mxu0 0.0
    %5583 = vmatpush2.xpose.msra.mxu0 0.0
    %5584 = vmatprep.subr.mxu0 0.0
    %5585 = vmatpush2.xpose.msra.mxu0 0.0
    %5586 = vmatprep.mubr.f32.mxu0 0.0
    %5587 = vmatmul.mubr.f32.gmra.mxu0 %v5518
    %v5588 = vpop.f32.mrf.mxu0
    %v5589 = vadd.f32 0.0, %v5588
    %v5590 = vpop.f32.mrf.mxu0
    %5591 = vdwg.mxu0
    %v5592 = vmul.f32 %v5511, 0.17677669
    %v5593 = vmul.f32 %v5589, 0.17677669
    %v5594 = vadd.f32 %v5592, %v94
    %v5595 = vadd.f32 %v5593, %v94
    %v5596 = vsel %vm2729, %v5594, -inf
    %5597 = vmax.xlane.f32.xlu0 %v5596
    %v5598 = vpop.xlane.xlu0 %5597
    %v5599 = vsel %vm2729, %v5595, -inf
    %5600 = vmax.xlane.f32.xlu0 %v5599
    %v5601 = vpop.xlane.xlu0 %5600
    %v5602 = vsub.f32 %v5594, %v5598
    %v5603 = vsub.f32 %v5595, %v5601
    %v5604 = vmul.f32 %v5602, 1.442695
    %v5605 = vpow.pop %v5604
    %v5606 = vmul.f32 %v5603, 1.442695
    %v5607 = vpow.pop %v5606
    %v5608 = vsel %vm2729, %v5605, 0.0
    %5609 = vadd.xlane.f32.xlu0 %v5608
    %v5610 = vpop.xlane.xlu0 %5609
    %v5611 = vsel %vm2729, %v5607, 0.0
    %5612 = vadd.xlane.f32.xlu0 %v5611
    %v5613 = vpop.xlane.xlu0 %5612
    %v5614 = vrcp.pop %v5610
    %v5615 = vrcp.pop %v5613
    %v5616 = vmul.f32 %v5605, %v5614
    %v5617 = vmul.f32 %v5607, %v5615
    %5619 = vrot.lane.b32.xlu0 %v5110, 96
    %v5620 = vpop.permute.xlu0 %5619
    %v5623 = vsel %vm2729, %v5616, 0
    %5625 = vmatprep.subr.mxu0 0.0
    %5626 = vmatpush1.msra.mxu0 0.0
    %5627 = vmatprep.subr.mxu0 0.0
    %5628 = vmatpush1.msra.mxu0 0.0
    %5629 = vmatprep.subr.mxu0 0.0
    %5630 = vmatpush1.msra.mxu0 0.0
    %5631 = vmatprep.subr.mxu0 0.0
    %5632 = vmatpush1.msra.mxu0 0.0
    %5633 = vmatprep.subr.mxu0 0.0
    %5634 = vmatpush1.msra.mxu0 0.0
    %5635 = vmatprep.subr.mxu0 0.0
    %5636 = vmatpush1.msra.mxu0 0.0
    %5637 = vmatprep.subr.mxu0 0.0
    %5638 = vmatpush1.msra.mxu0 0.0
    %5639 = vmatprep.subr.mxu0 0.0
    %5640 = vmatpush1.msra.mxu0 0.0
    %5641 = vmatprep.subr.mxu0 0.0
    %5642 = vmatpush1.msra.mxu0 0.0
    %5643 = vmatprep.subr.mxu0 0.0
    %5644 = vmatpush1.msra.mxu0 0.0
    %5645 = vmatprep.subr.mxu0 0.0
    %5646 = vmatpush1.msra.mxu0 0.0
    %5647 = vmatprep.subr.mxu0 0.0
    %5648 = vmatpush1.msra.mxu0 0.0
    %5649 = vmatprep.subr.mxu0 0.0
    %5650 = vmatpush1.msra.mxu0 0.0
    %5651 = vmatprep.subr.mxu0 0.0
    %5652 = vmatpush1.msra.mxu0 0.0
    %5653 = vmatprep.subr.mxu0 0.0
    %5654 = vmatpush1.msra.mxu0 0.0
    %5655 = vmatprep.subr.mxu0 0.0
    %5656 = vmatpush1.msra.mxu0 %v5620
    %5657 = vmatprep.subr.mxu0 0.0
    %5658 = vmatpush2.msra.mxu0 0.0
    %5659 = vmatprep.subr.mxu0 0.0
    %5660 = vmatpush2.msra.mxu0 0.0
    %5661 = vmatprep.subr.mxu0 0.0
    %5662 = vmatpush2.msra.mxu0 0.0
    %5663 = vmatprep.subr.mxu0 0.0
    %5664 = vmatpush2.msra.mxu0 0.0
    %5665 = vmatprep.subr.mxu0 0.0
    %5666 = vmatpush2.msra.mxu0 0.0
    %5667 = vmatprep.subr.mxu0 0.0
    %5668 = vmatpush2.msra.mxu0 0.0
    %5669 = vmatprep.subr.mxu0 0.0
    %5670 = vmatpush2.msra.mxu0 0.0
    %5671 = vmatprep.subr.mxu0 0.0
    %5672 = vmatpush2.msra.mxu0 0.0
    %5673 = vmatprep.subr.mxu0 0.0
    %5674 = vmatpush2.msra.mxu0 0.0
    %5675 = vmatprep.subr.mxu0 0.0
    %5676 = vmatpush2.msra.mxu0 0.0
    %5677 = vmatprep.subr.mxu0 0.0
    %5678 = vmatpush2.msra.mxu0 0.0
    %5679 = vmatprep.subr.mxu0 0.0
    %5680 = vmatpush2.msra.mxu0 0.0
    %5681 = vmatprep.subr.mxu0 0.0
    %5682 = vmatpush2.msra.mxu0 0.0
    %5683 = vmatprep.subr.mxu0 0.0
    %5684 = vmatpush2.msra.mxu0 0.0
    %5685 = vmatprep.subr.mxu0 0.0
    %5686 = vmatpush2.msra.mxu0 0.0
    %5687 = vmatprep.subr.mxu0 0.0
    %5688 = vmatpush2.msra.mxu0 0.0
    %5689 = vmatprep.mubr.f32.mxu0 0.0
    %5690 = vmatmul.mubr.f32.gmra.mxu0 %v5623
    %v5691 = vpop.f32.mrf.mxu0
    %v5692 = vadd.f32 0.0, %v5691
    %v5693 = vpop.f32.mrf.mxu0
    %5694 = vdwg.mxu0
    %5696 = vrot.lane.b32.xlu0 %v5111, 96
    %v5697 = vpop.permute.xlu0 %5696
    %v5700 = vsel %vm2729, %v5617, 0
    %5702 = vmatprep.subr.mxu0 0.0
    %5703 = vmatpush1.msra.mxu0 0.0
    %5704 = vmatprep.subr.mxu0 0.0
    %5705 = vmatpush1.msra.mxu0 0.0
    %5706 = vmatprep.subr.mxu0 0.0
    %5707 = vmatpush1.msra.mxu0 0.0
    %5708 = vmatprep.subr.mxu0 0.0
    %5709 = vmatpush1.msra.mxu0 0.0
    %5710 = vmatprep.subr.mxu0 0.0
    %5711 = vmatpush1.msra.mxu0 0.0
    %5712 = vmatprep.subr.mxu0 0.0
    %5713 = vmatpush1.msra.mxu0 0.0
    %5714 = vmatprep.subr.mxu0 0.0
    %5715 = vmatpush1.msra.mxu0 0.0
    %5716 = vmatprep.subr.mxu0 0.0
    %5717 = vmatpush1.msra.mxu0 0.0
    %5718 = vmatprep.subr.mxu0 0.0
    %5719 = vmatpush1.msra.mxu0 0.0
    %5720 = vmatprep.subr.mxu0 0.0
    %5721 = vmatpush1.msra.mxu0 0.0
    %5722 = vmatprep.subr.mxu0 0.0
    %5723 = vmatpush1.msra.mxu0 0.0
    %5724 = vmatprep.subr.mxu0 0.0
    %5725 = vmatpush1.msra.mxu0 0.0
    %5726 = vmatprep.subr.mxu0 0.0
    %5727 = vmatpush1.msra.mxu0 0.0
    %5728 = vmatprep.subr.mxu0 0.0
    %5729 = vmatpush1.msra.mxu0 0.0
    %5730 = vmatprep.subr.mxu0 0.0
    %5731 = vmatpush1.msra.mxu0 0.0
    %5732 = vmatprep.subr.mxu0 0.0
    %5733 = vmatpush1.msra.mxu0 %v5697
    %5734 = vmatprep.subr.mxu0 0.0
    %5735 = vmatpush2.msra.mxu0 0.0
    %5736 = vmatprep.subr.mxu0 0.0
    %5737 = vmatpush2.msra.mxu0 0.0
    %5738 = vmatprep.subr.mxu0 0.0
    %5739 = vmatpush2.msra.mxu0 0.0
    %5740 = vmatprep.subr.mxu0 0.0
    %5741 = vmatpush2.msra.mxu0 0.0
    %5742 = vmatprep.subr.mxu0 0.0
    %5743 = vmatpush2.msra.mxu0 0.0
    %5744 = vmatprep.subr.mxu0 0.0
    %5745 = vmatpush2.msra.mxu0 0.0
    %5746 = vmatprep.subr.mxu0 0.0
    %5747 = vmatpush2.msra.mxu0 0.0
    %5748 = vmatprep.subr.mxu0 0.0
    %5749 = vmatpush2.msra.mxu0 0.0
    %5750 = vmatprep.subr.mxu0 0.0
    %5751 = vmatpush2.msra.mxu0 0.0
    %5752 = vmatprep.subr.mxu0 0.0
    %5753 = vmatpush2.msra.mxu0 0.0
    %5754 = vmatprep.subr.mxu0 0.0
    %5755 = vmatpush2.msra.mxu0 0.0
    %5756 = vmatprep.subr.mxu0 0.0
    %5757 = vmatpush2.msra.mxu0 0.0
    %5758 = vmatprep.subr.mxu0 0.0
    %5759 = vmatpush2.msra.mxu0 0.0
    %5760 = vmatprep.subr.mxu0 0.0
    %5761 = vmatpush2.msra.mxu0 0.0
    %5762 = vmatprep.subr.mxu0 0.0
    %5763 = vmatpush2.msra.mxu0 0.0
    %5764 = vmatprep.subr.mxu0 0.0
    %5765 = vmatpush2.msra.mxu0 0.0
    %5766 = vmatprep.mubr.f32.mxu0 0.0
    %5767 = vmatmul.mubr.f32.gmra.mxu0 %v5700
    %v5768 = vpop.f32.mrf.mxu0
    %v5769 = vadd.f32 0.0, %v5768
    %v5770 = vpop.f32.mrf.mxu0
    %5771 = vdwg.mxu0
    %5772 = vrot.lane.b32.xlu0 %v5096, 64
    %v5773 = vpop.permute.xlu0 %5772
    %5774 = vrot.lane.b32.xlu0 %v5103, 64
    %v5775 = vpop.permute.xlu0 %5774
    %v5776 = vsel %vm2572, %v5773, 0
    %v5778 = vsel %vm2572, %v5775, 0
    %5780 = vmatprep.subr.mxu0 0.0
    %5781 = vmatpush1.xpose.msra.mxu0 0.0
    %5782 = vmatprep.subr.mxu0 0.0
    %5783 = vmatpush1.xpose.msra.mxu0 0.0
    %5784 = vmatprep.subr.mxu0 0.0
    %5785 = vmatpush1.xpose.msra.mxu0 0.0
    %5786 = vmatprep.subr.mxu0 0.0
    %5787 = vmatpush1.xpose.msra.mxu0 0.0
    %5788 = vmatprep.subr.mxu0 0.0
    %5789 = vmatpush1.xpose.msra.mxu0 0.0
    %5790 = vmatprep.subr.mxu0 0.0
    %5791 = vmatpush1.xpose.msra.mxu0 0.0
    %5792 = vmatprep.subr.mxu0 0.0
    %5793 = vmatpush1.xpose.msra.mxu0 0.0
    %5794 = vmatprep.subr.mxu0 0.0
    %5795 = vmatpush1.xpose.msra.mxu0 0.0
    %5796 = vmatprep.subr.mxu0 0.0
    %5797 = vmatpush1.xpose.msra.mxu0 0.0
    %5798 = vmatprep.subr.mxu0 0.0
    %5799 = vmatpush1.xpose.msra.mxu0 0.0
    %5800 = vmatprep.subr.mxu0 0.0
    %5801 = vmatpush1.xpose.msra.mxu0 0.0
    %5802 = vmatprep.subr.mxu0 0.0
    %5803 = vmatpush1.xpose.msra.mxu0 0.0
    %5804 = vmatprep.subr.mxu0 0.0
    %5805 = vmatpush1.xpose.msra.mxu0 0.0
    %5806 = vmatprep.subr.mxu0 0.0
    %5807 = vmatpush1.xpose.msra.mxu0 0.0
    %5808 = vmatprep.subr.mxu0 0.0
    %5809 = vmatpush1.xpose.msra.mxu0 0.0
    %5810 = vmatprep.subr.mxu0 0.0
    %5811 = vmatpush1.xpose.msra.mxu0 %v5778
    %5812 = vmatprep.subr.mxu0 0.0
    %5813 = vmatpush2.xpose.msra.mxu0 0.0
    %5814 = vmatprep.subr.mxu0 0.0
    %5815 = vmatpush2.xpose.msra.mxu0 0.0
    %5816 = vmatprep.subr.mxu0 0.0
    %5817 = vmatpush2.xpose.msra.mxu0 0.0
    %5818 = vmatprep.subr.mxu0 0.0
    %5819 = vmatpush2.xpose.msra.mxu0 0.0
    %5820 = vmatprep.subr.mxu0 0.0
    %5821 = vmatpush2.xpose.msra.mxu0 0.0
    %5822 = vmatprep.subr.mxu0 0.0
    %5823 = vmatpush2.xpose.msra.mxu0 0.0
    %5824 = vmatprep.subr.mxu0 0.0
    %5825 = vmatpush2.xpose.msra.mxu0 0.0
    %5826 = vmatprep.subr.mxu0 0.0
    %5827 = vmatpush2.xpose.msra.mxu0 0.0
    %5828 = vmatprep.subr.mxu0 0.0
    %5829 = vmatpush2.xpose.msra.mxu0 0.0
    %5830 = vmatprep.subr.mxu0 0.0
    %5831 = vmatpush2.xpose.msra.mxu0 0.0
    %5832 = vmatprep.subr.mxu0 0.0
    %5833 = vmatpush2.xpose.msra.mxu0 0.0
    %5834 = vmatprep.subr.mxu0 0.0
    %5835 = vmatpush2.xpose.msra.mxu0 0.0
    %5836 = vmatprep.subr.mxu0 0.0
    %5837 = vmatpush2.xpose.msra.mxu0 0.0
    %5838 = vmatprep.subr.mxu0 0.0
    %5839 = vmatpush2.xpose.msra.mxu0 0.0
    %5840 = vmatprep.subr.mxu0 0.0
    %5841 = vmatpush2.xpose.msra.mxu0 0.0
    %5842 = vmatprep.subr.mxu0 0.0
    %5843 = vmatpush2.xpose.msra.mxu0 0.0
    %5844 = vmatprep.mubr.f32.mxu0 0.0
    %5845 = vmatmul.mubr.f32.gmra.mxu0 %v5776
    %v5846 = vpop.f32.mrf.mxu0
    %v5847 = vadd.f32 0.0, %v5846
    %v5848 = vpop.f32.mrf.mxu0
    %5849 = vdwg.mxu0
    %5850 = vrot.lane.b32.xlu0 %v5097, 64
    %v5851 = vpop.permute.xlu0 %5850
    %5852 = vrot.lane.b32.xlu0 %v5104, 64
    %v5853 = vpop.permute.xlu0 %5852
    %v5854 = vsel %vm2572, %v5851, 0
    %v5856 = vsel %vm2572, %v5853, 0
    %5858 = vmatprep.subr.mxu0 0.0
    %5859 = vmatpush1.xpose.msra.mxu0 0.0
    %5860 = vmatprep.subr.mxu0 0.0
    %5861 = vmatpush1.xpose.msra.mxu0 0.0
    %5862 = vmatprep.subr.mxu0 0.0
    %5863 = vmatpush1.xpose.msra.mxu0 0.0
    %5864 = vmatprep.subr.mxu0 0.0
    %5865 = vmatpush1.xpose.msra.mxu0 0.0
    %5866 = vmatprep.subr.mxu0 0.0
    %5867 = vmatpush1.xpose.msra.mxu0 0.0
    %5868 = vmatprep.subr.mxu0 0.0
    %5869 = vmatpush1.xpose.msra.mxu0 0.0
    %5870 = vmatprep.subr.mxu0 0.0
    %5871 = vmatpush1.xpose.msra.mxu0 0.0
    %5872 = vmatprep.subr.mxu0 0.0
    %5873 = vmatpush1.xpose.msra.mxu0 0.0
    %5874 = vmatprep.subr.mxu0 0.0
    %5875 = vmatpush1.xpose.msra.mxu0 0.0
    %5876 = vmatprep.subr.mxu0 0.0
    %5877 = vmatpush1.xpose.msra.mxu0 0.0
    %5878 = vmatprep.subr.mxu0 0.0
    %5879 = vmatpush1.xpose.msra.mxu0 0.0
    %5880 = vmatprep.subr.mxu0 0.0
    %5881 = vmatpush1.xpose.msra.mxu0 0.0
    %5882 = vmatprep.subr.mxu0 0.0
    %5883 = vmatpush1.xpose.msra.mxu0 0.0
    %5884 = vmatprep.subr.mxu0 0.0
    %5885 = vmatpush1.xpose.msra.mxu0 0.0
    %5886 = vmatprep.subr.mxu0 0.0
    %5887 = vmatpush1.xpose.msra.mxu0 0.0
    %5888 = vmatprep.subr.mxu0 0.0
    %5889 = vmatpush1.xpose.msra.mxu0 %v5856
    %5890 = vmatprep.subr.mxu0 0.0
    %5891 = vmatpush2.xpose.msra.mxu0 0.0
    %5892 = vmatprep.subr.mxu0 0.0
    %5893 = vmatpush2.xpose.msra.mxu0 0.0
    %5894 = vmatprep.subr.mxu0 0.0
    %5895 = vmatpush2.xpose.msra.mxu0 0.0
    %5896 = vmatprep.subr.mxu0 0.0
    %5897 = vmatpush2.xpose.msra.mxu0 0.0
    %5898 = vmatprep.subr.mxu0 0.0
    %5899 = vmatpush2.xpose.msra.mxu0 0.0
    %5900 = vmatprep.subr.mxu0 0.0
    %5901 = vmatpush2.xpose.msra.mxu0 0.0
    %5902 = vmatprep.subr.mxu0 0.0
    %5903 = vmatpush2.xpose.msra.mxu0 0.0
    %5904 = vmatprep.subr.mxu0 0.0
    %5905 = vmatpush2.xpose.msra.mxu0 0.0
    %5906 = vmatprep.subr.mxu0 0.0
    %5907 = vmatpush2.xpose.msra.mxu0 0.0
    %5908 = vmatprep.subr.mxu0 0.0
    %5909 = vmatpush2.xpose.msra.mxu0 0.0
    %5910 = vmatprep.subr.mxu0 0.0
    %5911 = vmatpush2.xpose.msra.mxu0 0.0
    %5912 = vmatprep.subr.mxu0 0.0
    %5913 = vmatpush2.xpose.msra.mxu0 0.0
    %5914 = vmatprep.subr.mxu0 0.0
    %5915 = vmatpush2.xpose.msra.mxu0 0.0
    %5916 = vmatprep.subr.mxu0 0.0
    %5917 = vmatpush2.xpose.msra.mxu0 0.0
    %5918 = vmatprep.subr.mxu0 0.0
    %5919 = vmatpush2.xpose.msra.mxu0 0.0
    %5920 = vmatprep.subr.mxu0 0.0
    %5921 = vmatpush2.xpose.msra.mxu0 0.0
    %5922 = vmatprep.mubr.f32.mxu0 0.0
    %5923 = vmatmul.mubr.f32.gmra.mxu0 %v5854
    %v5924 = vpop.f32.mrf.mxu0
    %v5925 = vadd.f32 0.0, %v5924
    %v5926 = vpop.f32.mrf.mxu0
    %5927 = vdwg.mxu0
    %v5928 = vmul.f32 %v5847, 0.17677669
    %v5929 = vmul.f32 %v5925, 0.17677669
    %v5930 = vadd.f32 %v5928, %v94
    %v5931 = vadd.f32 %v5929, %v94
    %v5932 = vsel %vm2729, %v5930, -inf
    %5933 = vmax.xlane.f32.xlu0 %v5932
    %v5934 = vpop.xlane.xlu0 %5933
    %v5935 = vsel %vm2729, %v5931, -inf
    %5936 = vmax.xlane.f32.xlu0 %v5935
    %v5937 = vpop.xlane.xlu0 %5936
    %v5938 = vsub.f32 %v5930, %v5934
    %v5939 = vsub.f32 %v5931, %v5937
    %v5940 = vmul.f32 %v5938, 1.442695
    %v5941 = vpow.pop %v5940
    %v5942 = vmul.f32 %v5939, 1.442695
    %v5943 = vpow.pop %v5942
    %v5944 = vsel %vm2729, %v5941, 0.0
    %5945 = vadd.xlane.f32.xlu0 %v5944
    %v5946 = vpop.xlane.xlu0 %5945
    %v5947 = vsel %vm2729, %v5943, 0.0
    %5948 = vadd.xlane.f32.xlu0 %v5947
    %v5949 = vpop.xlane.xlu0 %5948
    %v5950 = vrcp.pop %v5946
    %v5951 = vrcp.pop %v5949
    %v5952 = vmul.f32 %v5941, %v5950
    %v5953 = vmul.f32 %v5943, %v5951
    %5954 = vrot.lane.b32.xlu0 %v5110, 64
    %v5955 = vpop.permute.xlu0 %5954
    %v5958 = vsel %vm2729, %v5952, 0
    %5960 = vmatprep.subr.mxu0 0.0
    %5961 = vmatpush1.msra.mxu0 0.0
    %5962 = vmatprep.subr.mxu0 0.0
    %5963 = vmatpush1.msra.mxu0 0.0
    %5964 = vmatprep.subr.mxu0 0.0
    %5965 = vmatpush1.msra.mxu0 0.0
    %5966 = vmatprep.subr.mxu0 0.0
    %5967 = vmatpush1.msra.mxu0 0.0
    %5968 = vmatprep.subr.mxu0 0.0
    %5969 = vmatpush1.msra.mxu0 0.0
    %5970 = vmatprep.subr.mxu0 0.0
    %5971 = vmatpush1.msra.mxu0 0.0
    %5972 = vmatprep.subr.mxu0 0.0
    %5973 = vmatpush1.msra.mxu0 0.0
    %5974 = vmatprep.subr.mxu0 0.0
    %5975 = vmatpush1.msra.mxu0 0.0
    %5976 = vmatprep.subr.mxu0 0.0
    %5977 = vmatpush1.msra.mxu0 0.0
    %5978 = vmatprep.subr.mxu0 0.0
    %5979 = vmatpush1.msra.mxu0 0.0
    %5980 = vmatprep.subr.mxu0 0.0
    %5981 = vmatpush1.msra.mxu0 0.0
    %5982 = vmatprep.subr.mxu0 0.0
    %5983 = vmatpush1.msra.mxu0 0.0
    %5984 = vmatprep.subr.mxu0 0.0
    %5985 = vmatpush1.msra.mxu0 0.0
    %5986 = vmatprep.subr.mxu0 0.0
    %5987 = vmatpush1.msra.mxu0 0.0
    %5988 = vmatprep.subr.mxu0 0.0
    %5989 = vmatpush1.msra.mxu0 0.0
    %5990 = vmatprep.subr.mxu0 0.0
    %5991 = vmatpush1.msra.mxu0 %v5955
    %5992 = vmatprep.subr.mxu0 0.0
    %5993 = vmatpush2.msra.mxu0 0.0
    %5994 = vmatprep.subr.mxu0 0.0
    %5995 = vmatpush2.msra.mxu0 0.0
    %5996 = vmatprep.subr.mxu0 0.0
    %5997 = vmatpush2.msra.mxu0 0.0
    %5998 = vmatprep.subr.mxu0 0.0
    %5999 = vmatpush2.msra.mxu0 0.0
    %6000 = vmatprep.subr.mxu0 0.0
    %6001 = vmatpush2.msra.mxu0 0.0
    %6002 = vmatprep.subr.mxu0 0.0
    %6003 = vmatpush2.msra.mxu0 0.0
    %6004 = vmatprep.subr.mxu0 0.0
    %6005 = vmatpush2.msra.mxu0 0.0
    %6006 = vmatprep.subr.mxu0 0.0
    %6007 = vmatpush2.msra.mxu0 0.0
    %6008 = vmatprep.subr.mxu0 0.0
    %6009 = vmatpush2.msra.mxu0 0.0
    %6010 = vmatprep.subr.mxu0 0.0
    %6011 = vmatpush2.msra.mxu0 0.0
    %6012 = vmatprep.subr.mxu0 0.0
    %6013 = vmatpush2.msra.mxu0 0.0
    %6014 = vmatprep.subr.mxu0 0.0
    %6015 = vmatpush2.msra.mxu0 0.0
    %6016 = vmatprep.subr.mxu0 0.0
    %6017 = vmatpush2.msra.mxu0 0.0
    %6018 = vmatprep.subr.mxu0 0.0
    %6019 = vmatpush2.msra.mxu0 0.0
    %6020 = vmatprep.subr.mxu0 0.0
    %6021 = vmatpush2.msra.mxu0 0.0
    %6022 = vmatprep.subr.mxu0 0.0
    %6023 = vmatpush2.msra.mxu0 0.0
    %6024 = vmatprep.mubr.f32.mxu0 0.0
    %6025 = vmatmul.mubr.f32.gmra.mxu0 %v5958
    %v6026 = vpop.f32.mrf.mxu0
    %v6027 = vadd.f32 0.0, %v6026
    %v6028 = vpop.f32.mrf.mxu0
    %6029 = vdwg.mxu0
    %6030 = vrot.lane.b32.xlu0 %v5111, 64
    %v6031 = vpop.permute.xlu0 %6030
    %v6034 = vsel %vm2729, %v5953, 0
    %6036 = vmatprep.subr.mxu0 0.0
    %6037 = vmatpush1.msra.mxu0 0.0
    %6038 = vmatprep.subr.mxu0 0.0
    %6039 = vmatpush1.msra.mxu0 0.0
    %6040 = vmatprep.subr.mxu0 0.0
    %6041 = vmatpush1.msra.mxu0 0.0
    %6042 = vmatprep.subr.mxu0 0.0
    %6043 = vmatpush1.msra.mxu0 0.0
    %6044 = vmatprep.subr.mxu0 0.0
    %6045 = vmatpush1.msra.mxu0 0.0
    %6046 = vmatprep.subr.mxu0 0.0
    %6047 = vmatpush1.msra.mxu0 0.0
    %6048 = vmatprep.subr.mxu0 0.0
    %6049 = vmatpush1.msra.mxu0 0.0
    %6050 = vmatprep.subr.mxu0 0.0
    %6051 = vmatpush1.msra.mxu0 0.0
    %6052 = vmatprep.subr.mxu0 0.0
    %6053 = vmatpush1.msra.mxu0 0.0
    %6054 = vmatprep.subr.mxu0 0.0
    %6055 = vmatpush1.msra.mxu0 0.0
    %6056 = vmatprep.subr.mxu0 0.0
    %6057 = vmatpush1.msra.mxu0 0.0
    %6058 = vmatprep.subr.mxu0 0.0
    %6059 = vmatpush1.msra.mxu0 0.0
    %6060 = vmatprep.subr.mxu0 0.0
    %6061 = vmatpush1.msra.mxu0 0.0
    %6062 = vmatprep.subr.mxu0 0.0
    %6063 = vmatpush1.msra.mxu0 0.0
    %6064 = vmatprep.subr.mxu0 0.0
    %6065 = vmatpush1.msra.mxu0 0.0
    %6066 = vmatprep.subr.mxu0 0.0
    %6067 = vmatpush1.msra.mxu0 %v6031
    %6068 = vmatprep.subr.mxu0 0.0
    %6069 = vmatpush2.msra.mxu0 0.0
    %6070 = vmatprep.subr.mxu0 0.0
    %6071 = vmatpush2.msra.mxu0 0.0
    %6072 = vmatprep.subr.mxu0 0.0
    %6073 = vmatpush2.msra.mxu0 0.0
    %6074 = vmatprep.subr.mxu0 0.0
    %6075 = vmatpush2.msra.mxu0 0.0
    %6076 = vmatprep.subr.mxu0 0.0
    %6077 = vmatpush2.msra.mxu0 0.0
    %6078 = vmatprep.subr.mxu0 0.0
    %6079 = vmatpush2.msra.mxu0 0.0
    %6080 = vmatprep.subr.mxu0 0.0
    %6081 = vmatpush2.msra.mxu0 0.0
    %6082 = vmatprep.subr.mxu0 0.0
    %6083 = vmatpush2.msra.mxu0 0.0
    %6084 = vmatprep.subr.mxu0 0.0
    %6085 = vmatpush2.msra.mxu0 0.0
    %6086 = vmatprep.subr.mxu0 0.0
    %6087 = vmatpush2.msra.mxu0 0.0
    %6088 = vmatprep.subr.mxu0 0.0
    %6089 = vmatpush2.msra.mxu0 0.0
    %6090 = vmatprep.subr.mxu0 0.0
    %6091 = vmatpush2.msra.mxu0 0.0
    %6092 = vmatprep.subr.mxu0 0.0
    %6093 = vmatpush2.msra.mxu0 0.0
    %6094 = vmatprep.subr.mxu0 0.0
    %6095 = vmatpush2.msra.mxu0 0.0
    %6096 = vmatprep.subr.mxu0 0.0
    %6097 = vmatpush2.msra.mxu0 0.0
    %6098 = vmatprep.subr.mxu0 0.0
    %6099 = vmatpush2.msra.mxu0 0.0
    %6100 = vmatprep.mubr.f32.mxu0 0.0
    %6101 = vmatmul.mubr.f32.gmra.mxu0 %v6034
    %v6102 = vpop.f32.mrf.mxu0
    %v6103 = vadd.f32 0.0, %v6102
    %v6104 = vpop.f32.mrf.mxu0
    %6105 = vdwg.mxu0
    %6106 = vrot.lane.b32.xlu0 %v5096, 32
    %v6107 = vpop.permute.xlu0 %6106
    %6108 = vrot.lane.b32.xlu0 %v5103, 32
    %v6109 = vpop.permute.xlu0 %6108
    %v6110 = vsel %vm2572, %v6107, 0
    %v6112 = vsel %vm2572, %v6109, 0
    %6114 = vmatprep.subr.mxu0 0.0
    %6115 = vmatpush1.xpose.msra.mxu0 0.0
    %6116 = vmatprep.subr.mxu0 0.0
    %6117 = vmatpush1.xpose.msra.mxu0 0.0
    %6118 = vmatprep.subr.mxu0 0.0
    %6119 = vmatpush1.xpose.msra.mxu0 0.0
    %6120 = vmatprep.subr.mxu0 0.0
    %6121 = vmatpush1.xpose.msra.mxu0 0.0
    %6122 = vmatprep.subr.mxu0 0.0
    %6123 = vmatpush1.xpose.msra.mxu0 0.0
    %6124 = vmatprep.subr.mxu0 0.0
    %6125 = vmatpush1.xpose.msra.mxu0 0.0
    %6126 = vmatprep.subr.mxu0 0.0
    %6127 = vmatpush1.xpose.msra.mxu0 0.0
    %6128 = vmatprep.subr.mxu0 0.0
    %6129 = vmatpush1.xpose.msra.mxu0 0.0
    %6130 = vmatprep.subr.mxu0 0.0
    %6131 = vmatpush1.xpose.msra.mxu0 0.0
    %6132 = vmatprep.subr.mxu0 0.0
    %6133 = vmatpush1.xpose.msra.mxu0 0.0
    %6134 = vmatprep.subr.mxu0 0.0
    %6135 = vmatpush1.xpose.msra.mxu0 0.0
    %6136 = vmatprep.subr.mxu0 0.0
    %6137 = vmatpush1.xpose.msra.mxu0 0.0
    %6138 = vmatprep.subr.mxu0 0.0
    %6139 = vmatpush1.xpose.msra.mxu0 0.0
    %6140 = vmatprep.subr.mxu0 0.0
    %6141 = vmatpush1.xpose.msra.mxu0 0.0
    %6142 = vmatprep.subr.mxu0 0.0
    %6143 = vmatpush1.xpose.msra.mxu0 0.0
    %6144 = vmatprep.subr.mxu0 0.0
    %6145 = vmatpush1.xpose.msra.mxu0 %v6112
    %6146 = vmatprep.subr.mxu0 0.0
    %6147 = vmatpush2.xpose.msra.mxu0 0.0
    %6148 = vmatprep.subr.mxu0 0.0
    %6149 = vmatpush2.xpose.msra.mxu0 0.0
    %6150 = vmatprep.subr.mxu0 0.0
    %6151 = vmatpush2.xpose.msra.mxu0 0.0
    %6152 = vmatprep.subr.mxu0 0.0
    %6153 = vmatpush2.xpose.msra.mxu0 0.0
    %6154 = vmatprep.subr.mxu0 0.0
    %6155 = vmatpush2.xpose.msra.mxu0 0.0
    %6156 = vmatprep.subr.mxu0 0.0
    %6157 = vmatpush2.xpose.msra.mxu0 0.0
    %6158 = vmatprep.subr.mxu0 0.0
    %6159 = vmatpush2.xpose.msra.mxu0 0.0
    %6160 = vmatprep.subr.mxu0 0.0
    %6161 = vmatpush2.xpose.msra.mxu0 0.0
    %6162 = vmatprep.subr.mxu0 0.0
    %6163 = vmatpush2.xpose.msra.mxu0 0.0
    %6164 = vmatprep.subr.mxu0 0.0
    %6165 = vmatpush2.xpose.msra.mxu0 0.0
    %6166 = vmatprep.subr.mxu0 0.0
    %6167 = vmatpush2.xpose.msra.mxu0 0.0
    %6168 = vmatprep.subr.mxu0 0.0
    %6169 = vmatpush2.xpose.msra.mxu0 0.0
    %6170 = vmatprep.subr.mxu0 0.0
    %6171 = vmatpush2.xpose.msra.mxu0 0.0
    %6172 = vmatprep.subr.mxu0 0.0
    %6173 = vmatpush2.xpose.msra.mxu0 0.0
    %6174 = vmatprep.subr.mxu0 0.0
    %6175 = vmatpush2.xpose.msra.mxu0 0.0
    %6176 = vmatprep.subr.mxu0 0.0
    %6177 = vmatpush2.xpose.msra.mxu0 0.0
    %6178 = vmatprep.mubr.f32.mxu0 0.0
    %6179 = vmatmul.mubr.f32.gmra.mxu0 %v6110
    %v6180 = vpop.f32.mrf.mxu0
    %v6181 = vadd.f32 0.0, %v6180
    %v6182 = vpop.f32.mrf.mxu0
    %6183 = vdwg.mxu0
    %6184 = vrot.lane.b32.xlu0 %v5097, 32
    %v6185 = vpop.permute.xlu0 %6184
    %6186 = vrot.lane.b32.xlu0 %v5104, 32
    %v6187 = vpop.permute.xlu0 %6186
    %v6188 = vsel %vm2572, %v6185, 0
    %v6190 = vsel %vm2572, %v6187, 0
    %6192 = vmatprep.subr.mxu0 0.0
    %6193 = vmatpush1.xpose.msra.mxu0 0.0
    %6194 = vmatprep.subr.mxu0 0.0
    %6195 = vmatpush1.xpose.msra.mxu0 0.0
    %6196 = vmatprep.subr.mxu0 0.0
    %6197 = vmatpush1.xpose.msra.mxu0 0.0
    %6198 = vmatprep.subr.mxu0 0.0
    %6199 = vmatpush1.xpose.msra.mxu0 0.0
    %6200 = vmatprep.subr.mxu0 0.0
    %6201 = vmatpush1.xpose.msra.mxu0 0.0
    %6202 = vmatprep.subr.mxu0 0.0
    %6203 = vmatpush1.xpose.msra.mxu0 0.0
    %6204 = vmatprep.subr.mxu0 0.0
    %6205 = vmatpush1.xpose.msra.mxu0 0.0
    %6206 = vmatprep.subr.mxu0 0.0
    %6207 = vmatpush1.xpose.msra.mxu0 0.0
    %6208 = vmatprep.subr.mxu0 0.0
    %6209 = vmatpush1.xpose.msra.mxu0 0.0
    %6210 = vmatprep.subr.mxu0 0.0
    %6211 = vmatpush1.xpose.msra.mxu0 0.0
    %6212 = vmatprep.subr.mxu0 0.0
    %6213 = vmatpush1.xpose.msra.mxu0 0.0
    %6214 = vmatprep.subr.mxu0 0.0
    %6215 = vmatpush1.xpose.msra.mxu0 0.0
    %6216 = vmatprep.subr.mxu0 0.0
    %6217 = vmatpush1.xpose.msra.mxu0 0.0
    %6218 = vmatprep.subr.mxu0 0.0
    %6219 = vmatpush1.xpose.msra.mxu0 0.0
    %6220 = vmatprep.subr.mxu0 0.0
    %6221 = vmatpush1.xpose.msra.mxu0 0.0
    %6222 = vmatprep.subr.mxu0 0.0
    %6223 = vmatpush1.xpose.msra.mxu0 %v6190
    %6224 = vmatprep.subr.mxu0 0.0
    %6225 = vmatpush2.xpose.msra.mxu0 0.0
    %6226 = vmatprep.subr.mxu0 0.0
    %6227 = vmatpush2.xpose.msra.mxu0 0.0
    %6228 = vmatprep.subr.mxu0 0.0
    %6229 = vmatpush2.xpose.msra.mxu0 0.0
    %6230 = vmatprep.subr.mxu0 0.0
    %6231 = vmatpush2.xpose.msra.mxu0 0.0
    %6232 = vmatprep.subr.mxu0 0.0
    %6233 = vmatpush2.xpose.msra.mxu0 0.0
    %6234 = vmatprep.subr.mxu0 0.0
    %6235 = vmatpush2.xpose.msra.mxu0 0.0
    %6236 = vmatprep.subr.mxu0 0.0
    %6237 = vmatpush2.xpose.msra.mxu0 0.0
    %6238 = vmatprep.subr.mxu0 0.0
    %6239 = vmatpush2.xpose.msra.mxu0 0.0
    %6240 = vmatprep.subr.mxu0 0.0
    %6241 = vmatpush2.xpose.msra.mxu0 0.0
    %6242 = vmatprep.subr.mxu0 0.0
    %6243 = vmatpush2.xpose.msra.mxu0 0.0
    %6244 = vmatprep.subr.mxu0 0.0
    %6245 = vmatpush2.xpose.msra.mxu0 0.0
    %6246 = vmatprep.subr.mxu0 0.0
    %6247 = vmatpush2.xpose.msra.mxu0 0.0
    %6248 = vmatprep.subr.mxu0 0.0
    %6249 = vmatpush2.xpose.msra.mxu0 0.0
    %6250 = vmatprep.subr.mxu0 0.0
    %6251 = vmatpush2.xpose.msra.mxu0 0.0
    %6252 = vmatprep.subr.mxu0 0.0
    %6253 = vmatpush2.xpose.msra.mxu0 0.0
    %6254 = vmatprep.subr.mxu0 0.0
    %6255 = vmatpush2.xpose.msra.mxu0 0.0
    %6256 = vmatprep.mubr.f32.mxu0 0.0
    %6257 = vmatmul.mubr.f32.gmra.mxu0 %v6188
    %v6258 = vpop.f32.mrf.mxu0
    %v6259 = vadd.f32 0.0, %v6258
    %v6260 = vpop.f32.mrf.mxu0
    %6261 = vdwg.mxu0
    %v6262 = vmul.f32 %v6181, 0.17677669
    %v6263 = vmul.f32 %v6259, 0.17677669
    %v6264 = vadd.f32 %v6262, %v94
    %v6265 = vadd.f32 %v6263, %v94
    %v6266 = vsel %vm2729, %v6264, -inf
    %6267 = vmax.xlane.f32.xlu0 %v6266
    %v6268 = vpop.xlane.xlu0 %6267
    %v6269 = vsel %vm2729, %v6265, -inf
    %6270 = vmax.xlane.f32.xlu0 %v6269
    %v6271 = vpop.xlane.xlu0 %6270
    %v6272 = vsub.f32 %v6264, %v6268
    %v6273 = vsub.f32 %v6265, %v6271
    %v6274 = vmul.f32 %v6272, 1.442695
    %v6275 = vpow.pop %v6274
    %v6276 = vmul.f32 %v6273, 1.442695
    %v6277 = vpow.pop %v6276
    %v6278 = vsel %vm2729, %v6275, 0.0
    %6279 = vadd.xlane.f32.xlu0 %v6278
    %v6280 = vpop.xlane.xlu0 %6279
    %v6281 = vsel %vm2729, %v6277, 0.0
    %6282 = vadd.xlane.f32.xlu0 %v6281
    %v6283 = vpop.xlane.xlu0 %6282
    %v6284 = vrcp.pop %v6280
    %v6285 = vrcp.pop %v6283
    %v6286 = vmul.f32 %v6275, %v6284
    %v6287 = vmul.f32 %v6277, %v6285
    %6288 = vrot.lane.b32.xlu0 %v5110, 32
    %v6289 = vpop.permute.xlu0 %6288
    %v6292 = vsel %vm2729, %v6286, 0
    %6294 = vmatprep.subr.mxu0 0.0
    %6295 = vmatpush1.msra.mxu0 0.0
    %6296 = vmatprep.subr.mxu0 0.0
    %6297 = vmatpush1.msra.mxu0 0.0
    %6298 = vmatprep.subr.mxu0 0.0
    %6299 = vmatpush1.msra.mxu0 0.0
    %6300 = vmatprep.subr.mxu0 0.0
    %6301 = vmatpush1.msra.mxu0 0.0
    %6302 = vmatprep.subr.mxu0 0.0
    %6303 = vmatpush1.msra.mxu0 0.0
    %6304 = vmatprep.subr.mxu0 0.0
    %6305 = vmatpush1.msra.mxu0 0.0
    %6306 = vmatprep.subr.mxu0 0.0
    %6307 = vmatpush1.msra.mxu0 0.0
    %6308 = vmatprep.subr.mxu0 0.0
    %6309 = vmatpush1.msra.mxu0 0.0
    %6310 = vmatprep.subr.mxu0 0.0
    %6311 = vmatpush1.msra.mxu0 0.0
    %6312 = vmatprep.subr.mxu0 0.0
    %6313 = vmatpush1.msra.mxu0 0.0
    %6314 = vmatprep.subr.mxu0 0.0
    %6315 = vmatpush1.msra.mxu0 0.0
    %6316 = vmatprep.subr.mxu0 0.0
    %6317 = vmatpush1.msra.mxu0 0.0
    %6318 = vmatprep.subr.mxu0 0.0
    %6319 = vmatpush1.msra.mxu0 0.0
    %6320 = vmatprep.subr.mxu0 0.0
    %6321 = vmatpush1.msra.mxu0 0.0
    %6322 = vmatprep.subr.mxu0 0.0
    %6323 = vmatpush1.msra.mxu0 0.0
    %6324 = vmatprep.subr.mxu0 0.0
    %6325 = vmatpush1.msra.mxu0 %v6289
    %6326 = vmatprep.subr.mxu0 0.0
    %6327 = vmatpush2.msra.mxu0 0.0
    %6328 = vmatprep.subr.mxu0 0.0
    %6329 = vmatpush2.msra.mxu0 0.0
    %6330 = vmatprep.subr.mxu0 0.0
    %6331 = vmatpush2.msra.mxu0 0.0
    %6332 = vmatprep.subr.mxu0 0.0
    %6333 = vmatpush2.msra.mxu0 0.0
    %6334 = vmatprep.subr.mxu0 0.0
    %6335 = vmatpush2.msra.mxu0 0.0
    %6336 = vmatprep.subr.mxu0 0.0
    %6337 = vmatpush2.msra.mxu0 0.0
    %6338 = vmatprep.subr.mxu0 0.0
    %6339 = vmatpush2.msra.mxu0 0.0
    %6340 = vmatprep.subr.mxu0 0.0
    %6341 = vmatpush2.msra.mxu0 0.0
    %6342 = vmatprep.subr.mxu0 0.0
    %6343 = vmatpush2.msra.mxu0 0.0
    %6344 = vmatprep.subr.mxu0 0.0
    %6345 = vmatpush2.msra.mxu0 0.0
    %6346 = vmatprep.subr.mxu0 0.0
    %6347 = vmatpush2.msra.mxu0 0.0
    %6348 = vmatprep.subr.mxu0 0.0
    %6349 = vmatpush2.msra.mxu0 0.0
    %6350 = vmatprep.subr.mxu0 0.0
    %6351 = vmatpush2.msra.mxu0 0.0
    %6352 = vmatprep.subr.mxu0 0.0
    %6353 = vmatpush2.msra.mxu0 0.0
    %6354 = vmatprep.subr.mxu0 0.0
    %6355 = vmatpush2.msra.mxu0 0.0
    %6356 = vmatprep.subr.mxu0 0.0
    %6357 = vmatpush2.msra.mxu0 0.0
    %6358 = vmatprep.mubr.f32.mxu0 0.0
    %6359 = vmatmul.mubr.f32.gmra.mxu0 %v6292
    %v6360 = vpop.f32.mrf.mxu0
    %v6361 = vadd.f32 0.0, %v6360
    %v6362 = vpop.f32.mrf.mxu0
    %6363 = vdwg.mxu0
    %6364 = vrot.lane.b32.xlu0 %v5111, 32
    %v6365 = vpop.permute.xlu0 %6364
    %v6368 = vsel %vm2729, %v6287, 0
    %6370 = vmatprep.subr.mxu0 0.0
    %6371 = vmatpush1.msra.mxu0 0.0
    %6372 = vmatprep.subr.mxu0 0.0
    %6373 = vmatpush1.msra.mxu0 0.0
    %6374 = vmatprep.subr.mxu0 0.0
    %6375 = vmatpush1.msra.mxu0 0.0
    %6376 = vmatprep.subr.mxu0 0.0
    %6377 = vmatpush1.msra.mxu0 0.0
    %6378 = vmatprep.subr.mxu0 0.0
    %6379 = vmatpush1.msra.mxu0 0.0
    %6380 = vmatprep.subr.mxu0 0.0
    %6381 = vmatpush1.msra.mxu0 0.0
    %6382 = vmatprep.subr.mxu0 0.0
    %6383 = vmatpush1.msra.mxu0 0.0
    %6384 = vmatprep.subr.mxu0 0.0
    %6385 = vmatpush1.msra.mxu0 0.0
    %6386 = vmatprep.subr.mxu0 0.0
    %6387 = vmatpush1.msra.mxu0 0.0
    %6388 = vmatprep.subr.mxu0 0.0
    %6389 = vmatpush1.msra.mxu0 0.0
    %6390 = vmatprep.subr.mxu0 0.0
    %6391 = vmatpush1.msra.mxu0 0.0
    %6392 = vmatprep.subr.mxu0 0.0
    %6393 = vmatpush1.msra.mxu0 0.0
    %6394 = vmatprep.subr.mxu0 0.0
    %6395 = vmatpush1.msra.mxu0 0.0
    %6396 = vmatprep.subr.mxu0 0.0
    %6397 = vmatpush1.msra.mxu0 0.0
    %6398 = vmatprep.subr.mxu0 0.0
    %6399 = vmatpush1.msra.mxu0 0.0
    %6400 = vmatprep.subr.mxu0 0.0
    %6401 = vmatpush1.msra.mxu0 %v6365
    %6402 = vmatprep.subr.mxu0 0.0
    %6403 = vmatpush2.msra.mxu0 0.0
    %6404 = vmatprep.subr.mxu0 0.0
    %6405 = vmatpush2.msra.mxu0 0.0
    %6406 = vmatprep.subr.mxu0 0.0
    %6407 = vmatpush2.msra.mxu0 0.0
    %6408 = vmatprep.subr.mxu0 0.0
    %6409 = vmatpush2.msra.mxu0 0.0
    %6410 = vmatprep.subr.mxu0 0.0
    %6411 = vmatpush2.msra.mxu0 0.0
    %6412 = vmatprep.subr.mxu0 0.0
    %6413 = vmatpush2.msra.mxu0 0.0
    %6414 = vmatprep.subr.mxu0 0.0
    %6415 = vmatpush2.msra.mxu0 0.0
    %6416 = vmatprep.subr.mxu0 0.0
    %6417 = vmatpush2.msra.mxu0 0.0
    %6418 = vmatprep.subr.mxu0 0.0
    %6419 = vmatpush2.msra.mxu0 0.0
    %6420 = vmatprep.subr.mxu0 0.0
    %6421 = vmatpush2.msra.mxu0 0.0
    %6422 = vmatprep.subr.mxu0 0.0
    %6423 = vmatpush2.msra.mxu0 0.0
    %6424 = vmatprep.subr.mxu0 0.0
    %6425 = vmatpush2.msra.mxu0 0.0
    %6426 = vmatprep.subr.mxu0 0.0
    %6427 = vmatpush2.msra.mxu0 0.0
    %6428 = vmatprep.subr.mxu0 0.0
    %6429 = vmatpush2.msra.mxu0 0.0
    %6430 = vmatprep.subr.mxu0 0.0
    %6431 = vmatpush2.msra.mxu0 0.0
    %6432 = vmatprep.subr.mxu0 0.0
    %6433 = vmatpush2.msra.mxu0 0.0
    %6434 = vmatprep.mubr.f32.mxu0 0.0
    %6435 = vmatmul.mubr.f32.gmra.mxu0 %v6368
    %v6436 = vpop.f32.mrf.mxu0
    %v6437 = vadd.f32 0.0, %v6436
    %v6438 = vpop.f32.mrf.mxu0
    %6439 = vdwg.mxu0
    %6442 = vrot.lane.b32.xlu0 %v5692, 32
    %v6443 = vpop.permute.xlu0 %6442
    %6444 = vrot.lane.b32.xlu0 %v5769, 32
    %v6445 = vpop.permute.xlu0 %6444
    %6450 = vrot.lane.b32.xlu0 %v6027, 64
    %v6451 = vpop.permute.xlu0 %6450
    %6452 = vrot.lane.b32.xlu0 %v6103, 64
    %v6453 = vpop.permute.xlu0 %6452
    %6458 = vrot.lane.b32.xlu0 %v6361, 96
    %v6459 = vpop.permute.xlu0 %6458
    %6460 = vrot.lane.b32.xlu0 %v6437, 96
    %v6461 = vpop.permute.xlu0 %6460
    %v6464 = vsel %vm2572, %v5360, %v6443
    %v6465 = vsel %vm2572, %v5433, %v6445
    %v6466 = vsel %vm3928, %v6464, %v6451
    %v6467 = vsel %vm3928, %v6465, %v6453
    %v6468 = vsel %vm3931, %v6466, %v6459
    %v6469 = vsel %vm3931, %v6467, %v6461
    %v6470 = vpack.c.bf16 %v6469, %v6468
    %s6471 = scalar_lea.vmem %s4, 64
    %v6472 = vld [vmem:[%s6471] sm:$0xf]
    %v6473 = vld [vmem:[%s6471 + $0x4] sm:$0xf]
    %v6474 = vld [vmem:[%s6471 + $0x8] sm:$0xf]
    %v6475 = vld [vmem:[%s6471 + $0xc] sm:$0xf]
    %v6476 = vld [vmem:[%s6471 + $0x10] sm:$0xf]
    %v6477 = vld [vmem:[%s6471 + $0x14] sm:$0xf]
    %v6478 = vld [vmem:[%s6471 + $0x18] sm:$0xf]
    %v6479 = vld [vmem:[%s6471 + $0x1c] sm:$0xf]
    %v6480 = vld [vmem:[%s6471 + $0x20] sm:$0xf]
    %v6481 = vld [vmem:[%s6471 + $0x24] sm:$0xf]
    %v6482 = vld [vmem:[%s6471 + $0x28] sm:$0xf]
    %v6483 = vld [vmem:[%s6471 + $0x2c] sm:$0xf]
    %v6484 = vld [vmem:[%s6471 + $0x30] sm:$0xf]
    %v6485 = vld [vmem:[%s6471 + $0x34] sm:$0xf]
    %v6486 = vld [vmem:[%s6471 + $0x38] sm:$0xf]
    %v6487 = vld [vmem:[%s6471 + $0x3c] sm:$0xf]
    %v6504 = vunpack.c.l.b16 %v6472
    %v6505 = vunpack.c.l.b16 %v6473
    %v6506 = vunpack.c.l.b16 %v6474
    %v6507 = vunpack.c.l.b16 %v6475
    %v6508 = vunpack.c.l.b16 %v6476
    %v6509 = vunpack.c.l.b16 %v6477
    %v6510 = vunpack.c.l.b16 %v6478
    %v6511 = vunpack.c.l.b16 %v6479
    %v6512 = vunpack.c.l.b16 %v6480
    %v6513 = vunpack.c.l.b16 %v6481
    %v6514 = vunpack.c.l.b16 %v6482
    %v6515 = vunpack.c.l.b16 %v6483
    %v6516 = vunpack.c.l.b16 %v6484
    %v6517 = vunpack.c.l.b16 %v6485
    %v6518 = vunpack.c.l.b16 %v6486
    %v6519 = vunpack.c.l.b16 %v6487
    %v6520 = vpack.c.b16 %v6505, %v6504
    %v6521 = vpack.c.b16 %v6507, %v6506
    %v6522 = vpack.c.b16 %v6509, %v6508
    %v6523 = vpack.c.b16 %v6511, %v6510
    %v6524 = vpack.c.b16 %v6513, %v6512
    %v6525 = vpack.c.b16 %v6515, %v6514
    %v6526 = vpack.c.b16 %v6517, %v6516
    %v6527 = vpack.c.b16 %v6519, %v6518
    %6536 = vmatprep.subr.bf16.mxu0 0
    %6537 = vmatpush1.bf16.msra.mxu0 %v6527
    %6538 = vmatprep.subr.bf16.mxu0 0
    %6539 = vmatpush1.bf16.msra.mxu0 %v6526
    %6540 = vmatprep.subr.bf16.mxu0 0
    %6541 = vmatpush1.bf16.msra.mxu0 %v6525
    %6542 = vmatprep.subr.bf16.mxu0 0
    %6543 = vmatpush1.bf16.msra.mxu0 %v6524
    %6544 = vmatprep.subr.bf16.mxu0 0
    %6545 = vmatpush1.bf16.msra.mxu0 %v6523
    %6546 = vmatprep.subr.bf16.mxu0 0
    %6547 = vmatpush1.bf16.msra.mxu0 %v6522
    %6548 = vmatprep.subr.bf16.mxu0 0
    %6549 = vmatpush1.bf16.msra.mxu0 %v6521
    %6550 = vmatprep.subr.bf16.mxu0 0
    %6551 = vmatpush1.bf16.msra.mxu0 %v6520
    %6552 = vmatprep.subr.bf16.mxu0 0
    %6553 = vmatpush2.bf16.msra.mxu0 0
    %6554 = vmatprep.subr.bf16.mxu0 0
    %6555 = vmatpush2.bf16.msra.mxu0 0
    %6556 = vmatprep.subr.bf16.mxu0 0
    %6557 = vmatpush2.bf16.msra.mxu0 0
    %6558 = vmatprep.subr.bf16.mxu0 0
    %6559 = vmatpush2.bf16.msra.mxu0 0
    %6560 = vmatprep.subr.bf16.mxu0 0
    %6561 = vmatpush2.bf16.msra.mxu0 0
    %6562 = vmatprep.subr.bf16.mxu0 0
    %6563 = vmatpush2.bf16.msra.mxu0 0
    %6564 = vmatprep.subr.bf16.mxu0 0
    %6565 = vmatpush2.bf16.msra.mxu0 0
    %6566 = vmatprep.subr.bf16.mxu0 0
    %6567 = vmatpush2.bf16.msra.mxu0 0
    %6568 = vmatprep.mubr.bf16.mxu0 0
    %6569 = vmatmul.mubr.bf16.gmra.mxu0 %v6470
    %v6570 = vpop.f32.mrf.mxu0
    %v6571 = vadd.f32 0.0, %v6570
    %v6572 = vpop.f32.mrf.mxu0
    %v6573 = vpop.f32.mrf.mxu0
    %v6574 = vadd.f32 0.0, %v6573
    %v6575 = vpop.f32.mrf.mxu0
    %6576 = vdwg.mxu0
    %v6577 = vadd.f32 %v4807, %v6571
    %v6578 = vadd.f32 %v4808, %v6574
    %v6579 = vld [vmem:[#allocation7 + $0x11] sm:$0x1]
    %v6580 = vlaneseq
    %v6581 = vshrl.u32 %v6580, 7
    %v6582 = vsub.s32 0, %v6581
    %v6583 = vrot.slane %v6579, %v6582
    %v6584 = vadd.f32 %v6577, %v6583
    %v6585 = vadd.f32 %v6578, %v6583
    %v6586 = vld [vmem:[#allocation7 + $0x12] sm:$0x1]
    %v6587 = vld [vmem:[#allocation7 + $0x13] sm:$0x1]
    %6588 = vadd.xlane.f32.xlu0 %v6584
    %v6589 = vpop.xlane.xlu0 %6588
    %6590 = vadd.xlane.f32.xlu0 %v6585
    %v6591 = vpop.xlane.xlu0 %6590
    %v6592 = vmul.f32 %v6589, %v2275
    %v6593 = vmul.f32 %v6591, %v2275
    %v6594 = vsub.f32 %v6584, %v6592
    %v6595 = vsub.f32 %v6585, %v6593
    %v6596 = vmul.f32 %v6594, %v6594
    %v6597 = vmul.f32 %v6595, %v6595
    %6598 = vadd.xlane.f32.xlu0 %v6596
    %v6599 = vpop.xlane.xlu0 %6598
    %6600 = vadd.xlane.f32.xlu0 %v6597
    %v6601 = vpop.xlane.xlu0 %6600
    %v6602 = vmul.f32 %v6599, %v2275
    %v6603 = vmul.f32 %v6601, %v2275
    %v6604 = vadd.f32 %v6602, 1e-06
    %v6605 = vadd.f32 %v6603, 1e-06
    %v6606 = vrsqrt.pop %v6604
    %v6607 = vrsqrt.pop %v6605
    %v6608 = vmul.f32 %v6594, %v6606
    %v6609 = vmul.f32 %v6595, %v6607
    %v6610 = vlaneseq
    %v6611 = vshrl.u32 %v6610, 7
    %v6612 = vsub.s32 0, %v6611
    %v6613 = vrot.slane %v6586, %v6612
    %v6614 = vmul.f32 %v6608, %v6613
    %v6615 = vmul.f32 %v6609, %v6613
    %v6616 = vlaneseq
    %v6617 = vshrl.u32 %v6616, 7
    %v6618 = vsub.s32 0, %v6617
    %v6619 = vrot.slane %v6587, %v6618
    %v6620 = vadd.f32 %v6614, %v6619
    %v6621 = vadd.f32 %v6615, %v6619
    %v6622 = vpack.c.bf16 %v6621, %v6620
    %s6623 = scalar_lea.vmem %s5, 256
    %v6624 = vld [vmem:[%s6623] sm:$0xff]
    %v6625 = vld [vmem:[%s6623 + $0x8] sm:$0xff]
    %v6626 = vld [vmem:[%s6623 + $0x10] sm:$0xff]
    %v6627 = vld [vmem:[%s6623 + $0x18] sm:$0xff]
    %v6628 = vld [vmem:[%s6623 + $0x20] sm:$0xff]
    %v6629 = vld [vmem:[%s6623 + $0x28] sm:$0xff]
    %v6630 = vld [vmem:[%s6623 + $0x30] sm:$0xff]
    %v6631 = vld [vmem:[%s6623 + $0x38] sm:$0xff]
    %v6632 = vld [vmem:[%s6623 + $0x40] sm:$0xff]
    %v6633 = vld [vmem:[%s6623 + $0x48] sm:$0xff]
    %v6634 = vld [vmem:[%s6623 + $0x50] sm:$0xff]
    %v6635 = vld [vmem:[%s6623 + $0x58] sm:$0xff]
    %v6636 = vld [vmem:[%s6623 + $0x60] sm:$0xff]
    %v6637 = vld [vmem:[%s6623 + $0x68] sm:$0xff]
    %v6638 = vld [vmem:[%s6623 + $0x70] sm:$0xff]
    %v6639 = vld [vmem:[%s6623 + $0x78] sm:$0xff]
    %v6640 = vld [vmem:[%s6623 + $0x80] sm:$0xff]
    %v6641 = vld [vmem:[%s6623 + $0x88] sm:$0xff]
    %v6642 = vld [vmem:[%s6623 + $0x90] sm:$0xff]
    %v6643 = vld [vmem:[%s6623 + $0x98] sm:$0xff]
    %v6644 = vld [vmem:[%s6623 + $0xa0] sm:$0xff]
    %v6645 = vld [vmem:[%s6623 + $0xa8] sm:$0xff]
    %v6646 = vld [vmem:[%s6623 + $0xb0] sm:$0xff]
    %v6647 = vld [vmem:[%s6623 + $0xb8] sm:$0xff]
    %v6648 = vld [vmem:[%s6623 + $0xc0] sm:$0xff]
    %v6649 = vld [vmem:[%s6623 + $0xc8] sm:$0xff]
    %v6650 = vld [vmem:[%s6623 + $0xd0] sm:$0xff]
    %v6651 = vld [vmem:[%s6623 + $0xd8] sm:$0xff]
    %v6652 = vld [vmem:[%s6623 + $0xe0] sm:$0xff]
    %v6653 = vld [vmem:[%s6623 + $0xe8] sm:$0xff]
    %v6654 = vld [vmem:[%s6623 + $0xf0] sm:$0xff]
    %v6655 = vld [vmem:[%s6623 + $0xf8] sm:$0xff]
    %s6656 = scalar_lea.vmem %s6, 4
    %v6657 = vld [vmem:[%s6656] sm:$0xf]
    %v6659 = vlaneseq
    %v6660 = vshrl.u32 %v6659, 7
    %v6661 = vsub.s32 0, %v6660
    %v6662 = vrot.slane %v6657, %v6661
    %v6663 = vlaneseq
    %v6664 = vshrl.u32 %v6663, 7
    %v6665 = vsub.s32 1, %v6664
    %v6666 = vrot.slane %v6657, %v6665
    %v6667 = vlaneseq
    %v6668 = vshrl.u32 %v6667, 7
    %v6669 = vsub.s32 2, %v6668
    %v6670 = vrot.slane %v6657, %v6669
    %v6671 = vlaneseq
    %v6672 = vshrl.u32 %v6671, 7
    %v6673 = vsub.s32 3, %v6672
    %v6674 = vrot.slane %v6657, %v6673
    %v6711 = vunpack.c.l.b16 %v6624
    %v6712 = vunpack.c.h.b16 %v6624
    %v6713 = vunpack.c.l.b16 %v6625
    %v6714 = vunpack.c.h.b16 %v6625
    %v6715 = vunpack.c.l.b16 %v6626
    %v6716 = vunpack.c.h.b16 %v6626
    %v6717 = vunpack.c.l.b16 %v6627
    %v6718 = vunpack.c.h.b16 %v6627
    %v6719 = vunpack.c.l.b16 %v6628
    %v6720 = vunpack.c.h.b16 %v6628
    %v6721 = vunpack.c.l.b16 %v6629
    %v6722 = vunpack.c.h.b16 %v6629
    %v6723 = vunpack.c.l.b16 %v6630
    %v6724 = vunpack.c.h.b16 %v6630
    %v6725 = vunpack.c.l.b16 %v6631
    %v6726 = vunpack.c.h.b16 %v6631
    %v6727 = vunpack.c.l.b16 %v6632
    %v6728 = vunpack.c.h.b16 %v6632
    %v6729 = vunpack.c.l.b16 %v6633
    %v6730 = vunpack.c.h.b16 %v6633
    %v6731 = vunpack.c.l.b16 %v6634
    %v6732 = vunpack.c.h.b16 %v6634
    %v6733 = vunpack.c.l.b16 %v6635
    %v6734 = vunpack.c.h.b16 %v6635
    %v6735 = vunpack.c.l.b16 %v6636
    %v6736 = vunpack.c.h.b16 %v6636
    %v6737 = vunpack.c.l.b16 %v6637
    %v6738 = vunpack.c.h.b16 %v6637
    %v6739 = vunpack.c.l.b16 %v6638
    %v6740 = vunpack.c.h.b16 %v6638
    %v6741 = vunpack.c.l.b16 %v6639
    %v6742 = vunpack.c.h.b16 %v6639
    %v6743 = vunpack.c.l.b16 %v6640
    %v6744 = vunpack.c.h.b16 %v6640
    %v6745 = vunpack.c.l.b16 %v6641
    %v6746 = vunpack.c.h.b16 %v6641
    %v6747 = vunpack.c.l.b16 %v6642
    %v6748 = vunpack.c.h.b16 %v6642
    %v6749 = vunpack.c.l.b16 %v6643
    %v6750 = vunpack.c.h.b16 %v6643
    %v6751 = vunpack.c.l.b16 %v6644
    %v6752 = vunpack.c.h.b16 %v6644
    %v6753 = vunpack.c.l.b16 %v6645
    %v6754 = vunpack.c.h.b16 %v6645
    %v6755 = vunpack.c.l.b16 %v6646
    %v6756 = vunpack.c.h.b16 %v6646
    %v6757 = vunpack.c.l.b16 %v6647
    %v6758 = vunpack.c.h.b16 %v6647
    %v6759 = vunpack.c.l.b16 %v6648
    %v6760 = vunpack.c.h.b16 %v6648
    %v6761 = vunpack.c.l.b16 %v6649
    %v6762 = vunpack.c.h.b16 %v6649
    %v6763 = vunpack.c.l.b16 %v6650
    %v6764 = vunpack.c.h.b16 %v6650
    %v6765 = vunpack.c.l.b16 %v6651
    %v6766 = vunpack.c.h.b16 %v6651
    %v6767 = vunpack.c.l.b16 %v6652
    %v6768 = vunpack.c.h.b16 %v6652
    %v6769 = vunpack.c.l.b16 %v6653
    %v6770 = vunpack.c.h.b16 %v6653
    %v6771 = vunpack.c.l.b16 %v6654
    %v6772 = vunpack.c.h.b16 %v6654
    %v6773 = vunpack.c.l.b16 %v6655
    %v6774 = vunpack.c.h.b16 %v6655
    %v6775 = vpack.c.b16 %v6715, %v6711
    %v6776 = vpack.c.b16 %v6716, %v6712
    %v6777 = vpack.c.b16 %v6717, %v6713
    %v6778 = vpack.c.b16 %v6718, %v6714
    %v6779 = vpack.c.b16 %v6723, %v6719
    %v6780 = vpack.c.b16 %v6724, %v6720
    %v6781 = vpack.c.b16 %v6725, %v6721
    %v6782 = vpack.c.b16 %v6726, %v6722
    %v6783 = vpack.c.b16 %v6731, %v6727
    %v6784 = vpack.c.b16 %v6732, %v6728
    %v6785 = vpack.c.b16 %v6733, %v6729
    %v6786 = vpack.c.b16 %v6734, %v6730
    %v6787 = vpack.c.b16 %v6739, %v6735
    %v6788 = vpack.c.b16 %v6740, %v6736
    %v6789 = vpack.c.b16 %v6741, %v6737
    %v6790 = vpack.c.b16 %v6742, %v6738
    %v6791 = vpack.c.b16 %v6747, %v6743
    %v6792 = vpack.c.b16 %v6748, %v6744
    %v6793 = vpack.c.b16 %v6749, %v6745
    %v6794 = vpack.c.b16 %v6750, %v6746
    %v6795 = vpack.c.b16 %v6755, %v6751
    %v6796 = vpack.c.b16 %v6756, %v6752
    %v6797 = vpack.c.b16 %v6757, %v6753
    %v6798 = vpack.c.b16 %v6758, %v6754
    %v6799 = vpack.c.b16 %v6763, %v6759
    %v6800 = vpack.c.b16 %v6764, %v6760
    %v6801 = vpack.c.b16 %v6765, %v6761
    %v6802 = vpack.c.b16 %v6766, %v6762
    %v6803 = vpack.c.b16 %v6771, %v6767
    %v6804 = vpack.c.b16 %v6772, %v6768
    %v6805 = vpack.c.b16 %v6773, %v6769
    %v6806 = vpack.c.b16 %v6774, %v6770
    %6839 = vmatprep.subr.bf16.mxu0 %v6804
    %6840 = vmatpush1.bf16.msra.mxu0 %v6803
    %6841 = vmatprep.subr.bf16.mxu0 %v6800
    %6842 = vmatpush1.bf16.msra.mxu0 %v6799
    %6843 = vmatprep.subr.bf16.mxu0 %v6796
    %6844 = vmatpush1.bf16.msra.mxu0 %v6795
    %6845 = vmatprep.subr.bf16.mxu0 %v6792
    %6846 = vmatpush1.bf16.msra.mxu0 %v6791
    %6847 = vmatprep.subr.bf16.mxu0 %v6788
    %6848 = vmatpush1.bf16.msra.mxu0 %v6787
    %6849 = vmatprep.subr.bf16.mxu0 %v6784
    %6850 = vmatpush1.bf16.msra.mxu0 %v6783
    %6851 = vmatprep.subr.bf16.mxu0 %v6780
    %6852 = vmatpush1.bf16.msra.mxu0 %v6779
    %6853 = vmatprep.subr.bf16.mxu0 %v6776
    %6854 = vmatpush1.bf16.msra.mxu0 %v6775
    %6855 = vmatprep.subr.bf16.mxu0 0
    %6856 = vmatpush2.bf16.msra.mxu0 0
    %6857 = vmatprep.subr.bf16.mxu0 0
    %6858 = vmatpush2.bf16.msra.mxu0 0
    %6859 = vmatprep.subr.bf16.mxu0 0
    %6860 = vmatpush2.bf16.msra.mxu0 0
    %6861 = vmatprep.subr.bf16.mxu0 0
    %6862 = vmatpush2.bf16.msra.mxu0 0
    %6863 = vmatprep.subr.bf16.mxu0 0
    %6864 = vmatpush2.bf16.msra.mxu0 0
    %6865 = vmatprep.subr.bf16.mxu0 0
    %6866 = vmatpush2.bf16.msra.mxu0 0
    %6867 = vmatprep.subr.bf16.mxu0 0
    %6868 = vmatpush2.bf16.msra.mxu0 0
    %6869 = vmatprep.subr.bf16.mxu0 0
    %6870 = vmatpush2.bf16.msra.mxu0 0
    %6871 = vmatprep.mubr.bf16.mxu0 0
    %6872 = vmatmul.mubr.bf16.gmra.mxu0 %v6622
    %v6873 = vpop.f32.mrf.mxu0
    %v6874 = vadd.f32 %v6662, %v6873
    %v6875 = vpop.f32.mrf.mxu0
    %v6876 = vadd.f32 %v6666, %v6875
    %v6877 = vpop.f32.mrf.mxu0
    %v6878 = vadd.f32 %v6662, %v6877
    %v6879 = vpop.f32.mrf.mxu0
    %v6880 = vadd.f32 %v6666, %v6879
    %6881 = vdwg.mxu0
    %6882 = vmatprep.subr.bf16.mxu0 %v6806
    %6883 = vmatpush1.bf16.msra.mxu0 %v6805
    %6884 = vmatprep.subr.bf16.mxu0 %v6802
    %6885 = vmatpush1.bf16.msra.mxu0 %v6801
    %6886 = vmatprep.subr.bf16.mxu0 %v6798
    %6887 = vmatpush1.bf16.msra.mxu0 %v6797
    %6888 = vmatprep.subr.bf16.mxu0 %v6794
    %6889 = vmatpush1.bf16.msra.mxu0 %v6793
    %6890 = vmatprep.subr.bf16.mxu0 %v6790
    %6891 = vmatpush1.bf16.msra.mxu0 %v6789
    %6892 = vmatprep.subr.bf16.mxu0 %v6786
    %6893 = vmatpush1.bf16.msra.mxu0 %v6785
    %6894 = vmatprep.subr.bf16.mxu0 %v6782
    %6895 = vmatpush1.bf16.msra.mxu0 %v6781
    %6896 = vmatprep.subr.bf16.mxu0 %v6778
    %6897 = vmatpush1.bf16.msra.mxu0 %v6777
    %6898 = vmatprep.subr.bf16.mxu0 0
    %6899 = vmatpush2.bf16.msra.mxu0 0
    %6900 = vmatprep.subr.bf16.mxu0 0
    %6901 = vmatpush2.bf16.msra.mxu0 0
    %6902 = vmatprep.subr.bf16.mxu0 0
    %6903 = vmatpush2.bf16.msra.mxu0 0
    %6904 = vmatprep.subr.bf16.mxu0 0
    %6905 = vmatpush2.bf16.msra.mxu0 0
    %6906 = vmatprep.subr.bf16.mxu0 0
    %6907 = vmatpush2.bf16.msra.mxu0 0
    %6908 = vmatprep.subr.bf16.mxu0 0
    %6909 = vmatpush2.bf16.msra.mxu0 0
    %6910 = vmatprep.subr.bf16.mxu0 0
    %6911 = vmatpush2.bf16.msra.mxu0 0
    %6912 = vmatprep.subr.bf16.mxu0 0
    %6913 = vmatpush2.bf16.msra.mxu0 0
    %6914 = vmatprep.mubr.bf16.mxu0 0
    %6915 = vmatmul.mubr.bf16.gmra.mxu0 %v6622
    %v6916 = vpop.f32.mrf.mxu0
    %v6917 = vadd.f32 %v6670, %v6916
    %v6918 = vpop.f32.mrf.mxu0
    %v6919 = vadd.f32 %v6674, %v6918
    %v6920 = vpop.f32.mrf.mxu0
    %v6921 = vadd.f32 %v6670, %v6920
    %v6922 = vpop.f32.mrf.mxu0
    %v6923 = vadd.f32 %v6674, %v6922
    %6924 = vdwg.mxu0
    %v6925 = vmul.f32 %v6874, %v6874
    %v6926 = vmul.f32 %v6876, %v6876
    %v6927 = vmul.f32 %v6917, %v6917
    %v6928 = vmul.f32 %v6919, %v6919
    %v6929 = vmul.f32 %v6878, %v6878
    %v6930 = vmul.f32 %v6880, %v6880
    %v6931 = vmul.f32 %v6921, %v6921
    %v6932 = vmul.f32 %v6923, %v6923
    %v6933 = vmul.f32 %v6874, %v6925
    %v6934 = vmul.f32 %v6876, %v6926
    %v6935 = vmul.f32 %v6917, %v6927
    %v6936 = vmul.f32 %v6919, %v6928
    %v6937 = vmul.f32 %v6878, %v6929
    %v6938 = vmul.f32 %v6880, %v6930
    %v6939 = vmul.f32 %v6921, %v6931
    %v6940 = vmul.f32 %v6923, %v6932
    %v6941 = vmul.f32 %v6933, 0.044715
    %v6942 = vmul.f32 %v6934, 0.044715
    %v6943 = vmul.f32 %v6935, 0.044715
    %v6944 = vmul.f32 %v6936, 0.044715
    %v6945 = vmul.f32 %v6937, 0.044715
    %v6946 = vmul.f32 %v6938, 0.044715
    %v6947 = vmul.f32 %v6939, 0.044715
    %v6948 = vmul.f32 %v6940, 0.044715
    %v6949 = vadd.f32 %v6874, %v6941
    %v6950 = vadd.f32 %v6876, %v6942
    %v6951 = vadd.f32 %v6917, %v6943
    %v6952 = vadd.f32 %v6919, %v6944
    %v6953 = vadd.f32 %v6878, %v6945
    %v6954 = vadd.f32 %v6880, %v6946
    %v6955 = vadd.f32 %v6921, %v6947
    %v6956 = vadd.f32 %v6923, %v6948
    %v6957 = vmul.f32 %v6949, 0.7978846
    %v6958 = vmul.f32 %v6950, 0.7978846
    %v6959 = vmul.f32 %v6951, 0.7978846
    %v6960 = vmul.f32 %v6952, 0.7978846
    %v6961 = vmul.f32 %v6953, 0.7978846
    %v6962 = vmul.f32 %v6954, 0.7978846
    %v6963 = vmul.f32 %v6955, 0.7978846
    %v6964 = vmul.f32 %v6956, 0.7978846
    %v6965 = vtanh.pop %v6957
    %v6966 = vtanh.pop %v6958
    %v6967 = vtanh.pop %v6959
    %v6968 = vtanh.pop %v6960
    %v6969 = vtanh.pop %v6961
    %v6970 = vtanh.pop %v6962
    %v6971 = vtanh.pop %v6963
    %v6972 = vtanh.pop %v6964
    %v6973 = vadd.f32 %v6965, 1.0
    %v6974 = vadd.f32 %v6966, 1.0
    %v6975 = vadd.f32 %v6967, 1.0
    %v6976 = vadd.f32 %v6968, 1.0
    %v6977 = vadd.f32 %v6969, 1.0
    %v6978 = vadd.f32 %v6970, 1.0
    %v6979 = vadd.f32 %v6971, 1.0
    %v6980 = vadd.f32 %v6972, 1.0
    %v6981 = vmul.f32 %v6973, 0.5
    %v6982 = vmul.f32 %v6974, 0.5
    %v6983 = vmul.f32 %v6975, 0.5
    %v6984 = vmul.f32 %v6976, 0.5
    %v6985 = vmul.f32 %v6977, 0.5
    %v6986 = vmul.f32 %v6978, 0.5
    %v6987 = vmul.f32 %v6979, 0.5
    %v6988 = vmul.f32 %v6980, 0.5
    %v6989 = vmul.f32 %v6874, %v6981
    %v6990 = vmul.f32 %v6876, %v6982
    %v6991 = vmul.f32 %v6917, %v6983
    %v6992 = vmul.f32 %v6919, %v6984
    %v6993 = vmul.f32 %v6878, %v6985
    %v6994 = vmul.f32 %v6880, %v6986
    %v6995 = vmul.f32 %v6921, %v6987
    %v6996 = vmul.f32 %v6923, %v6988
    %v6997 = vpack.c.bf16 %v6993, %v6989
    %v6998 = vpack.c.bf16 %v6994, %v6990
    %v6999 = vpack.c.bf16 %v6995, %v6991
    %v7000 = vpack.c.bf16 %v6996, %v6992
    %s7001 = scalar_lea.vmem %s7, 256
    %v7002 = vld [vmem:[%s7001] sm:$0xf]
    %v7003 = vld [vmem:[%s7001 + $0x4] sm:$0xf]
    %v7004 = vld [vmem:[%s7001 + $0x8] sm:$0xf]
    %v7005 = vld [vmem:[%s7001 + $0xc] sm:$0xf]
    %v7006 = vld [vmem:[%s7001 + $0x10] sm:$0xf]
    %v7007 = vld [vmem:[%s7001 + $0x14] sm:$0xf]
    %v7008 = vld [vmem:[%s7001 + $0x18] sm:$0xf]
    %v7009 = vld [vmem:[%s7001 + $0x1c] sm:$0xf]
    %v7010 = vld [vmem:[%s7001 + $0x20] sm:$0xf]
    %v7011 = vld [vmem:[%s7001 + $0x24] sm:$0xf]
    %v7012 = vld [vmem:[%s7001 + $0x28] sm:$0xf]
    %v7013 = vld [vmem:[%s7001 + $0x2c] sm:$0xf]
    %v7014 = vld [vmem:[%s7001 + $0x30] sm:$0xf]
    %v7015 = vld [vmem:[%s7001 + $0x34] sm:$0xf]
    %v7016 = vld [vmem:[%s7001 + $0x38] sm:$0xf]
    %v7017 = vld [vmem:[%s7001 + $0x3c] sm:$0xf]
    %v7018 = vld [vmem:[%s7001 + $0x40] sm:$0xf]
    %v7019 = vld [vmem:[%s7001 + $0x44] sm:$0xf]
    %v7020 = vld [vmem:[%s7001 + $0x48] sm:$0xf]
    %v7021 = vld [vmem:[%s7001 + $0x4c] sm:$0xf]
    %v7022 = vld [vmem:[%s7001 + $0x50] sm:$0xf]
    %v7023 = vld [vmem:[%s7001 + $0x54] sm:$0xf]
    %v7024 = vld [vmem:[%s7001 + $0x58] sm:$0xf]
    %v7025 = vld [vmem:[%s7001 + $0x5c] sm:$0xf]
    %v7026 = vld [vmem:[%s7001 + $0x60] sm:$0xf]
    %v7027 = vld [vmem:[%s7001 + $0x64] sm:$0xf]
    %v7028 = vld [vmem:[%s7001 + $0x68] sm:$0xf]
    %v7029 = vld [vmem:[%s7001 + $0x6c] sm:$0xf]
    %v7030 = vld [vmem:[%s7001 + $0x70] sm:$0xf]
    %v7031 = vld [vmem:[%s7001 + $0x74] sm:$0xf]
    %v7032 = vld [vmem:[%s7001 + $0x78] sm:$0xf]
    %v7033 = vld [vmem:[%s7001 + $0x7c] sm:$0xf]
    %v7034 = vld [vmem:[%s7001 + $0x80] sm:$0xf]
    %v7035 = vld [vmem:[%s7001 + $0x84] sm:$0xf]
    %v7036 = vld [vmem:[%s7001 + $0x88] sm:$0xf]
    %v7037 = vld [vmem:[%s7001 + $0x8c] sm:$0xf]
    %v7038 = vld [vmem:[%s7001 + $0x90] sm:$0xf]
    %v7039 = vld [vmem:[%s7001 + $0x94] sm:$0xf]
    %v7040 = vld [vmem:[%s7001 + $0x98] sm:$0xf]
    %v7041 = vld [vmem:[%s7001 + $0x9c] sm:$0xf]
    %v7042 = vld [vmem:[%s7001 + $0xa0] sm:$0xf]
    %v7043 = vld [vmem:[%s7001 + $0xa4] sm:$0xf]
    %v7044 = vld [vmem:[%s7001 + $0xa8] sm:$0xf]
    %v7045 = vld [vmem:[%s7001 + $0xac] sm:$0xf]
    %v7046 = vld [vmem:[%s7001 + $0xb0] sm:$0xf]
    %v7047 = vld [vmem:[%s7001 + $0xb4] sm:$0xf]
    %v7048 = vld [vmem:[%s7001 + $0xb8] sm:$0xf]
    %v7049 = vld [vmem:[%s7001 + $0xbc] sm:$0xf]
    %v7050 = vld [vmem:[%s7001 + $0xc0] sm:$0xf]
    %v7051 = vld [vmem:[%s7001 + $0xc4] sm:$0xf]
    %v7052 = vld [vmem:[%s7001 + $0xc8] sm:$0xf]
    %v7053 = vld [vmem:[%s7001 + $0xcc] sm:$0xf]
    %v7054 = vld [vmem:[%s7001 + $0xd0] sm:$0xf]
    %v7055 = vld [vmem:[%s7001 + $0xd4] sm:$0xf]
    %v7056 = vld [vmem:[%s7001 + $0xd8] sm:$0xf]
    %v7057 = vld [vmem:[%s7001 + $0xdc] sm:$0xf]
    %v7058 = vld [vmem:[%s7001 + $0xe0] sm:$0xf]
    %v7059 = vld [vmem:[%s7001 + $0xe4] sm:$0xf]
    %v7060 = vld [vmem:[%s7001 + $0xe8] sm:$0xf]
    %v7061 = vld [vmem:[%s7001 + $0xec] sm:$0xf]
    %v7062 = vld [vmem:[%s7001 + $0xf0] sm:$0xf]
    %v7063 = vld [vmem:[%s7001 + $0xf4] sm:$0xf]
    %v7064 = vld [vmem:[%s7001 + $0xf8] sm:$0xf]
    %v7065 = vld [vmem:[%s7001 + $0xfc] sm:$0xf]
    %v7130 = vunpack.c.l.b16 %v7002
    %v7131 = vunpack.c.l.b16 %v7003
    %v7132 = vunpack.c.l.b16 %v7004
    %v7133 = vunpack.c.l.b16 %v7005
    %v7134 = vunpack.c.l.b16 %v7006
    %v7135 = vunpack.c.l.b16 %v7007
    %v7136 = vunpack.c.l.b16 %v7008
    %v7137 = vunpack.c.l.b16 %v7009
    %v7138 = vunpack.c.l.b16 %v7010
    %v7139 = vunpack.c.l.b16 %v7011
    %v7140 = vunpack.c.l.b16 %v7012
    %v7141 = vunpack.c.l.b16 %v7013
    %v7142 = vunpack.c.l.b16 %v7014
    %v7143 = vunpack.c.l.b16 %v7015
    %v7144 = vunpack.c.l.b16 %v7016
    %v7145 = vunpack.c.l.b16 %v7017
    %v7146 = vunpack.c.l.b16 %v7018
    %v7147 = vunpack.c.l.b16 %v7019
    %v7148 = vunpack.c.l.b16 %v7020
    %v7149 = vunpack.c.l.b16 %v7021
    %v7150 = vunpack.c.l.b16 %v7022
    %v7151 = vunpack.c.l.b16 %v7023
    %v7152 = vunpack.c.l.b16 %v7024
    %v7153 = vunpack.c.l.b16 %v7025
    %v7154 = vunpack.c.l.b16 %v7026
    %v7155 = vunpack.c.l.b16 %v7027
    %v7156 = vunpack.c.l.b16 %v7028
    %v7157 = vunpack.c.l.b16 %v7029
    %v7158 = vunpack.c.l.b16 %v7030
    %v7159 = vunpack.c.l.b16 %v7031
    %v7160 = vunpack.c.l.b16 %v7032
    %v7161 = vunpack.c.l.b16 %v7033
    %v7162 = vunpack.c.l.b16 %v7034
    %v7163 = vunpack.c.l.b16 %v7035
    %v7164 = vunpack.c.l.b16 %v7036
    %v7165 = vunpack.c.l.b16 %v7037
    %v7166 = vunpack.c.l.b16 %v7038
    %v7167 = vunpack.c.l.b16 %v7039
    %v7168 = vunpack.c.l.b16 %v7040
    %v7169 = vunpack.c.l.b16 %v7041
    %v7170 = vunpack.c.l.b16 %v7042
    %v7171 = vunpack.c.l.b16 %v7043
    %v7172 = vunpack.c.l.b16 %v7044
    %v7173 = vunpack.c.l.b16 %v7045
    %v7174 = vunpack.c.l.b16 %v7046
    %v7175 = vunpack.c.l.b16 %v7047
    %v7176 = vunpack.c.l.b16 %v7048
    %v7177 = vunpack.c.l.b16 %v7049
    %v7178 = vunpack.c.l.b16 %v7050
    %v7179 = vunpack.c.l.b16 %v7051
    %v7180 = vunpack.c.l.b16 %v7052
    %v7181 = vunpack.c.l.b16 %v7053
    %v7182 = vunpack.c.l.b16 %v7054
    %v7183 = vunpack.c.l.b16 %v7055
    %v7184 = vunpack.c.l.b16 %v7056
    %v7185 = vunpack.c.l.b16 %v7057
    %v7186 = vunpack.c.l.b16 %v7058
    %v7187 = vunpack.c.l.b16 %v7059
    %v7188 = vunpack.c.l.b16 %v7060
    %v7189 = vunpack.c.l.b16 %v7061
    %v7190 = vunpack.c.l.b16 %v7062
    %v7191 = vunpack.c.l.b16 %v7063
    %v7192 = vunpack.c.l.b16 %v7064
    %v7193 = vunpack.c.l.b16 %v7065
    %v7194 = vpack.c.b16 %v7131, %v7130
    %v7195 = vpack.c.b16 %v7133, %v7132
    %v7196 = vpack.c.b16 %v7135, %v7134
    %v7197 = vpack.c.b16 %v7137, %v7136
    %v7198 = vpack.c.b16 %v7139, %v7138
    %v7199 = vpack.c.b16 %v7141, %v7140
    %v7200 = vpack.c.b16 %v7143, %v7142
    %v7201 = vpack.c.b16 %v7145, %v7144
    %v7202 = vpack.c.b16 %v7147, %v7146
    %v7203 = vpack.c.b16 %v7149, %v7148
    %v7204 = vpack.c.b16 %v7151, %v7150
    %v7205 = vpack.c.b16 %v7153, %v7152
    %v7206 = vpack.c.b16 %v7155, %v7154
    %v7207 = vpack.c.b16 %v7157, %v7156
    %v7208 = vpack.c.b16 %v7159, %v7158
    %v7209 = vpack.c.b16 %v7161, %v7160
    %v7210 = vpack.c.b16 %v7163, %v7162
    %v7211 = vpack.c.b16 %v7165, %v7164
    %v7212 = vpack.c.b16 %v7167, %v7166
    %v7213 = vpack.c.b16 %v7169, %v7168
    %v7214 = vpack.c.b16 %v7171, %v7170
    %v7215 = vpack.c.b16 %v7173, %v7172
    %v7216 = vpack.c.b16 %v7175, %v7174
    %v7217 = vpack.c.b16 %v7177, %v7176
    %v7218 = vpack.c.b16 %v7179, %v7178
    %v7219 = vpack.c.b16 %v7181, %v7180
    %v7220 = vpack.c.b16 %v7183, %v7182
    %v7221 = vpack.c.b16 %v7185, %v7184
    %v7222 = vpack.c.b16 %v7187, %v7186
    %v7223 = vpack.c.b16 %v7189, %v7188
    %v7224 = vpack.c.b16 %v7191, %v7190
    %v7225 = vpack.c.b16 %v7193, %v7192
    %7258 = vmatprep.subr.bf16.mxu0 0
    %7259 = vmatpush1.bf16.msra.mxu0 %v7201
    %7260 = vmatprep.subr.bf16.mxu0 0
    %7261 = vmatpush1.bf16.msra.mxu0 %v7200
    %7262 = vmatprep.subr.bf16.mxu0 0
    %7263 = vmatpush1.bf16.msra.mxu0 %v7199
    %7264 = vmatprep.subr.bf16.mxu0 0
    %7265 = vmatpush1.bf16.msra.mxu0 %v7198
    %7266 = vmatprep.subr.bf16.mxu0 0
    %7267 = vmatpush1.bf16.msra.mxu0 %v7197
    %7268 = vmatprep.subr.bf16.mxu0 0
    %7269 = vmatpush1.bf16.msra.mxu0 %v7196
    %7270 = vmatprep.subr.bf16.mxu0 0
    %7271 = vmatpush1.bf16.msra.mxu0 %v7195
    %7272 = vmatprep.subr.bf16.mxu0 0
    %7273 = vmatpush1.bf16.msra.mxu0 %v7194
    %7274 = vmatprep.subr.bf16.mxu0 0
    %7275 = vmatpush2.bf16.msra.mxu0 %v7209
    %7276 = vmatprep.subr.bf16.mxu0 0
    %7277 = vmatpush2.bf16.msra.mxu0 %v7208
    %7278 = vmatprep.subr.bf16.mxu0 0
    %7279 = vmatpush2.bf16.msra.mxu0 %v7207
    %7280 = vmatprep.subr.bf16.mxu0 0
    %7281 = vmatpush2.bf16.msra.mxu0 %v7206
    %7282 = vmatprep.subr.bf16.mxu0 0
    %7283 = vmatpush2.bf16.msra.mxu0 %v7205
    %7284 = vmatprep.subr.bf16.mxu0 0
    %7285 = vmatpush2.bf16.msra.mxu0 %v7204
    %7286 = vmatprep.subr.bf16.mxu0 0
    %7287 = vmatpush2.bf16.msra.mxu0 %v7203
    %7288 = vmatprep.subr.bf16.mxu0 0
    %7289 = vmatpush2.bf16.msra.mxu0 %v7202
    %7290 = vmatprep.mubr.bf16.mxu0 %v6998
    %7291 = vmatmul.mubr.bf16.gmra.mxu0 %v6997
    %v7292 = vpop.f32.mrf.mxu0
    %v7293 = vadd.f32 0.0, %v7292
    %v7294 = vpop.f32.mrf.mxu0
    %v7295 = vpop.f32.mrf.mxu0
    %v7296 = vadd.f32 0.0, %v7295
    %v7297 = vpop.f32.mrf.mxu0
    %7298 = vdwg.mxu0
    %7299 = vmatprep.subr.bf16.mxu0 0
    %7300 = vmatpush1.bf16.msra.mxu0 %v7217
    %7301 = vmatprep.subr.bf16.mxu0 0
    %7302 = vmatpush1.bf16.msra.mxu0 %v7216
    %7303 = vmatprep.subr.bf16.mxu0 0
    %7304 = vmatpush1.bf16.msra.mxu0 %v7215
    %7305 = vmatprep.subr.bf16.mxu0 0
    %7306 = vmatpush1.bf16.msra.mxu0 %v7214
    %7307 = vmatprep.subr.bf16.mxu0 0
    %7308 = vmatpush1.bf16.msra.mxu0 %v7213
    %7309 = vmatprep.subr.bf16.mxu0 0
    %7310 = vmatpush1.bf16.msra.mxu0 %v7212
    %7311 = vmatprep.subr.bf16.mxu0 0
    %7312 = vmatpush1.bf16.msra.mxu0 %v7211
    %7313 = vmatprep.subr.bf16.mxu0 0
    %7314 = vmatpush1.bf16.msra.mxu0 %v7210
    %7315 = vmatprep.subr.bf16.mxu0 0
    %7316 = vmatpush2.bf16.msra.mxu0 %v7225
    %7317 = vmatprep.subr.bf16.mxu0 0
    %7318 = vmatpush2.bf16.msra.mxu0 %v7224
    %7319 = vmatprep.subr.bf16.mxu0 0
    %7320 = vmatpush2.bf16.msra.mxu0 %v7223
    %7321 = vmatprep.subr.bf16.mxu0 0
    %7322 = vmatpush2.bf16.msra.mxu0 %v7222
    %7323 = vmatprep.subr.bf16.mxu0 0
    %7324 = vmatpush2.bf16.msra.mxu0 %v7221
    %7325 = vmatprep.subr.bf16.mxu0 0
    %7326 = vmatpush2.bf16.msra.mxu0 %v7220
    %7327 = vmatprep.subr.bf16.mxu0 0
    %7328 = vmatpush2.bf16.msra.mxu0 %v7219
    %7329 = vmatprep.subr.bf16.mxu0 0
    %7330 = vmatpush2.bf16.msra.mxu0 %v7218
    %7331 = vmatprep.mubr.bf16.mxu0 %v7000
    %7332 = vmatmul.mubr.bf16.gmra.mxu0 %v6999
    %v7333 = vpop.f32.mrf.mxu0
    %v7334 = vadd.f32 %v7293, %v7333
    %v7335 = vpop.f32.mrf.mxu0
    %v7336 = vpop.f32.mrf.mxu0
    %v7337 = vadd.f32 %v7296, %v7336
    %v7338 = vpop.f32.mrf.mxu0
    %7339 = vdwg.mxu0
    %v7340 = vadd.f32 %v6584, %v7334
    %v7341 = vadd.f32 %v6585, %v7337
    %v7342 = vld [vmem:[#allocation7 + $0x14] sm:$0x1]
    %v7343 = vlaneseq
    %v7344 = vshrl.u32 %v7343, 7
    %v7345 = vsub.s32 0, %v7344
    %v7346 = vrot.slane %v7342, %v7345
    %v7347 = vadd.f32 %v7340, %v7346
    %v7348 = vadd.f32 %v7341, %v7346
    %v7349 = vld [vmem:[#allocation7] sm:$0x1]
    %v7350 = vld [vmem:[#allocation7 + $0x1] sm:$0x1]
    %7351 = vadd.xlane.f32.xlu0 %v7347
    %v7352 = vpop.xlane.xlu0 %7351
    %7353 = vadd.xlane.f32.xlu0 %v7348
    %v7354 = vpop.xlane.xlu0 %7353
    %v7355 = vmul.f32 %v7352, %v2275
    %v7356 = vmul.f32 %v7354, %v2275
    %v7357 = vsub.f32 %v7347, %v7355
    %v7358 = vsub.f32 %v7348, %v7356
    %v7359 = vmul.f32 %v7357, %v7357
    %v7360 = vmul.f32 %v7358, %v7358
    %7361 = vadd.xlane.f32.xlu0 %v7359
    %v7362 = vpop.xlane.xlu0 %7361
    %7363 = vadd.xlane.f32.xlu0 %v7360
    %v7364 = vpop.xlane.xlu0 %7363
    %v7365 = vmul.f32 %v7362, %v2275
    %v7366 = vmul.f32 %v7364, %v2275
    %v7367 = vadd.f32 %v7365, 1e-06
    %v7368 = vadd.f32 %v7366, 1e-06
    %v7369 = vrsqrt.pop %v7367
    %v7370 = vrsqrt.pop %v7368
    %v7371 = vmul.f32 %v7357, %v7369
    %v7372 = vmul.f32 %v7358, %v7370
    %v7373 = vlaneseq
    %v7374 = vshrl.u32 %v7373, 7
    %v7375 = vsub.s32 0, %v7374
    %v7376 = vrot.slane %v7349, %v7375
    %v7377 = vmul.f32 %v7371, %v7376
    %v7378 = vmul.f32 %v7372, %v7376
    %v7379 = vlaneseq
    %v7380 = vshrl.u32 %v7379, 7
    %v7381 = vsub.s32 0, %v7380
    %v7382 = vrot.slane %v7350, %v7381
    %v7383 = vadd.f32 %v7377, %v7382
    %v7384 = vadd.f32 %v7378, %v7382
    %v7385 = vpack.c.bf16 %v7384, %v7383
    %v7386 = vld [vmem:[#allocation6] sm:$0xf]
    %v7387 = vld [vmem:[#allocation6 + $0x4] sm:$0xf]
    %v7388 = vld [vmem:[#allocation6 + $0x8] sm:$0xf]
    %v7389 = vld [vmem:[#allocation6 + $0xc] sm:$0xf]
    %v7390 = vld [vmem:[#allocation6 + $0x10] sm:$0xf]
    %v7391 = vld [vmem:[#allocation6 + $0x14] sm:$0xf]
    %v7392 = vld [vmem:[#allocation6 + $0x18] sm:$0xf]
    %v7393 = vld [vmem:[#allocation6 + $0x1c] sm:$0xf]
    %v7394 = vld [vmem:[#allocation6 + $0x20] sm:$0xf]
    %v7395 = vld [vmem:[#allocation6 + $0x24] sm:$0xf]
    %v7396 = vld [vmem:[#allocation6 + $0x28] sm:$0xf]
    %v7397 = vld [vmem:[#allocation6 + $0x2c] sm:$0xf]
    %v7398 = vld [vmem:[#allocation6 + $0x30] sm:$0xf]
    %v7399 = vld [vmem:[#allocation6 + $0x34] sm:$0xf]
    %v7400 = vld [vmem:[#allocation6 + $0x38] sm:$0xf]
    %v7401 = vld [vmem:[#allocation6 + $0x3c] sm:$0xf]
    %v7402 = vld [vmem:[#allocation7 + $0x2] sm:$0x1]
    %v7403 = vlaneseq
    %v7404 = vshrl.u32 %v7403, 7
    %v7405 = vsub.s32 0, %v7404
    %v7406 = vrot.slane %v7402, %v7405
    %v7423 = vunpack.c.l.b16 %v7386
    %v7424 = vunpack.c.l.b16 %v7387
    %v7425 = vunpack.c.l.b16 %v7388
    %v7426 = vunpack.c.l.b16 %v7389
    %v7427 = vunpack.c.l.b16 %v7390
    %v7428 = vunpack.c.l.b16 %v7391
    %v7429 = vunpack.c.l.b16 %v7392
    %v7430 = vunpack.c.l.b16 %v7393
    %v7431 = vunpack.c.l.b16 %v7394
    %v7432 = vunpack.c.l.b16 %v7395
    %v7433 = vunpack.c.l.b16 %v7396
    %v7434 = vunpack.c.l.b16 %v7397
    %v7435 = vunpack.c.l.b16 %v7398
    %v7436 = vunpack.c.l.b16 %v7399
    %v7437 = vunpack.c.l.b16 %v7400
    %v7438 = vunpack.c.l.b16 %v7401
    %v7439 = vpack.c.b16 %v7424, %v7423
    %v7440 = vpack.c.b16 %v7426, %v7425
    %v7441 = vpack.c.b16 %v7428, %v7427
    %v7442 = vpack.c.b16 %v7430, %v7429
    %v7443 = vpack.c.b16 %v7432, %v7431
    %v7444 = vpack.c.b16 %v7434, %v7433
    %v7445 = vpack.c.b16 %v7436, %v7435
    %v7446 = vpack.c.b16 %v7438, %v7437
    %7455 = vmatprep.subr.bf16.mxu0 0
    %7456 = vmatpush1.bf16.msra.mxu0 %v7446
    %7457 = vmatprep.subr.bf16.mxu0 0
    %7458 = vmatpush1.bf16.msra.mxu0 %v7445
    %7459 = vmatprep.subr.bf16.mxu0 0
    %7460 = vmatpush1.bf16.msra.mxu0 %v7444
    %7461 = vmatprep.subr.bf16.mxu0 0
    %7462 = vmatpush1.bf16.msra.mxu0 %v7443
    %7463 = vmatprep.subr.bf16.mxu0 0
    %7464 = vmatpush1.bf16.msra.mxu0 %v7442
    %7465 = vmatprep.subr.bf16.mxu0 0
    %7466 = vmatpush1.bf16.msra.mxu0 %v7441
    %7467 = vmatprep.subr.bf16.mxu0 0
    %7468 = vmatpush1.bf16.msra.mxu0 %v7440
    %7469 = vmatprep.subr.bf16.mxu0 0
    %7470 = vmatpush1.bf16.msra.mxu0 %v7439
    %7471 = vmatprep.subr.bf16.mxu0 0
    %7472 = vmatpush2.bf16.msra.mxu0 0
    %7473 = vmatprep.subr.bf16.mxu0 0
    %7474 = vmatpush2.bf16.msra.mxu0 0
    %7475 = vmatprep.subr.bf16.mxu0 0
    %7476 = vmatpush2.bf16.msra.mxu0 0
    %7477 = vmatprep.subr.bf16.mxu0 0
    %7478 = vmatpush2.bf16.msra.mxu0 0
    %7479 = vmatprep.subr.bf16.mxu0 0
    %7480 = vmatpush2.bf16.msra.mxu0 0
    %7481 = vmatprep.subr.bf16.mxu0 0
    %7482 = vmatpush2.bf16.msra.mxu0 0
    %7483 = vmatprep.subr.bf16.mxu0 0
    %7484 = vmatpush2.bf16.msra.mxu0 0
    %7485 = vmatprep.subr.bf16.mxu0 0
    %7486 = vmatpush2.bf16.msra.mxu0 0
    %7487 = vmatprep.mubr.bf16.mxu0 0
    %7488 = vmatmul.mubr.bf16.gmra.mxu0 %v7385
    %v7489 = vpop.f32.mrf.mxu0
    %v7490 = vadd.f32 %v7406, %v7489
    %v7491 = vpop.f32.mrf.mxu0
    %v7492 = vpop.f32.mrf.mxu0
    %v7493 = vadd.f32 %v7406, %v7492
    %v7494 = vpop.f32.mrf.mxu0
    %7495 = vdwg.mxu0
    %v7496 = vxor.u32 %v7490, 2147483648
    %v7497 = vxor.u32 %v7493, 2147483648
    %v7498 = vmul.f32 %v7496, 1.442695
    %v7499 = vpow.pop %v7498
    %v7500 = vmul.f32 %v7497, 1.442695
    %v7501 = vpow.pop %v7500
    %v7502 = vadd.f32 %v7499, 1.0
    %v7503 = vadd.f32 %v7501, 1.0
    %v7504 = vrcp.pop %v7502
    %v7505 = vmul.f32 1.0, %v7504
    %v7506 = vrcp.pop %v7503
    %v7507 = vmul.f32 1.0, %v7506
    %7508 = vst [vmem:[%s10] sm:$0xff] %v7505
    %7509 = vst [vmem:[%s10 + $0x8] sm:$0xff] %v7507
    // Predicated region
    $region58: #{vit_forward.1} parent=1 // pred_check
      _
    $region59: #{vit_forward.1} parent=1 // pred_check_branch
      %7511 = sbr.rel (0) target = $region61
    $region60: #{vit_forward.1} parent=1 // pred_region
      _
    $region61: #{vit_forward.1} parent=1 // pred_fallthru
      _
    // Predicated region
    $region62: #{vit_forward.1} parent=1 // pred_check
      _
    $region63: #{vit_forward.1} parent=1 // pred_check_branch
      %7513 = sbr.rel (0) target = $region65
    $region64: #{vit_forward.1} parent=1 // pred_region
      _
    $region65: #{vit_forward.1} parent=1 // pred_fallthru
      _
    %7514 = vsyncpa [#allocation3], 1
    %7515 = vsyncpa [#allocation5], 1
    %7516 = vsyncpa [#allocation8], 1

</llo_original>
